<compile_context>
chip_gen: v7x
topology: tpu7x:2x2x1
jax: 0.10.0
libtpu: 0.0.40
codegen_flags: <defaults>
</compile_context>

<pallas_src>
import jax
import jax.numpy as jnp
from jax.experimental import pallas as pl
from jax.experimental.pallas import tpu as pltpu

_K = 3                                   # kernel_size=3 (uniform / non-gaussian)
_C1 = (0.0001 * 1.0) ** 2                # (k1 * data_range)^2
_C2 = (0.0009 * 1.0) ** 2                # (k2 * data_range)^2
_BETAS = (0.0448, 0.2856, 0.3001, 0.2363, 0.1333)


# --------------------------------------------------------------------------- #
# In-kernel helpers (operate on traced (H, W) values)
# --------------------------------------------------------------------------- #
def _box3_sum(x, oh, ow):
    """3x3 box sum via separable shifted adds (sublane shifts then lane shifts)."""
    r = x[0:oh, :] + x[1:oh + 1, :] + x[2:oh + 2, :]            # (oh, W)
    return r[:, 0:ow] + r[:, 1:ow + 1] + r[:, 2:ow + 2]         # (oh, ow)


def _pool2x2(x):
    """F.avg_pool2d(kernel=2, stride=2) on an (h, w) value.

    The stride-2 pair selection is done as two matmuls against 0/1 selector
    matrices so it runs on the (otherwise idle) MXU and needs no strided slicing.
    precision=HIGHEST keeps the pooled values f32-exact.
    """
    h, w = x.shape
    h2, w2 = h // 2, w // 2
    # Row-pair selector S_r (h2, h): S_r[j, i] = 1 iff i in {2j, 2j+1}
    jr = jax.lax.broadcasted_iota(jnp.int32, (h2, h), 0)
    ir = jax.lax.broadcasted_iota(jnp.int32, (h2, h), 1)
    sel_r = jnp.logical_or(ir == 2 * jr, ir == 2 * jr + 1).astype(jnp.float32)
    # Column-pair selector S_c (w, w2): S_c[i, j] = 1 iff i in {2j, 2j+1}
    ic = jax.lax.broadcasted_iota(jnp.int32, (w, w2), 0)
    jc = jax.lax.broadcasted_iota(jnp.int32, (w, w2), 1)
    sel_c = jnp.logical_or(ic == 2 * jc, ic == 2 * jc + 1).astype(jnp.float32)

    y = jnp.dot(sel_r, x, preferred_element_type=jnp.float32,
                precision=jax.lax.Precision.HIGHEST)             # (h2, w)
    y = jnp.dot(y, sel_c, preferred_element_type=jnp.float32,
                precision=jax.lax.Precision.HIGHEST)             # (h2, w2)
    return y * 0.25


# --------------------------------------------------------------------------- #
# Fused Pallas kernel: all 5 scales + pooling for ONE image
# --------------------------------------------------------------------------- #
def _msssim_kernel(p_ref, t_ref, out_ref):
    p = p_ref[0].astype(jnp.float32)          # (H, W)
    t = t_ref[0].astype(jnp.float32)

    n_scales = len(_BETAS)
    inv_k2 = 1.0 / float(_K * _K)
    vals = []                                 # (1, 1) per scale

    for s in range(n_scales):                 # statically unrolled (shapes shrink)
        last = s == n_scales - 1
        h, w = p.shape
        oh, ow = h - (_K - 1), w - (_K - 1)   # valid-conv output size

        mu_p = _box3_sum(p, oh, ow) * inv_k2
        mu_t = _box3_sum(t, oh, ow) * inv_k2
        e_pp = _box3_sum(p * p, oh, ow) * inv_k2
        e_tt = _box3_sum(t * t, oh, ow) * inv_k2
        e_pt = _box3_sum(p * t, oh, ow) * inv_k2

        mu_pt = mu_p * mu_t
        mu_p_sq = mu_p * mu_p
        mu_t_sq = mu_t * mu_t
        sigma_p = e_pp - mu_p_sq
        sigma_t = e_tt - mu_t_sq
        sigma_pt = e_pt - mu_pt

        upper = 2.0 * sigma_pt + _C2
        lower = sigma_p + sigma_t + _C2

        if last:
            # Only the full SSIM map is consumed at the final scale (one divide).
            value_map = ((2.0 * mu_pt + _C1) * upper) / ((mu_p_sq + mu_t_sq + _C1) * lower)
        else:
            # Only the contrast-sensitivity map is consumed at scales 0..n-2.
            value_map = upper / lower

        inv_n = 1.0 / float(oh * ow)
        v = jnp.sum(jnp.sum(value_map, axis=1, keepdims=True),
                    axis=0, keepdims=True) * inv_n               # (1, 1)
        vals.append(v)

        if not last:
            p = _pool2x2(p)
            t = _pool2x2(t)

    # Pack the 5 scalars into one full (8, 128) block: row i holds vals[i] broadcast.
    row_idx = jax.lax.broadcasted_iota(jnp.int32, (8, 128), 0)
    out_block = jnp.zeros((8, 128), jnp.float32)
    for i, v in enumerate(vals):
        out_block = jnp.where(row_idx == i, jnp.broadcast_to(v, (8, 128)), out_block)
    out_ref[0] = out_block                     # single unmasked aligned store


# --------------------------------------------------------------------------- #
# Wrapper: full MS-SSIM loss
# --------------------------------------------------------------------------- #
def multiscale_ssim_loss(inputs_flat, targets_flat, batch_size, height, width):
    """inputs_flat/targets_flat: (B*H*W,) flattened per-pixel values in [0, 1]."""
    n_scales = len(_BETAS)
    # torchmetrics validity check for 5 scales with kernel_size=3
    assert (height // 2 ** (n_scales - 1)) > (_K - 1), "height too small for 5 scales"
    assert (width // 2 ** (n_scales - 1)) > (_K - 1), "width too small for 5 scales"

    p = inputs_flat.reshape(batch_size, height, width).astype(jnp.float32)
    t = targets_flat.reshape(batch_size, height, width).astype(jnp.float32)

    # Explicit scoped-VMEM budget: double-buffered input blocks + per-scale live
    # intermediates, clamped under v7x's 64 MiB physical VMEM.
    img_bytes = height * width * 4
    vmem_need = (2 * 2 + 20) * img_bytes
    vmem_limit_bytes = int(min(max(vmem_need, 32 * 1024 * 1024), 48 * 1024 * 1024))

    out = pl.pallas_call(
        _msssim_kernel,
        out_shape=jax.ShapeDtypeStruct((batch_size, 8, 128), jnp.float32),
        grid_spec=pltpu.PrefetchScalarGridSpec(
            num_scalar_prefetch=0,
            grid=(batch_size,),
            in_specs=[
                pl.BlockSpec((1, height, width), lambda i: (i, 0, 0)),
                pl.BlockSpec((1, height, width), lambda i: (i, 0, 0)),
            ],
            out_specs=pl.BlockSpec((1, 8, 128), lambda i: (i, 0, 0)),
        ),
        compiler_params=pltpu.CompilerParams(
            dimension_semantics=("parallel",),        # megacore over batch on v7x
            vmem_limit_bytes=vmem_limit_bytes,
        ),
    )(p, t)

    vals = out[:, :n_scales, 0]                       # (B, 5): cs_0..cs_3, ssim_4
    vals = jnp.maximum(vals, 0.0)                     # normalize="relu"
    betas = jnp.asarray(_BETAS, jnp.float32)[None, :]
    per_image = jnp.prod(vals ** betas, axis=1)       # (B,)
    return 1.0 - jnp.mean(per_image)


# --------------------------------------------------------------------------- #
# Pure-JAX reference (independent conv path via reduce_window)
# --------------------------------------------------------------------------- #
def _avg_pool2x2(x):
    """F.avg_pool2d(kernel=2, stride=2) on (B, H, W)."""
    b, h, w = x.shape
    h2, w2 = h // 2, w // 2
    x = x[:, : 2 * h2, : 2 * w2]
    return x.reshape(b, h2, 2, w2, 2).mean(axis=(2, 4))


def _ref_ssim_and_cs(p, t):
    def box_mean(x):
        s = jax.lax.reduce_window(x, 0.0, jax.lax.add,
                                  window_dimensions=(1, _K, _K),
                                  window_strides=(1, 1, 1),
                                  padding="VALID")
        return s / float(_K * _K)

    mu_p = box_mean(p)
    mu_t = box_mean(t)
    sigma_p = box_mean(p * p) - mu_p * mu_p
    sigma_t = box_mean(t * t) - mu_t * mu_t
    sigma_pt = box_mean(p * t) - mu_p * mu_t
    upper = 2.0 * sigma_pt + _C2
    lower = sigma_p + sigma_t + _C2
    ssim_map = ((2.0 * mu_p * mu_t + _C1) * upper) / ((mu_p ** 2 + mu_t ** 2 + _C1) * lower)
    cs_map = upper / lower
    b = p.shape[0]
    return ssim_map.reshape(b, -1).mean(-1), cs_map.reshape(b, -1).mean(-1)


def _reference_loss(inputs_flat, targets_flat, batch_size, height, width):
    p = inputs_flat.reshape(batch_size, height, width).astype(jnp.float32)
    t = targets_flat.reshape(batch_size, height, width).astype(jnp.float32)
    mcs = []
    sim = None
    for s in range(len(_BETAS)):
        sim, cs = _ref_ssim_and_cs(p, t)
        mcs.append(cs)
        if s < len(_BETAS) - 1:
            p = _avg_pool2x2(p)
            t = _avg_pool2x2(t)
    mcs[-1] = sim
    stack = jnp.maximum(jnp.stack(mcs, axis=0), 0.0)
    betas = jnp.asarray(_BETAS, jnp.float32)[:, None]
    return 1.0 - jnp.mean(jnp.prod(stack ** betas, axis=0))


if __name__ == "__main__":
    # Smallest spatial size compatible with 5-scale MS-SSIM (needs H, W >= 48):
    # batch=2, single channel, 64x64 images, flattened graph layout (B*H*W,).
    B, H, W = 2, 64, 64
    key = jax.random.PRNGKey(0)
    k_x, k_t = jax.random.split(key)
    inputs_flat = jax.random.uniform(k_x, (B * H * W,), dtype=jnp.float32)   # probabilities
    targets_flat = jax.random.uniform(k_t, (B * H * W,), dtype=jnp.float32)  # inv. dist. transform

    loss_fn = jax.jit(lambda a, b: multiscale_ssim_loss(a, b, B, H, W))
    loss = jax.block_until_ready(loss_fn(inputs_flat, targets_flat))
    ref = jax.block_until_ready(_reference_loss(inputs_flat, targets_flat, B, H, W))

    assert jnp.allclose(loss, ref, atol=2e-5, rtol=2e-5), (loss, ref)
    print("KERNEL_OK")
</pallas_src>

<mosaic_0001>
module attributes {stable_mosaic.version = 11 : i64} {
  func.func @_msssim_kernel(%arg0: i32, %arg1: memref<1x64x64xf32, #tpu.memory_space<vmem>>, %arg2: memref<1x64x64xf32, #tpu.memory_space<vmem>>, %arg3: memref<1x8x128xf32, #tpu.memory_space<vmem>>) attributes {dimension_semantics = [#tpu.dimension_semantics<parallel>], iteration_bounds = array<i64: 2>, scalar_prefetch = 0 : i64, scratch_operands = 0 : i64, tpu.core_type = #tpu.core_type<tc>, window_params = [{transform_indices = @transform_0, window_bounds = array<i64: 1, 64, 64>}, {transform_indices = @transform_1, window_bounds = array<i64: 1, 64, 64>}, {transform_indices = @transform_2, window_bounds = array<i64: 1, 8, 128>}]} {
    %c0 = arith.constant 0 : index
    %c0_0 = arith.constant 0 : index
    %c0_1 = arith.constant 0 : index
    %0 = vector.load %arg1[%c0, %c0_0, %c0_1] : memref<1x64x64xf32, #tpu.memory_space<vmem>>, vector<1x64x64xf32>
    %1 = vector.shape_cast %0 : vector<1x64x64xf32> to vector<64x64xf32>
    %c0_2 = arith.constant 0 : index
    %c0_3 = arith.constant 0 : index
    %c0_4 = arith.constant 0 : index
    %2 = vector.load %arg2[%c0_2, %c0_3, %c0_4] : memref<1x64x64xf32, #tpu.memory_space<vmem>>, vector<1x64x64xf32>
    %3 = vector.shape_cast %2 : vector<1x64x64xf32> to vector<64x64xf32>
    %4 = vector.extract_strided_slice %1 {offsets = [0, 0], sizes = [62, 64], strides = [1, 1]} : vector<64x64xf32> to vector<62x64xf32>
    %5 = vector.extract_strided_slice %1 {offsets = [1, 0], sizes = [62, 64], strides = [1, 1]} : vector<64x64xf32> to vector<62x64xf32>
    %6 = arith.addf %4, %5 : vector<62x64xf32>
    %7 = vector.extract_strided_slice %1 {offsets = [2, 0], sizes = [62, 64], strides = [1, 1]} : vector<64x64xf32> to vector<62x64xf32>
    %8 = arith.addf %6, %7 : vector<62x64xf32>
    %9 = vector.extract_strided_slice %8 {offsets = [0, 0], sizes = [62, 62], strides = [1, 1]} : vector<62x64xf32> to vector<62x62xf32>
    %10 = vector.extract_strided_slice %8 {offsets = [0, 1], sizes = [62, 62], strides = [1, 1]} : vector<62x64xf32> to vector<62x62xf32>
    %11 = arith.addf %9, %10 : vector<62x62xf32>
    %12 = vector.extract_strided_slice %8 {offsets = [0, 2], sizes = [62, 62], strides = [1, 1]} : vector<62x64xf32> to vector<62x62xf32>
    %13 = arith.addf %11, %12 : vector<62x62xf32>
    %cst = arith.constant 0.111111112 : f32
    %14 = vector.broadcast %cst : f32 to vector<62x62xf32>
    %15 = arith.mulf %13, %14 : vector<62x62xf32>
    %16 = vector.extract_strided_slice %3 {offsets = [0, 0], sizes = [62, 64], strides = [1, 1]} : vector<64x64xf32> to vector<62x64xf32>
    %17 = vector.extract_strided_slice %3 {offsets = [1, 0], sizes = [62, 64], strides = [1, 1]} : vector<64x64xf32> to vector<62x64xf32>
    %18 = arith.addf %16, %17 : vector<62x64xf32>
    %19 = vector.extract_strided_slice %3 {offsets = [2, 0], sizes = [62, 64], strides = [1, 1]} : vector<64x64xf32> to vector<62x64xf32>
    %20 = arith.addf %18, %19 : vector<62x64xf32>
    %21 = vector.extract_strided_slice %20 {offsets = [0, 0], sizes = [62, 62], strides = [1, 1]} : vector<62x64xf32> to vector<62x62xf32>
    %22 = vector.extract_strided_slice %20 {offsets = [0, 1], sizes = [62, 62], strides = [1, 1]} : vector<62x64xf32> to vector<62x62xf32>
    %23 = arith.addf %21, %22 : vector<62x62xf32>
    %24 = vector.extract_strided_slice %20 {offsets = [0, 2], sizes = [62, 62], strides = [1, 1]} : vector<62x64xf32> to vector<62x62xf32>
    %25 = arith.addf %23, %24 : vector<62x62xf32>
    %cst_5 = arith.constant 0.111111112 : f32
    %26 = vector.broadcast %cst_5 : f32 to vector<62x62xf32>
    %27 = arith.mulf %25, %26 : vector<62x62xf32>
    %28 = arith.mulf %1, %1 : vector<64x64xf32>
    %29 = vector.extract_strided_slice %28 {offsets = [0, 0], sizes = [62, 64], strides = [1, 1]} : vector<64x64xf32> to vector<62x64xf32>
    %30 = vector.extract_strided_slice %28 {offsets = [1, 0], sizes = [62, 64], strides = [1, 1]} : vector<64x64xf32> to vector<62x64xf32>
    %31 = arith.addf %29, %30 : vector<62x64xf32>
    %32 = vector.extract_strided_slice %28 {offsets = [2, 0], sizes = [62, 64], strides = [1, 1]} : vector<64x64xf32> to vector<62x64xf32>
    %33 = arith.addf %31, %32 : vector<62x64xf32>
    %34 = vector.extract_strided_slice %33 {offsets = [0, 0], sizes = [62, 62], strides = [1, 1]} : vector<62x64xf32> to vector<62x62xf32>
    %35 = vector.extract_strided_slice %33 {offsets = [0, 1], sizes = [62, 62], strides = [1, 1]} : vector<62x64xf32> to vector<62x62xf32>
    %36 = arith.addf %34, %35 : vector<62x62xf32>
    %37 = vector.extract_strided_slice %33 {offsets = [0, 2], sizes = [62, 62], strides = [1, 1]} : vector<62x64xf32> to vector<62x62xf32>
    %38 = arith.addf %36, %37 : vector<62x62xf32>
    %cst_6 = arith.constant 0.111111112 : f32
    %39 = vector.broadcast %cst_6 : f32 to vector<62x62xf32>
    %40 = arith.mulf %38, %39 : vector<62x62xf32>
    %41 = arith.mulf %3, %3 : vector<64x64xf32>
    %42 = vector.extract_strided_slice %41 {offsets = [0, 0], sizes = [62, 64], strides = [1, 1]} : vector<64x64xf32> to vector<62x64xf32>
    %43 = vector.extract_strided_slice %41 {offsets = [1, 0], sizes = [62, 64], strides = [1, 1]} : vector<64x64xf32> to vector<62x64xf32>
    %44 = arith.addf %42, %43 : vector<62x64xf32>
    %45 = vector.extract_strided_slice %41 {offsets = [2, 0], sizes = [62, 64], strides = [1, 1]} : vector<64x64xf32> to vector<62x64xf32>
    %46 = arith.addf %44, %45 : vector<62x64xf32>
    %47 = vector.extract_strided_slice %46 {offsets = [0, 0], sizes = [62, 62], strides = [1, 1]} : vector<62x64xf32> to vector<62x62xf32>
    %48 = vector.extract_strided_slice %46 {offsets = [0, 1], sizes = [62, 62], strides = [1, 1]} : vector<62x64xf32> to vector<62x62xf32>
    %49 = arith.addf %47, %48 : vector<62x62xf32>
    %50 = vector.extract_strided_slice %46 {offsets = [0, 2], sizes = [62, 62], strides = [1, 1]} : vector<62x64xf32> to vector<62x62xf32>
    %51 = arith.addf %49, %50 : vector<62x62xf32>
    %cst_7 = arith.constant 0.111111112 : f32
    %52 = vector.broadcast %cst_7 : f32 to vector<62x62xf32>
    %53 = arith.mulf %51, %52 : vector<62x62xf32>
    %54 = arith.mulf %1, %3 : vector<64x64xf32>
    %55 = vector.extract_strided_slice %54 {offsets = [0, 0], sizes = [62, 64], strides = [1, 1]} : vector<64x64xf32> to vector<62x64xf32>
    %56 = vector.extract_strided_slice %54 {offsets = [1, 0], sizes = [62, 64], strides = [1, 1]} : vector<64x64xf32> to vector<62x64xf32>
    %57 = arith.addf %55, %56 : vector<62x64xf32>
    %58 = vector.extract_strided_slice %54 {offsets = [2, 0], sizes = [62, 64], strides = [1, 1]} : vector<64x64xf32> to vector<62x64xf32>
    %59 = arith.addf %57, %58 : vector<62x64xf32>
    %60 = vector.extract_strided_slice %59 {offsets = [0, 0], sizes = [62, 62], strides = [1, 1]} : vector<62x64xf32> to vector<62x62xf32>
    %61 = vector.extract_strided_slice %59 {offsets = [0, 1], sizes = [62, 62], strides = [1, 1]} : vector<62x64xf32> to vector<62x62xf32>
    %62 = arith.addf %60, %61 : vector<62x62xf32>
    %63 = vector.extract_strided_slice %59 {offsets = [0, 2], sizes = [62, 62], strides = [1, 1]} : vector<62x64xf32> to vector<62x62xf32>
    %64 = arith.addf %62, %63 : vector<62x62xf32>
    %cst_8 = arith.constant 0.111111112 : f32
    %65 = vector.broadcast %cst_8 : f32 to vector<62x62xf32>
    %66 = arith.mulf %64, %65 : vector<62x62xf32>
    %67 = arith.mulf %15, %27 : vector<62x62xf32>
    %68 = arith.mulf %15, %15 : vector<62x62xf32>
    %69 = arith.mulf %27, %27 : vector<62x62xf32>
    %70 = arith.subf %40, %68 : vector<62x62xf32>
    %71 = arith.subf %53, %69 : vector<62x62xf32>
    %72 = arith.subf %66, %67 : vector<62x62xf32>
    %cst_9 = arith.constant 2.000000e+00 : f32
    %73 = vector.broadcast %cst_9 : f32 to vector<62x62xf32>
    %74 = arith.mulf %73, %72 : vector<62x62xf32>
    %cst_10 = arith.constant 8.100000e-07 : f32
    %75 = vector.broadcast %cst_10 : f32 to vector<62x62xf32>
    %76 = arith.addf %74, %75 : vector<62x62xf32>
    %77 = arith.addf %70, %71 : vector<62x62xf32>
    %cst_11 = arith.constant 8.100000e-07 : f32
    %78 = vector.broadcast %cst_11 : f32 to vector<62x62xf32>
    %79 = arith.addf %77, %78 : vector<62x62xf32>
    %80 = arith.divf %76, %79 : vector<62x62xf32>
    %cst_12 = arith.constant dense<0.000000e+00> : vector<62xf32>
    %81 = vector.multi_reduction <add>, %80, %cst_12 [1] : vector<62x62xf32> to vector<62xf32>
    %82 = vector.shape_cast %81 : vector<62xf32> to vector<62x1xf32>
    %cst_13 = arith.constant dense<0.000000e+00> : vector<1xf32>
    %83 = vector.multi_reduction <add>, %82, %cst_13 [0] : vector<62x1xf32> to vector<1xf32>
    %84 = vector.shape_cast %83 : vector<1xf32> to vector<1x1xf32>
    %cst_14 = arith.constant 2.60145694E-4 : f32
    %85 = vector.broadcast %cst_14 : f32 to vector<1x1xf32>
    %86 = arith.mulf %84, %85 : vector<1x1xf32>
    %87 = tpu.iota {dimensions = array<i32: 0>} : vector<32x64xi32>
    %88 = tpu.iota {dimensions = array<i32: 1>} : vector<32x64xi32>
    %c2_i32 = arith.constant 2 : i32
    %89 = vector.broadcast %c2_i32 : i32 to vector<32x64xi32>
    %90 = arith.muli %89, %87 : vector<32x64xi32>
    %91 = arith.cmpi eq, %88, %90 : vector<32x64xi32>
    %c2_i32_15 = arith.constant 2 : i32
    %92 = vector.broadcast %c2_i32_15 : i32 to vector<32x64xi32>
    %93 = arith.muli %92, %87 : vector<32x64xi32>
    %c1_i32 = arith.constant 1 : i32
    %94 = vector.broadcast %c1_i32 : i32 to vector<32x64xi32>
    %95 = arith.addi %93, %94 : vector<32x64xi32>
    %96 = arith.cmpi eq, %88, %95 : vector<32x64xi32>
    %97 = arith.ori %91, %96 : vector<32x64xi1>
    %98 = arith.extui %97 : vector<32x64xi1> to vector<32x64xi32>
    %99 = arith.sitofp %98 : vector<32x64xi32> to vector<32x64xf32>
    %100 = tpu.iota {dimensions = array<i32: 0>} : vector<64x32xi32>
    %101 = tpu.iota {dimensions = array<i32: 1>} : vector<64x32xi32>
    %c2_i32_16 = arith.constant 2 : i32
    %102 = vector.broadcast %c2_i32_16 : i32 to vector<64x32xi32>
    %103 = arith.muli %102, %101 : vector<64x32xi32>
    %104 = arith.cmpi eq, %100, %103 : vector<64x32xi32>
    %c2_i32_17 = arith.constant 2 : i32
    %105 = vector.broadcast %c2_i32_17 : i32 to vector<64x32xi32>
    %106 = arith.muli %105, %101 : vector<64x32xi32>
    %c1_i32_18 = arith.constant 1 : i32
    %107 = vector.broadcast %c1_i32_18 : i32 to vector<64x32xi32>
    %108 = arith.addi %106, %107 : vector<64x32xi32>
    %109 = arith.cmpi eq, %100, %108 : vector<64x32xi32>
    %110 = arith.ori %104, %109 : vector<64x32xi1>
    %111 = arith.extui %110 : vector<64x32xi1> to vector<64x32xi32>
    %112 = arith.sitofp %111 : vector<64x32xi32> to vector<64x32xf32>
    %cst_19 = arith.constant dense<0.000000e+00> : vector<32x64xf32>
    %113 = tpu.matmul %99, %1, %cst_19 {dimension_numbers = #tpu.dot_dimension_numbers<[1], [0], [0], [1], [0, 0, 1, 1], [], []>, precision = #tpu.contract_precision<fp32>} : vector<32x64xf32>, vector<64x64xf32>, vector<32x64xf32> -> vector<32x64xf32>
    %cst_20 = arith.constant dense<0.000000e+00> : vector<32x32xf32>
    %114 = tpu.matmul %113, %112, %cst_20 {dimension_numbers = #tpu.dot_dimension_numbers<[1], [0], [0], [1], [0, 0, 1, 1], [], []>, precision = #tpu.contract_precision<fp32>} : vector<32x64xf32>, vector<64x32xf32>, vector<32x32xf32> -> vector<32x32xf32>
    %cst_21 = arith.constant 2.500000e-01 : f32
    %115 = vector.broadcast %cst_21 : f32 to vector<32x32xf32>
    %116 = arith.mulf %114, %115 : vector<32x32xf32>
    %117 = tpu.iota {dimensions = array<i32: 0>} : vector<32x64xi32>
    %118 = tpu.iota {dimensions = array<i32: 1>} : vector<32x64xi32>
    %c2_i32_22 = arith.constant 2 : i32
    %119 = vector.broadcast %c2_i32_22 : i32 to vector<32x64xi32>
    %120 = arith.muli %119, %117 : vector<32x64xi32>
    %121 = arith.cmpi eq, %118, %120 : vector<32x64xi32>
    %c2_i32_23 = arith.constant 2 : i32
    %122 = vector.broadcast %c2_i32_23 : i32 to vector<32x64xi32>
    %123 = arith.muli %122, %117 : vector<32x64xi32>
    %c1_i32_24 = arith.constant 1 : i32
    %124 = vector.broadcast %c1_i32_24 : i32 to vector<32x64xi32>
    %125 = arith.addi %123, %124 : vector<32x64xi32>
    %126 = arith.cmpi eq, %118, %125 : vector<32x64xi32>
    %127 = arith.ori %121, %126 : vector<32x64xi1>
    %128 = arith.extui %127 : vector<32x64xi1> to vector<32x64xi32>
    %129 = arith.sitofp %128 : vector<32x64xi32> to vector<32x64xf32>
    %130 = tpu.iota {dimensions = array<i32: 0>} : vector<64x32xi32>
    %131 = tpu.iota {dimensions = array<i32: 1>} : vector<64x32xi32>
    %c2_i32_25 = arith.constant 2 : i32
    %132 = vector.broadcast %c2_i32_25 : i32 to vector<64x32xi32>
    %133 = arith.muli %132, %131 : vector<64x32xi32>
    %134 = arith.cmpi eq, %130, %133 : vector<64x32xi32>
    %c2_i32_26 = arith.constant 2 : i32
    %135 = vector.broadcast %c2_i32_26 : i32 to vector<64x32xi32>
    %136 = arith.muli %135, %131 : vector<64x32xi32>
    %c1_i32_27 = arith.constant 1 : i32
    %137 = vector.broadcast %c1_i32_27 : i32 to vector<64x32xi32>
    %138 = arith.addi %136, %137 : vector<64x32xi32>
    %139 = arith.cmpi eq, %130, %138 : vector<64x32xi32>
    %140 = arith.ori %134, %139 : vector<64x32xi1>
    %141 = arith.extui %140 : vector<64x32xi1> to vector<64x32xi32>
    %142 = arith.sitofp %141 : vector<64x32xi32> to vector<64x32xf32>
    %cst_28 = arith.constant dense<0.000000e+00> : vector<32x64xf32>
    %143 = tpu.matmul %129, %3, %cst_28 {dimension_numbers = #tpu.dot_dimension_numbers<[1], [0], [0], [1], [0, 0, 1, 1], [], []>, precision = #tpu.contract_precision<fp32>} : vector<32x64xf32>, vector<64x64xf32>, vector<32x64xf32> -> vector<32x64xf32>
    %cst_29 = arith.constant dense<0.000000e+00> : vector<32x32xf32>
    %144 = tpu.matmul %143, %142, %cst_29 {dimension_numbers = #tpu.dot_dimension_numbers<[1], [0], [0], [1], [0, 0, 1, 1], [], []>, precision = #tpu.contract_precision<fp32>} : vector<32x64xf32>, vector<64x32xf32>, vector<32x32xf32> -> vector<32x32xf32>
    %cst_30 = arith.constant 2.500000e-01 : f32
    %145 = vector.broadcast %cst_30 : f32 to vector<32x32xf32>
    %146 = arith.mulf %144, %145 : vector<32x32xf32>
    %147 = vector.extract_strided_slice %116 {offsets = [0, 0], sizes = [30, 32], strides = [1, 1]} : vector<32x32xf32> to vector<30x32xf32>
    %148 = vector.extract_strided_slice %116 {offsets = [1, 0], sizes = [30, 32], strides = [1, 1]} : vector<32x32xf32> to vector<30x32xf32>
    %149 = arith.addf %147, %148 : vector<30x32xf32>
    %150 = vector.extract_strided_slice %116 {offsets = [2, 0], sizes = [30, 32], strides = [1, 1]} : vector<32x32xf32> to vector<30x32xf32>
    %151 = arith.addf %149, %150 : vector<30x32xf32>
    %152 = vector.extract_strided_slice %151 {offsets = [0, 0], sizes = [30, 30], strides = [1, 1]} : vector<30x32xf32> to vector<30x30xf32>
    %153 = vector.extract_strided_slice %151 {offsets = [0, 1], sizes = [30, 30], strides = [1, 1]} : vector<30x32xf32> to vector<30x30xf32>
    %154 = arith.addf %152, %153 : vector<30x30xf32>
    %155 = vector.extract_strided_slice %151 {offsets = [0, 2], sizes = [30, 30], strides = [1, 1]} : vector<30x32xf32> to vector<30x30xf32>
    %156 = arith.addf %154, %155 : vector<30x30xf32>
    %cst_31 = arith.constant 0.111111112 : f32
    %157 = vector.broadcast %cst_31 : f32 to vector<30x30xf32>
    %158 = arith.mulf %156, %157 : vector<30x30xf32>
    %159 = vector.extract_strided_slice %146 {offsets = [0, 0], sizes = [30, 32], strides = [1, 1]} : vector<32x32xf32> to vector<30x32xf32>
    %160 = vector.extract_strided_slice %146 {offsets = [1, 0], sizes = [30, 32], strides = [1, 1]} : vector<32x32xf32> to vector<30x32xf32>
    %161 = arith.addf %159, %160 : vector<30x32xf32>
    %162 = vector.extract_strided_slice %146 {offsets = [2, 0], sizes = [30, 32], strides = [1, 1]} : vector<32x32xf32> to vector<30x32xf32>
    %163 = arith.addf %161, %162 : vector<30x32xf32>
    %164 = vector.extract_strided_slice %163 {offsets = [0, 0], sizes = [30, 30], strides = [1, 1]} : vector<30x32xf32> to vector<30x30xf32>
    %165 = vector.extract_strided_slice %163 {offsets = [0, 1], sizes = [30, 30], strides = [1, 1]} : vector<30x32xf32> to vector<30x30xf32>
    %166 = arith.addf %164, %165 : vector<30x30xf32>
    %167 = vector.extract_strided_slice %163 {offsets = [0, 2], sizes = [30, 30], strides = [1, 1]} : vector<30x32xf32> to vector<30x30xf32>
    %168 = arith.addf %166, %167 : vector<30x30xf32>
    %cst_32 = arith.constant 0.111111112 : f32
    %169 = vector.broadcast %cst_32 : f32 to vector<30x30xf32>
    %170 = arith.mulf %168, %169 : vector<30x30xf32>
    %171 = arith.mulf %116, %116 : vector<32x32xf32>
    %172 = vector.extract_strided_slice %171 {offsets = [0, 0], sizes = [30, 32], strides = [1, 1]} : vector<32x32xf32> to vector<30x32xf32>
    %173 = vector.extract_strided_slice %171 {offsets = [1, 0], sizes = [30, 32], strides = [1, 1]} : vector<32x32xf32> to vector<30x32xf32>
    %174 = arith.addf %172, %173 : vector<30x32xf32>
    %175 = vector.extract_strided_slice %171 {offsets = [2, 0], sizes = [30, 32], strides = [1, 1]} : vector<32x32xf32> to vector<30x32xf32>
    %176 = arith.addf %174, %175 : vector<30x32xf32>
    %177 = vector.extract_strided_slice %176 {offsets = [0, 0], sizes = [30, 30], strides = [1, 1]} : vector<30x32xf32> to vector<30x30xf32>
    %178 = vector.extract_strided_slice %176 {offsets = [0, 1], sizes = [30, 30], strides = [1, 1]} : vector<30x32xf32> to vector<30x30xf32>
    %179 = arith.addf %177, %178 : vector<30x30xf32>
    %180 = vector.extract_strided_slice %176 {offsets = [0, 2], sizes = [30, 30], strides = [1, 1]} : vector<30x32xf32> to vector<30x30xf32>
    %181 = arith.addf %179, %180 : vector<30x30xf32>
    %cst_33 = arith.constant 0.111111112 : f32
    %182 = vector.broadcast %cst_33 : f32 to vector<30x30xf32>
    %183 = arith.mulf %181, %182 : vector<30x30xf32>
    %184 = arith.mulf %146, %146 : vector<32x32xf32>
    %185 = vector.extract_strided_slice %184 {offsets = [0, 0], sizes = [30, 32], strides = [1, 1]} : vector<32x32xf32> to vector<30x32xf32>
    %186 = vector.extract_strided_slice %184 {offsets = [1, 0], sizes = [30, 32], strides = [1, 1]} : vector<32x32xf32> to vector<30x32xf32>
    %187 = arith.addf %185, %186 : vector<30x32xf32>
    %188 = vector.extract_strided_slice %184 {offsets = [2, 0], sizes = [30, 32], strides = [1, 1]} : vector<32x32xf32> to vector<30x32xf32>
    %189 = arith.addf %187, %188 : vector<30x32xf32>
    %190 = vector.extract_strided_slice %189 {offsets = [0, 0], sizes = [30, 30], strides = [1, 1]} : vector<30x32xf32> to vector<30x30xf32>
    %191 = vector.extract_strided_slice %189 {offsets = [0, 1], sizes = [30, 30], strides = [1, 1]} : vector<30x32xf32> to vector<30x30xf32>
    %192 = arith.addf %190, %191 : vector<30x30xf32>
    %193 = vector.extract_strided_slice %189 {offsets = [0, 2], sizes = [30, 30], strides = [1, 1]} : vector<30x32xf32> to vector<30x30xf32>
    %194 = arith.addf %192, %193 : vector<30x30xf32>
    %cst_34 = arith.constant 0.111111112 : f32
    %195 = vector.broadcast %cst_34 : f32 to vector<30x30xf32>
    %196 = arith.mulf %194, %195 : vector<30x30xf32>
    %197 = arith.mulf %116, %146 : vector<32x32xf32>
    %198 = vector.extract_strided_slice %197 {offsets = [0, 0], sizes = [30, 32], strides = [1, 1]} : vector<32x32xf32> to vector<30x32xf32>
    %199 = vector.extract_strided_slice %197 {offsets = [1, 0], sizes = [30, 32], strides = [1, 1]} : vector<32x32xf32> to vector<30x32xf32>
    %200 = arith.addf %198, %199 : vector<30x32xf32>
    %201 = vector.extract_strided_slice %197 {offsets = [2, 0], sizes = [30, 32], strides = [1, 1]} : vector<32x32xf32> to vector<30x32xf32>
    %202 = arith.addf %200, %201 : vector<30x32xf32>
    %203 = vector.extract_strided_slice %202 {offsets = [0, 0], sizes = [30, 30], strides = [1, 1]} : vector<30x32xf32> to vector<30x30xf32>
    %204 = vector.extract_strided_slice %202 {offsets = [0, 1], sizes = [30, 30], strides = [1, 1]} : vector<30x32xf32> to vector<30x30xf32>
    %205 = arith.addf %203, %204 : vector<30x30xf32>
    %206 = vector.extract_strided_slice %202 {offsets = [0, 2], sizes = [30, 30], strides = [1, 1]} : vector<30x32xf32> to vector<30x30xf32>
    %207 = arith.addf %205, %206 : vector<30x30xf32>
    %cst_35 = arith.constant 0.111111112 : f32
    %208 = vector.broadcast %cst_35 : f32 to vector<30x30xf32>
    %209 = arith.mulf %207, %208 : vector<30x30xf32>
    %210 = arith.mulf %158, %170 : vector<30x30xf32>
    %211 = arith.mulf %158, %158 : vector<30x30xf32>
    %212 = arith.mulf %170, %170 : vector<30x30xf32>
    %213 = arith.subf %183, %211 : vector<30x30xf32>
    %214 = arith.subf %196, %212 : vector<30x30xf32>
    %215 = arith.subf %209, %210 : vector<30x30xf32>
    %cst_36 = arith.constant 2.000000e+00 : f32
    %216 = vector.broadcast %cst_36 : f32 to vector<30x30xf32>
    %217 = arith.mulf %216, %215 : vector<30x30xf32>
    %cst_37 = arith.constant 8.100000e-07 : f32
    %218 = vector.broadcast %cst_37 : f32 to vector<30x30xf32>
    %219 = arith.addf %217, %218 : vector<30x30xf32>
    %220 = arith.addf %213, %214 : vector<30x30xf32>
    %cst_38 = arith.constant 8.100000e-07 : f32
    %221 = vector.broadcast %cst_38 : f32 to vector<30x30xf32>
    %222 = arith.addf %220, %221 : vector<30x30xf32>
    %223 = arith.divf %219, %222 : vector<30x30xf32>
    %cst_39 = arith.constant dense<0.000000e+00> : vector<30xf32>
    %224 = vector.multi_reduction <add>, %223, %cst_39 [1] : vector<30x30xf32> to vector<30xf32>
    %225 = vector.shape_cast %224 : vector<30xf32> to vector<30x1xf32>
    %cst_40 = arith.constant dense<0.000000e+00> : vector<1xf32>
    %226 = vector.multi_reduction <add>, %225, %cst_40 [0] : vector<30x1xf32> to vector<1xf32>
    %227 = vector.shape_cast %226 : vector<1xf32> to vector<1x1xf32>
    %cst_41 = arith.constant 0.00111111114 : f32
    %228 = vector.broadcast %cst_41 : f32 to vector<1x1xf32>
    %229 = arith.mulf %227, %228 : vector<1x1xf32>
    %230 = tpu.iota {dimensions = array<i32: 0>} : vector<16x32xi32>
    %231 = tpu.iota {dimensions = array<i32: 1>} : vector<16x32xi32>
    %c2_i32_42 = arith.constant 2 : i32
    %232 = vector.broadcast %c2_i32_42 : i32 to vector<16x32xi32>
    %233 = arith.muli %232, %230 : vector<16x32xi32>
    %234 = arith.cmpi eq, %231, %233 : vector<16x32xi32>
    %c2_i32_43 = arith.constant 2 : i32
    %235 = vector.broadcast %c2_i32_43 : i32 to vector<16x32xi32>
    %236 = arith.muli %235, %230 : vector<16x32xi32>
    %c1_i32_44 = arith.constant 1 : i32
    %237 = vector.broadcast %c1_i32_44 : i32 to vector<16x32xi32>
    %238 = arith.addi %236, %237 : vector<16x32xi32>
    %239 = arith.cmpi eq, %231, %238 : vector<16x32xi32>
    %240 = arith.ori %234, %239 : vector<16x32xi1>
    %241 = arith.extui %240 : vector<16x32xi1> to vector<16x32xi32>
    %242 = arith.sitofp %241 : vector<16x32xi32> to vector<16x32xf32>
    %243 = tpu.iota {dimensions = array<i32: 0>} : vector<32x16xi32>
    %244 = tpu.iota {dimensions = array<i32: 1>} : vector<32x16xi32>
    %c2_i32_45 = arith.constant 2 : i32
    %245 = vector.broadcast %c2_i32_45 : i32 to vector<32x16xi32>
    %246 = arith.muli %245, %244 : vector<32x16xi32>
    %247 = arith.cmpi eq, %243, %246 : vector<32x16xi32>
    %c2_i32_46 = arith.constant 2 : i32
    %248 = vector.broadcast %c2_i32_46 : i32 to vector<32x16xi32>
    %249 = arith.muli %248, %244 : vector<32x16xi32>
    %c1_i32_47 = arith.constant 1 : i32
    %250 = vector.broadcast %c1_i32_47 : i32 to vector<32x16xi32>
    %251 = arith.addi %249, %250 : vector<32x16xi32>
    %252 = arith.cmpi eq, %243, %251 : vector<32x16xi32>
    %253 = arith.ori %247, %252 : vector<32x16xi1>
    %254 = arith.extui %253 : vector<32x16xi1> to vector<32x16xi32>
    %255 = arith.sitofp %254 : vector<32x16xi32> to vector<32x16xf32>
    %cst_48 = arith.constant dense<0.000000e+00> : vector<16x32xf32>
    %256 = tpu.matmul %242, %116, %cst_48 {dimension_numbers = #tpu.dot_dimension_numbers<[1], [0], [0], [1], [0, 0, 1, 1], [], []>, precision = #tpu.contract_precision<fp32>} : vector<16x32xf32>, vector<32x32xf32>, vector<16x32xf32> -> vector<16x32xf32>
    %cst_49 = arith.constant dense<0.000000e+00> : vector<16x16xf32>
    %257 = tpu.matmul %256, %255, %cst_49 {dimension_numbers = #tpu.dot_dimension_numbers<[1], [0], [0], [1], [0, 0, 1, 1], [], []>, precision = #tpu.contract_precision<fp32>} : vector<16x32xf32>, vector<32x16xf32>, vector<16x16xf32> -> vector<16x16xf32>
    %cst_50 = arith.constant 2.500000e-01 : f32
    %258 = vector.broadcast %cst_50 : f32 to vector<16x16xf32>
    %259 = arith.mulf %257, %258 : vector<16x16xf32>
    %260 = tpu.iota {dimensions = array<i32: 0>} : vector<16x32xi32>
    %261 = tpu.iota {dimensions = array<i32: 1>} : vector<16x32xi32>
    %c2_i32_51 = arith.constant 2 : i32
    %262 = vector.broadcast %c2_i32_51 : i32 to vector<16x32xi32>
    %263 = arith.muli %262, %260 : vector<16x32xi32>
    %264 = arith.cmpi eq, %261, %263 : vector<16x32xi32>
    %c2_i32_52 = arith.constant 2 : i32
    %265 = vector.broadcast %c2_i32_52 : i32 to vector<16x32xi32>
    %266 = arith.muli %265, %260 : vector<16x32xi32>
    %c1_i32_53 = arith.constant 1 : i32
    %267 = vector.broadcast %c1_i32_53 : i32 to vector<16x32xi32>
    %268 = arith.addi %266, %267 : vector<16x32xi32>
    %269 = arith.cmpi eq, %261, %268 : vector<16x32xi32>
    %270 = arith.ori %264, %269 : vector<16x32xi1>
    %271 = arith.extui %270 : vector<16x32xi1> to vector<16x32xi32>
    %272 = arith.sitofp %271 : vector<16x32xi32> to vector<16x32xf32>
    %273 = tpu.iota {dimensions = array<i32: 0>} : vector<32x16xi32>
    %274 = tpu.iota {dimensions = array<i32: 1>} : vector<32x16xi32>
    %c2_i32_54 = arith.constant 2 : i32
    %275 = vector.broadcast %c2_i32_54 : i32 to vector<32x16xi32>
    %276 = arith.muli %275, %274 : vector<32x16xi32>
    %277 = arith.cmpi eq, %273, %276 : vector<32x16xi32>
    %c2_i32_55 = arith.constant 2 : i32
    %278 = vector.broadcast %c2_i32_55 : i32 to vector<32x16xi32>
    %279 = arith.muli %278, %274 : vector<32x16xi32>
    %c1_i32_56 = arith.constant 1 : i32
    %280 = vector.broadcast %c1_i32_56 : i32 to vector<32x16xi32>
    %281 = arith.addi %279, %280 : vector<32x16xi32>
    %282 = arith.cmpi eq, %273, %281 : vector<32x16xi32>
    %283 = arith.ori %277, %282 : vector<32x16xi1>
    %284 = arith.extui %283 : vector<32x16xi1> to vector<32x16xi32>
    %285 = arith.sitofp %284 : vector<32x16xi32> to vector<32x16xf32>
    %cst_57 = arith.constant dense<0.000000e+00> : vector<16x32xf32>
    %286 = tpu.matmul %272, %146, %cst_57 {dimension_numbers = #tpu.dot_dimension_numbers<[1], [0], [0], [1], [0, 0, 1, 1], [], []>, precision = #tpu.contract_precision<fp32>} : vector<16x32xf32>, vector<32x32xf32>, vector<16x32xf32> -> vector<16x32xf32>
    %cst_58 = arith.constant dense<0.000000e+00> : vector<16x16xf32>
    %287 = tpu.matmul %286, %285, %cst_58 {dimension_numbers = #tpu.dot_dimension_numbers<[1], [0], [0], [1], [0, 0, 1, 1], [], []>, precision = #tpu.contract_precision<fp32>} : vector<16x32xf32>, vector<32x16xf32>, vector<16x16xf32> -> vector<16x16xf32>
    %cst_59 = arith.constant 2.500000e-01 : f32
    %288 = vector.broadcast %cst_59 : f32 to vector<16x16xf32>
    %289 = arith.mulf %287, %288 : vector<16x16xf32>
    %290 = vector.extract_strided_slice %259 {offsets = [0, 0], sizes = [14, 16], strides = [1, 1]} : vector<16x16xf32> to vector<14x16xf32>
    %291 = vector.extract_strided_slice %259 {offsets = [1, 0], sizes = [14, 16], strides = [1, 1]} : vector<16x16xf32> to vector<14x16xf32>
    %292 = arith.addf %290, %291 : vector<14x16xf32>
    %293 = vector.extract_strided_slice %259 {offsets = [2, 0], sizes = [14, 16], strides = [1, 1]} : vector<16x16xf32> to vector<14x16xf32>
    %294 = arith.addf %292, %293 : vector<14x16xf32>
    %295 = vector.extract_strided_slice %294 {offsets = [0, 0], sizes = [14, 14], strides = [1, 1]} : vector<14x16xf32> to vector<14x14xf32>
    %296 = vector.extract_strided_slice %294 {offsets = [0, 1], sizes = [14, 14], strides = [1, 1]} : vector<14x16xf32> to vector<14x14xf32>
    %297 = arith.addf %295, %296 : vector<14x14xf32>
    %298 = vector.extract_strided_slice %294 {offsets = [0, 2], sizes = [14, 14], strides = [1, 1]} : vector<14x16xf32> to vector<14x14xf32>
    %299 = arith.addf %297, %298 : vector<14x14xf32>
    %cst_60 = arith.constant 0.111111112 : f32
    %300 = vector.broadcast %cst_60 : f32 to vector<14x14xf32>
    %301 = arith.mulf %299, %300 : vector<14x14xf32>
    %302 = vector.extract_strided_slice %289 {offsets = [0, 0], sizes = [14, 16], strides = [1, 1]} : vector<16x16xf32> to vector<14x16xf32>
    %303 = vector.extract_strided_slice %289 {offsets = [1, 0], sizes = [14, 16], strides = [1, 1]} : vector<16x16xf32> to vector<14x16xf32>
    %304 = arith.addf %302, %303 : vector<14x16xf32>
    %305 = vector.extract_strided_slice %289 {offsets = [2, 0], sizes = [14, 16], strides = [1, 1]} : vector<16x16xf32> to vector<14x16xf32>
    %306 = arith.addf %304, %305 : vector<14x16xf32>
    %307 = vector.extract_strided_slice %306 {offsets = [0, 0], sizes = [14, 14], strides = [1, 1]} : vector<14x16xf32> to vector<14x14xf32>
    %308 = vector.extract_strided_slice %306 {offsets = [0, 1], sizes = [14, 14], strides = [1, 1]} : vector<14x16xf32> to vector<14x14xf32>
    %309 = arith.addf %307, %308 : vector<14x14xf32>
    %310 = vector.extract_strided_slice %306 {offsets = [0, 2], sizes = [14, 14], strides = [1, 1]} : vector<14x16xf32> to vector<14x14xf32>
    %311 = arith.addf %309, %310 : vector<14x14xf32>
    %cst_61 = arith.constant 0.111111112 : f32
    %312 = vector.broadcast %cst_61 : f32 to vector<14x14xf32>
    %313 = arith.mulf %311, %312 : vector<14x14xf32>
    %314 = arith.mulf %259, %259 : vector<16x16xf32>
    %315 = vector.extract_strided_slice %314 {offsets = [0, 0], sizes = [14, 16], strides = [1, 1]} : vector<16x16xf32> to vector<14x16xf32>
    %316 = vector.extract_strided_slice %314 {offsets = [1, 0], sizes = [14, 16], strides = [1, 1]} : vector<16x16xf32> to vector<14x16xf32>
    %317 = arith.addf %315, %316 : vector<14x16xf32>
    %318 = vector.extract_strided_slice %314 {offsets = [2, 0], sizes = [14, 16], strides = [1, 1]} : vector<16x16xf32> to vector<14x16xf32>
    %319 = arith.addf %317, %318 : vector<14x16xf32>
    %320 = vector.extract_strided_slice %319 {offsets = [0, 0], sizes = [14, 14], strides = [1, 1]} : vector<14x16xf32> to vector<14x14xf32>
    %321 = vector.extract_strided_slice %319 {offsets = [0, 1], sizes = [14, 14], strides = [1, 1]} : vector<14x16xf32> to vector<14x14xf32>
    %322 = arith.addf %320, %321 : vector<14x14xf32>
    %323 = vector.extract_strided_slice %319 {offsets = [0, 2], sizes = [14, 14], strides = [1, 1]} : vector<14x16xf32> to vector<14x14xf32>
    %324 = arith.addf %322, %323 : vector<14x14xf32>
    %cst_62 = arith.constant 0.111111112 : f32
    %325 = vector.broadcast %cst_62 : f32 to vector<14x14xf32>
    %326 = arith.mulf %324, %325 : vector<14x14xf32>
    %327 = arith.mulf %289, %289 : vector<16x16xf32>
    %328 = vector.extract_strided_slice %327 {offsets = [0, 0], sizes = [14, 16], strides = [1, 1]} : vector<16x16xf32> to vector<14x16xf32>
    %329 = vector.extract_strided_slice %327 {offsets = [1, 0], sizes = [14, 16], strides = [1, 1]} : vector<16x16xf32> to vector<14x16xf32>
    %330 = arith.addf %328, %329 : vector<14x16xf32>
    %331 = vector.extract_strided_slice %327 {offsets = [2, 0], sizes = [14, 16], strides = [1, 1]} : vector<16x16xf32> to vector<14x16xf32>
    %332 = arith.addf %330, %331 : vector<14x16xf32>
    %333 = vector.extract_strided_slice %332 {offsets = [0, 0], sizes = [14, 14], strides = [1, 1]} : vector<14x16xf32> to vector<14x14xf32>
    %334 = vector.extract_strided_slice %332 {offsets = [0, 1], sizes = [14, 14], strides = [1, 1]} : vector<14x16xf32> to vector<14x14xf32>
    %335 = arith.addf %333, %334 : vector<14x14xf32>
    %336 = vector.extract_strided_slice %332 {offsets = [0, 2], sizes = [14, 14], strides = [1, 1]} : vector<14x16xf32> to vector<14x14xf32>
    %337 = arith.addf %335, %336 : vector<14x14xf32>
    %cst_63 = arith.constant 0.111111112 : f32
    %338 = vector.broadcast %cst_63 : f32 to vector<14x14xf32>
    %339 = arith.mulf %337, %338 : vector<14x14xf32>
    %340 = arith.mulf %259, %289 : vector<16x16xf32>
    %341 = vector.extract_strided_slice %340 {offsets = [0, 0], sizes = [14, 16], strides = [1, 1]} : vector<16x16xf32> to vector<14x16xf32>
    %342 = vector.extract_strided_slice %340 {offsets = [1, 0], sizes = [14, 16], strides = [1, 1]} : vector<16x16xf32> to vector<14x16xf32>
    %343 = arith.addf %341, %342 : vector<14x16xf32>
    %344 = vector.extract_strided_slice %340 {offsets = [2, 0], sizes = [14, 16], strides = [1, 1]} : vector<16x16xf32> to vector<14x16xf32>
    %345 = arith.addf %343, %344 : vector<14x16xf32>
    %346 = vector.extract_strided_slice %345 {offsets = [0, 0], sizes = [14, 14], strides = [1, 1]} : vector<14x16xf32> to vector<14x14xf32>
    %347 = vector.extract_strided_slice %345 {offsets = [0, 1], sizes = [14, 14], strides = [1, 1]} : vector<14x16xf32> to vector<14x14xf32>
    %348 = arith.addf %346, %347 : vector<14x14xf32>
    %349 = vector.extract_strided_slice %345 {offsets = [0, 2], sizes = [14, 14], strides = [1, 1]} : vector<14x16xf32> to vector<14x14xf32>
    %350 = arith.addf %348, %349 : vector<14x14xf32>
    %cst_64 = arith.constant 0.111111112 : f32
    %351 = vector.broadcast %cst_64 : f32 to vector<14x14xf32>
    %352 = arith.mulf %350, %351 : vector<14x14xf32>
    %353 = arith.mulf %301, %313 : vector<14x14xf32>
    %354 = arith.mulf %301, %301 : vector<14x14xf32>
    %355 = arith.mulf %313, %313 : vector<14x14xf32>
    %356 = arith.subf %326, %354 : vector<14x14xf32>
    %357 = arith.subf %339, %355 : vector<14x14xf32>
    %358 = arith.subf %352, %353 : vector<14x14xf32>
    %cst_65 = arith.constant 2.000000e+00 : f32
    %359 = vector.broadcast %cst_65 : f32 to vector<14x14xf32>
    %360 = arith.mulf %359, %358 : vector<14x14xf32>
    %cst_66 = arith.constant 8.100000e-07 : f32
    %361 = vector.broadcast %cst_66 : f32 to vector<14x14xf32>
    %362 = arith.addf %360, %361 : vector<14x14xf32>
    %363 = arith.addf %356, %357 : vector<14x14xf32>
    %cst_67 = arith.constant 8.100000e-07 : f32
    %364 = vector.broadcast %cst_67 : f32 to vector<14x14xf32>
    %365 = arith.addf %363, %364 : vector<14x14xf32>
    %366 = arith.divf %362, %365 : vector<14x14xf32>
    %cst_68 = arith.constant dense<0.000000e+00> : vector<14xf32>
    %367 = vector.multi_reduction <add>, %366, %cst_68 [1] : vector<14x14xf32> to vector<14xf32>
    %368 = vector.shape_cast %367 : vector<14xf32> to vector<14x1xf32>
    %cst_69 = arith.constant dense<0.000000e+00> : vector<1xf32>
    %369 = vector.multi_reduction <add>, %368, %cst_69 [0] : vector<14x1xf32> to vector<1xf32>
    %370 = vector.shape_cast %369 : vector<1xf32> to vector<1x1xf32>
    %cst_70 = arith.constant 0.00510204071 : f32
    %371 = vector.broadcast %cst_70 : f32 to vector<1x1xf32>
    %372 = arith.mulf %370, %371 : vector<1x1xf32>
    %373 = tpu.iota {dimensions = array<i32: 0>} : vector<8x16xi32>
    %374 = tpu.iota {dimensions = array<i32: 1>} : vector<8x16xi32>
    %c2_i32_71 = arith.constant 2 : i32
    %375 = vector.broadcast %c2_i32_71 : i32 to vector<8x16xi32>
    %376 = arith.muli %375, %373 : vector<8x16xi32>
    %377 = arith.cmpi eq, %374, %376 : vector<8x16xi32>
    %c2_i32_72 = arith.constant 2 : i32
    %378 = vector.broadcast %c2_i32_72 : i32 to vector<8x16xi32>
    %379 = arith.muli %378, %373 : vector<8x16xi32>
    %c1_i32_73 = arith.constant 1 : i32
    %380 = vector.broadcast %c1_i32_73 : i32 to vector<8x16xi32>
    %381 = arith.addi %379, %380 : vector<8x16xi32>
    %382 = arith.cmpi eq, %374, %381 : vector<8x16xi32>
    %383 = arith.ori %377, %382 : vector<8x16xi1>
    %384 = arith.extui %383 : vector<8x16xi1> to vector<8x16xi32>
    %385 = arith.sitofp %384 : vector<8x16xi32> to vector<8x16xf32>
    %386 = tpu.iota {dimensions = array<i32: 0>} : vector<16x8xi32>
    %387 = tpu.iota {dimensions = array<i32: 1>} : vector<16x8xi32>
    %c2_i32_74 = arith.constant 2 : i32
    %388 = vector.broadcast %c2_i32_74 : i32 to vector<16x8xi32>
    %389 = arith.muli %388, %387 : vector<16x8xi32>
    %390 = arith.cmpi eq, %386, %389 : vector<16x8xi32>
    %c2_i32_75 = arith.constant 2 : i32
    %391 = vector.broadcast %c2_i32_75 : i32 to vector<16x8xi32>
    %392 = arith.muli %391, %387 : vector<16x8xi32>
    %c1_i32_76 = arith.constant 1 : i32
    %393 = vector.broadcast %c1_i32_76 : i32 to vector<16x8xi32>
    %394 = arith.addi %392, %393 : vector<16x8xi32>
    %395 = arith.cmpi eq, %386, %394 : vector<16x8xi32>
    %396 = arith.ori %390, %395 : vector<16x8xi1>
    %397 = arith.extui %396 : vector<16x8xi1> to vector<16x8xi32>
    %398 = arith.sitofp %397 : vector<16x8xi32> to vector<16x8xf32>
    %cst_77 = arith.constant dense<0.000000e+00> : vector<8x16xf32>
    %399 = tpu.matmul %385, %259, %cst_77 {dimension_numbers = #tpu.dot_dimension_numbers<[1], [0], [0], [1], [0, 0, 1, 1], [], []>, precision = #tpu.contract_precision<fp32>} : vector<8x16xf32>, vector<16x16xf32>, vector<8x16xf32> -> vector<8x16xf32>
    %cst_78 = arith.constant dense<0.000000e+00> : vector<8x8xf32>
    %400 = tpu.matmul %399, %398, %cst_78 {dimension_numbers = #tpu.dot_dimension_numbers<[1], [0], [0], [1], [0, 0, 1, 1], [], []>, precision = #tpu.contract_precision<fp32>} : vector<8x16xf32>, vector<16x8xf32>, vector<8x8xf32> -> vector<8x8xf32>
    %cst_79 = arith.constant 2.500000e-01 : f32
    %401 = vector.broadcast %cst_79 : f32 to vector<8x8xf32>
    %402 = arith.mulf %400, %401 : vector<8x8xf32>
    %403 = tpu.iota {dimensions = array<i32: 0>} : vector<8x16xi32>
    %404 = tpu.iota {dimensions = array<i32: 1>} : vector<8x16xi32>
    %c2_i32_80 = arith.constant 2 : i32
    %405 = vector.broadcast %c2_i32_80 : i32 to vector<8x16xi32>
    %406 = arith.muli %405, %403 : vector<8x16xi32>
    %407 = arith.cmpi eq, %404, %406 : vector<8x16xi32>
    %c2_i32_81 = arith.constant 2 : i32
    %408 = vector.broadcast %c2_i32_81 : i32 to vector<8x16xi32>
    %409 = arith.muli %408, %403 : vector<8x16xi32>
    %c1_i32_82 = arith.constant 1 : i32
    %410 = vector.broadcast %c1_i32_82 : i32 to vector<8x16xi32>
    %411 = arith.addi %409, %410 : vector<8x16xi32>
    %412 = arith.cmpi eq, %404, %411 : vector<8x16xi32>
    %413 = arith.ori %407, %412 : vector<8x16xi1>
    %414 = arith.extui %413 : vector<8x16xi1> to vector<8x16xi32>
    %415 = arith.sitofp %414 : vector<8x16xi32> to vector<8x16xf32>
    %416 = tpu.iota {dimensions = array<i32: 0>} : vector<16x8xi32>
    %417 = tpu.iota {dimensions = array<i32: 1>} : vector<16x8xi32>
    %c2_i32_83 = arith.constant 2 : i32
    %418 = vector.broadcast %c2_i32_83 : i32 to vector<16x8xi32>
    %419 = arith.muli %418, %417 : vector<16x8xi32>
    %420 = arith.cmpi eq, %416, %419 : vector<16x8xi32>
    %c2_i32_84 = arith.constant 2 : i32
    %421 = vector.broadcast %c2_i32_84 : i32 to vector<16x8xi32>
    %422 = arith.muli %421, %417 : vector<16x8xi32>
    %c1_i32_85 = arith.constant 1 : i32
    %423 = vector.broadcast %c1_i32_85 : i32 to vector<16x8xi32>
    %424 = arith.addi %422, %423 : vector<16x8xi32>
    %425 = arith.cmpi eq, %416, %424 : vector<16x8xi32>
    %426 = arith.ori %420, %425 : vector<16x8xi1>
    %427 = arith.extui %426 : vector<16x8xi1> to vector<16x8xi32>
    %428 = arith.sitofp %427 : vector<16x8xi32> to vector<16x8xf32>
    %cst_86 = arith.constant dense<0.000000e+00> : vector<8x16xf32>
    %429 = tpu.matmul %415, %289, %cst_86 {dimension_numbers = #tpu.dot_dimension_numbers<[1], [0], [0], [1], [0, 0, 1, 1], [], []>, precision = #tpu.contract_precision<fp32>} : vector<8x16xf32>, vector<16x16xf32>, vector<8x16xf32> -> vector<8x16xf32>
    %cst_87 = arith.constant dense<0.000000e+00> : vector<8x8xf32>
    %430 = tpu.matmul %429, %428, %cst_87 {dimension_numbers = #tpu.dot_dimension_numbers<[1], [0], [0], [1], [0, 0, 1, 1], [], []>, precision = #tpu.contract_precision<fp32>} : vector<8x16xf32>, vector<16x8xf32>, vector<8x8xf32> -> vector<8x8xf32>
    %cst_88 = arith.constant 2.500000e-01 : f32
    %431 = vector.broadcast %cst_88 : f32 to vector<8x8xf32>
    %432 = arith.mulf %430, %431 : vector<8x8xf32>
    %433 = vector.extract_strided_slice %402 {offsets = [0, 0], sizes = [6, 8], strides = [1, 1]} : vector<8x8xf32> to vector<6x8xf32>
    %434 = vector.extract_strided_slice %402 {offsets = [1, 0], sizes = [6, 8], strides = [1, 1]} : vector<8x8xf32> to vector<6x8xf32>
    %435 = arith.addf %433, %434 : vector<6x8xf32>
    %436 = vector.extract_strided_slice %402 {offsets = [2, 0], sizes = [6, 8], strides = [1, 1]} : vector<8x8xf32> to vector<6x8xf32>
    %437 = arith.addf %435, %436 : vector<6x8xf32>
    %438 = vector.extract_strided_slice %437 {offsets = [0, 0], sizes = [6, 6], strides = [1, 1]} : vector<6x8xf32> to vector<6x6xf32>
    %439 = vector.extract_strided_slice %437 {offsets = [0, 1], sizes = [6, 6], strides = [1, 1]} : vector<6x8xf32> to vector<6x6xf32>
    %440 = arith.addf %438, %439 : vector<6x6xf32>
    %441 = vector.extract_strided_slice %437 {offsets = [0, 2], sizes = [6, 6], strides = [1, 1]} : vector<6x8xf32> to vector<6x6xf32>
    %442 = arith.addf %440, %441 : vector<6x6xf32>
    %cst_89 = arith.constant 0.111111112 : f32
    %443 = vector.broadcast %cst_89 : f32 to vector<6x6xf32>
    %444 = arith.mulf %442, %443 : vector<6x6xf32>
    %445 = vector.extract_strided_slice %432 {offsets = [0, 0], sizes = [6, 8], strides = [1, 1]} : vector<8x8xf32> to vector<6x8xf32>
    %446 = vector.extract_strided_slice %432 {offsets = [1, 0], sizes = [6, 8], strides = [1, 1]} : vector<8x8xf32> to vector<6x8xf32>
    %447 = arith.addf %445, %446 : vector<6x8xf32>
    %448 = vector.extract_strided_slice %432 {offsets = [2, 0], sizes = [6, 8], strides = [1, 1]} : vector<8x8xf32> to vector<6x8xf32>
    %449 = arith.addf %447, %448 : vector<6x8xf32>
    %450 = vector.extract_strided_slice %449 {offsets = [0, 0], sizes = [6, 6], strides = [1, 1]} : vector<6x8xf32> to vector<6x6xf32>
    %451 = vector.extract_strided_slice %449 {offsets = [0, 1], sizes = [6, 6], strides = [1, 1]} : vector<6x8xf32> to vector<6x6xf32>
    %452 = arith.addf %450, %451 : vector<6x6xf32>
    %453 = vector.extract_strided_slice %449 {offsets = [0, 2], sizes = [6, 6], strides = [1, 1]} : vector<6x8xf32> to vector<6x6xf32>
    %454 = arith.addf %452, %453 : vector<6x6xf32>
    %cst_90 = arith.constant 0.111111112 : f32
    %455 = vector.broadcast %cst_90 : f32 to vector<6x6xf32>
    %456 = arith.mulf %454, %455 : vector<6x6xf32>
    %457 = arith.mulf %402, %402 : vector<8x8xf32>
    %458 = vector.extract_strided_slice %457 {offsets = [0, 0], sizes = [6, 8], strides = [1, 1]} : vector<8x8xf32> to vector<6x8xf32>
    %459 = vector.extract_strided_slice %457 {offsets = [1, 0], sizes = [6, 8], strides = [1, 1]} : vector<8x8xf32> to vector<6x8xf32>
    %460 = arith.addf %458, %459 : vector<6x8xf32>
    %461 = vector.extract_strided_slice %457 {offsets = [2, 0], sizes = [6, 8], strides = [1, 1]} : vector<8x8xf32> to vector<6x8xf32>
    %462 = arith.addf %460, %461 : vector<6x8xf32>
    %463 = vector.extract_strided_slice %462 {offsets = [0, 0], sizes = [6, 6], strides = [1, 1]} : vector<6x8xf32> to vector<6x6xf32>
    %464 = vector.extract_strided_slice %462 {offsets = [0, 1], sizes = [6, 6], strides = [1, 1]} : vector<6x8xf32> to vector<6x6xf32>
    %465 = arith.addf %463, %464 : vector<6x6xf32>
    %466 = vector.extract_strided_slice %462 {offsets = [0, 2], sizes = [6, 6], strides = [1, 1]} : vector<6x8xf32> to vector<6x6xf32>
    %467 = arith.addf %465, %466 : vector<6x6xf32>
    %cst_91 = arith.constant 0.111111112 : f32
    %468 = vector.broadcast %cst_91 : f32 to vector<6x6xf32>
    %469 = arith.mulf %467, %468 : vector<6x6xf32>
    %470 = arith.mulf %432, %432 : vector<8x8xf32>
    %471 = vector.extract_strided_slice %470 {offsets = [0, 0], sizes = [6, 8], strides = [1, 1]} : vector<8x8xf32> to vector<6x8xf32>
    %472 = vector.extract_strided_slice %470 {offsets = [1, 0], sizes = [6, 8], strides = [1, 1]} : vector<8x8xf32> to vector<6x8xf32>
    %473 = arith.addf %471, %472 : vector<6x8xf32>
    %474 = vector.extract_strided_slice %470 {offsets = [2, 0], sizes = [6, 8], strides = [1, 1]} : vector<8x8xf32> to vector<6x8xf32>
    %475 = arith.addf %473, %474 : vector<6x8xf32>
    %476 = vector.extract_strided_slice %475 {offsets = [0, 0], sizes = [6, 6], strides = [1, 1]} : vector<6x8xf32> to vector<6x6xf32>
    %477 = vector.extract_strided_slice %475 {offsets = [0, 1], sizes = [6, 6], strides = [1, 1]} : vector<6x8xf32> to vector<6x6xf32>
    %478 = arith.addf %476, %477 : vector<6x6xf32>
    %479 = vector.extract_strided_slice %475 {offsets = [0, 2], sizes = [6, 6], strides = [1, 1]} : vector<6x8xf32> to vector<6x6xf32>
    %480 = arith.addf %478, %479 : vector<6x6xf32>
    %cst_92 = arith.constant 0.111111112 : f32
    %481 = vector.broadcast %cst_92 : f32 to vector<6x6xf32>
    %482 = arith.mulf %480, %481 : vector<6x6xf32>
    %483 = arith.mulf %402, %432 : vector<8x8xf32>
    %484 = vector.extract_strided_slice %483 {offsets = [0, 0], sizes = [6, 8], strides = [1, 1]} : vector<8x8xf32> to vector<6x8xf32>
    %485 = vector.extract_strided_slice %483 {offsets = [1, 0], sizes = [6, 8], strides = [1, 1]} : vector<8x8xf32> to vector<6x8xf32>
    %486 = arith.addf %484, %485 : vector<6x8xf32>
    %487 = vector.extract_strided_slice %483 {offsets = [2, 0], sizes = [6, 8], strides = [1, 1]} : vector<8x8xf32> to vector<6x8xf32>
    %488 = arith.addf %486, %487 : vector<6x8xf32>
    %489 = vector.extract_strided_slice %488 {offsets = [0, 0], sizes = [6, 6], strides = [1, 1]} : vector<6x8xf32> to vector<6x6xf32>
    %490 = vector.extract_strided_slice %488 {offsets = [0, 1], sizes = [6, 6], strides = [1, 1]} : vector<6x8xf32> to vector<6x6xf32>
    %491 = arith.addf %489, %490 : vector<6x6xf32>
    %492 = vector.extract_strided_slice %488 {offsets = [0, 2], sizes = [6, 6], strides = [1, 1]} : vector<6x8xf32> to vector<6x6xf32>
    %493 = arith.addf %491, %492 : vector<6x6xf32>
    %cst_93 = arith.constant 0.111111112 : f32
    %494 = vector.broadcast %cst_93 : f32 to vector<6x6xf32>
    %495 = arith.mulf %493, %494 : vector<6x6xf32>
    %496 = arith.mulf %444, %456 : vector<6x6xf32>
    %497 = arith.mulf %444, %444 : vector<6x6xf32>
    %498 = arith.mulf %456, %456 : vector<6x6xf32>
    %499 = arith.subf %469, %497 : vector<6x6xf32>
    %500 = arith.subf %482, %498 : vector<6x6xf32>
    %501 = arith.subf %495, %496 : vector<6x6xf32>
    %cst_94 = arith.constant 2.000000e+00 : f32
    %502 = vector.broadcast %cst_94 : f32 to vector<6x6xf32>
    %503 = arith.mulf %502, %501 : vector<6x6xf32>
    %cst_95 = arith.constant 8.100000e-07 : f32
    %504 = vector.broadcast %cst_95 : f32 to vector<6x6xf32>
    %505 = arith.addf %503, %504 : vector<6x6xf32>
    %506 = arith.addf %499, %500 : vector<6x6xf32>
    %cst_96 = arith.constant 8.100000e-07 : f32
    %507 = vector.broadcast %cst_96 : f32 to vector<6x6xf32>
    %508 = arith.addf %506, %507 : vector<6x6xf32>
    %509 = arith.divf %505, %508 : vector<6x6xf32>
    %cst_97 = arith.constant dense<0.000000e+00> : vector<6xf32>
    %510 = vector.multi_reduction <add>, %509, %cst_97 [1] : vector<6x6xf32> to vector<6xf32>
    %511 = vector.shape_cast %510 : vector<6xf32> to vector<6x1xf32>
    %cst_98 = arith.constant dense<0.000000e+00> : vector<1xf32>
    %512 = vector.multi_reduction <add>, %511, %cst_98 [0] : vector<6x1xf32> to vector<1xf32>
    %513 = vector.shape_cast %512 : vector<1xf32> to vector<1x1xf32>
    %cst_99 = arith.constant 0.027777778 : f32
    %514 = vector.broadcast %cst_99 : f32 to vector<1x1xf32>
    %515 = arith.mulf %513, %514 : vector<1x1xf32>
    %516 = tpu.iota {dimensions = array<i32: 0>} : vector<4x8xi32>
    %517 = tpu.iota {dimensions = array<i32: 1>} : vector<4x8xi32>
    %c2_i32_100 = arith.constant 2 : i32
    %518 = vector.broadcast %c2_i32_100 : i32 to vector<4x8xi32>
    %519 = arith.muli %518, %516 : vector<4x8xi32>
    %520 = arith.cmpi eq, %517, %519 : vector<4x8xi32>
    %c2_i32_101 = arith.constant 2 : i32
    %521 = vector.broadcast %c2_i32_101 : i32 to vector<4x8xi32>
    %522 = arith.muli %521, %516 : vector<4x8xi32>
    %c1_i32_102 = arith.constant 1 : i32
    %523 = vector.broadcast %c1_i32_102 : i32 to vector<4x8xi32>
    %524 = arith.addi %522, %523 : vector<4x8xi32>
    %525 = arith.cmpi eq, %517, %524 : vector<4x8xi32>
    %526 = arith.ori %520, %525 : vector<4x8xi1>
    %527 = arith.extui %526 : vector<4x8xi1> to vector<4x8xi32>
    %528 = arith.sitofp %527 : vector<4x8xi32> to vector<4x8xf32>
    %529 = tpu.iota {dimensions = array<i32: 0>} : vector<8x4xi32>
    %530 = tpu.iota {dimensions = array<i32: 1>} : vector<8x4xi32>
    %c2_i32_103 = arith.constant 2 : i32
    %531 = vector.broadcast %c2_i32_103 : i32 to vector<8x4xi32>
    %532 = arith.muli %531, %530 : vector<8x4xi32>
    %533 = arith.cmpi eq, %529, %532 : vector<8x4xi32>
    %c2_i32_104 = arith.constant 2 : i32
    %534 = vector.broadcast %c2_i32_104 : i32 to vector<8x4xi32>
    %535 = arith.muli %534, %530 : vector<8x4xi32>
    %c1_i32_105 = arith.constant 1 : i32
    %536 = vector.broadcast %c1_i32_105 : i32 to vector<8x4xi32>
    %537 = arith.addi %535, %536 : vector<8x4xi32>
    %538 = arith.cmpi eq, %529, %537 : vector<8x4xi32>
    %539 = arith.ori %533, %538 : vector<8x4xi1>
    %540 = arith.extui %539 : vector<8x4xi1> to vector<8x4xi32>
    %541 = arith.sitofp %540 : vector<8x4xi32> to vector<8x4xf32>
    %cst_106 = arith.constant dense<0.000000e+00> : vector<4x8xf32>
    %542 = tpu.matmul %528, %402, %cst_106 {dimension_numbers = #tpu.dot_dimension_numbers<[1], [0], [0], [1], [0, 0, 1, 1], [], []>, precision = #tpu.contract_precision<fp32>} : vector<4x8xf32>, vector<8x8xf32>, vector<4x8xf32> -> vector<4x8xf32>
    %cst_107 = arith.constant dense<0.000000e+00> : vector<4x4xf32>
    %543 = tpu.matmul %542, %541, %cst_107 {dimension_numbers = #tpu.dot_dimension_numbers<[1], [0], [0], [1], [0, 0, 1, 1], [], []>, precision = #tpu.contract_precision<fp32>} : vector<4x8xf32>, vector<8x4xf32>, vector<4x4xf32> -> vector<4x4xf32>
    %cst_108 = arith.constant 2.500000e-01 : f32
    %544 = vector.broadcast %cst_108 : f32 to vector<4x4xf32>
    %545 = arith.mulf %543, %544 : vector<4x4xf32>
    %546 = tpu.iota {dimensions = array<i32: 0>} : vector<4x8xi32>
    %547 = tpu.iota {dimensions = array<i32: 1>} : vector<4x8xi32>
    %c2_i32_109 = arith.constant 2 : i32
    %548 = vector.broadcast %c2_i32_109 : i32 to vector<4x8xi32>
    %549 = arith.muli %548, %546 : vector<4x8xi32>
    %550 = arith.cmpi eq, %547, %549 : vector<4x8xi32>
    %c2_i32_110 = arith.constant 2 : i32
    %551 = vector.broadcast %c2_i32_110 : i32 to vector<4x8xi32>
    %552 = arith.muli %551, %546 : vector<4x8xi32>
    %c1_i32_111 = arith.constant 1 : i32
    %553 = vector.broadcast %c1_i32_111 : i32 to vector<4x8xi32>
    %554 = arith.addi %552, %553 : vector<4x8xi32>
    %555 = arith.cmpi eq, %547, %554 : vector<4x8xi32>
    %556 = arith.ori %550, %555 : vector<4x8xi1>
    %557 = arith.extui %556 : vector<4x8xi1> to vector<4x8xi32>
    %558 = arith.sitofp %557 : vector<4x8xi32> to vector<4x8xf32>
    %559 = tpu.iota {dimensions = array<i32: 0>} : vector<8x4xi32>
    %560 = tpu.iota {dimensions = array<i32: 1>} : vector<8x4xi32>
    %c2_i32_112 = arith.constant 2 : i32
    %561 = vector.broadcast %c2_i32_112 : i32 to vector<8x4xi32>
    %562 = arith.muli %561, %560 : vector<8x4xi32>
    %563 = arith.cmpi eq, %559, %562 : vector<8x4xi32>
    %c2_i32_113 = arith.constant 2 : i32
    %564 = vector.broadcast %c2_i32_113 : i32 to vector<8x4xi32>
    %565 = arith.muli %564, %560 : vector<8x4xi32>
    %c1_i32_114 = arith.constant 1 : i32
    %566 = vector.broadcast %c1_i32_114 : i32 to vector<8x4xi32>
    %567 = arith.addi %565, %566 : vector<8x4xi32>
    %568 = arith.cmpi eq, %559, %567 : vector<8x4xi32>
    %569 = arith.ori %563, %568 : vector<8x4xi1>
    %570 = arith.extui %569 : vector<8x4xi1> to vector<8x4xi32>
    %571 = arith.sitofp %570 : vector<8x4xi32> to vector<8x4xf32>
    %cst_115 = arith.constant dense<0.000000e+00> : vector<4x8xf32>
    %572 = tpu.matmul %558, %432, %cst_115 {dimension_numbers = #tpu.dot_dimension_numbers<[1], [0], [0], [1], [0, 0, 1, 1], [], []>, precision = #tpu.contract_precision<fp32>} : vector<4x8xf32>, vector<8x8xf32>, vector<4x8xf32> -> vector<4x8xf32>
    %cst_116 = arith.constant dense<0.000000e+00> : vector<4x4xf32>
    %573 = tpu.matmul %572, %571, %cst_116 {dimension_numbers = #tpu.dot_dimension_numbers<[1], [0], [0], [1], [0, 0, 1, 1], [], []>, precision = #tpu.contract_precision<fp32>} : vector<4x8xf32>, vector<8x4xf32>, vector<4x4xf32> -> vector<4x4xf32>
    %cst_117 = arith.constant 2.500000e-01 : f32
    %574 = vector.broadcast %cst_117 : f32 to vector<4x4xf32>
    %575 = arith.mulf %573, %574 : vector<4x4xf32>
    %576 = vector.extract_strided_slice %545 {offsets = [0, 0], sizes = [2, 4], strides = [1, 1]} : vector<4x4xf32> to vector<2x4xf32>
    %577 = vector.extract_strided_slice %545 {offsets = [1, 0], sizes = [2, 4], strides = [1, 1]} : vector<4x4xf32> to vector<2x4xf32>
    %578 = arith.addf %576, %577 : vector<2x4xf32>
    %579 = vector.extract_strided_slice %545 {offsets = [2, 0], sizes = [2, 4], strides = [1, 1]} : vector<4x4xf32> to vector<2x4xf32>
    %580 = arith.addf %578, %579 : vector<2x4xf32>
    %581 = vector.extract_strided_slice %580 {offsets = [0, 0], sizes = [2, 2], strides = [1, 1]} : vector<2x4xf32> to vector<2x2xf32>
    %582 = vector.extract_strided_slice %580 {offsets = [0, 1], sizes = [2, 2], strides = [1, 1]} : vector<2x4xf32> to vector<2x2xf32>
    %583 = arith.addf %581, %582 : vector<2x2xf32>
    %584 = vector.extract_strided_slice %580 {offsets = [0, 2], sizes = [2, 2], strides = [1, 1]} : vector<2x4xf32> to vector<2x2xf32>
    %585 = arith.addf %583, %584 : vector<2x2xf32>
    %cst_118 = arith.constant 0.111111112 : f32
    %586 = vector.broadcast %cst_118 : f32 to vector<2x2xf32>
    %587 = arith.mulf %585, %586 : vector<2x2xf32>
    %588 = vector.extract_strided_slice %575 {offsets = [0, 0], sizes = [2, 4], strides = [1, 1]} : vector<4x4xf32> to vector<2x4xf32>
    %589 = vector.extract_strided_slice %575 {offsets = [1, 0], sizes = [2, 4], strides = [1, 1]} : vector<4x4xf32> to vector<2x4xf32>
    %590 = arith.addf %588, %589 : vector<2x4xf32>
    %591 = vector.extract_strided_slice %575 {offsets = [2, 0], sizes = [2, 4], strides = [1, 1]} : vector<4x4xf32> to vector<2x4xf32>
    %592 = arith.addf %590, %591 : vector<2x4xf32>
    %593 = vector.extract_strided_slice %592 {offsets = [0, 0], sizes = [2, 2], strides = [1, 1]} : vector<2x4xf32> to vector<2x2xf32>
    %594 = vector.extract_strided_slice %592 {offsets = [0, 1], sizes = [2, 2], strides = [1, 1]} : vector<2x4xf32> to vector<2x2xf32>
    %595 = arith.addf %593, %594 : vector<2x2xf32>
    %596 = vector.extract_strided_slice %592 {offsets = [0, 2], sizes = [2, 2], strides = [1, 1]} : vector<2x4xf32> to vector<2x2xf32>
    %597 = arith.addf %595, %596 : vector<2x2xf32>
    %cst_119 = arith.constant 0.111111112 : f32
    %598 = vector.broadcast %cst_119 : f32 to vector<2x2xf32>
    %599 = arith.mulf %597, %598 : vector<2x2xf32>
    %600 = arith.mulf %545, %545 : vector<4x4xf32>
    %601 = vector.extract_strided_slice %600 {offsets = [0, 0], sizes = [2, 4], strides = [1, 1]} : vector<4x4xf32> to vector<2x4xf32>
    %602 = vector.extract_strided_slice %600 {offsets = [1, 0], sizes = [2, 4], strides = [1, 1]} : vector<4x4xf32> to vector<2x4xf32>
    %603 = arith.addf %601, %602 : vector<2x4xf32>
    %604 = vector.extract_strided_slice %600 {offsets = [2, 0], sizes = [2, 4], strides = [1, 1]} : vector<4x4xf32> to vector<2x4xf32>
    %605 = arith.addf %603, %604 : vector<2x4xf32>
    %606 = vector.extract_strided_slice %605 {offsets = [0, 0], sizes = [2, 2], strides = [1, 1]} : vector<2x4xf32> to vector<2x2xf32>
    %607 = vector.extract_strided_slice %605 {offsets = [0, 1], sizes = [2, 2], strides = [1, 1]} : vector<2x4xf32> to vector<2x2xf32>
    %608 = arith.addf %606, %607 : vector<2x2xf32>
    %609 = vector.extract_strided_slice %605 {offsets = [0, 2], sizes = [2, 2], strides = [1, 1]} : vector<2x4xf32> to vector<2x2xf32>
    %610 = arith.addf %608, %609 : vector<2x2xf32>
    %cst_120 = arith.constant 0.111111112 : f32
    %611 = vector.broadcast %cst_120 : f32 to vector<2x2xf32>
    %612 = arith.mulf %610, %611 : vector<2x2xf32>
    %613 = arith.mulf %575, %575 : vector<4x4xf32>
    %614 = vector.extract_strided_slice %613 {offsets = [0, 0], sizes = [2, 4], strides = [1, 1]} : vector<4x4xf32> to vector<2x4xf32>
    %615 = vector.extract_strided_slice %613 {offsets = [1, 0], sizes = [2, 4], strides = [1, 1]} : vector<4x4xf32> to vector<2x4xf32>
    %616 = arith.addf %614, %615 : vector<2x4xf32>
    %617 = vector.extract_strided_slice %613 {offsets = [2, 0], sizes = [2, 4], strides = [1, 1]} : vector<4x4xf32> to vector<2x4xf32>
    %618 = arith.addf %616, %617 : vector<2x4xf32>
    %619 = vector.extract_strided_slice %618 {offsets = [0, 0], sizes = [2, 2], strides = [1, 1]} : vector<2x4xf32> to vector<2x2xf32>
    %620 = vector.extract_strided_slice %618 {offsets = [0, 1], sizes = [2, 2], strides = [1, 1]} : vector<2x4xf32> to vector<2x2xf32>
    %621 = arith.addf %619, %620 : vector<2x2xf32>
    %622 = vector.extract_strided_slice %618 {offsets = [0, 2], sizes = [2, 2], strides = [1, 1]} : vector<2x4xf32> to vector<2x2xf32>
    %623 = arith.addf %621, %622 : vector<2x2xf32>
    %cst_121 = arith.constant 0.111111112 : f32
    %624 = vector.broadcast %cst_121 : f32 to vector<2x2xf32>
    %625 = arith.mulf %623, %624 : vector<2x2xf32>
    %626 = arith.mulf %545, %575 : vector<4x4xf32>
    %627 = vector.extract_strided_slice %626 {offsets = [0, 0], sizes = [2, 4], strides = [1, 1]} : vector<4x4xf32> to vector<2x4xf32>
    %628 = vector.extract_strided_slice %626 {offsets = [1, 0], sizes = [2, 4], strides = [1, 1]} : vector<4x4xf32> to vector<2x4xf32>
    %629 = arith.addf %627, %628 : vector<2x4xf32>
    %630 = vector.extract_strided_slice %626 {offsets = [2, 0], sizes = [2, 4], strides = [1, 1]} : vector<4x4xf32> to vector<2x4xf32>
    %631 = arith.addf %629, %630 : vector<2x4xf32>
    %632 = vector.extract_strided_slice %631 {offsets = [0, 0], sizes = [2, 2], strides = [1, 1]} : vector<2x4xf32> to vector<2x2xf32>
    %633 = vector.extract_strided_slice %631 {offsets = [0, 1], sizes = [2, 2], strides = [1, 1]} : vector<2x4xf32> to vector<2x2xf32>
    %634 = arith.addf %632, %633 : vector<2x2xf32>
    %635 = vector.extract_strided_slice %631 {offsets = [0, 2], sizes = [2, 2], strides = [1, 1]} : vector<2x4xf32> to vector<2x2xf32>
    %636 = arith.addf %634, %635 : vector<2x2xf32>
    %cst_122 = arith.constant 0.111111112 : f32
    %637 = vector.broadcast %cst_122 : f32 to vector<2x2xf32>
    %638 = arith.mulf %636, %637 : vector<2x2xf32>
    %639 = arith.mulf %587, %599 : vector<2x2xf32>
    %640 = arith.mulf %587, %587 : vector<2x2xf32>
    %641 = arith.mulf %599, %599 : vector<2x2xf32>
    %642 = arith.subf %612, %640 : vector<2x2xf32>
    %643 = arith.subf %625, %641 : vector<2x2xf32>
    %644 = arith.subf %638, %639 : vector<2x2xf32>
    %cst_123 = arith.constant 2.000000e+00 : f32
    %645 = vector.broadcast %cst_123 : f32 to vector<2x2xf32>
    %646 = arith.mulf %645, %644 : vector<2x2xf32>
    %cst_124 = arith.constant 8.100000e-07 : f32
    %647 = vector.broadcast %cst_124 : f32 to vector<2x2xf32>
    %648 = arith.addf %646, %647 : vector<2x2xf32>
    %649 = arith.addf %642, %643 : vector<2x2xf32>
    %cst_125 = arith.constant 8.100000e-07 : f32
    %650 = vector.broadcast %cst_125 : f32 to vector<2x2xf32>
    %651 = arith.addf %649, %650 : vector<2x2xf32>
    %cst_126 = arith.constant 2.000000e+00 : f32
    %652 = vector.broadcast %cst_126 : f32 to vector<2x2xf32>
    %653 = arith.mulf %652, %639 : vector<2x2xf32>
    %cst_127 = arith.constant 9.99999993E-9 : f32
    %654 = vector.broadcast %cst_127 : f32 to vector<2x2xf32>
    %655 = arith.addf %653, %654 : vector<2x2xf32>
    %656 = arith.mulf %655, %648 : vector<2x2xf32>
    %657 = arith.addf %640, %641 : vector<2x2xf32>
    %cst_128 = arith.constant 9.99999993E-9 : f32
    %658 = vector.broadcast %cst_128 : f32 to vector<2x2xf32>
    %659 = arith.addf %657, %658 : vector<2x2xf32>
    %660 = arith.mulf %659, %651 : vector<2x2xf32>
    %661 = arith.divf %656, %660 : vector<2x2xf32>
    %cst_129 = arith.constant dense<0.000000e+00> : vector<2xf32>
    %662 = vector.multi_reduction <add>, %661, %cst_129 [1] : vector<2x2xf32> to vector<2xf32>
    %663 = vector.shape_cast %662 : vector<2xf32> to vector<2x1xf32>
    %cst_130 = arith.constant dense<0.000000e+00> : vector<1xf32>
    %664 = vector.multi_reduction <add>, %663, %cst_130 [0] : vector<2x1xf32> to vector<1xf32>
    %665 = vector.shape_cast %664 : vector<1xf32> to vector<1x1xf32>
    %cst_131 = arith.constant 2.500000e-01 : f32
    %666 = vector.broadcast %cst_131 : f32 to vector<1x1xf32>
    %667 = arith.mulf %665, %666 : vector<1x1xf32>
    %668 = tpu.iota {dimensions = array<i32: 0>} : vector<8x128xi32>
    %cst_132 = arith.constant 0.000000e+00 : f32
    %669 = vector.broadcast %cst_132 : f32 to vector<8x128xf32>
    %c0_i32 = arith.constant 0 : i32
    %670 = vector.broadcast %c0_i32 : i32 to vector<8x128xi32>
    %671 = arith.cmpi eq, %668, %670 : vector<8x128xi32>
    %672 = vector.shape_cast %86 : vector<1x1xf32> to vector<1x1xf32>
    %673 = vector.broadcast %672 : vector<1x1xf32> to vector<8x128xf32>
    %674 = arith.select %671, %673, %669 : vector<8x128xi1>, vector<8x128xf32>
    %c1_i32_133 = arith.constant 1 : i32
    %675 = vector.broadcast %c1_i32_133 : i32 to vector<8x128xi32>
    %676 = arith.cmpi eq, %668, %675 : vector<8x128xi32>
    %677 = vector.shape_cast %229 : vector<1x1xf32> to vector<1x1xf32>
    %678 = vector.broadcast %677 : vector<1x1xf32> to vector<8x128xf32>
    %679 = arith.select %676, %678, %674 : vector<8x128xi1>, vector<8x128xf32>
    %c2_i32_134 = arith.constant 2 : i32
    %680 = vector.broadcast %c2_i32_134 : i32 to vector<8x128xi32>
    %681 = arith.cmpi eq, %668, %680 : vector<8x128xi32>
    %682 = vector.shape_cast %372 : vector<1x1xf32> to vector<1x1xf32>
    %683 = vector.broadcast %682 : vector<1x1xf32> to vector<8x128xf32>
    %684 = arith.select %681, %683, %679 : vector<8x128xi1>, vector<8x128xf32>
    %c3_i32 = arith.constant 3 : i32
    %685 = vector.broadcast %c3_i32 : i32 to vector<8x128xi32>
    %686 = arith.cmpi eq, %668, %685 : vector<8x128xi32>
    %687 = vector.shape_cast %515 : vector<1x1xf32> to vector<1x1xf32>
    %688 = vector.broadcast %687 : vector<1x1xf32> to vector<8x128xf32>
    %689 = arith.select %686, %688, %684 : vector<8x128xi1>, vector<8x128xf32>
    %c4_i32 = arith.constant 4 : i32
    %690 = vector.broadcast %c4_i32 : i32 to vector<8x128xi32>
    %691 = arith.cmpi eq, %668, %690 : vector<8x128xi32>
    %692 = vector.shape_cast %667 : vector<1x1xf32> to vector<1x1xf32>
    %693 = vector.broadcast %692 : vector<1x1xf32> to vector<8x128xf32>
    %694 = arith.select %691, %693, %689 : vector<8x128xi1>, vector<8x128xf32>
    %c0_135 = arith.constant 0 : index
    %c0_136 = arith.constant 0 : index
    %c0_137 = arith.constant 0 : index
    %695 = vector.load %arg3[%c0_135, %c0_136, %c0_137] : memref<1x8x128xf32, #tpu.memory_space<vmem>>, vector<1x8x128xf32>
    %696 = vector.shape_cast %695 : vector<1x8x128xf32> to vector<8x128xf32>
    %697 = vector.shape_cast %694 : vector<8x128xf32> to vector<1x8x128xf32>
    tpu.vector_store %arg3[%c0_135, %c0_136, %c0_137], %697 {strides = array<i32>} : memref<1x8x128xf32, #tpu.memory_space<vmem>>, vector<1x8x128xf32>,
    return
  }
  func.func @transform_0(%arg0: i32) -> (i32, i32, i32) {
    %c0_i32 = arith.constant 0 : i32
    %c0_i32_0 = arith.constant 0 : i32
    %c0_i32_1 = arith.constant 0 : i32
    return %arg0, %c0_i32, %c0_i32_0 : i32, i32, i32
  }
  func.func @transform_1(%arg0: i32) -> (i32, i32, i32) {
    %c0_i32 = arith.constant 0 : i32
    %c0_i32_0 = arith.constant 0 : i32
    %c0_i32_1 = arith.constant 0 : i32
    return %arg0, %c0_i32, %c0_i32_0 : i32, i32, i32
  }
  func.func @transform_2(%arg0: i32) -> (i32, i32, i32) {
    %c0_i32 = arith.constant 0 : i32
    %c0_i32_0 = arith.constant 0 : i32
    %c0_i32_1 = arith.constant 0 : i32
    return %arg0, %c0_i32, %c0_i32_0 : i32, i32, i32
  }
}

</mosaic_0001>

<llo_original>
// kernel: _lambda_.1
$region0: #{_lambda_.1}
  #allocation0 [shape = 'u32[]', space=smem, size = 0x4, offset = 0x4, fixed_abs, tag = 'smem constant byte address 0x4 - core index']
  #allocation1 [shape = 'u32[144,128]{1,0:T(1,128)}', space=vmem, size = 0x12000, scoped, tag = 'internal scratch']
  %s0 = inlined_call_operand.vmem [shape: f32[2,64,64], index: 0, kind: input, shape index: {}]
  %s1 = inlined_call_operand.vmem [shape: f32[2,64,64], index: 1, kind: input, shape index: {}]
  %s2 = inlined_call_operand.vmem [shape: f32[2,8,128], index: 2, kind: output, shape index: {}]
  %s3 = sld [smem:[#allocation0]]
  $region41: #{_lambda_.1} parent=0
    _
  %s5 = ssub.s32 1, %s3
  %s6 = scalar_select 0, %s5, %s3
  loop: start=0, step=1, limit=4
  $region2: #{_lambda_.1} parent=0 // loop_pre_header
    _
  $region3: #{_lambda_.1} parent=0 // loop_header
    %s8 = sphi 0, %s12
    %p9 = scmp.ge.s32.totalorder %s8, 4
    %s18 = sphi 0, %s20
    %s21 = sphi 0, %s18
    %s22 = sphi 0, %s21
    %s38 = sphi 0, %s22
    %s44 = sphi 0, %s46
    %s47 = sphi 0, %s44
    %s48 = sphi 0, %s47
    %s64 = sphi 0, %s48
    %s70 = sphi 0, %s72
    %s73 = sphi 0, %s70
    %s74 = sphi 0, %s73
    %s90 = sphi 0, %s74
  $region4: #{_lambda_.1} parent=0 // loop_header_branch
    %11 = sbr.rel (%p9) target = $region8
  $region5: #{_lambda_.1} parent=0 // loop_body
    %s13 = ssub.s32 %s8, 1
    %s14 = ssub.s32 %s8, 2
    %s15 = sadd.s32 %s8, 1
    %s16 = ssub.s32 %s8, %s15
    %p17 = scmp.eq.s32.totalorder %s16, 0
    %s19 = sadd.s32 %s18, 1
    %s20 = scalar_select %p17, %s18, %s19
    %p23 = pneg %p17
    %p24 = scmp.eq.s32.totalorder %s8, 1
    %p25 = por %p23, %p24
    %p26 = scmp.ne.s32.totalorder %s18, %s21
    %p27 = scmp.eq.s32.totalorder %s8, 0
    %p28 = por %p26, %p27
    %p29 = scmp.ne.s32.totalorder %s18, %s21
    %p30 = scmp.eq.s32.totalorder %s13, 1
    %p31 = por %p29, %p30
    %p32 = scmp.ne.s32.totalorder %s21, %s22
    %p33 = scmp.eq.s32.totalorder %s13, 0
    %p34 = por %p32, %p33
    %p35 = scmp.ne.s32.totalorder %s21, %s22
    %p36 = scmp.eq.s32.totalorder %s14, 1
    %p37 = por %p35, %p36
    %p39 = scmp.ne.s32.totalorder %s22, %s38
    %p40 = scmp.eq.s32.totalorder %s14, 0
    %p41 = por %p39, %p40
    %s42 = ssub.s32 %s8, %s15
    %p43 = scmp.eq.s32.totalorder %s42, 0
    %s45 = sadd.s32 %s44, 1
    %s46 = scalar_select %p43, %s44, %s45
    %p49 = pneg %p43
    %p50 = scmp.eq.s32.totalorder %s8, 1
    %p51 = por %p49, %p50
    %p52 = scmp.ne.s32.totalorder %s44, %s47
    %p53 = scmp.eq.s32.totalorder %s8, 0
    %p54 = por %p52, %p53
    %p55 = scmp.ne.s32.totalorder %s44, %s47
    %p56 = scmp.eq.s32.totalorder %s13, 1
    %p57 = por %p55, %p56
    %p58 = scmp.ne.s32.totalorder %s47, %s48
    %p59 = scmp.eq.s32.totalorder %s13, 0
    %p60 = por %p58, %p59
    %p61 = scmp.ne.s32.totalorder %s47, %s48
    %p62 = scmp.eq.s32.totalorder %s14, 1
    %p63 = por %p61, %p62
    %p65 = scmp.ne.s32.totalorder %s48, %s64
    %p66 = scmp.eq.s32.totalorder %s14, 0
    %p67 = por %p65, %p66
    %s68 = ssub.s32 %s8, %s15
    %p69 = scmp.eq.s32.totalorder %s68, 0
    %s71 = sadd.s32 %s70, 1
    %s72 = scalar_select %p69, %s70, %s71
    %p75 = pneg %p69
    %p76 = scmp.eq.s32.totalorder %s8, 1
    %p77 = por %p75, %p76
    %p78 = scmp.ne.s32.totalorder %s70, %s73
    %p79 = scmp.eq.s32.totalorder %s8, 0
    %p80 = por %p78, %p79
    %p81 = scmp.ne.s32.totalorder %s70, %s73
    %p82 = scmp.eq.s32.totalorder %s13, 1
    %p83 = por %p81, %p82
    %p84 = scmp.ne.s32.totalorder %s73, %s74
    %p85 = scmp.eq.s32.totalorder %s13, 0
    %p86 = por %p84, %p85
    %p87 = scmp.ne.s32.totalorder %s73, %s74
    %p88 = scmp.eq.s32.totalorder %s14, 1
    %p89 = por %p87, %p88
    %p91 = scmp.ne.s32.totalorder %s74, %s90
    %p92 = scmp.eq.s32.totalorder %s14, 0
    %p93 = por %p91, %p92
    %p94 = scmp.le.s32.totalorder 1, %s8
    %p95 = scmp.lt.s32.totalorder %s8, 3
    %p96 = pnand %p94, %p95
    %p97 = pneg %p96
    // Predicated region
    $region9: #{_lambda_.1} parent=5 // pred_check
      _
    $region10: #{_lambda_.1} parent=5 // pred_check_branch
      %99 = sbr.rel (%p96) target = $region12
    $region11: #{_lambda_.1} parent=5 // pred_region
      %s100 = ssub.s32 %s8, 1
    $region12: #{_lambda_.1} parent=5 // pred_fallthru
      _
    %p101 = scmp.lt.s32.totalorder %s8, 2
    // Predicated region
    $region13: #{_lambda_.1} parent=5 // pred_check
      %p102 = pneg %p101
    $region14: #{_lambda_.1} parent=5 // pred_check_branch
      %104 = sbr.rel (%p102) target = $region16
    $region15: #{_lambda_.1} parent=5 // pred_region
      // Predicated region
      $region17: #{_lambda_.1} parent=15 // pred_check
        %p105 = pneg %p28
      $region18: #{_lambda_.1} parent=15 // pred_check_branch
        %107 = sbr.rel (%p105) target = $region20
      $region19: #{_lambda_.1} parent=15 // pred_region
        %p108 = scmp.lt.s32.totalorder %s8, 1
        %s109 = scalar_select %p108, %s8, 1
        %s110 = smul.addr %s109, 8
        %s111 = smul.addr %s110, 8
        %s112 = scalar_lea.vmem %s0, %s111
      $region20: #{_lambda_.1} parent=15 // pred_fallthru
        _
      // Predicated region
      $region21: #{_lambda_.1} parent=15 // pred_check
        %p113 = pneg %p54
      $region22: #{_lambda_.1} parent=15 // pred_check_branch
        %115 = sbr.rel (%p113) target = $region24
      $region23: #{_lambda_.1} parent=15 // pred_region
        %p116 = scmp.lt.s32.totalorder %s8, 1
        %s117 = scalar_select %p116, %s8, 1
        %s118 = smul.addr %s117, 8
        %s119 = smul.addr %s118, 8
        %s120 = scalar_lea.vmem %s1, %s119
      $region24: #{_lambda_.1} parent=15 // pred_fallthru
        _
    $region16: #{_lambda_.1} parent=5 // pred_fallthru
      _
    %p121 = scmp.le.s32.totalorder 1, %s8
    %p122 = scmp.lt.s32.totalorder %s8, 3
    %p123 = pnand %p121, %p122
    %p124 = pneg %p123
    // Predicated region
    $region25: #{_lambda_.1} parent=5 // pred_check
      _
    $region26: #{_lambda_.1} parent=5 // pred_check_branch
      %126 = sbr.rel (%p123) target = $region28
    $region27: #{_lambda_.1} parent=5 // pred_region
      %s127 = ssub.s32 %s8, 1
      %p128 = scmp.lt.s32.totalorder %s13, 1
      %s129 = scalar_select %p128, %s13, 1
      %s130 = smul.addr %s129, 8
      %s131 = smul.addr %s130, 8
      %s132 = scalar_lea.vmem %s0, %s131
      %p133 = pneg %p34
      %p134 = pneg %p31
      %p135 = scmp.lt.s32.totalorder %s13, 1
      %s136 = scalar_select %p135, %s13, 1
      %s137 = smul.addr %s136, 8
      %s138 = smul.addr %s137, 8
      %s139 = scalar_lea.vmem %s1, %s138
      %p140 = pneg %p60
      %p141 = pneg %p57
      %p142 = pneg %p86
      %p143 = pneg %p83
      %p144 = scmp.lt.s32.totalorder %s13, 1
      %s145 = scalar_select %p144, %s13, 1
      %s146 = smul.addr %s145, 8
      %s147 = scalar_lea.vmem %s2, %s146
      %p148 = scmp.lt.s32.totalorder %s13, 1
      %s149 = scalar_select %p148, %s13, 1
      %s150 = smul.addr %s149, 8
      %s151 = smul.addr %s150, 8
      %s152 = scalar_lea.vmem %s0, %s151
      %p153 = scmp.lt.s32.totalorder %s13, 1
      %s154 = scalar_select %p153, %s13, 1
      %s155 = smul.addr %s154, 8
      %s156 = smul.addr %s155, 8
      %s157 = scalar_lea.vmem %s1, %s156
      %p158 = scmp.lt.s32.totalorder %s13, 1
      %s159 = scalar_select %p158, %s13, 1
      %s160 = smul.addr %s159, 8
      %s161 = scalar_lea.vmem %s2, %s160
      %v162 = vld [vmem:[%s152] sm:$0xff]
      %v163 = vld [vmem:[%s152 + $0x8] sm:$0xff]
      %v164 = vld [vmem:[%s152 + $0x10] sm:$0xff]
      %v165 = vld [vmem:[%s152 + $0x18] sm:$0xff]
      %v166 = vld [vmem:[%s152 + $0x20] sm:$0xff]
      %v167 = vld [vmem:[%s152 + $0x28] sm:$0xff]
      %v168 = vld [vmem:[%s152 + $0x30] sm:$0xff]
      %v169 = vld [vmem:[%s152 + $0x38] sm:$0xff]
      %v170 = vld [vmem:[%s157] sm:$0xff]
      %v171 = vld [vmem:[%s157 + $0x8] sm:$0xff]
      %v172 = vld [vmem:[%s157 + $0x10] sm:$0xff]
      %v173 = vld [vmem:[%s157 + $0x18] sm:$0xff]
      %v174 = vld [vmem:[%s157 + $0x20] sm:$0xff]
      %v175 = vld [vmem:[%s157 + $0x28] sm:$0xff]
      %v176 = vld [vmem:[%s157 + $0x30] sm:$0xff]
      %v177 = vld [vmem:[%s157 + $0x38] sm:$0xff]
      %vm186 = vcmask 1046528
      %v187 = vrot.slane %v162, 1
      %v188 = vrot.slane %v163, 1
      %v189 = vsel %vm186, %v187, %v188
      %v190 = vrot.slane %v164, 1
      %v191 = vsel %vm186, %v188, %v190
      %v192 = vrot.slane %v165, 1
      %v193 = vsel %vm186, %v190, %v192
      %v194 = vrot.slane %v166, 1
      %v195 = vsel %vm186, %v192, %v194
      %v196 = vrot.slane %v167, 1
      %v197 = vsel %vm186, %v194, %v196
      %v198 = vrot.slane %v168, 1
      %v199 = vsel %vm186, %v196, %v198
      %v200 = vrot.slane %v169, 1
      %v201 = vsel %vm186, %v198, %v200
      %v210 = vadd.f32 %v162, %v189
      %v211 = vadd.f32 %v163, %v191
      %v212 = vadd.f32 %v164, %v193
      %v213 = vadd.f32 %v165, %v195
      %v214 = vadd.f32 %v166, %v197
      %v215 = vadd.f32 %v167, %v199
      %v216 = vadd.f32 %v168, %v201
      %v217 = vadd.f32 %v169, %v200
      %vm218 = vcmask 1045504
      %v219 = vrot.slane %v162, 2
      %v220 = vrot.slane %v163, 2
      %v221 = vsel %vm218, %v219, %v220
      %v222 = vrot.slane %v164, 2
      %v223 = vsel %vm218, %v220, %v222
      %v224 = vrot.slane %v165, 2
      %v225 = vsel %vm218, %v222, %v224
      %v226 = vrot.slane %v166, 2
      %v227 = vsel %vm218, %v224, %v226
      %v228 = vrot.slane %v167, 2
      %v229 = vsel %vm218, %v226, %v228
      %v230 = vrot.slane %v168, 2
      %v231 = vsel %vm218, %v228, %v230
      %v232 = vrot.slane %v169, 2
      %v233 = vsel %vm218, %v230, %v232
      %v242 = vadd.f32 %v210, %v221
      %v243 = vadd.f32 %v211, %v223
      %v244 = vadd.f32 %v212, %v225
      %v245 = vadd.f32 %v213, %v227
      %v246 = vadd.f32 %v214, %v229
      %v247 = vadd.f32 %v215, %v231
      %v248 = vadd.f32 %v216, %v233
      %v249 = vadd.f32 %v217, %v232
      %258 = vrot.lane.b32.xlu0 %v242, 127
      %v259 = vpop.permute.xlu0 %258
      %260 = vrot.lane.b32.xlu0 %v243, 127
      %v261 = vpop.permute.xlu0 %260
      %262 = vrot.lane.b32.xlu0 %v244, 127
      %v263 = vpop.permute.xlu0 %262
      %264 = vrot.lane.b32.xlu0 %v245, 127
      %v265 = vpop.permute.xlu0 %264
      %266 = vrot.lane.b32.xlu0 %v246, 127
      %v267 = vpop.permute.xlu0 %266
      %268 = vrot.lane.b32.xlu0 %v247, 127
      %v269 = vpop.permute.xlu0 %268
      %270 = vrot.lane.b32.xlu0 %v248, 127
      %v271 = vpop.permute.xlu0 %270
      %272 = vrot.lane.b32.xlu0 %v249, 127
      %v273 = vpop.permute.xlu0 %272
      %v282 = vadd.f32 %v242, %v259
      %v283 = vadd.f32 %v243, %v261
      %v284 = vadd.f32 %v244, %v263
      %v285 = vadd.f32 %v245, %v265
      %v286 = vadd.f32 %v246, %v267
      %v287 = vadd.f32 %v247, %v269
      %v288 = vadd.f32 %v248, %v271
      %v289 = vadd.f32 %v249, %v273
      %290 = vrot.lane.b32.xlu0 %v242, 126
      %v291 = vpop.permute.xlu0 %290
      %292 = vrot.lane.b32.xlu0 %v243, 126
      %v293 = vpop.permute.xlu0 %292
      %294 = vrot.lane.b32.xlu0 %v244, 126
      %v295 = vpop.permute.xlu0 %294
      %296 = vrot.lane.b32.xlu0 %v245, 126
      %v297 = vpop.permute.xlu0 %296
      %298 = vrot.lane.b32.xlu0 %v246, 126
      %v299 = vpop.permute.xlu0 %298
      %300 = vrot.lane.b32.xlu0 %v247, 126
      %v301 = vpop.permute.xlu0 %300
      %302 = vrot.lane.b32.xlu0 %v248, 126
      %v303 = vpop.permute.xlu0 %302
      %304 = vrot.lane.b32.xlu0 %v249, 126
      %v305 = vpop.permute.xlu0 %304
      %v314 = vadd.f32 %v282, %v291
      %v315 = vadd.f32 %v283, %v293
      %v316 = vadd.f32 %v284, %v295
      %v317 = vadd.f32 %v285, %v297
      %v318 = vadd.f32 %v286, %v299
      %v319 = vadd.f32 %v287, %v301
      %v320 = vadd.f32 %v288, %v303
      %v321 = vadd.f32 %v289, %v305
      %v322 = vmul.f32 %v314, 0.11111111
      %v323 = vmul.f32 %v315, 0.11111111
      %v324 = vmul.f32 %v316, 0.11111111
      %v325 = vmul.f32 %v317, 0.11111111
      %v326 = vmul.f32 %v318, 0.11111111
      %v327 = vmul.f32 %v319, 0.11111111
      %v328 = vmul.f32 %v320, 0.11111111
      %v329 = vmul.f32 %v321, 0.11111111
      %v338 = vrot.slane %v170, 1
      %v339 = vrot.slane %v171, 1
      %v340 = vsel %vm186, %v338, %v339
      %v341 = vrot.slane %v172, 1
      %v342 = vsel %vm186, %v339, %v341
      %v343 = vrot.slane %v173, 1
      %v344 = vsel %vm186, %v341, %v343
      %v345 = vrot.slane %v174, 1
      %v346 = vsel %vm186, %v343, %v345
      %v347 = vrot.slane %v175, 1
      %v348 = vsel %vm186, %v345, %v347
      %v349 = vrot.slane %v176, 1
      %v350 = vsel %vm186, %v347, %v349
      %v351 = vrot.slane %v177, 1
      %v352 = vsel %vm186, %v349, %v351
      %v361 = vadd.f32 %v170, %v340
      %v362 = vadd.f32 %v171, %v342
      %v363 = vadd.f32 %v172, %v344
      %v364 = vadd.f32 %v173, %v346
      %v365 = vadd.f32 %v174, %v348
      %v366 = vadd.f32 %v175, %v350
      %v367 = vadd.f32 %v176, %v352
      %v368 = vadd.f32 %v177, %v351
      %v369 = vrot.slane %v170, 2
      %v370 = vrot.slane %v171, 2
      %v371 = vsel %vm218, %v369, %v370
      %v372 = vrot.slane %v172, 2
      %v373 = vsel %vm218, %v370, %v372
      %v374 = vrot.slane %v173, 2
      %v375 = vsel %vm218, %v372, %v374
      %v376 = vrot.slane %v174, 2
      %v377 = vsel %vm218, %v374, %v376
      %v378 = vrot.slane %v175, 2
      %v379 = vsel %vm218, %v376, %v378
      %v380 = vrot.slane %v176, 2
      %v381 = vsel %vm218, %v378, %v380
      %v382 = vrot.slane %v177, 2
      %v383 = vsel %vm218, %v380, %v382
      %v392 = vadd.f32 %v361, %v371
      %v393 = vadd.f32 %v362, %v373
      %v394 = vadd.f32 %v363, %v375
      %v395 = vadd.f32 %v364, %v377
      %v396 = vadd.f32 %v365, %v379
      %v397 = vadd.f32 %v366, %v381
      %v398 = vadd.f32 %v367, %v383
      %v399 = vadd.f32 %v368, %v382
      %408 = vrot.lane.b32.xlu0 %v392, 127
      %v409 = vpop.permute.xlu0 %408
      %410 = vrot.lane.b32.xlu0 %v393, 127
      %v411 = vpop.permute.xlu0 %410
      %412 = vrot.lane.b32.xlu0 %v394, 127
      %v413 = vpop.permute.xlu0 %412
      %414 = vrot.lane.b32.xlu0 %v395, 127
      %v415 = vpop.permute.xlu0 %414
      %416 = vrot.lane.b32.xlu0 %v396, 127
      %v417 = vpop.permute.xlu0 %416
      %418 = vrot.lane.b32.xlu0 %v397, 127
      %v419 = vpop.permute.xlu0 %418
      %420 = vrot.lane.b32.xlu0 %v398, 127
      %v421 = vpop.permute.xlu0 %420
      %422 = vrot.lane.b32.xlu0 %v399, 127
      %v423 = vpop.permute.xlu0 %422
      %v432 = vadd.f32 %v392, %v409
      %v433 = vadd.f32 %v393, %v411
      %v434 = vadd.f32 %v394, %v413
      %v435 = vadd.f32 %v395, %v415
      %v436 = vadd.f32 %v396, %v417
      %v437 = vadd.f32 %v397, %v419
      %v438 = vadd.f32 %v398, %v421
      %v439 = vadd.f32 %v399, %v423
      %440 = vrot.lane.b32.xlu0 %v392, 126
      %v441 = vpop.permute.xlu0 %440
      %442 = vrot.lane.b32.xlu0 %v393, 126
      %v443 = vpop.permute.xlu0 %442
      %444 = vrot.lane.b32.xlu0 %v394, 126
      %v445 = vpop.permute.xlu0 %444
      %446 = vrot.lane.b32.xlu0 %v395, 126
      %v447 = vpop.permute.xlu0 %446
      %448 = vrot.lane.b32.xlu0 %v396, 126
      %v449 = vpop.permute.xlu0 %448
      %450 = vrot.lane.b32.xlu0 %v397, 126
      %v451 = vpop.permute.xlu0 %450
      %452 = vrot.lane.b32.xlu0 %v398, 126
      %v453 = vpop.permute.xlu0 %452
      %454 = vrot.lane.b32.xlu0 %v399, 126
      %v455 = vpop.permute.xlu0 %454
      %v464 = vadd.f32 %v432, %v441
      %v465 = vadd.f32 %v433, %v443
      %v466 = vadd.f32 %v434, %v445
      %v467 = vadd.f32 %v435, %v447
      %v468 = vadd.f32 %v436, %v449
      %v469 = vadd.f32 %v437, %v451
      %v470 = vadd.f32 %v438, %v453
      %v471 = vadd.f32 %v439, %v455
      %v472 = vmul.f32 %v464, 0.11111111
      %v473 = vmul.f32 %v465, 0.11111111
      %v474 = vmul.f32 %v466, 0.11111111
      %v475 = vmul.f32 %v467, 0.11111111
      %v476 = vmul.f32 %v468, 0.11111111
      %v477 = vmul.f32 %v469, 0.11111111
      %v478 = vmul.f32 %v470, 0.11111111
      %v479 = vmul.f32 %v471, 0.11111111
      %v480 = vmul.f32 %v162, %v162
      %v481 = vmul.f32 %v163, %v163
      %v482 = vmul.f32 %v164, %v164
      %v483 = vmul.f32 %v165, %v165
      %v484 = vmul.f32 %v166, %v166
      %v485 = vmul.f32 %v167, %v167
      %v486 = vmul.f32 %v168, %v168
      %v487 = vmul.f32 %v169, %v169
      %v496 = vrot.slane %v480, 1
      %v497 = vrot.slane %v481, 1
      %v498 = vsel %vm186, %v496, %v497
      %v499 = vrot.slane %v482, 1
      %v500 = vsel %vm186, %v497, %v499
      %v501 = vrot.slane %v483, 1
      %v502 = vsel %vm186, %v499, %v501
      %v503 = vrot.slane %v484, 1
      %v504 = vsel %vm186, %v501, %v503
      %v505 = vrot.slane %v485, 1
      %v506 = vsel %vm186, %v503, %v505
      %v507 = vrot.slane %v486, 1
      %v508 = vsel %vm186, %v505, %v507
      %v509 = vrot.slane %v487, 1
      %v510 = vsel %vm186, %v507, %v509
      %v519 = vadd.f32 %v480, %v498
      %v520 = vadd.f32 %v481, %v500
      %v521 = vadd.f32 %v482, %v502
      %v522 = vadd.f32 %v483, %v504
      %v523 = vadd.f32 %v484, %v506
      %v524 = vadd.f32 %v485, %v508
      %v525 = vadd.f32 %v486, %v510
      %v526 = vadd.f32 %v487, %v509
      %v527 = vrot.slane %v480, 2
      %v528 = vrot.slane %v481, 2
      %v529 = vsel %vm218, %v527, %v528
      %v530 = vrot.slane %v482, 2
      %v531 = vsel %vm218, %v528, %v530
      %v532 = vrot.slane %v483, 2
      %v533 = vsel %vm218, %v530, %v532
      %v534 = vrot.slane %v484, 2
      %v535 = vsel %vm218, %v532, %v534
      %v536 = vrot.slane %v485, 2
      %v537 = vsel %vm218, %v534, %v536
      %v538 = vrot.slane %v486, 2
      %v539 = vsel %vm218, %v536, %v538
      %v540 = vrot.slane %v487, 2
      %v541 = vsel %vm218, %v538, %v540
      %v550 = vadd.f32 %v519, %v529
      %v551 = vadd.f32 %v520, %v531
      %v552 = vadd.f32 %v521, %v533
      %v553 = vadd.f32 %v522, %v535
      %v554 = vadd.f32 %v523, %v537
      %v555 = vadd.f32 %v524, %v539
      %v556 = vadd.f32 %v525, %v541
      %v557 = vadd.f32 %v526, %v540
      %566 = vrot.lane.b32.xlu0 %v550, 127
      %v567 = vpop.permute.xlu0 %566
      %568 = vrot.lane.b32.xlu0 %v551, 127
      %v569 = vpop.permute.xlu0 %568
      %570 = vrot.lane.b32.xlu0 %v552, 127
      %v571 = vpop.permute.xlu0 %570
      %572 = vrot.lane.b32.xlu0 %v553, 127
      %v573 = vpop.permute.xlu0 %572
      %574 = vrot.lane.b32.xlu0 %v554, 127
      %v575 = vpop.permute.xlu0 %574
      %576 = vrot.lane.b32.xlu0 %v555, 127
      %v577 = vpop.permute.xlu0 %576
      %578 = vrot.lane.b32.xlu0 %v556, 127
      %v579 = vpop.permute.xlu0 %578
      %580 = vrot.lane.b32.xlu0 %v557, 127
      %v581 = vpop.permute.xlu0 %580
      %v590 = vadd.f32 %v550, %v567
      %v591 = vadd.f32 %v551, %v569
      %v592 = vadd.f32 %v552, %v571
      %v593 = vadd.f32 %v553, %v573
      %v594 = vadd.f32 %v554, %v575
      %v595 = vadd.f32 %v555, %v577
      %v596 = vadd.f32 %v556, %v579
      %v597 = vadd.f32 %v557, %v581
      %598 = vrot.lane.b32.xlu0 %v550, 126
      %v599 = vpop.permute.xlu0 %598
      %600 = vrot.lane.b32.xlu0 %v551, 126
      %v601 = vpop.permute.xlu0 %600
      %602 = vrot.lane.b32.xlu0 %v552, 126
      %v603 = vpop.permute.xlu0 %602
      %604 = vrot.lane.b32.xlu0 %v553, 126
      %v605 = vpop.permute.xlu0 %604
      %606 = vrot.lane.b32.xlu0 %v554, 126
      %v607 = vpop.permute.xlu0 %606
      %608 = vrot.lane.b32.xlu0 %v555, 126
      %v609 = vpop.permute.xlu0 %608
      %610 = vrot.lane.b32.xlu0 %v556, 126
      %v611 = vpop.permute.xlu0 %610
      %612 = vrot.lane.b32.xlu0 %v557, 126
      %v613 = vpop.permute.xlu0 %612
      %v622 = vadd.f32 %v590, %v599
      %v623 = vadd.f32 %v591, %v601
      %v624 = vadd.f32 %v592, %v603
      %v625 = vadd.f32 %v593, %v605
      %v626 = vadd.f32 %v594, %v607
      %v627 = vadd.f32 %v595, %v609
      %v628 = vadd.f32 %v596, %v611
      %v629 = vadd.f32 %v597, %v613
      %v630 = vmul.f32 %v622, 0.11111111
      %v631 = vmul.f32 %v623, 0.11111111
      %v632 = vmul.f32 %v624, 0.11111111
      %v633 = vmul.f32 %v625, 0.11111111
      %v634 = vmul.f32 %v626, 0.11111111
      %v635 = vmul.f32 %v627, 0.11111111
      %v636 = vmul.f32 %v628, 0.11111111
      %v637 = vmul.f32 %v629, 0.11111111
      %v638 = vmul.f32 %v170, %v170
      %v639 = vmul.f32 %v171, %v171
      %v640 = vmul.f32 %v172, %v172
      %v641 = vmul.f32 %v173, %v173
      %v642 = vmul.f32 %v174, %v174
      %v643 = vmul.f32 %v175, %v175
      %v644 = vmul.f32 %v176, %v176
      %v645 = vmul.f32 %v177, %v177
      %v654 = vrot.slane %v638, 1
      %v655 = vrot.slane %v639, 1
      %v656 = vsel %vm186, %v654, %v655
      %v657 = vrot.slane %v640, 1
      %v658 = vsel %vm186, %v655, %v657
      %v659 = vrot.slane %v641, 1
      %v660 = vsel %vm186, %v657, %v659
      %v661 = vrot.slane %v642, 1
      %v662 = vsel %vm186, %v659, %v661
      %v663 = vrot.slane %v643, 1
      %v664 = vsel %vm186, %v661, %v663
      %v665 = vrot.slane %v644, 1
      %v666 = vsel %vm186, %v663, %v665
      %v667 = vrot.slane %v645, 1
      %v668 = vsel %vm186, %v665, %v667
      %v677 = vadd.f32 %v638, %v656
      %v678 = vadd.f32 %v639, %v658
      %v679 = vadd.f32 %v640, %v660
      %v680 = vadd.f32 %v641, %v662
      %v681 = vadd.f32 %v642, %v664
      %v682 = vadd.f32 %v643, %v666
      %v683 = vadd.f32 %v644, %v668
      %v684 = vadd.f32 %v645, %v667
      %v685 = vrot.slane %v638, 2
      %v686 = vrot.slane %v639, 2
      %v687 = vsel %vm218, %v685, %v686
      %v688 = vrot.slane %v640, 2
      %v689 = vsel %vm218, %v686, %v688
      %v690 = vrot.slane %v641, 2
      %v691 = vsel %vm218, %v688, %v690
      %v692 = vrot.slane %v642, 2
      %v693 = vsel %vm218, %v690, %v692
      %v694 = vrot.slane %v643, 2
      %v695 = vsel %vm218, %v692, %v694
      %v696 = vrot.slane %v644, 2
      %v697 = vsel %vm218, %v694, %v696
      %v698 = vrot.slane %v645, 2
      %v699 = vsel %vm218, %v696, %v698
      %v708 = vadd.f32 %v677, %v687
      %v709 = vadd.f32 %v678, %v689
      %v710 = vadd.f32 %v679, %v691
      %v711 = vadd.f32 %v680, %v693
      %v712 = vadd.f32 %v681, %v695
      %v713 = vadd.f32 %v682, %v697
      %v714 = vadd.f32 %v683, %v699
      %v715 = vadd.f32 %v684, %v698
      %724 = vrot.lane.b32.xlu0 %v708, 127
      %v725 = vpop.permute.xlu0 %724
      %726 = vrot.lane.b32.xlu0 %v709, 127
      %v727 = vpop.permute.xlu0 %726
      %728 = vrot.lane.b32.xlu0 %v710, 127
      %v729 = vpop.permute.xlu0 %728
      %730 = vrot.lane.b32.xlu0 %v711, 127
      %v731 = vpop.permute.xlu0 %730
      %732 = vrot.lane.b32.xlu0 %v712, 127
      %v733 = vpop.permute.xlu0 %732
      %734 = vrot.lane.b32.xlu0 %v713, 127
      %v735 = vpop.permute.xlu0 %734
      %736 = vrot.lane.b32.xlu0 %v714, 127
      %v737 = vpop.permute.xlu0 %736
      %738 = vrot.lane.b32.xlu0 %v715, 127
      %v739 = vpop.permute.xlu0 %738
      %v748 = vadd.f32 %v708, %v725
      %v749 = vadd.f32 %v709, %v727
      %v750 = vadd.f32 %v710, %v729
      %v751 = vadd.f32 %v711, %v731
      %v752 = vadd.f32 %v712, %v733
      %v753 = vadd.f32 %v713, %v735
      %v754 = vadd.f32 %v714, %v737
      %v755 = vadd.f32 %v715, %v739
      %756 = vrot.lane.b32.xlu0 %v708, 126
      %v757 = vpop.permute.xlu0 %756
      %758 = vrot.lane.b32.xlu0 %v709, 126
      %v759 = vpop.permute.xlu0 %758
      %760 = vrot.lane.b32.xlu0 %v710, 126
      %v761 = vpop.permute.xlu0 %760
      %762 = vrot.lane.b32.xlu0 %v711, 126
      %v763 = vpop.permute.xlu0 %762
      %764 = vrot.lane.b32.xlu0 %v712, 126
      %v765 = vpop.permute.xlu0 %764
      %766 = vrot.lane.b32.xlu0 %v713, 126
      %v767 = vpop.permute.xlu0 %766
      %768 = vrot.lane.b32.xlu0 %v714, 126
      %v769 = vpop.permute.xlu0 %768
      %770 = vrot.lane.b32.xlu0 %v715, 126
      %v771 = vpop.permute.xlu0 %770
      %v780 = vadd.f32 %v748, %v757
      %v781 = vadd.f32 %v749, %v759
      %v782 = vadd.f32 %v750, %v761
      %v783 = vadd.f32 %v751, %v763
      %v784 = vadd.f32 %v752, %v765
      %v785 = vadd.f32 %v753, %v767
      %v786 = vadd.f32 %v754, %v769
      %v787 = vadd.f32 %v755, %v771
      %v788 = vmul.f32 %v780, 0.11111111
      %v789 = vmul.f32 %v781, 0.11111111
      %v790 = vmul.f32 %v782, 0.11111111
      %v791 = vmul.f32 %v783, 0.11111111
      %v792 = vmul.f32 %v784, 0.11111111
      %v793 = vmul.f32 %v785, 0.11111111
      %v794 = vmul.f32 %v786, 0.11111111
      %v795 = vmul.f32 %v787, 0.11111111
      %v796 = vmul.f32 %v162, %v170
      %v797 = vmul.f32 %v163, %v171
      %v798 = vmul.f32 %v164, %v172
      %v799 = vmul.f32 %v165, %v173
      %v800 = vmul.f32 %v166, %v174
      %v801 = vmul.f32 %v167, %v175
      %v802 = vmul.f32 %v168, %v176
      %v803 = vmul.f32 %v169, %v177
      %v812 = vrot.slane %v796, 1
      %v813 = vrot.slane %v797, 1
      %v814 = vsel %vm186, %v812, %v813
      %v815 = vrot.slane %v798, 1
      %v816 = vsel %vm186, %v813, %v815
      %v817 = vrot.slane %v799, 1
      %v818 = vsel %vm186, %v815, %v817
      %v819 = vrot.slane %v800, 1
      %v820 = vsel %vm186, %v817, %v819
      %v821 = vrot.slane %v801, 1
      %v822 = vsel %vm186, %v819, %v821
      %v823 = vrot.slane %v802, 1
      %v824 = vsel %vm186, %v821, %v823
      %v825 = vrot.slane %v803, 1
      %v826 = vsel %vm186, %v823, %v825
      %v835 = vadd.f32 %v796, %v814
      %v836 = vadd.f32 %v797, %v816
      %v837 = vadd.f32 %v798, %v818
      %v838 = vadd.f32 %v799, %v820
      %v839 = vadd.f32 %v800, %v822
      %v840 = vadd.f32 %v801, %v824
      %v841 = vadd.f32 %v802, %v826
      %v842 = vadd.f32 %v803, %v825
      %v843 = vrot.slane %v796, 2
      %v844 = vrot.slane %v797, 2
      %v845 = vsel %vm218, %v843, %v844
      %v846 = vrot.slane %v798, 2
      %v847 = vsel %vm218, %v844, %v846
      %v848 = vrot.slane %v799, 2
      %v849 = vsel %vm218, %v846, %v848
      %v850 = vrot.slane %v800, 2
      %v851 = vsel %vm218, %v848, %v850
      %v852 = vrot.slane %v801, 2
      %v853 = vsel %vm218, %v850, %v852
      %v854 = vrot.slane %v802, 2
      %v855 = vsel %vm218, %v852, %v854
      %v856 = vrot.slane %v803, 2
      %v857 = vsel %vm218, %v854, %v856
      %v866 = vadd.f32 %v835, %v845
      %v867 = vadd.f32 %v836, %v847
      %v868 = vadd.f32 %v837, %v849
      %v869 = vadd.f32 %v838, %v851
      %v870 = vadd.f32 %v839, %v853
      %v871 = vadd.f32 %v840, %v855
      %v872 = vadd.f32 %v841, %v857
      %v873 = vadd.f32 %v842, %v856
      %882 = vrot.lane.b32.xlu0 %v866, 127
      %v883 = vpop.permute.xlu0 %882
      %884 = vrot.lane.b32.xlu0 %v867, 127
      %v885 = vpop.permute.xlu0 %884
      %886 = vrot.lane.b32.xlu0 %v868, 127
      %v887 = vpop.permute.xlu0 %886
      %888 = vrot.lane.b32.xlu0 %v869, 127
      %v889 = vpop.permute.xlu0 %888
      %890 = vrot.lane.b32.xlu0 %v870, 127
      %v891 = vpop.permute.xlu0 %890
      %892 = vrot.lane.b32.xlu0 %v871, 127
      %v893 = vpop.permute.xlu0 %892
      %894 = vrot.lane.b32.xlu0 %v872, 127
      %v895 = vpop.permute.xlu0 %894
      %896 = vrot.lane.b32.xlu0 %v873, 127
      %v897 = vpop.permute.xlu0 %896
      %v906 = vadd.f32 %v866, %v883
      %v907 = vadd.f32 %v867, %v885
      %v908 = vadd.f32 %v868, %v887
      %v909 = vadd.f32 %v869, %v889
      %v910 = vadd.f32 %v870, %v891
      %v911 = vadd.f32 %v871, %v893
      %v912 = vadd.f32 %v872, %v895
      %v913 = vadd.f32 %v873, %v897
      %914 = vrot.lane.b32.xlu0 %v866, 126
      %v915 = vpop.permute.xlu0 %914
      %916 = vrot.lane.b32.xlu0 %v867, 126
      %v917 = vpop.permute.xlu0 %916
      %918 = vrot.lane.b32.xlu0 %v868, 126
      %v919 = vpop.permute.xlu0 %918
      %920 = vrot.lane.b32.xlu0 %v869, 126
      %v921 = vpop.permute.xlu0 %920
      %922 = vrot.lane.b32.xlu0 %v870, 126
      %v923 = vpop.permute.xlu0 %922
      %924 = vrot.lane.b32.xlu0 %v871, 126
      %v925 = vpop.permute.xlu0 %924
      %926 = vrot.lane.b32.xlu0 %v872, 126
      %v927 = vpop.permute.xlu0 %926
      %928 = vrot.lane.b32.xlu0 %v873, 126
      %v929 = vpop.permute.xlu0 %928
      %v938 = vadd.f32 %v906, %v915
      %v939 = vadd.f32 %v907, %v917
      %v940 = vadd.f32 %v908, %v919
      %v941 = vadd.f32 %v909, %v921
      %v942 = vadd.f32 %v910, %v923
      %v943 = vadd.f32 %v911, %v925
      %v944 = vadd.f32 %v912, %v927
      %v945 = vadd.f32 %v913, %v929
      %v946 = vmul.f32 %v938, 0.11111111
      %v947 = vmul.f32 %v939, 0.11111111
      %v948 = vmul.f32 %v940, 0.11111111
      %v949 = vmul.f32 %v941, 0.11111111
      %v950 = vmul.f32 %v942, 0.11111111
      %v951 = vmul.f32 %v943, 0.11111111
      %v952 = vmul.f32 %v944, 0.11111111
      %v953 = vmul.f32 %v945, 0.11111111
      %v954 = vmul.f32 %v322, %v472
      %v955 = vmul.f32 %v323, %v473
      %v956 = vmul.f32 %v324, %v474
      %v957 = vmul.f32 %v325, %v475
      %v958 = vmul.f32 %v326, %v476
      %v959 = vmul.f32 %v327, %v477
      %v960 = vmul.f32 %v328, %v478
      %v961 = vmul.f32 %v329, %v479
      %v962 = vmul.f32 %v322, %v322
      %v963 = vmul.f32 %v323, %v323
      %v964 = vmul.f32 %v324, %v324
      %v965 = vmul.f32 %v325, %v325
      %v966 = vmul.f32 %v326, %v326
      %v967 = vmul.f32 %v327, %v327
      %v968 = vmul.f32 %v328, %v328
      %v969 = vmul.f32 %v329, %v329
      %v970 = vmul.f32 %v472, %v472
      %v971 = vmul.f32 %v473, %v473
      %v972 = vmul.f32 %v474, %v474
      %v973 = vmul.f32 %v475, %v475
      %v974 = vmul.f32 %v476, %v476
      %v975 = vmul.f32 %v477, %v477
      %v976 = vmul.f32 %v478, %v478
      %v977 = vmul.f32 %v479, %v479
      %v978 = vsub.f32 %v630, %v962
      %v979 = vsub.f32 %v631, %v963
      %v980 = vsub.f32 %v632, %v964
      %v981 = vsub.f32 %v633, %v965
      %v982 = vsub.f32 %v634, %v966
      %v983 = vsub.f32 %v635, %v967
      %v984 = vsub.f32 %v636, %v968
      %v985 = vsub.f32 %v637, %v969
      %v986 = vsub.f32 %v788, %v970
      %v987 = vsub.f32 %v789, %v971
      %v988 = vsub.f32 %v790, %v972
      %v989 = vsub.f32 %v791, %v973
      %v990 = vsub.f32 %v792, %v974
      %v991 = vsub.f32 %v793, %v975
      %v992 = vsub.f32 %v794, %v976
      %v993 = vsub.f32 %v795, %v977
      %v994 = vsub.f32 %v946, %v954
      %v995 = vsub.f32 %v947, %v955
      %v996 = vsub.f32 %v948, %v956
      %v997 = vsub.f32 %v949, %v957
      %v998 = vsub.f32 %v950, %v958
      %v999 = vsub.f32 %v951, %v959
      %v1000 = vsub.f32 %v952, %v960
      %v1001 = vsub.f32 %v953, %v961
      %v1002 = vmul.f32 %v994, 2.0
      %v1003 = vmul.f32 %v995, 2.0
      %v1004 = vmul.f32 %v996, 2.0
      %v1005 = vmul.f32 %v997, 2.0
      %v1006 = vmul.f32 %v998, 2.0
      %v1007 = vmul.f32 %v999, 2.0
      %v1008 = vmul.f32 %v1000, 2.0
      %v1009 = vmul.f32 %v1001, 2.0
      %v1010 = vadd.f32 %v1002, 8.1e-07
      %v1011 = vadd.f32 %v1003, 8.1e-07
      %v1012 = vadd.f32 %v1004, 8.1e-07
      %v1013 = vadd.f32 %v1005, 8.1e-07
      %v1014 = vadd.f32 %v1006, 8.1e-07
      %v1015 = vadd.f32 %v1007, 8.1e-07
      %v1016 = vadd.f32 %v1008, 8.1e-07
      %v1017 = vadd.f32 %v1009, 8.1e-07
      %v1018 = vadd.f32 %v978, %v986
      %v1019 = vadd.f32 %v979, %v987
      %v1020 = vadd.f32 %v980, %v988
      %v1021 = vadd.f32 %v981, %v989
      %v1022 = vadd.f32 %v982, %v990
      %v1023 = vadd.f32 %v983, %v991
      %v1024 = vadd.f32 %v984, %v992
      %v1025 = vadd.f32 %v985, %v993
      %v1026 = vadd.f32 %v1018, 8.1e-07
      %v1027 = vadd.f32 %v1019, 8.1e-07
      %v1028 = vadd.f32 %v1020, 8.1e-07
      %v1029 = vadd.f32 %v1021, 8.1e-07
      %v1030 = vadd.f32 %v1022, 8.1e-07
      %v1031 = vadd.f32 %v1023, 8.1e-07
      %v1032 = vadd.f32 %v1024, 8.1e-07
      %v1033 = vadd.f32 %v1025, 8.1e-07
      %v1034 = vrcp.pop %v1026
      %v1035 = vmul.f32 %v1010, %v1034
      %v1036 = vrcp.pop %v1027
      %v1037 = vmul.f32 %v1011, %v1036
      %v1038 = vrcp.pop %v1028
      %v1039 = vmul.f32 %v1012, %v1038
      %v1040 = vrcp.pop %v1029
      %v1041 = vmul.f32 %v1013, %v1040
      %v1042 = vrcp.pop %v1030
      %v1043 = vmul.f32 %v1014, %v1042
      %v1044 = vrcp.pop %v1031
      %v1045 = vmul.f32 %v1015, %v1044
      %v1046 = vrcp.pop %v1032
      %v1047 = vmul.f32 %v1016, %v1046
      %v1048 = vrcp.pop %v1033
      %v1049 = vmul.f32 %v1017, %v1048
      %vm1050 = vcmask 506880
      %v1051 = vsel %vm1050, %v1035, 0.0
      %1052 = vadd.xlane.f32.xlu0 %v1051
      %v1053 = vpop.xlane.xlu0 %1052
      %v1054 = vsel %vm1050, %v1037, 0.0
      %1055 = vadd.xlane.f32.xlu0 %v1054
      %v1056 = vpop.xlane.xlu0 %1055
      %v1057 = vsel %vm1050, %v1039, 0.0
      %1058 = vadd.xlane.f32.xlu0 %v1057
      %v1059 = vpop.xlane.xlu0 %1058
      %v1060 = vsel %vm1050, %v1041, 0.0
      %1061 = vadd.xlane.f32.xlu0 %v1060
      %v1062 = vpop.xlane.xlu0 %1061
      %v1063 = vsel %vm1050, %v1043, 0.0
      %1064 = vadd.xlane.f32.xlu0 %v1063
      %v1065 = vpop.xlane.xlu0 %1064
      %v1066 = vsel %vm1050, %v1045, 0.0
      %1067 = vadd.xlane.f32.xlu0 %v1066
      %v1068 = vpop.xlane.xlu0 %1067
      %v1069 = vsel %vm1050, %v1047, 0.0
      %1070 = vadd.xlane.f32.xlu0 %v1069
      %v1071 = vpop.xlane.xlu0 %1070
      %vm1072 = vcmask 504832
      %v1073 = vsel %vm1072, %v1049, 0.0
      %1074 = vadd.xlane.f32.xlu0 %v1073
      %v1075 = vpop.xlane.xlu0 %1074
      %v1076 = vadd.f32 %v1053, %v1056
      %v1077 = vadd.f32 %v1076, %v1059
      %v1078 = vadd.f32 %v1077, %v1062
      %v1079 = vadd.f32 %v1078, %v1065
      %v1080 = vadd.f32 %v1079, %v1068
      %v1081 = vadd.f32 %v1080, %v1071
      %v1082 = vsel %vm218, %v1075, 0.0
      %v1083 = vadd.f32 %v1081, %v1082
      %v1084 = vrot.slane %v1083, 4
      %v1085 = vadd.f32 %v1083, %v1084
      %v1086 = vrot.slane %v1085, 2
      %v1087 = vadd.f32 %v1085, %v1086
      %v1088 = vrot.slane %v1087, 1
      %v1089 = vadd.f32 %v1087, %v1088
      %v1090 = vmul.f32 %v1089, 0.0002601457
      %v1091 = vlaneseq
      %v1092 = vshrl.u32 %v1091, 7
      %v1093 = vadd.s32 %v1092, 8
      %v1094 = vadd.s32 %v1092, 16
      %v1095 = vadd.s32 %v1092, 24
      %v1096 = vlaneseq
      %v1097 = vand.u32 %v1096, 127
      %v1098 = vmul.u32 %v1092, 2
      %v1099 = vmul.u32 %v1093, 2
      %v1100 = vmul.u32 %v1094, 2
      %v1101 = vmul.u32 %v1095, 2
      %vm1102 = vcmp.eq.s32.totalorder %v1097, %v1098
      %vm1103 = vcmp.eq.s32.totalorder %v1097, %v1099
      %vm1104 = vcmp.eq.s32.totalorder %v1097, %v1100
      %vm1105 = vcmp.eq.s32.totalorder %v1097, %v1101
      %v1106 = vadd.s32 %v1098, 1
      %v1107 = vadd.s32 %v1099, 1
      %v1108 = vadd.s32 %v1100, 1
      %v1109 = vadd.s32 %v1101, 1
      %vm1110 = vcmp.eq.s32.totalorder %v1097, %v1106
      %vm1111 = vcmp.eq.s32.totalorder %v1097, %v1107
      %vm1112 = vcmp.eq.s32.totalorder %v1097, %v1108
      %vm1113 = vcmp.eq.s32.totalorder %v1097, %v1109
      %vm1114 = vmor %vm1102, %vm1110
      %vm1115 = vmor %vm1103, %vm1111
      %vm1116 = vmor %vm1104, %vm1112
      %vm1117 = vmor %vm1105, %vm1113
      %v1118 = vsel %vm1114, 1, 0
      %v1119 = vsel %vm1115, 1, 0
      %v1120 = vsel %vm1116, 1, 0
      %v1121 = vsel %vm1117, 1, 0
      %v1122 = vcvt.s32.f32 %v1118
      %v1123 = vcvt.s32.f32 %v1119
      %v1124 = vcvt.s32.f32 %v1120
      %v1125 = vcvt.s32.f32 %v1121
      %v1126 = vadd.s32 %v1092, 32
      %v1127 = vadd.s32 %v1092, 40
      %v1128 = vadd.s32 %v1092, 48
      %v1129 = vadd.s32 %v1092, 56
      %v1130 = vmul.u32 %v1097, 2
      %vm1131 = vcmp.eq.s32.totalorder %v1092, %v1130
      %vm1132 = vcmp.eq.s32.totalorder %v1093, %v1130
      %vm1133 = vcmp.eq.s32.totalorder %v1094, %v1130
      %vm1134 = vcmp.eq.s32.totalorder %v1095, %v1130
      %vm1135 = vcmp.eq.s32.totalorder %v1126, %v1130
      %vm1136 = vcmp.eq.s32.totalorder %v1127, %v1130
      %vm1137 = vcmp.eq.s32.totalorder %v1128, %v1130
      %vm1138 = vcmp.eq.s32.totalorder %v1129, %v1130
      %v1139 = vadd.s32 %v1130, 1
      %vm1140 = vcmp.eq.s32.totalorder %v1092, %v1139
      %vm1141 = vcmp.eq.s32.totalorder %v1093, %v1139
      %vm1142 = vcmp.eq.s32.totalorder %v1094, %v1139
      %vm1143 = vcmp.eq.s32.totalorder %v1095, %v1139
      %vm1144 = vcmp.eq.s32.totalorder %v1126, %v1139
      %vm1145 = vcmp.eq.s32.totalorder %v1127, %v1139
      %vm1146 = vcmp.eq.s32.totalorder %v1128, %v1139
      %vm1147 = vcmp.eq.s32.totalorder %v1129, %v1139
      %vm1148 = vmor %vm1131, %vm1140
      %vm1149 = vmor %vm1132, %vm1141
      %vm1150 = vmor %vm1133, %vm1142
      %vm1151 = vmor %vm1134, %vm1143
      %vm1152 = vmor %vm1135, %vm1144
      %vm1153 = vmor %vm1136, %vm1145
      %vm1154 = vmor %vm1137, %vm1146
      %vm1155 = vmor %vm1138, %vm1147
      %v1156 = vsel %vm1148, 1, 0
      %v1157 = vsel %vm1149, 1, 0
      %v1158 = vsel %vm1150, 1, 0
      %v1159 = vsel %vm1151, 1, 0
      %v1160 = vsel %vm1152, 1, 0
      %v1161 = vsel %vm1153, 1, 0
      %v1162 = vsel %vm1154, 1, 0
      %v1163 = vsel %vm1155, 1, 0
      %v1164 = vcvt.s32.f32 %v1156
      %v1165 = vcvt.s32.f32 %v1157
      %v1166 = vcvt.s32.f32 %v1158
      %v1167 = vcvt.s32.f32 %v1159
      %v1168 = vcvt.s32.f32 %v1160
      %v1169 = vcvt.s32.f32 %v1161
      %v1170 = vcvt.s32.f32 %v1162
      %v1171 = vcvt.s32.f32 %v1163
      %vm1172 = vcmask 523264
      %v1174 = vsel %vm1172, %v1122, 0
      %v1177 = vsel %vm1172, %v1123, 0
      %v1180 = vsel %vm1172, %v1124, 0
      %v1183 = vsel %vm1172, %v1125, 0
      %1185 = vmatprep.subr.mxu0 0.0
      %v1186 = vand.u32 %v162, 4294901760
      %1187 = vmatpush1.msra.mxu0 %v1186
      %1188 = vmatprep.subr.mxu0 0.0
      %v1189 = vand.u32 %v163, 4294901760
      %1190 = vmatpush1.msra.mxu0 %v1189
      %1191 = vmatprep.subr.mxu0 0.0
      %v1192 = vand.u32 %v164, 4294901760
      %1193 = vmatpush1.msra.mxu0 %v1192
      %1194 = vmatprep.subr.mxu0 0.0
      %v1195 = vand.u32 %v165, 4294901760
      %1196 = vmatpush1.msra.mxu0 %v1195
      %1197 = vmatprep.subr.mxu0 0.0
      %v1198 = vand.u32 %v166, 4294901760
      %1199 = vmatpush1.msra.mxu0 %v1198
      %1200 = vmatprep.subr.mxu0 0.0
      %v1201 = vand.u32 %v167, 4294901760
      %1202 = vmatpush1.msra.mxu0 %v1201
      %1203 = vmatprep.subr.mxu0 0.0
      %v1204 = vand.u32 %v168, 4294901760
      %1205 = vmatpush1.msra.mxu0 %v1204
      %1206 = vmatprep.subr.mxu0 0.0
      %v1207 = vand.u32 %v169, 4294901760
      %1208 = vmatpush1.msra.mxu0 %v1207
      %1209 = vmatprep.subr.mxu0 0.0
      %1210 = vmatpush1.msra.mxu0 0.0
      %1211 = vmatprep.subr.mxu0 0.0
      %1212 = vmatpush1.msra.mxu0 0.0
      %1213 = vmatprep.subr.mxu0 0.0
      %1214 = vmatpush1.msra.mxu0 0.0
      %1215 = vmatprep.subr.mxu0 0.0
      %1216 = vmatpush1.msra.mxu0 0.0
      %1217 = vmatprep.subr.mxu0 0.0
      %1218 = vmatpush1.msra.mxu0 0.0
      %1219 = vmatprep.subr.mxu0 0.0
      %1220 = vmatpush1.msra.mxu0 0.0
      %1221 = vmatprep.subr.mxu0 0.0
      %1222 = vmatpush1.msra.mxu0 0.0
      %1223 = vmatprep.subr.mxu0 0.0
      %1224 = vmatpush1.msra.mxu0 0.0
      %1225 = vmatprep.subr.mxu0 0.0
      %1226 = vmatpush1.msra.mxu0 0.0
      %1227 = vmatprep.subr.mxu0 0.0
      %1228 = vmatpush1.msra.mxu0 0.0
      %1229 = vmatprep.subr.mxu0 0.0
      %1230 = vmatpush1.msra.mxu0 0.0
      %1231 = vmatprep.subr.mxu0 0.0
      %1232 = vmatpush1.msra.mxu0 0.0
      %1233 = vmatprep.subr.mxu0 0.0
      %1234 = vmatpush1.msra.mxu0 0.0
      %1235 = vmatprep.subr.mxu0 0.0
      %1236 = vmatpush1.msra.mxu0 0.0
      %1237 = vmatprep.subr.mxu0 0.0
      %1238 = vmatpush1.msra.mxu0 0.0
      %1239 = vmatprep.subr.mxu0 0.0
      %1240 = vmatpush1.msra.mxu0 0.0
      %1241 = vmatprep.subr.mxu0 0.0
      %1242 = vmatpush1.msra.mxu0 0.0
      %1243 = vmatprep.subr.mxu0 0.0
      %1244 = vmatpush1.msra.mxu0 0.0
      %1245 = vmatprep.subr.mxu0 0.0
      %1246 = vmatpush1.msra.mxu0 0.0
      %1247 = vmatprep.subr.mxu0 0.0
      %1248 = vmatpush1.msra.mxu0 0.0
      %1249 = vmatprep.subr.mxu0 0.0
      %1250 = vmatpush1.msra.mxu0 0.0
      %1251 = vmatprep.subr.mxu0 0.0
      %1252 = vmatpush1.msra.mxu0 0.0
      %1253 = vmatprep.subr.mxu0 0.0
      %1254 = vmatpush1.msra.mxu0 0.0
      %1255 = vmatprep.subr.mxu0 0.0
      %1256 = vmatpush1.msra.mxu0 0.0
      %1257 = vmatprep.mubr.f32.mxu0 0.0
      %v1258 = vand.u32 %v1174, 4294901760
      %v1259 = vsub.f32 %v1174, %v1258
      %v1260 = vand.u32 %v1259, 4294901760
      %v1261 = vsub.f32 %v1259, %v1260
      %v1262 = vand.u32 %v1261, 4294901760
      %1263 = vmatmul.mubr.f32.gmra.mrb[0].mxu0 %v1262
      %v1264 = vpop.f32.mrb[0].mxu0
      %v1265 = vadd.f32 0.0, %v1264
      %v1266 = vpop.f32.mrb[0].mxu0
      %1267 = vmatprep.mubr.f32.mxu0 0.0
      %v1268 = vand.u32 %v1177, 4294901760
      %v1269 = vsub.f32 %v1177, %v1268
      %v1270 = vand.u32 %v1269, 4294901760
      %v1271 = vsub.f32 %v1269, %v1270
      %v1272 = vand.u32 %v1271, 4294901760
      %1273 = vmatmul.mubr.f32.gmra.mrb[0].mxu0 %v1272
      %v1274 = vpop.f32.mrb[0].mxu0
      %v1275 = vadd.f32 0.0, %v1274
      %v1276 = vpop.f32.mrb[0].mxu0
      %1277 = vmatprep.mubr.f32.mxu0 0.0
      %v1278 = vand.u32 %v1180, 4294901760
      %v1279 = vsub.f32 %v1180, %v1278
      %v1280 = vand.u32 %v1279, 4294901760
      %v1281 = vsub.f32 %v1279, %v1280
      %v1282 = vand.u32 %v1281, 4294901760
      %1283 = vmatmul.mubr.f32.gmra.mrb[0].mxu0 %v1282
      %v1284 = vpop.f32.mrb[0].mxu0
      %v1285 = vadd.f32 0.0, %v1284
      %v1286 = vpop.f32.mrb[0].mxu0
      %1287 = vmatprep.mubr.f32.mxu0 0.0
      %v1288 = vand.u32 %v1183, 4294901760
      %v1289 = vsub.f32 %v1183, %v1288
      %v1290 = vand.u32 %v1289, 4294901760
      %v1291 = vsub.f32 %v1289, %v1290
      %v1292 = vand.u32 %v1291, 4294901760
      %1293 = vmatmul.mubr.f32.gmra.mrb[0].mxu0 %v1292
      %v1294 = vpop.f32.mrb[0].mxu0
      %v1295 = vadd.f32 0.0, %v1294
      %v1296 = vpop.f32.mrb[0].mxu0
      %1297 = vdwg.mxu0
      %1298 = vmatprep.subr.mxu0 0.0
      %v1299 = vand.u32 %v162, 4294901760
      %v1300 = vsub.f32 %v162, %v1299
      %v1301 = vand.u32 %v1300, 4294901760
      %v1302 = vsub.f32 %v1300, %v1301
      %v1303 = vand.u32 %v1302, 4294901760
      %1304 = vmatpush1.msra.mxu0 %v1303
      %1305 = vmatprep.subr.mxu0 0.0
      %v1306 = vand.u32 %v163, 4294901760
      %v1307 = vsub.f32 %v163, %v1306
      %v1308 = vand.u32 %v1307, 4294901760
      %v1309 = vsub.f32 %v1307, %v1308
      %v1310 = vand.u32 %v1309, 4294901760
      %1311 = vmatpush1.msra.mxu0 %v1310
      %1312 = vmatprep.subr.mxu0 0.0
      %v1313 = vand.u32 %v164, 4294901760
      %v1314 = vsub.f32 %v164, %v1313
      %v1315 = vand.u32 %v1314, 4294901760
      %v1316 = vsub.f32 %v1314, %v1315
      %v1317 = vand.u32 %v1316, 4294901760
      %1318 = vmatpush1.msra.mxu0 %v1317
      %1319 = vmatprep.subr.mxu0 0.0
      %v1320 = vand.u32 %v165, 4294901760
      %v1321 = vsub.f32 %v165, %v1320
      %v1322 = vand.u32 %v1321, 4294901760
      %v1323 = vsub.f32 %v1321, %v1322
      %v1324 = vand.u32 %v1323, 4294901760
      %1325 = vmatpush1.msra.mxu0 %v1324
      %1326 = vmatprep.subr.mxu0 0.0
      %v1327 = vand.u32 %v166, 4294901760
      %v1328 = vsub.f32 %v166, %v1327
      %v1329 = vand.u32 %v1328, 4294901760
      %v1330 = vsub.f32 %v1328, %v1329
      %v1331 = vand.u32 %v1330, 4294901760
      %1332 = vmatpush1.msra.mxu0 %v1331
      %1333 = vmatprep.subr.mxu0 0.0
      %v1334 = vand.u32 %v167, 4294901760
      %v1335 = vsub.f32 %v167, %v1334
      %v1336 = vand.u32 %v1335, 4294901760
      %v1337 = vsub.f32 %v1335, %v1336
      %v1338 = vand.u32 %v1337, 4294901760
      %1339 = vmatpush1.msra.mxu0 %v1338
      %1340 = vmatprep.subr.mxu0 0.0
      %v1341 = vand.u32 %v168, 4294901760
      %v1342 = vsub.f32 %v168, %v1341
      %v1343 = vand.u32 %v1342, 4294901760
      %v1344 = vsub.f32 %v1342, %v1343
      %v1345 = vand.u32 %v1344, 4294901760
      %1346 = vmatpush1.msra.mxu0 %v1345
      %1347 = vmatprep.subr.mxu0 0.0
      %v1348 = vand.u32 %v169, 4294901760
      %v1349 = vsub.f32 %v169, %v1348
      %v1350 = vand.u32 %v1349, 4294901760
      %v1351 = vsub.f32 %v1349, %v1350
      %v1352 = vand.u32 %v1351, 4294901760
      %1353 = vmatpush1.msra.mxu0 %v1352
      %1354 = vmatprep.subr.mxu0 0.0
      %1355 = vmatpush1.msra.mxu0 0.0
      %1356 = vmatprep.subr.mxu0 0.0
      %1357 = vmatpush1.msra.mxu0 0.0
      %1358 = vmatprep.subr.mxu0 0.0
      %1359 = vmatpush1.msra.mxu0 0.0
      %1360 = vmatprep.subr.mxu0 0.0
      %1361 = vmatpush1.msra.mxu0 0.0
      %1362 = vmatprep.subr.mxu0 0.0
      %1363 = vmatpush1.msra.mxu0 0.0
      %1364 = vmatprep.subr.mxu0 0.0
      %1365 = vmatpush1.msra.mxu0 0.0
      %1366 = vmatprep.subr.mxu0 0.0
      %1367 = vmatpush1.msra.mxu0 0.0
      %1368 = vmatprep.subr.mxu0 0.0
      %1369 = vmatpush1.msra.mxu0 0.0
      %1370 = vmatprep.subr.mxu0 0.0
      %1371 = vmatpush1.msra.mxu0 0.0
      %1372 = vmatprep.subr.mxu0 0.0
      %1373 = vmatpush1.msra.mxu0 0.0
      %1374 = vmatprep.subr.mxu0 0.0
      %1375 = vmatpush1.msra.mxu0 0.0
      %1376 = vmatprep.subr.mxu0 0.0
      %1377 = vmatpush1.msra.mxu0 0.0
      %1378 = vmatprep.subr.mxu0 0.0
      %1379 = vmatpush1.msra.mxu0 0.0
      %1380 = vmatprep.subr.mxu0 0.0
      %1381 = vmatpush1.msra.mxu0 0.0
      %1382 = vmatprep.subr.mxu0 0.0
      %1383 = vmatpush1.msra.mxu0 0.0
      %1384 = vmatprep.subr.mxu0 0.0
      %1385 = vmatpush1.msra.mxu0 0.0
      %1386 = vmatprep.subr.mxu0 0.0
      %1387 = vmatpush1.msra.mxu0 0.0
      %1388 = vmatprep.subr.mxu0 0.0
      %1389 = vmatpush1.msra.mxu0 0.0
      %1390 = vmatprep.subr.mxu0 0.0
      %1391 = vmatpush1.msra.mxu0 0.0
      %1392 = vmatprep.subr.mxu0 0.0
      %1393 = vmatpush1.msra.mxu0 0.0
      %1394 = vmatprep.subr.mxu0 0.0
      %1395 = vmatpush1.msra.mxu0 0.0
      %1396 = vmatprep.subr.mxu0 0.0
      %1397 = vmatpush1.msra.mxu0 0.0
      %1398 = vmatprep.subr.mxu0 0.0
      %1399 = vmatpush1.msra.mxu0 0.0
      %1400 = vmatprep.subr.mxu0 0.0
      %1401 = vmatpush1.msra.mxu0 0.0
      %1402 = vmatprep.mubr.f32.mxu0 0.0
      %v1403 = vand.u32 %v1174, 4294901760
      %1404 = vmatmul.mubr.f32.gmra.mrb[0].mxu0 %v1403
      %v1405 = vpop.f32.mrb[0].mxu0
      %v1406 = vadd.f32 %v1265, %v1405
      %v1407 = vpop.f32.mrb[0].mxu0
      %1408 = vmatprep.mubr.f32.mxu0 0.0
      %v1409 = vand.u32 %v1177, 4294901760
      %1410 = vmatmul.mubr.f32.gmra.mrb[0].mxu0 %v1409
      %v1411 = vpop.f32.mrb[0].mxu0
      %v1412 = vadd.f32 %v1275, %v1411
      %v1413 = vpop.f32.mrb[0].mxu0
      %1414 = vmatprep.mubr.f32.mxu0 0.0
      %v1415 = vand.u32 %v1180, 4294901760
      %1416 = vmatmul.mubr.f32.gmra.mrb[0].mxu0 %v1415
      %v1417 = vpop.f32.mrb[0].mxu0
      %v1418 = vadd.f32 %v1285, %v1417
      %v1419 = vpop.f32.mrb[0].mxu0
      %1420 = vmatprep.mubr.f32.mxu0 0.0
      %v1421 = vand.u32 %v1183, 4294901760
      %1422 = vmatmul.mubr.f32.gmra.mrb[0].mxu0 %v1421
      %v1423 = vpop.f32.mrb[0].mxu0
      %v1424 = vadd.f32 %v1295, %v1423
      %v1425 = vpop.f32.mrb[0].mxu0
      %1426 = vdwg.mxu0
      %1427 = vmatprep.subr.mxu0 0.0
      %v1428 = vand.u32 %v162, 4294901760
      %v1429 = vsub.f32 %v162, %v1428
      %1430 = vmatpush1.msra.mxu0 %v1429
      %1431 = vmatprep.subr.mxu0 0.0
      %v1432 = vand.u32 %v163, 4294901760
      %v1433 = vsub.f32 %v163, %v1432
      %1434 = vmatpush1.msra.mxu0 %v1433
      %1435 = vmatprep.subr.mxu0 0.0
      %v1436 = vand.u32 %v164, 4294901760
      %v1437 = vsub.f32 %v164, %v1436
      %1438 = vmatpush1.msra.mxu0 %v1437
      %1439 = vmatprep.subr.mxu0 0.0
      %v1440 = vand.u32 %v165, 4294901760
      %v1441 = vsub.f32 %v165, %v1440
      %1442 = vmatpush1.msra.mxu0 %v1441
      %1443 = vmatprep.subr.mxu0 0.0
      %v1444 = vand.u32 %v166, 4294901760
      %v1445 = vsub.f32 %v166, %v1444
      %1446 = vmatpush1.msra.mxu0 %v1445
      %1447 = vmatprep.subr.mxu0 0.0
      %v1448 = vand.u32 %v167, 4294901760
      %v1449 = vsub.f32 %v167, %v1448
      %1450 = vmatpush1.msra.mxu0 %v1449
      %1451 = vmatprep.subr.mxu0 0.0
      %v1452 = vand.u32 %v168, 4294901760
      %v1453 = vsub.f32 %v168, %v1452
      %1454 = vmatpush1.msra.mxu0 %v1453
      %1455 = vmatprep.subr.mxu0 0.0
      %v1456 = vand.u32 %v169, 4294901760
      %v1457 = vsub.f32 %v169, %v1456
      %1458 = vmatpush1.msra.mxu0 %v1457
      %1459 = vmatprep.subr.mxu0 0.0
      %1460 = vmatpush1.msra.mxu0 0.0
      %1461 = vmatprep.subr.mxu0 0.0
      %1462 = vmatpush1.msra.mxu0 0.0
      %1463 = vmatprep.subr.mxu0 0.0
      %1464 = vmatpush1.msra.mxu0 0.0
      %1465 = vmatprep.subr.mxu0 0.0
      %1466 = vmatpush1.msra.mxu0 0.0
      %1467 = vmatprep.subr.mxu0 0.0
      %1468 = vmatpush1.msra.mxu0 0.0
      %1469 = vmatprep.subr.mxu0 0.0
      %1470 = vmatpush1.msra.mxu0 0.0
      %1471 = vmatprep.subr.mxu0 0.0
      %1472 = vmatpush1.msra.mxu0 0.0
      %1473 = vmatprep.subr.mxu0 0.0
      %1474 = vmatpush1.msra.mxu0 0.0
      %1475 = vmatprep.subr.mxu0 0.0
      %1476 = vmatpush1.msra.mxu0 0.0
      %1477 = vmatprep.subr.mxu0 0.0
      %1478 = vmatpush1.msra.mxu0 0.0
      %1479 = vmatprep.subr.mxu0 0.0
      %1480 = vmatpush1.msra.mxu0 0.0
      %1481 = vmatprep.subr.mxu0 0.0
      %1482 = vmatpush1.msra.mxu0 0.0
      %1483 = vmatprep.subr.mxu0 0.0
      %1484 = vmatpush1.msra.mxu0 0.0
      %1485 = vmatprep.subr.mxu0 0.0
      %1486 = vmatpush1.msra.mxu0 0.0
      %1487 = vmatprep.subr.mxu0 0.0
      %1488 = vmatpush1.msra.mxu0 0.0
      %1489 = vmatprep.subr.mxu0 0.0
      %1490 = vmatpush1.msra.mxu0 0.0
      %1491 = vmatprep.subr.mxu0 0.0
      %1492 = vmatpush1.msra.mxu0 0.0
      %1493 = vmatprep.subr.mxu0 0.0
      %1494 = vmatpush1.msra.mxu0 0.0
      %1495 = vmatprep.subr.mxu0 0.0
      %1496 = vmatpush1.msra.mxu0 0.0
      %1497 = vmatprep.subr.mxu0 0.0
      %1498 = vmatpush1.msra.mxu0 0.0
      %1499 = vmatprep.subr.mxu0 0.0
      %1500 = vmatpush1.msra.mxu0 0.0
      %1501 = vmatprep.subr.mxu0 0.0
      %1502 = vmatpush1.msra.mxu0 0.0
      %1503 = vmatprep.subr.mxu0 0.0
      %1504 = vmatpush1.msra.mxu0 0.0
      %1505 = vmatprep.subr.mxu0 0.0
      %1506 = vmatpush1.msra.mxu0 0.0
      %1507 = vmatprep.mubr.f32.mxu0 0.0
      %v1508 = vand.u32 %v1174, 4294901760
      %v1509 = vsub.f32 %v1174, %v1508
      %1510 = vmatmul.mubr.f32.gmra.mrb[0].mxu0 %v1509
      %v1511 = vpop.f32.mrb[0].mxu0
      %v1512 = vadd.f32 %v1406, %v1511
      %v1513 = vpop.f32.mrb[0].mxu0
      %1514 = vmatprep.mubr.f32.mxu0 0.0
      %v1515 = vand.u32 %v1177, 4294901760
      %v1516 = vsub.f32 %v1177, %v1515
      %1517 = vmatmul.mubr.f32.gmra.mrb[0].mxu0 %v1516
      %v1518 = vpop.f32.mrb[0].mxu0
      %v1519 = vadd.f32 %v1412, %v1518
      %v1520 = vpop.f32.mrb[0].mxu0
      %1521 = vmatprep.mubr.f32.mxu0 0.0
      %v1522 = vand.u32 %v1180, 4294901760
      %v1523 = vsub.f32 %v1180, %v1522
      %1524 = vmatmul.mubr.f32.gmra.mrb[0].mxu0 %v1523
      %v1525 = vpop.f32.mrb[0].mxu0
      %v1526 = vadd.f32 %v1418, %v1525
      %v1527 = vpop.f32.mrb[0].mxu0
      %1528 = vmatprep.mubr.f32.mxu0 0.0
      %v1529 = vand.u32 %v1183, 4294901760
      %v1530 = vsub.f32 %v1183, %v1529
      %1531 = vmatmul.mubr.f32.gmra.mrb[0].mxu0 %v1530
      %v1532 = vpop.f32.mrb[0].mxu0
      %v1533 = vadd.f32 %v1424, %v1532
      %v1534 = vpop.f32.mrb[0].mxu0
      %1535 = vdwg.mxu0
      %1536 = vmatprep.subr.mxu0 0.0
      %v1537 = vand.u32 %v162, 4294901760
      %1538 = vmatpush1.msra.mxu0 %v1537
      %1539 = vmatprep.subr.mxu0 0.0
      %v1540 = vand.u32 %v163, 4294901760
      %1541 = vmatpush1.msra.mxu0 %v1540
      %1542 = vmatprep.subr.mxu0 0.0
      %v1543 = vand.u32 %v164, 4294901760
      %1544 = vmatpush1.msra.mxu0 %v1543
      %1545 = vmatprep.subr.mxu0 0.0
      %v1546 = vand.u32 %v165, 4294901760
      %1547 = vmatpush1.msra.mxu0 %v1546
      %1548 = vmatprep.subr.mxu0 0.0
      %v1549 = vand.u32 %v166, 4294901760
      %1550 = vmatpush1.msra.mxu0 %v1549
      %1551 = vmatprep.subr.mxu0 0.0
      %v1552 = vand.u32 %v167, 4294901760
      %1553 = vmatpush1.msra.mxu0 %v1552
      %1554 = vmatprep.subr.mxu0 0.0
      %v1555 = vand.u32 %v168, 4294901760
      %1556 = vmatpush1.msra.mxu0 %v1555
      %1557 = vmatprep.subr.mxu0 0.0
      %v1558 = vand.u32 %v169, 4294901760
      %1559 = vmatpush1.msra.mxu0 %v1558
      %1560 = vmatprep.subr.mxu0 0.0
      %1561 = vmatpush1.msra.mxu0 0.0
      %1562 = vmatprep.subr.mxu0 0.0
      %1563 = vmatpush1.msra.mxu0 0.0
      %1564 = vmatprep.subr.mxu0 0.0
      %1565 = vmatpush1.msra.mxu0 0.0
      %1566 = vmatprep.subr.mxu0 0.0
      %1567 = vmatpush1.msra.mxu0 0.0
      %1568 = vmatprep.subr.mxu0 0.0
      %1569 = vmatpush1.msra.mxu0 0.0
      %1570 = vmatprep.subr.mxu0 0.0
      %1571 = vmatpush1.msra.mxu0 0.0
      %1572 = vmatprep.subr.mxu0 0.0
      %1573 = vmatpush1.msra.mxu0 0.0
      %1574 = vmatprep.subr.mxu0 0.0
      %1575 = vmatpush1.msra.mxu0 0.0
      %1576 = vmatprep.subr.mxu0 0.0
      %1577 = vmatpush1.msra.mxu0 0.0
      %1578 = vmatprep.subr.mxu0 0.0
      %1579 = vmatpush1.msra.mxu0 0.0
      %1580 = vmatprep.subr.mxu0 0.0
      %1581 = vmatpush1.msra.mxu0 0.0
      %1582 = vmatprep.subr.mxu0 0.0
      %1583 = vmatpush1.msra.mxu0 0.0
      %1584 = vmatprep.subr.mxu0 0.0
      %1585 = vmatpush1.msra.mxu0 0.0
      %1586 = vmatprep.subr.mxu0 0.0
      %1587 = vmatpush1.msra.mxu0 0.0
      %1588 = vmatprep.subr.mxu0 0.0
      %1589 = vmatpush1.msra.mxu0 0.0
      %1590 = vmatprep.subr.mxu0 0.0
      %1591 = vmatpush1.msra.mxu0 0.0
      %1592 = vmatprep.subr.mxu0 0.0
      %1593 = vmatpush1.msra.mxu0 0.0
      %1594 = vmatprep.subr.mxu0 0.0
      %1595 = vmatpush1.msra.mxu0 0.0
      %1596 = vmatprep.subr.mxu0 0.0
      %1597 = vmatpush1.msra.mxu0 0.0
      %1598 = vmatprep.subr.mxu0 0.0
      %1599 = vmatpush1.msra.mxu0 0.0
      %1600 = vmatprep.subr.mxu0 0.0
      %1601 = vmatpush1.msra.mxu0 0.0
      %1602 = vmatprep.subr.mxu0 0.0
      %1603 = vmatpush1.msra.mxu0 0.0
      %1604 = vmatprep.subr.mxu0 0.0
      %1605 = vmatpush1.msra.mxu0 0.0
      %1606 = vmatprep.subr.mxu0 0.0
      %1607 = vmatpush1.msra.mxu0 0.0
      %1608 = vmatprep.mubr.f32.mxu0 0.0
      %v1609 = vand.u32 %v1174, 4294901760
      %v1610 = vsub.f32 %v1174, %v1609
      %v1611 = vand.u32 %v1610, 4294901760
      %1612 = vmatmul.mubr.f32.gmra.mrb[0].mxu0 %v1611
      %v1613 = vpop.f32.mrb[0].mxu0
      %v1614 = vadd.f32 %v1512, %v1613
      %v1615 = vpop.f32.mrb[0].mxu0
      %1616 = vmatprep.mubr.f32.mxu0 0.0
      %v1617 = vand.u32 %v1177, 4294901760
      %v1618 = vsub.f32 %v1177, %v1617
      %v1619 = vand.u32 %v1618, 4294901760
      %1620 = vmatmul.mubr.f32.gmra.mrb[0].mxu0 %v1619
      %v1621 = vpop.f32.mrb[0].mxu0
      %v1622 = vadd.f32 %v1519, %v1621
      %v1623 = vpop.f32.mrb[0].mxu0
      %1624 = vmatprep.mubr.f32.mxu0 0.0
      %v1625 = vand.u32 %v1180, 4294901760
      %v1626 = vsub.f32 %v1180, %v1625
      %v1627 = vand.u32 %v1626, 4294901760
      %1628 = vmatmul.mubr.f32.gmra.mrb[0].mxu0 %v1627
      %v1629 = vpop.f32.mrb[0].mxu0
      %v1630 = vadd.f32 %v1526, %v1629
      %v1631 = vpop.f32.mrb[0].mxu0
      %1632 = vmatprep.mubr.f32.mxu0 0.0
      %v1633 = vand.u32 %v1183, 4294901760
      %v1634 = vsub.f32 %v1183, %v1633
      %v1635 = vand.u32 %v1634, 4294901760
      %1636 = vmatmul.mubr.f32.gmra.mrb[0].mxu0 %v1635
      %v1637 = vpop.f32.mrb[0].mxu0
      %v1638 = vadd.f32 %v1533, %v1637
      %v1639 = vpop.f32.mrb[0].mxu0
      %1640 = vdwg.mxu0
      %1641 = vmatprep.subr.mxu0 0.0
      %v1642 = vand.u32 %v162, 4294901760
      %v1643 = vsub.f32 %v162, %v1642
      %v1644 = vand.u32 %v1643, 4294901760
      %1645 = vmatpush1.msra.mxu0 %v1644
      %1646 = vmatprep.subr.mxu0 0.0
      %v1647 = vand.u32 %v163, 4294901760
      %v1648 = vsub.f32 %v163, %v1647
      %v1649 = vand.u32 %v1648, 4294901760
      %1650 = vmatpush1.msra.mxu0 %v1649
      %1651 = vmatprep.subr.mxu0 0.0
      %v1652 = vand.u32 %v164, 4294901760
      %v1653 = vsub.f32 %v164, %v1652
      %v1654 = vand.u32 %v1653, 4294901760
      %1655 = vmatpush1.msra.mxu0 %v1654
      %1656 = vmatprep.subr.mxu0 0.0
      %v1657 = vand.u32 %v165, 4294901760
      %v1658 = vsub.f32 %v165, %v1657
      %v1659 = vand.u32 %v1658, 4294901760
      %1660 = vmatpush1.msra.mxu0 %v1659
      %1661 = vmatprep.subr.mxu0 0.0
      %v1662 = vand.u32 %v166, 4294901760
      %v1663 = vsub.f32 %v166, %v1662
      %v1664 = vand.u32 %v1663, 4294901760
      %1665 = vmatpush1.msra.mxu0 %v1664
      %1666 = vmatprep.subr.mxu0 0.0
      %v1667 = vand.u32 %v167, 4294901760
      %v1668 = vsub.f32 %v167, %v1667
      %v1669 = vand.u32 %v1668, 4294901760
      %1670 = vmatpush1.msra.mxu0 %v1669
      %1671 = vmatprep.subr.mxu0 0.0
      %v1672 = vand.u32 %v168, 4294901760
      %v1673 = vsub.f32 %v168, %v1672
      %v1674 = vand.u32 %v1673, 4294901760
      %1675 = vmatpush1.msra.mxu0 %v1674
      %1676 = vmatprep.subr.mxu0 0.0
      %v1677 = vand.u32 %v169, 4294901760
      %v1678 = vsub.f32 %v169, %v1677
      %v1679 = vand.u32 %v1678, 4294901760
      %1680 = vmatpush1.msra.mxu0 %v1679
      %1681 = vmatprep.subr.mxu0 0.0
      %1682 = vmatpush1.msra.mxu0 0.0
      %1683 = vmatprep.subr.mxu0 0.0
      %1684 = vmatpush1.msra.mxu0 0.0
      %1685 = vmatprep.subr.mxu0 0.0
      %1686 = vmatpush1.msra.mxu0 0.0
      %1687 = vmatprep.subr.mxu0 0.0
      %1688 = vmatpush1.msra.mxu0 0.0
      %1689 = vmatprep.subr.mxu0 0.0
      %1690 = vmatpush1.msra.mxu0 0.0
      %1691 = vmatprep.subr.mxu0 0.0
      %1692 = vmatpush1.msra.mxu0 0.0
      %1693 = vmatprep.subr.mxu0 0.0
      %1694 = vmatpush1.msra.mxu0 0.0
      %1695 = vmatprep.subr.mxu0 0.0
      %1696 = vmatpush1.msra.mxu0 0.0
      %1697 = vmatprep.subr.mxu0 0.0
      %1698 = vmatpush1.msra.mxu0 0.0
      %1699 = vmatprep.subr.mxu0 0.0
      %1700 = vmatpush1.msra.mxu0 0.0
      %1701 = vmatprep.subr.mxu0 0.0
      %1702 = vmatpush1.msra.mxu0 0.0
      %1703 = vmatprep.subr.mxu0 0.0
      %1704 = vmatpush1.msra.mxu0 0.0
      %1705 = vmatprep.subr.mxu0 0.0
      %1706 = vmatpush1.msra.mxu0 0.0
      %1707 = vmatprep.subr.mxu0 0.0
      %1708 = vmatpush1.msra.mxu0 0.0
      %1709 = vmatprep.subr.mxu0 0.0
      %1710 = vmatpush1.msra.mxu0 0.0
      %1711 = vmatprep.subr.mxu0 0.0
      %1712 = vmatpush1.msra.mxu0 0.0
      %1713 = vmatprep.subr.mxu0 0.0
      %1714 = vmatpush1.msra.mxu0 0.0
      %1715 = vmatprep.subr.mxu0 0.0
      %1716 = vmatpush1.msra.mxu0 0.0
      %1717 = vmatprep.subr.mxu0 0.0
      %1718 = vmatpush1.msra.mxu0 0.0
      %1719 = vmatprep.subr.mxu0 0.0
      %1720 = vmatpush1.msra.mxu0 0.0
      %1721 = vmatprep.subr.mxu0 0.0
      %1722 = vmatpush1.msra.mxu0 0.0
      %1723 = vmatprep.subr.mxu0 0.0
      %1724 = vmatpush1.msra.mxu0 0.0
      %1725 = vmatprep.subr.mxu0 0.0
      %1726 = vmatpush1.msra.mxu0 0.0
      %1727 = vmatprep.subr.mxu0 0.0
      %1728 = vmatpush1.msra.mxu0 0.0
      %1729 = vmatprep.mubr.f32.mxu0 0.0
      %v1730 = vand.u32 %v1174, 4294901760
      %1731 = vmatmul.mubr.f32.gmra.mrb[0].mxu0 %v1730
      %v1732 = vpop.f32.mrb[0].mxu0
      %v1733 = vadd.f32 %v1614, %v1732
      %v1734 = vpop.f32.mrb[0].mxu0
      %1735 = vmatprep.mubr.f32.mxu0 0.0
      %v1736 = vand.u32 %v1177, 4294901760
      %1737 = vmatmul.mubr.f32.gmra.mrb[0].mxu0 %v1736
      %v1738 = vpop.f32.mrb[0].mxu0
      %v1739 = vadd.f32 %v1622, %v1738
      %v1740 = vpop.f32.mrb[0].mxu0
      %1741 = vmatprep.mubr.f32.mxu0 0.0
      %v1742 = vand.u32 %v1180, 4294901760
      %1743 = vmatmul.mubr.f32.gmra.mrb[0].mxu0 %v1742
      %v1744 = vpop.f32.mrb[0].mxu0
      %v1745 = vadd.f32 %v1630, %v1744
      %v1746 = vpop.f32.mrb[0].mxu0
      %1747 = vmatprep.mubr.f32.mxu0 0.0
      %v1748 = vand.u32 %v1183, 4294901760
      %1749 = vmatmul.mubr.f32.gmra.mrb[0].mxu0 %v1748
      %v1750 = vpop.f32.mrb[0].mxu0
      %v1751 = vadd.f32 %v1638, %v1750
      %v1752 = vpop.f32.mrb[0].mxu0
      %1753 = vdwg.mxu0
      %1754 = vmatprep.subr.mxu0 0.0
      %v1755 = vand.u32 %v162, 4294901760
      %1756 = vmatpush1.msra.mxu0 %v1755
      %1757 = vmatprep.subr.mxu0 0.0
      %v1758 = vand.u32 %v163, 4294901760
      %1759 = vmatpush1.msra.mxu0 %v1758
      %1760 = vmatprep.subr.mxu0 0.0
      %v1761 = vand.u32 %v164, 4294901760
      %1762 = vmatpush1.msra.mxu0 %v1761
      %1763 = vmatprep.subr.mxu0 0.0
      %v1764 = vand.u32 %v165, 4294901760
      %1765 = vmatpush1.msra.mxu0 %v1764
      %1766 = vmatprep.subr.mxu0 0.0
      %v1767 = vand.u32 %v166, 4294901760
      %1768 = vmatpush1.msra.mxu0 %v1767
      %1769 = vmatprep.subr.mxu0 0.0
      %v1770 = vand.u32 %v167, 4294901760
      %1771 = vmatpush1.msra.mxu0 %v1770
      %1772 = vmatprep.subr.mxu0 0.0
      %v1773 = vand.u32 %v168, 4294901760
      %1774 = vmatpush1.msra.mxu0 %v1773
      %1775 = vmatprep.subr.mxu0 0.0
      %v1776 = vand.u32 %v169, 4294901760
      %1777 = vmatpush1.msra.mxu0 %v1776
      %1778 = vmatprep.subr.mxu0 0.0
      %1779 = vmatpush1.msra.mxu0 0.0
      %1780 = vmatprep.subr.mxu0 0.0
      %1781 = vmatpush1.msra.mxu0 0.0
      %1782 = vmatprep.subr.mxu0 0.0
      %1783 = vmatpush1.msra.mxu0 0.0
      %1784 = vmatprep.subr.mxu0 0.0
      %1785 = vmatpush1.msra.mxu0 0.0
      %1786 = vmatprep.subr.mxu0 0.0
      %1787 = vmatpush1.msra.mxu0 0.0
      %1788 = vmatprep.subr.mxu0 0.0
      %1789 = vmatpush1.msra.mxu0 0.0
      %1790 = vmatprep.subr.mxu0 0.0
      %1791 = vmatpush1.msra.mxu0 0.0
      %1792 = vmatprep.subr.mxu0 0.0
      %1793 = vmatpush1.msra.mxu0 0.0
      %1794 = vmatprep.subr.mxu0 0.0
      %1795 = vmatpush1.msra.mxu0 0.0
      %1796 = vmatprep.subr.mxu0 0.0
      %1797 = vmatpush1.msra.mxu0 0.0
      %1798 = vmatprep.subr.mxu0 0.0
      %1799 = vmatpush1.msra.mxu0 0.0
      %1800 = vmatprep.subr.mxu0 0.0
      %1801 = vmatpush1.msra.mxu0 0.0
      %1802 = vmatprep.subr.mxu0 0.0
      %1803 = vmatpush1.msra.mxu0 0.0
      %1804 = vmatprep.subr.mxu0 0.0
      %1805 = vmatpush1.msra.mxu0 0.0
      %1806 = vmatprep.subr.mxu0 0.0
      %1807 = vmatpush1.msra.mxu0 0.0
      %1808 = vmatprep.subr.mxu0 0.0
      %1809 = vmatpush1.msra.mxu0 0.0
      %1810 = vmatprep.subr.mxu0 0.0
      %1811 = vmatpush1.msra.mxu0 0.0
      %1812 = vmatprep.subr.mxu0 0.0
      %1813 = vmatpush1.msra.mxu0 0.0
      %1814 = vmatprep.subr.mxu0 0.0
      %1815 = vmatpush1.msra.mxu0 0.0
      %1816 = vmatprep.subr.mxu0 0.0
      %1817 = vmatpush1.msra.mxu0 0.0
      %1818 = vmatprep.subr.mxu0 0.0
      %1819 = vmatpush1.msra.mxu0 0.0
      %1820 = vmatprep.subr.mxu0 0.0
      %1821 = vmatpush1.msra.mxu0 0.0
      %1822 = vmatprep.subr.mxu0 0.0
      %1823 = vmatpush1.msra.mxu0 0.0
      %1824 = vmatprep.subr.mxu0 0.0
      %1825 = vmatpush1.msra.mxu0 0.0
      %1826 = vmatprep.mubr.f32.mxu0 0.0
      %v1827 = vand.u32 %v1174, 4294901760
      %1828 = vmatmul.mubr.f32.gmra.mrb[0].mxu0 %v1827
      %v1829 = vpop.f32.mrb[0].mxu0
      %v1830 = vadd.f32 %v1733, %v1829
      %v1831 = vpop.f32.mrb[0].mxu0
      %1832 = vmatprep.mubr.f32.mxu0 0.0
      %v1833 = vand.u32 %v1177, 4294901760
      %1834 = vmatmul.mubr.f32.gmra.mrb[0].mxu0 %v1833
      %v1835 = vpop.f32.mrb[0].mxu0
      %v1836 = vadd.f32 %v1739, %v1835
      %v1837 = vpop.f32.mrb[0].mxu0
      %1838 = vmatprep.mubr.f32.mxu0 0.0
      %v1839 = vand.u32 %v1180, 4294901760
      %1840 = vmatmul.mubr.f32.gmra.mrb[0].mxu0 %v1839
      %v1841 = vpop.f32.mrb[0].mxu0
      %v1842 = vadd.f32 %v1745, %v1841
      %v1843 = vpop.f32.mrb[0].mxu0
      %1844 = vmatprep.mubr.f32.mxu0 0.0
      %v1845 = vand.u32 %v1183, 4294901760
      %1846 = vmatmul.mubr.f32.gmra.mrb[0].mxu0 %v1845
      %v1847 = vpop.f32.mrb[0].mxu0
      %v1848 = vadd.f32 %v1751, %v1847
      %v1849 = vpop.f32.mrb[0].mxu0
      %1850 = vdwg.mxu0
      %v1852 = vsel %vm1172, %v1830, 0
      %v1855 = vsel %vm1172, %v1836, 0
      %v1858 = vsel %vm1172, %v1842, 0
      %v1861 = vsel %vm1172, %v1848, 0
      %1863 = vmatprep.subr.mxu0 0.0
      %v1864 = vand.u32 %v1164, 4294901760
      %1865 = vmatpush1.msra.mxu0 %v1864
      %1866 = vmatprep.subr.mxu0 0.0
      %v1867 = vand.u32 %v1165, 4294901760
      %1868 = vmatpush1.msra.mxu0 %v1867
      %1869 = vmatprep.subr.mxu0 0.0
      %v1870 = vand.u32 %v1166, 4294901760
      %1871 = vmatpush1.msra.mxu0 %v1870
      %1872 = vmatprep.subr.mxu0 0.0
      %v1873 = vand.u32 %v1167, 4294901760
      %1874 = vmatpush1.msra.mxu0 %v1873
      %1875 = vmatprep.subr.mxu0 0.0
      %v1876 = vand.u32 %v1168, 4294901760
      %1877 = vmatpush1.msra.mxu0 %v1876
      %1878 = vmatprep.subr.mxu0 0.0
      %v1879 = vand.u32 %v1169, 4294901760
      %1880 = vmatpush1.msra.mxu0 %v1879
      %1881 = vmatprep.subr.mxu0 0.0
      %v1882 = vand.u32 %v1170, 4294901760
      %1883 = vmatpush1.msra.mxu0 %v1882
      %1884 = vmatprep.subr.mxu0 0.0
      %v1885 = vand.u32 %v1171, 4294901760
      %1886 = vmatpush1.msra.mxu0 %v1885
      %1887 = vmatprep.subr.mxu0 0.0
      %1888 = vmatpush1.msra.mxu0 0.0
      %1889 = vmatprep.subr.mxu0 0.0
      %1890 = vmatpush1.msra.mxu0 0.0
      %1891 = vmatprep.subr.mxu0 0.0
      %1892 = vmatpush1.msra.mxu0 0.0
      %1893 = vmatprep.subr.mxu0 0.0
      %1894 = vmatpush1.msra.mxu0 0.0
      %1895 = vmatprep.subr.mxu0 0.0
      %1896 = vmatpush1.msra.mxu0 0.0
      %1897 = vmatprep.subr.mxu0 0.0
      %1898 = vmatpush1.msra.mxu0 0.0
      %1899 = vmatprep.subr.mxu0 0.0
      %1900 = vmatpush1.msra.mxu0 0.0
      %1901 = vmatprep.subr.mxu0 0.0
      %1902 = vmatpush1.msra.mxu0 0.0
      %1903 = vmatprep.subr.mxu0 0.0
      %1904 = vmatpush1.msra.mxu0 0.0
      %1905 = vmatprep.subr.mxu0 0.0
      %1906 = vmatpush1.msra.mxu0 0.0
      %1907 = vmatprep.subr.mxu0 0.0
      %1908 = vmatpush1.msra.mxu0 0.0
      %1909 = vmatprep.subr.mxu0 0.0
      %1910 = vmatpush1.msra.mxu0 0.0
      %1911 = vmatprep.subr.mxu0 0.0
      %1912 = vmatpush1.msra.mxu0 0.0
      %1913 = vmatprep.subr.mxu0 0.0
      %1914 = vmatpush1.msra.mxu0 0.0
      %1915 = vmatprep.subr.mxu0 0.0
      %1916 = vmatpush1.msra.mxu0 0.0
      %1917 = vmatprep.subr.mxu0 0.0
      %1918 = vmatpush1.msra.mxu0 0.0
      %1919 = vmatprep.subr.mxu0 0.0
      %1920 = vmatpush1.msra.mxu0 0.0
      %1921 = vmatprep.subr.mxu0 0.0
      %1922 = vmatpush1.msra.mxu0 0.0
      %1923 = vmatprep.subr.mxu0 0.0
      %1924 = vmatpush1.msra.mxu0 0.0
      %1925 = vmatprep.subr.mxu0 0.0
      %1926 = vmatpush1.msra.mxu0 0.0
      %1927 = vmatprep.subr.mxu0 0.0
      %1928 = vmatpush1.msra.mxu0 0.0
      %1929 = vmatprep.subr.mxu0 0.0
      %1930 = vmatpush1.msra.mxu0 0.0
      %1931 = vmatprep.subr.mxu0 0.0
      %1932 = vmatpush1.msra.mxu0 0.0
      %1933 = vmatprep.subr.mxu0 0.0
      %1934 = vmatpush1.msra.mxu0 0.0
      %1935 = vmatprep.mubr.f32.mxu0 0.0
      %v1936 = vand.u32 %v1852, 4294901760
      %v1937 = vsub.f32 %v1852, %v1936
      %v1938 = vand.u32 %v1937, 4294901760
      %v1939 = vsub.f32 %v1937, %v1938
      %v1940 = vand.u32 %v1939, 4294901760
      %1941 = vmatmul.mubr.f32.gmra.mrb[0].mxu0 %v1940
      %v1942 = vpop.f32.mrb[0].mxu0
      %v1943 = vadd.f32 0.0, %v1942
      %v1944 = vpop.f32.mrb[0].mxu0
      %1945 = vmatprep.mubr.f32.mxu0 0.0
      %v1946 = vand.u32 %v1855, 4294901760
      %v1947 = vsub.f32 %v1855, %v1946
      %v1948 = vand.u32 %v1947, 4294901760
      %v1949 = vsub.f32 %v1947, %v1948
      %v1950 = vand.u32 %v1949, 4294901760
      %1951 = vmatmul.mubr.f32.gmra.mrb[0].mxu0 %v1950
      %v1952 = vpop.f32.mrb[0].mxu0
      %v1953 = vadd.f32 0.0, %v1952
      %v1954 = vpop.f32.mrb[0].mxu0
      %1955 = vmatprep.mubr.f32.mxu0 0.0
      %v1956 = vand.u32 %v1858, 4294901760
      %v1957 = vsub.f32 %v1858, %v1956
      %v1958 = vand.u32 %v1957, 4294901760
      %v1959 = vsub.f32 %v1957, %v1958
      %v1960 = vand.u32 %v1959, 4294901760
      %1961 = vmatmul.mubr.f32.gmra.mrb[0].mxu0 %v1960
      %v1962 = vpop.f32.mrb[0].mxu0
      %v1963 = vadd.f32 0.0, %v1962
      %v1964 = vpop.f32.mrb[0].mxu0
      %1965 = vmatprep.mubr.f32.mxu0 0.0
      %v1966 = vand.u32 %v1861, 4294901760
      %v1967 = vsub.f32 %v1861, %v1966
      %v1968 = vand.u32 %v1967, 4294901760
      %v1969 = vsub.f32 %v1967, %v1968
      %v1970 = vand.u32 %v1969, 4294901760
      %1971 = vmatmul.mubr.f32.gmra.mrb[0].mxu0 %v1970
      %v1972 = vpop.f32.mrb[0].mxu0
      %v1973 = vadd.f32 0.0, %v1972
      %v1974 = vpop.f32.mrb[0].mxu0
      %1975 = vdwg.mxu0
      %1976 = vmatprep.subr.mxu0 0.0
      %v1977 = vand.u32 %v1164, 4294901760
      %v1978 = vsub.f32 %v1164, %v1977
      %v1979 = vand.u32 %v1978, 4294901760
      %v1980 = vsub.f32 %v1978, %v1979
      %v1981 = vand.u32 %v1980, 4294901760
      %1982 = vmatpush1.msra.mxu0 %v1981
      %1983 = vmatprep.subr.mxu0 0.0
      %v1984 = vand.u32 %v1165, 4294901760
      %v1985 = vsub.f32 %v1165, %v1984
      %v1986 = vand.u32 %v1985, 4294901760
      %v1987 = vsub.f32 %v1985, %v1986
      %v1988 = vand.u32 %v1987, 4294901760
      %1989 = vmatpush1.msra.mxu0 %v1988
      %1990 = vmatprep.subr.mxu0 0.0
      %v1991 = vand.u32 %v1166, 4294901760
      %v1992 = vsub.f32 %v1166, %v1991
      %v1993 = vand.u32 %v1992, 4294901760
      %v1994 = vsub.f32 %v1992, %v1993
      %v1995 = vand.u32 %v1994, 4294901760
      %1996 = vmatpush1.msra.mxu0 %v1995
      %1997 = vmatprep.subr.mxu0 0.0
      %v1998 = vand.u32 %v1167, 4294901760
      %v1999 = vsub.f32 %v1167, %v1998
      %v2000 = vand.u32 %v1999, 4294901760
      %v2001 = vsub.f32 %v1999, %v2000
      %v2002 = vand.u32 %v2001, 4294901760
      %2003 = vmatpush1.msra.mxu0 %v2002
      %2004 = vmatprep.subr.mxu0 0.0
      %v2005 = vand.u32 %v1168, 4294901760
      %v2006 = vsub.f32 %v1168, %v2005
      %v2007 = vand.u32 %v2006, 4294901760
      %v2008 = vsub.f32 %v2006, %v2007
      %v2009 = vand.u32 %v2008, 4294901760
      %2010 = vmatpush1.msra.mxu0 %v2009
      %2011 = vmatprep.subr.mxu0 0.0
      %v2012 = vand.u32 %v1169, 4294901760
      %v2013 = vsub.f32 %v1169, %v2012
      %v2014 = vand.u32 %v2013, 4294901760
      %v2015 = vsub.f32 %v2013, %v2014
      %v2016 = vand.u32 %v2015, 4294901760
      %2017 = vmatpush1.msra.mxu0 %v2016
      %2018 = vmatprep.subr.mxu0 0.0
      %v2019 = vand.u32 %v1170, 4294901760
      %v2020 = vsub.f32 %v1170, %v2019
      %v2021 = vand.u32 %v2020, 4294901760
      %v2022 = vsub.f32 %v2020, %v2021
      %v2023 = vand.u32 %v2022, 4294901760
      %2024 = vmatpush1.msra.mxu0 %v2023
      %2025 = vmatprep.subr.mxu0 0.0
      %v2026 = vand.u32 %v1171, 4294901760
      %v2027 = vsub.f32 %v1171, %v2026
      %v2028 = vand.u32 %v2027, 4294901760
      %v2029 = vsub.f32 %v2027, %v2028
      %v2030 = vand.u32 %v2029, 4294901760
      %2031 = vmatpush1.msra.mxu0 %v2030
      %2032 = vmatprep.subr.mxu0 0.0
      %2033 = vmatpush1.msra.mxu0 0.0
      %2034 = vmatprep.subr.mxu0 0.0
      %2035 = vmatpush1.msra.mxu0 0.0
      %2036 = vmatprep.subr.mxu0 0.0
      %2037 = vmatpush1.msra.mxu0 0.0
      %2038 = vmatprep.subr.mxu0 0.0
      %2039 = vmatpush1.msra.mxu0 0.0
      %2040 = vmatprep.subr.mxu0 0.0
      %2041 = vmatpush1.msra.mxu0 0.0
      %2042 = vmatprep.subr.mxu0 0.0
      %2043 = vmatpush1.msra.mxu0 0.0
      %2044 = vmatprep.subr.mxu0 0.0
      %2045 = vmatpush1.msra.mxu0 0.0
      %2046 = vmatprep.subr.mxu0 0.0
      %2047 = vmatpush1.msra.mxu0 0.0
      %2048 = vmatprep.subr.mxu0 0.0
      %2049 = vmatpush1.msra.mxu0 0.0
      %2050 = vmatprep.subr.mxu0 0.0
      %2051 = vmatpush1.msra.mxu0 0.0
      %2052 = vmatprep.subr.mxu0 0.0
      %2053 = vmatpush1.msra.mxu0 0.0
      %2054 = vmatprep.subr.mxu0 0.0
      %2055 = vmatpush1.msra.mxu0 0.0
      %2056 = vmatprep.subr.mxu0 0.0
      %2057 = vmatpush1.msra.mxu0 0.0
      %2058 = vmatprep.subr.mxu0 0.0
      %2059 = vmatpush1.msra.mxu0 0.0
      %2060 = vmatprep.subr.mxu0 0.0
      %2061 = vmatpush1.msra.mxu0 0.0
      %2062 = vmatprep.subr.mxu0 0.0
      %2063 = vmatpush1.msra.mxu0 0.0
      %2064 = vmatprep.subr.mxu0 0.0
      %2065 = vmatpush1.msra.mxu0 0.0
      %2066 = vmatprep.subr.mxu0 0.0
      %2067 = vmatpush1.msra.mxu0 0.0
      %2068 = vmatprep.subr.mxu0 0.0
      %2069 = vmatpush1.msra.mxu0 0.0
      %2070 = vmatprep.subr.mxu0 0.0
      %2071 = vmatpush1.msra.mxu0 0.0
      %2072 = vmatprep.subr.mxu0 0.0
      %2073 = vmatpush1.msra.mxu0 0.0
      %2074 = vmatprep.subr.mxu0 0.0
      %2075 = vmatpush1.msra.mxu0 0.0
      %2076 = vmatprep.subr.mxu0 0.0
      %2077 = vmatpush1.msra.mxu0 0.0
      %2078 = vmatprep.subr.mxu0 0.0
      %2079 = vmatpush1.msra.mxu0 0.0
      %2080 = vmatprep.mubr.f32.mxu0 0.0
      %v2081 = vand.u32 %v1852, 4294901760
      %2082 = vmatmul.mubr.f32.gmra.mrb[0].mxu0 %v2081
      %v2083 = vpop.f32.mrb[0].mxu0
      %v2084 = vadd.f32 %v1943, %v2083
      %v2085 = vpop.f32.mrb[0].mxu0
      %2086 = vmatprep.mubr.f32.mxu0 0.0
      %v2087 = vand.u32 %v1855, 4294901760
      %2088 = vmatmul.mubr.f32.gmra.mrb[0].mxu0 %v2087
      %v2089 = vpop.f32.mrb[0].mxu0
      %v2090 = vadd.f32 %v1953, %v2089
      %v2091 = vpop.f32.mrb[0].mxu0
      %2092 = vmatprep.mubr.f32.mxu0 0.0
      %v2093 = vand.u32 %v1858, 4294901760
      %2094 = vmatmul.mubr.f32.gmra.mrb[0].mxu0 %v2093
      %v2095 = vpop.f32.mrb[0].mxu0
      %v2096 = vadd.f32 %v1963, %v2095
      %v2097 = vpop.f32.mrb[0].mxu0
      %2098 = vmatprep.mubr.f32.mxu0 0.0
      %v2099 = vand.u32 %v1861, 4294901760
      %2100 = vmatmul.mubr.f32.gmra.mrb[0].mxu0 %v2099
      %v2101 = vpop.f32.mrb[0].mxu0
      %v2102 = vadd.f32 %v1973, %v2101
      %v2103 = vpop.f32.mrb[0].mxu0
      %2104 = vdwg.mxu0
      %2105 = vmatprep.subr.mxu0 0.0
      %v2106 = vand.u32 %v1164, 4294901760
      %v2107 = vsub.f32 %v1164, %v2106
      %2108 = vmatpush1.msra.mxu0 %v2107
      %2109 = vmatprep.subr.mxu0 0.0
      %v2110 = vand.u32 %v1165, 4294901760
      %v2111 = vsub.f32 %v1165, %v2110
      %2112 = vmatpush1.msra.mxu0 %v2111
      %2113 = vmatprep.subr.mxu0 0.0
      %v2114 = vand.u32 %v1166, 4294901760
      %v2115 = vsub.f32 %v1166, %v2114
      %2116 = vmatpush1.msra.mxu0 %v2115
      %2117 = vmatprep.subr.mxu0 0.0
      %v2118 = vand.u32 %v1167, 4294901760
      %v2119 = vsub.f32 %v1167, %v2118
      %2120 = vmatpush1.msra.mxu0 %v2119
      %2121 = vmatprep.subr.mxu0 0.0
      %v2122 = vand.u32 %v1168, 4294901760
      %v2123 = vsub.f32 %v1168, %v2122
      %2124 = vmatpush1.msra.mxu0 %v2123
      %2125 = vmatprep.subr.mxu0 0.0
      %v2126 = vand.u32 %v1169, 4294901760
      %v2127 = vsub.f32 %v1169, %v2126
      %2128 = vmatpush1.msra.mxu0 %v2127
      %2129 = vmatprep.subr.mxu0 0.0
      %v2130 = vand.u32 %v1170, 4294901760
      %v2131 = vsub.f32 %v1170, %v2130
      %2132 = vmatpush1.msra.mxu0 %v2131
      %2133 = vmatprep.subr.mxu0 0.0
      %v2134 = vand.u32 %v1171, 4294901760
      %v2135 = vsub.f32 %v1171, %v2134
      %2136 = vmatpush1.msra.mxu0 %v2135
      %2137 = vmatprep.subr.mxu0 0.0
      %2138 = vmatpush1.msra.mxu0 0.0
      %2139 = vmatprep.subr.mxu0 0.0
      %2140 = vmatpush1.msra.mxu0 0.0
      %2141 = vmatprep.subr.mxu0 0.0
      %2142 = vmatpush1.msra.mxu0 0.0
      %2143 = vmatprep.subr.mxu0 0.0
      %2144 = vmatpush1.msra.mxu0 0.0
      %2145 = vmatprep.subr.mxu0 0.0
      %2146 = vmatpush1.msra.mxu0 0.0
      %2147 = vmatprep.subr.mxu0 0.0
      %2148 = vmatpush1.msra.mxu0 0.0
      %2149 = vmatprep.subr.mxu0 0.0
      %2150 = vmatpush1.msra.mxu0 0.0
      %2151 = vmatprep.subr.mxu0 0.0
      %2152 = vmatpush1.msra.mxu0 0.0
      %2153 = vmatprep.subr.mxu0 0.0
      %2154 = vmatpush1.msra.mxu0 0.0
      %2155 = vmatprep.subr.mxu0 0.0
      %2156 = vmatpush1.msra.mxu0 0.0
      %2157 = vmatprep.subr.mxu0 0.0
      %2158 = vmatpush1.msra.mxu0 0.0
      %2159 = vmatprep.subr.mxu0 0.0
      %2160 = vmatpush1.msra.mxu0 0.0
      %2161 = vmatprep.subr.mxu0 0.0
      %2162 = vmatpush1.msra.mxu0 0.0
      %2163 = vmatprep.subr.mxu0 0.0
      %2164 = vmatpush1.msra.mxu0 0.0
      %2165 = vmatprep.subr.mxu0 0.0
      %2166 = vmatpush1.msra.mxu0 0.0
      %2167 = vmatprep.subr.mxu0 0.0
      %2168 = vmatpush1.msra.mxu0 0.0
      %2169 = vmatprep.subr.mxu0 0.0
      %2170 = vmatpush1.msra.mxu0 0.0
      %2171 = vmatprep.subr.mxu0 0.0
      %2172 = vmatpush1.msra.mxu0 0.0
      %2173 = vmatprep.subr.mxu0 0.0
      %2174 = vmatpush1.msra.mxu0 0.0
      %2175 = vmatprep.subr.mxu0 0.0
      %2176 = vmatpush1.msra.mxu0 0.0
      %2177 = vmatprep.subr.mxu0 0.0
      %2178 = vmatpush1.msra.mxu0 0.0
      %2179 = vmatprep.subr.mxu0 0.0
      %2180 = vmatpush1.msra.mxu0 0.0
      %2181 = vmatprep.subr.mxu0 0.0
      %2182 = vmatpush1.msra.mxu0 0.0
      %2183 = vmatprep.subr.mxu0 0.0
      %2184 = vmatpush1.msra.mxu0 0.0
      %2185 = vmatprep.mubr.f32.mxu0 0.0
      %v2186 = vand.u32 %v1852, 4294901760
      %v2187 = vsub.f32 %v1852, %v2186
      %2188 = vmatmul.mubr.f32.gmra.mrb[0].mxu0 %v2187
      %v2189 = vpop.f32.mrb[0].mxu0
      %v2190 = vadd.f32 %v2084, %v2189
      %v2191 = vpop.f32.mrb[0].mxu0
      %2192 = vmatprep.mubr.f32.mxu0 0.0
      %v2193 = vand.u32 %v1855, 4294901760
      %v2194 = vsub.f32 %v1855, %v2193
      %2195 = vmatmul.mubr.f32.gmra.mrb[0].mxu0 %v2194
      %v2196 = vpop.f32.mrb[0].mxu0
      %v2197 = vadd.f32 %v2090, %v2196
      %v2198 = vpop.f32.mrb[0].mxu0
      %2199 = vmatprep.mubr.f32.mxu0 0.0
      %v2200 = vand.u32 %v1858, 4294901760
      %v2201 = vsub.f32 %v1858, %v2200
      %2202 = vmatmul.mubr.f32.gmra.mrb[0].mxu0 %v2201
      %v2203 = vpop.f32.mrb[0].mxu0
      %v2204 = vadd.f32 %v2096, %v2203
      %v2205 = vpop.f32.mrb[0].mxu0
      %2206 = vmatprep.mubr.f32.mxu0 0.0
      %v2207 = vand.u32 %v1861, 4294901760
      %v2208 = vsub.f32 %v1861, %v2207
      %2209 = vmatmul.mubr.f32.gmra.mrb[0].mxu0 %v2208
      %v2210 = vpop.f32.mrb[0].mxu0
      %v2211 = vadd.f32 %v2102, %v2210
      %v2212 = vpop.f32.mrb[0].mxu0
      %2213 = vdwg.mxu0
      %2214 = vmatprep.subr.mxu0 0.0
      %v2215 = vand.u32 %v1164, 4294901760
      %2216 = vmatpush1.msra.mxu0 %v2215
      %2217 = vmatprep.subr.mxu0 0.0
      %v2218 = vand.u32 %v1165, 4294901760
      %2219 = vmatpush1.msra.mxu0 %v2218
      %2220 = vmatprep.subr.mxu0 0.0
      %v2221 = vand.u32 %v1166, 4294901760
      %2222 = vmatpush1.msra.mxu0 %v2221
      %2223 = vmatprep.subr.mxu0 0.0
      %v2224 = vand.u32 %v1167, 4294901760
      %2225 = vmatpush1.msra.mxu0 %v2224
      %2226 = vmatprep.subr.mxu0 0.0
      %v2227 = vand.u32 %v1168, 4294901760
      %2228 = vmatpush1.msra.mxu0 %v2227
      %2229 = vmatprep.subr.mxu0 0.0
      %v2230 = vand.u32 %v1169, 4294901760
      %2231 = vmatpush1.msra.mxu0 %v2230
      %2232 = vmatprep.subr.mxu0 0.0
      %v2233 = vand.u32 %v1170, 4294901760
      %2234 = vmatpush1.msra.mxu0 %v2233
      %2235 = vmatprep.subr.mxu0 0.0
      %v2236 = vand.u32 %v1171, 4294901760
      %2237 = vmatpush1.msra.mxu0 %v2236
      %2238 = vmatprep.subr.mxu0 0.0
      %2239 = vmatpush1.msra.mxu0 0.0
      %2240 = vmatprep.subr.mxu0 0.0
      %2241 = vmatpush1.msra.mxu0 0.0
      %2242 = vmatprep.subr.mxu0 0.0
      %2243 = vmatpush1.msra.mxu0 0.0
      %2244 = vmatprep.subr.mxu0 0.0
      %2245 = vmatpush1.msra.mxu0 0.0
      %2246 = vmatprep.subr.mxu0 0.0
      %2247 = vmatpush1.msra.mxu0 0.0
      %2248 = vmatprep.subr.mxu0 0.0
      %2249 = vmatpush1.msra.mxu0 0.0
      %2250 = vmatprep.subr.mxu0 0.0
      %2251 = vmatpush1.msra.mxu0 0.0
      %2252 = vmatprep.subr.mxu0 0.0
      %2253 = vmatpush1.msra.mxu0 0.0
      %2254 = vmatprep.subr.mxu0 0.0
      %2255 = vmatpush1.msra.mxu0 0.0
      %2256 = vmatprep.subr.mxu0 0.0
      %2257 = vmatpush1.msra.mxu0 0.0
      %2258 = vmatprep.subr.mxu0 0.0
      %2259 = vmatpush1.msra.mxu0 0.0
      %2260 = vmatprep.subr.mxu0 0.0
      %2261 = vmatpush1.msra.mxu0 0.0
      %2262 = vmatprep.subr.mxu0 0.0
      %2263 = vmatpush1.msra.mxu0 0.0
      %2264 = vmatprep.subr.mxu0 0.0
      %2265 = vmatpush1.msra.mxu0 0.0
      %2266 = vmatprep.subr.mxu0 0.0
      %2267 = vmatpush1.msra.mxu0 0.0
      %2268 = vmatprep.subr.mxu0 0.0
      %2269 = vmatpush1.msra.mxu0 0.0
      %2270 = vmatprep.subr.mxu0 0.0
      %2271 = vmatpush1.msra.mxu0 0.0
      %2272 = vmatprep.subr.mxu0 0.0
      %2273 = vmatpush1.msra.mxu0 0.0
      %2274 = vmatprep.subr.mxu0 0.0
      %2275 = vmatpush1.msra.mxu0 0.0
      %2276 = vmatprep.subr.mxu0 0.0
      %2277 = vmatpush1.msra.mxu0 0.0
      %2278 = vmatprep.subr.mxu0 0.0
      %2279 = vmatpush1.msra.mxu0 0.0
      %2280 = vmatprep.subr.mxu0 0.0
      %2281 = vmatpush1.msra.mxu0 0.0
      %2282 = vmatprep.subr.mxu0 0.0
      %2283 = vmatpush1.msra.mxu0 0.0
      %2284 = vmatprep.subr.mxu0 0.0
      %2285 = vmatpush1.msra.mxu0 0.0
      %2286 = vmatprep.mubr.f32.mxu0 0.0
      %v2287 = vand.u32 %v1852, 4294901760
      %v2288 = vsub.f32 %v1852, %v2287
      %v2289 = vand.u32 %v2288, 4294901760
      %2290 = vmatmul.mubr.f32.gmra.mrb[0].mxu0 %v2289
      %v2291 = vpop.f32.mrb[0].mxu0
      %v2292 = vadd.f32 %v2190, %v2291
      %v2293 = vpop.f32.mrb[0].mxu0
      %2294 = vmatprep.mubr.f32.mxu0 0.0
      %v2295 = vand.u32 %v1855, 4294901760
      %v2296 = vsub.f32 %v1855, %v2295
      %v2297 = vand.u32 %v2296, 4294901760
      %2298 = vmatmul.mubr.f32.gmra.mrb[0].mxu0 %v2297
      %v2299 = vpop.f32.mrb[0].mxu0
      %v2300 = vadd.f32 %v2197, %v2299
      %v2301 = vpop.f32.mrb[0].mxu0
      %2302 = vmatprep.mubr.f32.mxu0 0.0
      %v2303 = vand.u32 %v1858, 4294901760
      %v2304 = vsub.f32 %v1858, %v2303
      %v2305 = vand.u32 %v2304, 4294901760
      %2306 = vmatmul.mubr.f32.gmra.mrb[0].mxu0 %v2305
      %v2307 = vpop.f32.mrb[0].mxu0
      %v2308 = vadd.f32 %v2204, %v2307
      %v2309 = vpop.f32.mrb[0].mxu0
      %2310 = vmatprep.mubr.f32.mxu0 0.0
      %v2311 = vand.u32 %v1861, 4294901760
      %v2312 = vsub.f32 %v1861, %v2311
      %v2313 = vand.u32 %v2312, 4294901760
      %2314 = vmatmul.mubr.f32.gmra.mrb[0].mxu0 %v2313
      %v2315 = vpop.f32.mrb[0].mxu0
      %v2316 = vadd.f32 %v2211, %v2315
      %v2317 = vpop.f32.mrb[0].mxu0
      %2318 = vdwg.mxu0
      %2319 = vmatprep.subr.mxu0 0.0
      %v2320 = vand.u32 %v1164, 4294901760
      %v2321 = vsub.f32 %v1164, %v2320
      %v2322 = vand.u32 %v2321, 4294901760
      %2323 = vmatpush1.msra.mxu0 %v2322
      %2324 = vmatprep.subr.mxu0 0.0
      %v2325 = vand.u32 %v1165, 4294901760
      %v2326 = vsub.f32 %v1165, %v2325
      %v2327 = vand.u32 %v2326, 4294901760
      %2328 = vmatpush1.msra.mxu0 %v2327
      %2329 = vmatprep.subr.mxu0 0.0
      %v2330 = vand.u32 %v1166, 4294901760
      %v2331 = vsub.f32 %v1166, %v2330
      %v2332 = vand.u32 %v2331, 4294901760
      %2333 = vmatpush1.msra.mxu0 %v2332
      %2334 = vmatprep.subr.mxu0 0.0
      %v2335 = vand.u32 %v1167, 4294901760
      %v2336 = vsub.f32 %v1167, %v2335
      %v2337 = vand.u32 %v2336, 4294901760
      %2338 = vmatpush1.msra.mxu0 %v2337
      %2339 = vmatprep.subr.mxu0 0.0
      %v2340 = vand.u32 %v1168, 4294901760
      %v2341 = vsub.f32 %v1168, %v2340
      %v2342 = vand.u32 %v2341, 4294901760
      %2343 = vmatpush1.msra.mxu0 %v2342
      %2344 = vmatprep.subr.mxu0 0.0
      %v2345 = vand.u32 %v1169, 4294901760
      %v2346 = vsub.f32 %v1169, %v2345
      %v2347 = vand.u32 %v2346, 4294901760
      %2348 = vmatpush1.msra.mxu0 %v2347
      %2349 = vmatprep.subr.mxu0 0.0
      %v2350 = vand.u32 %v1170, 4294901760
      %v2351 = vsub.f32 %v1170, %v2350
      %v2352 = vand.u32 %v2351, 4294901760
      %2353 = vmatpush1.msra.mxu0 %v2352
      %2354 = vmatprep.subr.mxu0 0.0
      %v2355 = vand.u32 %v1171, 4294901760
      %v2356 = vsub.f32 %v1171, %v2355
      %v2357 = vand.u32 %v2356, 4294901760
      %2358 = vmatpush1.msra.mxu0 %v2357
      %2359 = vmatprep.subr.mxu0 0.0
      %2360 = vmatpush1.msra.mxu0 0.0
      %2361 = vmatprep.subr.mxu0 0.0
      %2362 = vmatpush1.msra.mxu0 0.0
      %2363 = vmatprep.subr.mxu0 0.0
      %2364 = vmatpush1.msra.mxu0 0.0
      %2365 = vmatprep.subr.mxu0 0.0
      %2366 = vmatpush1.msra.mxu0 0.0
      %2367 = vmatprep.subr.mxu0 0.0
      %2368 = vmatpush1.msra.mxu0 0.0
      %2369 = vmatprep.subr.mxu0 0.0
      %2370 = vmatpush1.msra.mxu0 0.0
      %2371 = vmatprep.subr.mxu0 0.0
      %2372 = vmatpush1.msra.mxu0 0.0
      %2373 = vmatprep.subr.mxu0 0.0
      %2374 = vmatpush1.msra.mxu0 0.0
      %2375 = vmatprep.subr.mxu0 0.0
      %2376 = vmatpush1.msra.mxu0 0.0
      %2377 = vmatprep.subr.mxu0 0.0
      %2378 = vmatpush1.msra.mxu0 0.0
      %2379 = vmatprep.subr.mxu0 0.0
      %2380 = vmatpush1.msra.mxu0 0.0
      %2381 = vmatprep.subr.mxu0 0.0
      %2382 = vmatpush1.msra.mxu0 0.0
      %2383 = vmatprep.subr.mxu0 0.0
      %2384 = vmatpush1.msra.mxu0 0.0
      %2385 = vmatprep.subr.mxu0 0.0
      %2386 = vmatpush1.msra.mxu0 0.0
      %2387 = vmatprep.subr.mxu0 0.0
      %2388 = vmatpush1.msra.mxu0 0.0
      %2389 = vmatprep.subr.mxu0 0.0
      %2390 = vmatpush1.msra.mxu0 0.0
      %2391 = vmatprep.subr.mxu0 0.0
      %2392 = vmatpush1.msra.mxu0 0.0
      %2393 = vmatprep.subr.mxu0 0.0
      %2394 = vmatpush1.msra.mxu0 0.0
      %2395 = vmatprep.subr.mxu0 0.0
      %2396 = vmatpush1.msra.mxu0 0.0
      %2397 = vmatprep.subr.mxu0 0.0
      %2398 = vmatpush1.msra.mxu0 0.0
      %2399 = vmatprep.subr.mxu0 0.0
      %2400 = vmatpush1.msra.mxu0 0.0
      %2401 = vmatprep.subr.mxu0 0.0
      %2402 = vmatpush1.msra.mxu0 0.0
      %2403 = vmatprep.subr.mxu0 0.0
      %2404 = vmatpush1.msra.mxu0 0.0
      %2405 = vmatprep.subr.mxu0 0.0
      %2406 = vmatpush1.msra.mxu0 0.0
      %2407 = vmatprep.mubr.f32.mxu0 0.0
      %v2408 = vand.u32 %v1852, 4294901760
      %2409 = vmatmul.mubr.f32.gmra.mrb[0].mxu0 %v2408
      %v2410 = vpop.f32.mrb[0].mxu0
      %v2411 = vadd.f32 %v2292, %v2410
      %v2412 = vpop.f32.mrb[0].mxu0
      %2413 = vmatprep.mubr.f32.mxu0 0.0
      %v2414 = vand.u32 %v1855, 4294901760
      %2415 = vmatmul.mubr.f32.gmra.mrb[0].mxu0 %v2414
      %v2416 = vpop.f32.mrb[0].mxu0
      %v2417 = vadd.f32 %v2300, %v2416
      %v2418 = vpop.f32.mrb[0].mxu0
      %2419 = vmatprep.mubr.f32.mxu0 0.0
      %v2420 = vand.u32 %v1858, 4294901760
      %2421 = vmatmul.mubr.f32.gmra.mrb[0].mxu0 %v2420
      %v2422 = vpop.f32.mrb[0].mxu0
      %v2423 = vadd.f32 %v2308, %v2422
      %v2424 = vpop.f32.mrb[0].mxu0
      %2425 = vmatprep.mubr.f32.mxu0 0.0
      %v2426 = vand.u32 %v1861, 4294901760
      %2427 = vmatmul.mubr.f32.gmra.mrb[0].mxu0 %v2426
      %v2428 = vpop.f32.mrb[0].mxu0
      %v2429 = vadd.f32 %v2316, %v2428
      %v2430 = vpop.f32.mrb[0].mxu0
      %2431 = vdwg.mxu0
      %2432 = vmatprep.subr.mxu0 0.0
      %v2433 = vand.u32 %v1164, 4294901760
      %2434 = vmatpush1.msra.mxu0 %v2433
      %2435 = vmatprep.subr.mxu0 0.0
      %v2436 = vand.u32 %v1165, 4294901760
      %2437 = vmatpush1.msra.mxu0 %v2436
      %2438 = vmatprep.subr.mxu0 0.0
      %v2439 = vand.u32 %v1166, 4294901760
      %2440 = vmatpush1.msra.mxu0 %v2439
      %2441 = vmatprep.subr.mxu0 0.0
      %v2442 = vand.u32 %v1167, 4294901760
      %2443 = vmatpush1.msra.mxu0 %v2442
      %2444 = vmatprep.subr.mxu0 0.0
      %v2445 = vand.u32 %v1168, 4294901760
      %2446 = vmatpush1.msra.mxu0 %v2445
      %2447 = vmatprep.subr.mxu0 0.0
      %v2448 = vand.u32 %v1169, 4294901760
      %2449 = vmatpush1.msra.mxu0 %v2448
      %2450 = vmatprep.subr.mxu0 0.0
      %v2451 = vand.u32 %v1170, 4294901760
      %2452 = vmatpush1.msra.mxu0 %v2451
      %2453 = vmatprep.subr.mxu0 0.0
      %v2454 = vand.u32 %v1171, 4294901760
      %2455 = vmatpush1.msra.mxu0 %v2454
      %2456 = vmatprep.subr.mxu0 0.0
      %2457 = vmatpush1.msra.mxu0 0.0
      %2458 = vmatprep.subr.mxu0 0.0
      %2459 = vmatpush1.msra.mxu0 0.0
      %2460 = vmatprep.subr.mxu0 0.0
      %2461 = vmatpush1.msra.mxu0 0.0
      %2462 = vmatprep.subr.mxu0 0.0
      %2463 = vmatpush1.msra.mxu0 0.0
      %2464 = vmatprep.subr.mxu0 0.0
      %2465 = vmatpush1.msra.mxu0 0.0
      %2466 = vmatprep.subr.mxu0 0.0
      %2467 = vmatpush1.msra.mxu0 0.0
      %2468 = vmatprep.subr.mxu0 0.0
      %2469 = vmatpush1.msra.mxu0 0.0
      %2470 = vmatprep.subr.mxu0 0.0
      %2471 = vmatpush1.msra.mxu0 0.0
      %2472 = vmatprep.subr.mxu0 0.0
      %2473 = vmatpush1.msra.mxu0 0.0
      %2474 = vmatprep.subr.mxu0 0.0
      %2475 = vmatpush1.msra.mxu0 0.0
      %2476 = vmatprep.subr.mxu0 0.0
      %2477 = vmatpush1.msra.mxu0 0.0
      %2478 = vmatprep.subr.mxu0 0.0
      %2479 = vmatpush1.msra.mxu0 0.0
      %2480 = vmatprep.subr.mxu0 0.0
      %2481 = vmatpush1.msra.mxu0 0.0
      %2482 = vmatprep.subr.mxu0 0.0
      %2483 = vmatpush1.msra.mxu0 0.0
      %2484 = vmatprep.subr.mxu0 0.0
      %2485 = vmatpush1.msra.mxu0 0.0
      %2486 = vmatprep.subr.mxu0 0.0
      %2487 = vmatpush1.msra.mxu0 0.0
      %2488 = vmatprep.subr.mxu0 0.0
      %2489 = vmatpush1.msra.mxu0 0.0
      %2490 = vmatprep.subr.mxu0 0.0
      %2491 = vmatpush1.msra.mxu0 0.0
      %2492 = vmatprep.subr.mxu0 0.0
      %2493 = vmatpush1.msra.mxu0 0.0
      %2494 = vmatprep.subr.mxu0 0.0
      %2495 = vmatpush1.msra.mxu0 0.0
      %2496 = vmatprep.subr.mxu0 0.0
      %2497 = vmatpush1.msra.mxu0 0.0
      %2498 = vmatprep.subr.mxu0 0.0
      %2499 = vmatpush1.msra.mxu0 0.0
      %2500 = vmatprep.subr.mxu0 0.0
      %2501 = vmatpush1.msra.mxu0 0.0
      %2502 = vmatprep.subr.mxu0 0.0
      %2503 = vmatpush1.msra.mxu0 0.0
      %2504 = vmatprep.mubr.f32.mxu0 0.0
      %v2505 = vand.u32 %v1852, 4294901760
      %2506 = vmatmul.mubr.f32.gmra.mrb[0].mxu0 %v2505
      %v2507 = vpop.f32.mrb[0].mxu0
      %v2508 = vadd.f32 %v2411, %v2507
      %v2509 = vpop.f32.mrb[0].mxu0
      %2510 = vmatprep.mubr.f32.mxu0 0.0
      %v2511 = vand.u32 %v1855, 4294901760
      %2512 = vmatmul.mubr.f32.gmra.mrb[0].mxu0 %v2511
      %v2513 = vpop.f32.mrb[0].mxu0
      %v2514 = vadd.f32 %v2417, %v2513
      %v2515 = vpop.f32.mrb[0].mxu0
      %2516 = vmatprep.mubr.f32.mxu0 0.0
      %v2517 = vand.u32 %v1858, 4294901760
      %2518 = vmatmul.mubr.f32.gmra.mrb[0].mxu0 %v2517
      %v2519 = vpop.f32.mrb[0].mxu0
      %v2520 = vadd.f32 %v2423, %v2519
      %v2521 = vpop.f32.mrb[0].mxu0
      %2522 = vmatprep.mubr.f32.mxu0 0.0
      %v2523 = vand.u32 %v1861, 4294901760
      %2524 = vmatmul.mubr.f32.gmra.mrb[0].mxu0 %v2523
      %v2525 = vpop.f32.mrb[0].mxu0
      %v2526 = vadd.f32 %v2429, %v2525
      %v2527 = vpop.f32.mrb[0].mxu0
      %2528 = vdwg.mxu0
      %v2529 = vmul.f32 %v2508, 0.25
      %v2530 = vmul.f32 %v2514, 0.25
      %v2531 = vmul.f32 %v2520, 0.25
      %v2532 = vmul.f32 %v2526, 0.25
      %2533 = vmatprep.subr.mxu0 0.0
      %v2534 = vand.u32 %v170, 4294901760
      %2535 = vmatpush1.msra.mxu0 %v2534
      %2536 = vmatprep.subr.mxu0 0.0
      %v2537 = vand.u32 %v171, 4294901760
      %2538 = vmatpush1.msra.mxu0 %v2537
      %2539 = vmatprep.subr.mxu0 0.0
      %v2540 = vand.u32 %v172, 4294901760
      %2541 = vmatpush1.msra.mxu0 %v2540
      %2542 = vmatprep.subr.mxu0 0.0
      %v2543 = vand.u32 %v173, 4294901760
      %2544 = vmatpush1.msra.mxu0 %v2543
      %2545 = vmatprep.subr.mxu0 0.0
      %v2546 = vand.u32 %v174, 4294901760
      %2547 = vmatpush1.msra.mxu0 %v2546
      %2548 = vmatprep.subr.mxu0 0.0
      %v2549 = vand.u32 %v175, 4294901760
      %2550 = vmatpush1.msra.mxu0 %v2549
      %2551 = vmatprep.subr.mxu0 0.0
      %v2552 = vand.u32 %v176, 4294901760
      %2553 = vmatpush1.msra.mxu0 %v2552
      %2554 = vmatprep.subr.mxu0 0.0
      %v2555 = vand.u32 %v177, 4294901760
      %2556 = vmatpush1.msra.mxu0 %v2555
      %2557 = vmatprep.subr.mxu0 0.0
      %2558 = vmatpush1.msra.mxu0 0.0
      %2559 = vmatprep.subr.mxu0 0.0
      %2560 = vmatpush1.msra.mxu0 0.0
      %2561 = vmatprep.subr.mxu0 0.0
      %2562 = vmatpush1.msra.mxu0 0.0
      %2563 = vmatprep.subr.mxu0 0.0
      %2564 = vmatpush1.msra.mxu0 0.0
      %2565 = vmatprep.subr.mxu0 0.0
      %2566 = vmatpush1.msra.mxu0 0.0
      %2567 = vmatprep.subr.mxu0 0.0
      %2568 = vmatpush1.msra.mxu0 0.0
      %2569 = vmatprep.subr.mxu0 0.0
      %2570 = vmatpush1.msra.mxu0 0.0
      %2571 = vmatprep.subr.mxu0 0.0
      %2572 = vmatpush1.msra.mxu0 0.0
      %2573 = vmatprep.subr.mxu0 0.0
      %2574 = vmatpush1.msra.mxu0 0.0
      %2575 = vmatprep.subr.mxu0 0.0
      %2576 = vmatpush1.msra.mxu0 0.0
      %2577 = vmatprep.subr.mxu0 0.0
      %2578 = vmatpush1.msra.mxu0 0.0
      %2579 = vmatprep.subr.mxu0 0.0
      %2580 = vmatpush1.msra.mxu0 0.0
      %2581 = vmatprep.subr.mxu0 0.0
      %2582 = vmatpush1.msra.mxu0 0.0
      %2583 = vmatprep.subr.mxu0 0.0
      %2584 = vmatpush1.msra.mxu0 0.0
      %2585 = vmatprep.subr.mxu0 0.0
      %2586 = vmatpush1.msra.mxu0 0.0
      %2587 = vmatprep.subr.mxu0 0.0
      %2588 = vmatpush1.msra.mxu0 0.0
      %2589 = vmatprep.subr.mxu0 0.0
      %2590 = vmatpush1.msra.mxu0 0.0
      %2591 = vmatprep.subr.mxu0 0.0
      %2592 = vmatpush1.msra.mxu0 0.0
      %2593 = vmatprep.subr.mxu0 0.0
      %2594 = vmatpush1.msra.mxu0 0.0
      %2595 = vmatprep.subr.mxu0 0.0
      %2596 = vmatpush1.msra.mxu0 0.0
      %2597 = vmatprep.subr.mxu0 0.0
      %2598 = vmatpush1.msra.mxu0 0.0
      %2599 = vmatprep.subr.mxu0 0.0
      %2600 = vmatpush1.msra.mxu0 0.0
      %2601 = vmatprep.subr.mxu0 0.0
      %2602 = vmatpush1.msra.mxu0 0.0
      %2603 = vmatprep.subr.mxu0 0.0
      %2604 = vmatpush1.msra.mxu0 0.0
      %2605 = vmatprep.mubr.f32.mxu0 0.0
      %v2606 = vand.u32 %v1174, 4294901760
      %v2607 = vsub.f32 %v1174, %v2606
      %v2608 = vand.u32 %v2607, 4294901760
      %v2609 = vsub.f32 %v2607, %v2608
      %v2610 = vand.u32 %v2609, 4294901760
      %2611 = vmatmul.mubr.f32.gmra.mrb[0].mxu0 %v2610
      %v2612 = vpop.f32.mrb[0].mxu0
      %v2613 = vadd.f32 0.0, %v2612
      %v2614 = vpop.f32.mrb[0].mxu0
      %2615 = vmatprep.mubr.f32.mxu0 0.0
      %v2616 = vand.u32 %v1177, 4294901760
      %v2617 = vsub.f32 %v1177, %v2616
      %v2618 = vand.u32 %v2617, 4294901760
      %v2619 = vsub.f32 %v2617, %v2618
      %v2620 = vand.u32 %v2619, 4294901760
      %2621 = vmatmul.mubr.f32.gmra.mrb[0].mxu0 %v2620
      %v2622 = vpop.f32.mrb[0].mxu0
      %v2623 = vadd.f32 0.0, %v2622
      %v2624 = vpop.f32.mrb[0].mxu0
      %2625 = vmatprep.mubr.f32.mxu0 0.0
      %v2626 = vand.u32 %v1180, 4294901760
      %v2627 = vsub.f32 %v1180, %v2626
      %v2628 = vand.u32 %v2627, 4294901760
      %v2629 = vsub.f32 %v2627, %v2628
      %v2630 = vand.u32 %v2629, 4294901760
      %2631 = vmatmul.mubr.f32.gmra.mrb[0].mxu0 %v2630
      %v2632 = vpop.f32.mrb[0].mxu0
      %v2633 = vadd.f32 0.0, %v2632
      %v2634 = vpop.f32.mrb[0].mxu0
      %2635 = vmatprep.mubr.f32.mxu0 0.0
      %v2636 = vand.u32 %v1183, 4294901760
      %v2637 = vsub.f32 %v1183, %v2636
      %v2638 = vand.u32 %v2637, 4294901760
      %v2639 = vsub.f32 %v2637, %v2638
      %v2640 = vand.u32 %v2639, 4294901760
      %2641 = vmatmul.mubr.f32.gmra.mrb[0].mxu0 %v2640
      %v2642 = vpop.f32.mrb[0].mxu0
      %v2643 = vadd.f32 0.0, %v2642
      %v2644 = vpop.f32.mrb[0].mxu0
      %2645 = vdwg.mxu0
      %2646 = vmatprep.subr.mxu0 0.0
      %v2647 = vand.u32 %v170, 4294901760
      %v2648 = vsub.f32 %v170, %v2647
      %v2649 = vand.u32 %v2648, 4294901760
      %v2650 = vsub.f32 %v2648, %v2649
      %v2651 = vand.u32 %v2650, 4294901760
      %2652 = vmatpush1.msra.mxu0 %v2651
      %2653 = vmatprep.subr.mxu0 0.0
      %v2654 = vand.u32 %v171, 4294901760
      %v2655 = vsub.f32 %v171, %v2654
      %v2656 = vand.u32 %v2655, 4294901760
      %v2657 = vsub.f32 %v2655, %v2656
      %v2658 = vand.u32 %v2657, 4294901760
      %2659 = vmatpush1.msra.mxu0 %v2658
      %2660 = vmatprep.subr.mxu0 0.0
      %v2661 = vand.u32 %v172, 4294901760
      %v2662 = vsub.f32 %v172, %v2661
      %v2663 = vand.u32 %v2662, 4294901760
      %v2664 = vsub.f32 %v2662, %v2663
      %v2665 = vand.u32 %v2664, 4294901760
      %2666 = vmatpush1.msra.mxu0 %v2665
      %2667 = vmatprep.subr.mxu0 0.0
      %v2668 = vand.u32 %v173, 4294901760
      %v2669 = vsub.f32 %v173, %v2668
      %v2670 = vand.u32 %v2669, 4294901760
      %v2671 = vsub.f32 %v2669, %v2670
      %v2672 = vand.u32 %v2671, 4294901760
      %2673 = vmatpush1.msra.mxu0 %v2672
      %2674 = vmatprep.subr.mxu0 0.0
      %v2675 = vand.u32 %v174, 4294901760
      %v2676 = vsub.f32 %v174, %v2675
      %v2677 = vand.u32 %v2676, 4294901760
      %v2678 = vsub.f32 %v2676, %v2677
      %v2679 = vand.u32 %v2678, 4294901760
      %2680 = vmatpush1.msra.mxu0 %v2679
      %2681 = vmatprep.subr.mxu0 0.0
      %v2682 = vand.u32 %v175, 4294901760
      %v2683 = vsub.f32 %v175, %v2682
      %v2684 = vand.u32 %v2683, 4294901760
      %v2685 = vsub.f32 %v2683, %v2684
      %v2686 = vand.u32 %v2685, 4294901760
      %2687 = vmatpush1.msra.mxu0 %v2686
      %2688 = vmatprep.subr.mxu0 0.0
      %v2689 = vand.u32 %v176, 4294901760
      %v2690 = vsub.f32 %v176, %v2689
      %v2691 = vand.u32 %v2690, 4294901760
      %v2692 = vsub.f32 %v2690, %v2691
      %v2693 = vand.u32 %v2692, 4294901760
      %2694 = vmatpush1.msra.mxu0 %v2693
      %2695 = vmatprep.subr.mxu0 0.0
      %v2696 = vand.u32 %v177, 4294901760
      %v2697 = vsub.f32 %v177, %v2696
      %v2698 = vand.u32 %v2697, 4294901760
      %v2699 = vsub.f32 %v2697, %v2698
      %v2700 = vand.u32 %v2699, 4294901760
      %2701 = vmatpush1.msra.mxu0 %v2700
      %2702 = vmatprep.subr.mxu0 0.0
      %2703 = vmatpush1.msra.mxu0 0.0
      %2704 = vmatprep.subr.mxu0 0.0
      %2705 = vmatpush1.msra.mxu0 0.0
      %2706 = vmatprep.subr.mxu0 0.0
      %2707 = vmatpush1.msra.mxu0 0.0
      %2708 = vmatprep.subr.mxu0 0.0
      %2709 = vmatpush1.msra.mxu0 0.0
      %2710 = vmatprep.subr.mxu0 0.0
      %2711 = vmatpush1.msra.mxu0 0.0
      %2712 = vmatprep.subr.mxu0 0.0
      %2713 = vmatpush1.msra.mxu0 0.0
      %2714 = vmatprep.subr.mxu0 0.0
      %2715 = vmatpush1.msra.mxu0 0.0
      %2716 = vmatprep.subr.mxu0 0.0
      %2717 = vmatpush1.msra.mxu0 0.0
      %2718 = vmatprep.subr.mxu0 0.0
      %2719 = vmatpush1.msra.mxu0 0.0
      %2720 = vmatprep.subr.mxu0 0.0
      %2721 = vmatpush1.msra.mxu0 0.0
      %2722 = vmatprep.subr.mxu0 0.0
      %2723 = vmatpush1.msra.mxu0 0.0
      %2724 = vmatprep.subr.mxu0 0.0
      %2725 = vmatpush1.msra.mxu0 0.0
      %2726 = vmatprep.subr.mxu0 0.0
      %2727 = vmatpush1.msra.mxu0 0.0
      %2728 = vmatprep.subr.mxu0 0.0
      %2729 = vmatpush1.msra.mxu0 0.0
      %2730 = vmatprep.subr.mxu0 0.0
      %2731 = vmatpush1.msra.mxu0 0.0
      %2732 = vmatprep.subr.mxu0 0.0
      %2733 = vmatpush1.msra.mxu0 0.0
      %2734 = vmatprep.subr.mxu0 0.0
      %2735 = vmatpush1.msra.mxu0 0.0
      %2736 = vmatprep.subr.mxu0 0.0
      %2737 = vmatpush1.msra.mxu0 0.0
      %2738 = vmatprep.subr.mxu0 0.0
      %2739 = vmatpush1.msra.mxu0 0.0
      %2740 = vmatprep.subr.mxu0 0.0
      %2741 = vmatpush1.msra.mxu0 0.0
      %2742 = vmatprep.subr.mxu0 0.0
      %2743 = vmatpush1.msra.mxu0 0.0
      %2744 = vmatprep.subr.mxu0 0.0
      %2745 = vmatpush1.msra.mxu0 0.0
      %2746 = vmatprep.subr.mxu0 0.0
      %2747 = vmatpush1.msra.mxu0 0.0
      %2748 = vmatprep.subr.mxu0 0.0
      %2749 = vmatpush1.msra.mxu0 0.0
      %2750 = vmatprep.mubr.f32.mxu0 0.0
      %v2751 = vand.u32 %v1174, 4294901760
      %2752 = vmatmul.mubr.f32.gmra.mrb[0].mxu0 %v2751
      %v2753 = vpop.f32.mrb[0].mxu0
      %v2754 = vadd.f32 %v2613, %v2753
      %v2755 = vpop.f32.mrb[0].mxu0
      %2756 = vmatprep.mubr.f32.mxu0 0.0
      %v2757 = vand.u32 %v1177, 4294901760
      %2758 = vmatmul.mubr.f32.gmra.mrb[0].mxu0 %v2757
      %v2759 = vpop.f32.mrb[0].mxu0
      %v2760 = vadd.f32 %v2623, %v2759
      %v2761 = vpop.f32.mrb[0].mxu0
      %2762 = vmatprep.mubr.f32.mxu0 0.0
      %v2763 = vand.u32 %v1180, 4294901760
      %2764 = vmatmul.mubr.f32.gmra.mrb[0].mxu0 %v2763
      %v2765 = vpop.f32.mrb[0].mxu0
      %v2766 = vadd.f32 %v2633, %v2765
      %v2767 = vpop.f32.mrb[0].mxu0
      %2768 = vmatprep.mubr.f32.mxu0 0.0
      %v2769 = vand.u32 %v1183, 4294901760
      %2770 = vmatmul.mubr.f32.gmra.mrb[0].mxu0 %v2769
      %v2771 = vpop.f32.mrb[0].mxu0
      %v2772 = vadd.f32 %v2643, %v2771
      %v2773 = vpop.f32.mrb[0].mxu0
      %2774 = vdwg.mxu0
      %2775 = vmatprep.subr.mxu0 0.0
      %v2776 = vand.u32 %v170, 4294901760
      %v2777 = vsub.f32 %v170, %v2776
      %2778 = vmatpush1.msra.mxu0 %v2777
      %2779 = vmatprep.subr.mxu0 0.0
      %v2780 = vand.u32 %v171, 4294901760
      %v2781 = vsub.f32 %v171, %v2780
      %2782 = vmatpush1.msra.mxu0 %v2781
      %2783 = vmatprep.subr.mxu0 0.0
      %v2784 = vand.u32 %v172, 4294901760
      %v2785 = vsub.f32 %v172, %v2784
      %2786 = vmatpush1.msra.mxu0 %v2785
      %2787 = vmatprep.subr.mxu0 0.0
      %v2788 = vand.u32 %v173, 4294901760
      %v2789 = vsub.f32 %v173, %v2788
      %2790 = vmatpush1.msra.mxu0 %v2789
      %2791 = vmatprep.subr.mxu0 0.0
      %v2792 = vand.u32 %v174, 4294901760
      %v2793 = vsub.f32 %v174, %v2792
      %2794 = vmatpush1.msra.mxu0 %v2793
      %2795 = vmatprep.subr.mxu0 0.0
      %v2796 = vand.u32 %v175, 4294901760
      %v2797 = vsub.f32 %v175, %v2796
      %2798 = vmatpush1.msra.mxu0 %v2797
      %2799 = vmatprep.subr.mxu0 0.0
      %v2800 = vand.u32 %v176, 4294901760
      %v2801 = vsub.f32 %v176, %v2800
      %2802 = vmatpush1.msra.mxu0 %v2801
      %2803 = vmatprep.subr.mxu0 0.0
      %v2804 = vand.u32 %v177, 4294901760
      %v2805 = vsub.f32 %v177, %v2804
      %2806 = vmatpush1.msra.mxu0 %v2805
      %2807 = vmatprep.subr.mxu0 0.0
      %2808 = vmatpush1.msra.mxu0 0.0
      %2809 = vmatprep.subr.mxu0 0.0
      %2810 = vmatpush1.msra.mxu0 0.0
      %2811 = vmatprep.subr.mxu0 0.0
      %2812 = vmatpush1.msra.mxu0 0.0
      %2813 = vmatprep.subr.mxu0 0.0
      %2814 = vmatpush1.msra.mxu0 0.0
      %2815 = vmatprep.subr.mxu0 0.0
      %2816 = vmatpush1.msra.mxu0 0.0
      %2817 = vmatprep.subr.mxu0 0.0
      %2818 = vmatpush1.msra.mxu0 0.0
      %2819 = vmatprep.subr.mxu0 0.0
      %2820 = vmatpush1.msra.mxu0 0.0
      %2821 = vmatprep.subr.mxu0 0.0
      %2822 = vmatpush1.msra.mxu0 0.0
      %2823 = vmatprep.subr.mxu0 0.0
      %2824 = vmatpush1.msra.mxu0 0.0
      %2825 = vmatprep.subr.mxu0 0.0
      %2826 = vmatpush1.msra.mxu0 0.0
      %2827 = vmatprep.subr.mxu0 0.0
      %2828 = vmatpush1.msra.mxu0 0.0
      %2829 = vmatprep.subr.mxu0 0.0
      %2830 = vmatpush1.msra.mxu0 0.0
      %2831 = vmatprep.subr.mxu0 0.0
      %2832 = vmatpush1.msra.mxu0 0.0
      %2833 = vmatprep.subr.mxu0 0.0
      %2834 = vmatpush1.msra.mxu0 0.0
      %2835 = vmatprep.subr.mxu0 0.0
      %2836 = vmatpush1.msra.mxu0 0.0
      %2837 = vmatprep.subr.mxu0 0.0
      %2838 = vmatpush1.msra.mxu0 0.0
      %2839 = vmatprep.subr.mxu0 0.0
      %2840 = vmatpush1.msra.mxu0 0.0
      %2841 = vmatprep.subr.mxu0 0.0
      %2842 = vmatpush1.msra.mxu0 0.0
      %2843 = vmatprep.subr.mxu0 0.0
      %2844 = vmatpush1.msra.mxu0 0.0
      %2845 = vmatprep.subr.mxu0 0.0
      %2846 = vmatpush1.msra.mxu0 0.0
      %2847 = vmatprep.subr.mxu0 0.0
      %2848 = vmatpush1.msra.mxu0 0.0
      %2849 = vmatprep.subr.mxu0 0.0
      %2850 = vmatpush1.msra.mxu0 0.0
      %2851 = vmatprep.subr.mxu0 0.0
      %2852 = vmatpush1.msra.mxu0 0.0
      %2853 = vmatprep.subr.mxu0 0.0
      %2854 = vmatpush1.msra.mxu0 0.0
      %2855 = vmatprep.mubr.f32.mxu0 0.0
      %v2856 = vand.u32 %v1174, 4294901760
      %v2857 = vsub.f32 %v1174, %v2856
      %2858 = vmatmul.mubr.f32.gmra.mrb[0].mxu0 %v2857
      %v2859 = vpop.f32.mrb[0].mxu0
      %v2860 = vadd.f32 %v2754, %v2859
      %v2861 = vpop.f32.mrb[0].mxu0
      %2862 = vmatprep.mubr.f32.mxu0 0.0
      %v2863 = vand.u32 %v1177, 4294901760
      %v2864 = vsub.f32 %v1177, %v2863
      %2865 = vmatmul.mubr.f32.gmra.mrb[0].mxu0 %v2864
      %v2866 = vpop.f32.mrb[0].mxu0
      %v2867 = vadd.f32 %v2760, %v2866
      %v2868 = vpop.f32.mrb[0].mxu0
      %2869 = vmatprep.mubr.f32.mxu0 0.0
      %v2870 = vand.u32 %v1180, 4294901760
      %v2871 = vsub.f32 %v1180, %v2870
      %2872 = vmatmul.mubr.f32.gmra.mrb[0].mxu0 %v2871
      %v2873 = vpop.f32.mrb[0].mxu0
      %v2874 = vadd.f32 %v2766, %v2873
      %v2875 = vpop.f32.mrb[0].mxu0
      %2876 = vmatprep.mubr.f32.mxu0 0.0
      %v2877 = vand.u32 %v1183, 4294901760
      %v2878 = vsub.f32 %v1183, %v2877
      %2879 = vmatmul.mubr.f32.gmra.mrb[0].mxu0 %v2878
      %v2880 = vpop.f32.mrb[0].mxu0
      %v2881 = vadd.f32 %v2772, %v2880
      %v2882 = vpop.f32.mrb[0].mxu0
      %2883 = vdwg.mxu0
      %2884 = vmatprep.subr.mxu0 0.0
      %v2885 = vand.u32 %v170, 4294901760
      %2886 = vmatpush1.msra.mxu0 %v2885
      %2887 = vmatprep.subr.mxu0 0.0
      %v2888 = vand.u32 %v171, 4294901760
      %2889 = vmatpush1.msra.mxu0 %v2888
      %2890 = vmatprep.subr.mxu0 0.0
      %v2891 = vand.u32 %v172, 4294901760
      %2892 = vmatpush1.msra.mxu0 %v2891
      %2893 = vmatprep.subr.mxu0 0.0
      %v2894 = vand.u32 %v173, 4294901760
      %2895 = vmatpush1.msra.mxu0 %v2894
      %2896 = vmatprep.subr.mxu0 0.0
      %v2897 = vand.u32 %v174, 4294901760
      %2898 = vmatpush1.msra.mxu0 %v2897
      %2899 = vmatprep.subr.mxu0 0.0
      %v2900 = vand.u32 %v175, 4294901760
      %2901 = vmatpush1.msra.mxu0 %v2900
      %2902 = vmatprep.subr.mxu0 0.0
      %v2903 = vand.u32 %v176, 4294901760
      %2904 = vmatpush1.msra.mxu0 %v2903
      %2905 = vmatprep.subr.mxu0 0.0
      %v2906 = vand.u32 %v177, 4294901760
      %2907 = vmatpush1.msra.mxu0 %v2906
      %2908 = vmatprep.subr.mxu0 0.0
      %2909 = vmatpush1.msra.mxu0 0.0
      %2910 = vmatprep.subr.mxu0 0.0
      %2911 = vmatpush1.msra.mxu0 0.0
      %2912 = vmatprep.subr.mxu0 0.0
      %2913 = vmatpush1.msra.mxu0 0.0
      %2914 = vmatprep.subr.mxu0 0.0
      %2915 = vmatpush1.msra.mxu0 0.0
      %2916 = vmatprep.subr.mxu0 0.0
      %2917 = vmatpush1.msra.mxu0 0.0
      %2918 = vmatprep.subr.mxu0 0.0
      %2919 = vmatpush1.msra.mxu0 0.0
      %2920 = vmatprep.subr.mxu0 0.0
      %2921 = vmatpush1.msra.mxu0 0.0
      %2922 = vmatprep.subr.mxu0 0.0
      %2923 = vmatpush1.msra.mxu0 0.0
      %2924 = vmatprep.subr.mxu0 0.0
      %2925 = vmatpush1.msra.mxu0 0.0
      %2926 = vmatprep.subr.mxu0 0.0
      %2927 = vmatpush1.msra.mxu0 0.0
      %2928 = vmatprep.subr.mxu0 0.0
      %2929 = vmatpush1.msra.mxu0 0.0
      %2930 = vmatprep.subr.mxu0 0.0
      %2931 = vmatpush1.msra.mxu0 0.0
      %2932 = vmatprep.subr.mxu0 0.0
      %2933 = vmatpush1.msra.mxu0 0.0
      %2934 = vmatprep.subr.mxu0 0.0
      %2935 = vmatpush1.msra.mxu0 0.0
      %2936 = vmatprep.subr.mxu0 0.0
      %2937 = vmatpush1.msra.mxu0 0.0
      %2938 = vmatprep.subr.mxu0 0.0
      %2939 = vmatpush1.msra.mxu0 0.0
      %2940 = vmatprep.subr.mxu0 0.0
      %2941 = vmatpush1.msra.mxu0 0.0
      %2942 = vmatprep.subr.mxu0 0.0
      %2943 = vmatpush1.msra.mxu0 0.0
      %2944 = vmatprep.subr.mxu0 0.0
      %2945 = vmatpush1.msra.mxu0 0.0
      %2946 = vmatprep.subr.mxu0 0.0
      %2947 = vmatpush1.msra.mxu0 0.0
      %2948 = vmatprep.subr.mxu0 0.0
      %2949 = vmatpush1.msra.mxu0 0.0
      %2950 = vmatprep.subr.mxu0 0.0
      %2951 = vmatpush1.msra.mxu0 0.0
      %2952 = vmatprep.subr.mxu0 0.0
      %2953 = vmatpush1.msra.mxu0 0.0
      %2954 = vmatprep.subr.mxu0 0.0
      %2955 = vmatpush1.msra.mxu0 0.0
      %2956 = vmatprep.mubr.f32.mxu0 0.0
      %v2957 = vand.u32 %v1174, 4294901760
      %v2958 = vsub.f32 %v1174, %v2957
      %v2959 = vand.u32 %v2958, 4294901760
      %2960 = vmatmul.mubr.f32.gmra.mrb[0].mxu0 %v2959
      %v2961 = vpop.f32.mrb[0].mxu0
      %v2962 = vadd.f32 %v2860, %v2961
      %v2963 = vpop.f32.mrb[0].mxu0
      %2964 = vmatprep.mubr.f32.mxu0 0.0
      %v2965 = vand.u32 %v1177, 4294901760
      %v2966 = vsub.f32 %v1177, %v2965
      %v2967 = vand.u32 %v2966, 4294901760
      %2968 = vmatmul.mubr.f32.gmra.mrb[0].mxu0 %v2967
      %v2969 = vpop.f32.mrb[0].mxu0
      %v2970 = vadd.f32 %v2867, %v2969
      %v2971 = vpop.f32.mrb[0].mxu0
      %2972 = vmatprep.mubr.f32.mxu0 0.0
      %v2973 = vand.u32 %v1180, 4294901760
      %v2974 = vsub.f32 %v1180, %v2973
      %v2975 = vand.u32 %v2974, 4294901760
      %2976 = vmatmul.mubr.f32.gmra.mrb[0].mxu0 %v2975
      %v2977 = vpop.f32.mrb[0].mxu0
      %v2978 = vadd.f32 %v2874, %v2977
      %v2979 = vpop.f32.mrb[0].mxu0
      %2980 = vmatprep.mubr.f32.mxu0 0.0
      %v2981 = vand.u32 %v1183, 4294901760
      %v2982 = vsub.f32 %v1183, %v2981
      %v2983 = vand.u32 %v2982, 4294901760
      %2984 = vmatmul.mubr.f32.gmra.mrb[0].mxu0 %v2983
      %v2985 = vpop.f32.mrb[0].mxu0
      %v2986 = vadd.f32 %v2881, %v2985
      %v2987 = vpop.f32.mrb[0].mxu0
      %2988 = vdwg.mxu0
      %2989 = vmatprep.subr.mxu0 0.0
      %v2990 = vand.u32 %v170, 4294901760
      %v2991 = vsub.f32 %v170, %v2990
      %v2992 = vand.u32 %v2991, 4294901760
      %2993 = vmatpush1.msra.mxu0 %v2992
      %2994 = vmatprep.subr.mxu0 0.0
      %v2995 = vand.u32 %v171, 4294901760
      %v2996 = vsub.f32 %v171, %v2995
      %v2997 = vand.u32 %v2996, 4294901760
      %2998 = vmatpush1.msra.mxu0 %v2997
      %2999 = vmatprep.subr.mxu0 0.0
      %v3000 = vand.u32 %v172, 4294901760
      %v3001 = vsub.f32 %v172, %v3000
      %v3002 = vand.u32 %v3001, 4294901760
      %3003 = vmatpush1.msra.mxu0 %v3002
      %3004 = vmatprep.subr.mxu0 0.0
      %v3005 = vand.u32 %v173, 4294901760
      %v3006 = vsub.f32 %v173, %v3005
      %v3007 = vand.u32 %v3006, 4294901760
      %3008 = vmatpush1.msra.mxu0 %v3007
      %3009 = vmatprep.subr.mxu0 0.0
      %v3010 = vand.u32 %v174, 4294901760
      %v3011 = vsub.f32 %v174, %v3010
      %v3012 = vand.u32 %v3011, 4294901760
      %3013 = vmatpush1.msra.mxu0 %v3012
      %3014 = vmatprep.subr.mxu0 0.0
      %v3015 = vand.u32 %v175, 4294901760
      %v3016 = vsub.f32 %v175, %v3015
      %v3017 = vand.u32 %v3016, 4294901760
      %3018 = vmatpush1.msra.mxu0 %v3017
      %3019 = vmatprep.subr.mxu0 0.0
      %v3020 = vand.u32 %v176, 4294901760
      %v3021 = vsub.f32 %v176, %v3020
      %v3022 = vand.u32 %v3021, 4294901760
      %3023 = vmatpush1.msra.mxu0 %v3022
      %3024 = vmatprep.subr.mxu0 0.0
      %v3025 = vand.u32 %v177, 4294901760
      %v3026 = vsub.f32 %v177, %v3025
      %v3027 = vand.u32 %v3026, 4294901760
      %3028 = vmatpush1.msra.mxu0 %v3027
      %3029 = vmatprep.subr.mxu0 0.0
      %3030 = vmatpush1.msra.mxu0 0.0
      %3031 = vmatprep.subr.mxu0 0.0
      %3032 = vmatpush1.msra.mxu0 0.0
      %3033 = vmatprep.subr.mxu0 0.0
      %3034 = vmatpush1.msra.mxu0 0.0
      %3035 = vmatprep.subr.mxu0 0.0
      %3036 = vmatpush1.msra.mxu0 0.0
      %3037 = vmatprep.subr.mxu0 0.0
      %3038 = vmatpush1.msra.mxu0 0.0
      %3039 = vmatprep.subr.mxu0 0.0
      %3040 = vmatpush1.msra.mxu0 0.0
      %3041 = vmatprep.subr.mxu0 0.0
      %3042 = vmatpush1.msra.mxu0 0.0
      %3043 = vmatprep.subr.mxu0 0.0
      %3044 = vmatpush1.msra.mxu0 0.0
      %3045 = vmatprep.subr.mxu0 0.0
      %3046 = vmatpush1.msra.mxu0 0.0
      %3047 = vmatprep.subr.mxu0 0.0
      %3048 = vmatpush1.msra.mxu0 0.0
      %3049 = vmatprep.subr.mxu0 0.0
      %3050 = vmatpush1.msra.mxu0 0.0
      %3051 = vmatprep.subr.mxu0 0.0
      %3052 = vmatpush1.msra.mxu0 0.0
      %3053 = vmatprep.subr.mxu0 0.0
      %3054 = vmatpush1.msra.mxu0 0.0
      %3055 = vmatprep.subr.mxu0 0.0
      %3056 = vmatpush1.msra.mxu0 0.0
      %3057 = vmatprep.subr.mxu0 0.0
      %3058 = vmatpush1.msra.mxu0 0.0
      %3059 = vmatprep.subr.mxu0 0.0
      %3060 = vmatpush1.msra.mxu0 0.0
      %3061 = vmatprep.subr.mxu0 0.0
      %3062 = vmatpush1.msra.mxu0 0.0
      %3063 = vmatprep.subr.mxu0 0.0
      %3064 = vmatpush1.msra.mxu0 0.0
      %3065 = vmatprep.subr.mxu0 0.0
      %3066 = vmatpush1.msra.mxu0 0.0
      %3067 = vmatprep.subr.mxu0 0.0
      %3068 = vmatpush1.msra.mxu0 0.0
      %3069 = vmatprep.subr.mxu0 0.0
      %3070 = vmatpush1.msra.mxu0 0.0
      %3071 = vmatprep.subr.mxu0 0.0
      %3072 = vmatpush1.msra.mxu0 0.0
      %3073 = vmatprep.subr.mxu0 0.0
      %3074 = vmatpush1.msra.mxu0 0.0
      %3075 = vmatprep.subr.mxu0 0.0
      %3076 = vmatpush1.msra.mxu0 0.0
      %3077 = vmatprep.mubr.f32.mxu0 0.0
      %v3078 = vand.u32 %v1174, 4294901760
      %3079 = vmatmul.mubr.f32.gmra.mrb[0].mxu0 %v3078
      %v3080 = vpop.f32.mrb[0].mxu0
      %v3081 = vadd.f32 %v2962, %v3080
      %v3082 = vpop.f32.mrb[0].mxu0
      %3083 = vmatprep.mubr.f32.mxu0 0.0
      %v3084 = vand.u32 %v1177, 4294901760
      %3085 = vmatmul.mubr.f32.gmra.mrb[0].mxu0 %v3084
      %v3086 = vpop.f32.mrb[0].mxu0
      %v3087 = vadd.f32 %v2970, %v3086
      %v3088 = vpop.f32.mrb[0].mxu0
      %3089 = vmatprep.mubr.f32.mxu0 0.0
      %v3090 = vand.u32 %v1180, 4294901760
      %3091 = vmatmul.mubr.f32.gmra.mrb[0].mxu0 %v3090
      %v3092 = vpop.f32.mrb[0].mxu0
      %v3093 = vadd.f32 %v2978, %v3092
      %v3094 = vpop.f32.mrb[0].mxu0
      %3095 = vmatprep.mubr.f32.mxu0 0.0
      %v3096 = vand.u32 %v1183, 4294901760
      %3097 = vmatmul.mubr.f32.gmra.mrb[0].mxu0 %v3096
      %v3098 = vpop.f32.mrb[0].mxu0
      %v3099 = vadd.f32 %v2986, %v3098
      %v3100 = vpop.f32.mrb[0].mxu0
      %3101 = vdwg.mxu0
      %3102 = vmatprep.subr.mxu0 0.0
      %v3103 = vand.u32 %v170, 4294901760
      %3104 = vmatpush1.msra.mxu0 %v3103
      %3105 = vmatprep.subr.mxu0 0.0
      %v3106 = vand.u32 %v171, 4294901760
      %3107 = vmatpush1.msra.mxu0 %v3106
      %3108 = vmatprep.subr.mxu0 0.0
      %v3109 = vand.u32 %v172, 4294901760
      %3110 = vmatpush1.msra.mxu0 %v3109
      %3111 = vmatprep.subr.mxu0 0.0
      %v3112 = vand.u32 %v173, 4294901760
      %3113 = vmatpush1.msra.mxu0 %v3112
      %3114 = vmatprep.subr.mxu0 0.0
      %v3115 = vand.u32 %v174, 4294901760
      %3116 = vmatpush1.msra.mxu0 %v3115
      %3117 = vmatprep.subr.mxu0 0.0
      %v3118 = vand.u32 %v175, 4294901760
      %3119 = vmatpush1.msra.mxu0 %v3118
      %3120 = vmatprep.subr.mxu0 0.0
      %v3121 = vand.u32 %v176, 4294901760
      %3122 = vmatpush1.msra.mxu0 %v3121
      %3123 = vmatprep.subr.mxu0 0.0
      %v3124 = vand.u32 %v177, 4294901760
      %3125 = vmatpush1.msra.mxu0 %v3124
      %3126 = vmatprep.subr.mxu0 0.0
      %3127 = vmatpush1.msra.mxu0 0.0
      %3128 = vmatprep.subr.mxu0 0.0
      %3129 = vmatpush1.msra.mxu0 0.0
      %3130 = vmatprep.subr.mxu0 0.0
      %3131 = vmatpush1.msra.mxu0 0.0
      %3132 = vmatprep.subr.mxu0 0.0
      %3133 = vmatpush1.msra.mxu0 0.0
      %3134 = vmatprep.subr.mxu0 0.0
      %3135 = vmatpush1.msra.mxu0 0.0
      %3136 = vmatprep.subr.mxu0 0.0
      %3137 = vmatpush1.msra.mxu0 0.0
      %3138 = vmatprep.subr.mxu0 0.0
      %3139 = vmatpush1.msra.mxu0 0.0
      %3140 = vmatprep.subr.mxu0 0.0
      %3141 = vmatpush1.msra.mxu0 0.0
      %3142 = vmatprep.subr.mxu0 0.0
      %3143 = vmatpush1.msra.mxu0 0.0
      %3144 = vmatprep.subr.mxu0 0.0
      %3145 = vmatpush1.msra.mxu0 0.0
      %3146 = vmatprep.subr.mxu0 0.0
      %3147 = vmatpush1.msra.mxu0 0.0
      %3148 = vmatprep.subr.mxu0 0.0
      %3149 = vmatpush1.msra.mxu0 0.0
      %3150 = vmatprep.subr.mxu0 0.0
      %3151 = vmatpush1.msra.mxu0 0.0
      %3152 = vmatprep.subr.mxu0 0.0
      %3153 = vmatpush1.msra.mxu0 0.0
      %3154 = vmatprep.subr.mxu0 0.0
      %3155 = vmatpush1.msra.mxu0 0.0
      %3156 = vmatprep.subr.mxu0 0.0
      %3157 = vmatpush1.msra.mxu0 0.0
      %3158 = vmatprep.subr.mxu0 0.0
      %3159 = vmatpush1.msra.mxu0 0.0
      %3160 = vmatprep.subr.mxu0 0.0
      %3161 = vmatpush1.msra.mxu0 0.0
      %3162 = vmatprep.subr.mxu0 0.0
      %3163 = vmatpush1.msra.mxu0 0.0
      %3164 = vmatprep.subr.mxu0 0.0
      %3165 = vmatpush1.msra.mxu0 0.0
      %3166 = vmatprep.subr.mxu0 0.0
      %3167 = vmatpush1.msra.mxu0 0.0
      %3168 = vmatprep.subr.mxu0 0.0
      %3169 = vmatpush1.msra.mxu0 0.0
      %3170 = vmatprep.subr.mxu0 0.0
      %3171 = vmatpush1.msra.mxu0 0.0
      %3172 = vmatprep.subr.mxu0 0.0
      %3173 = vmatpush1.msra.mxu0 0.0
      %3174 = vmatprep.mubr.f32.mxu0 0.0
      %v3175 = vand.u32 %v1174, 4294901760
      %3176 = vmatmul.mubr.f32.gmra.mrb[0].mxu0 %v3175
      %v3177 = vpop.f32.mrb[0].mxu0
      %v3178 = vadd.f32 %v3081, %v3177
      %v3179 = vpop.f32.mrb[0].mxu0
      %3180 = vmatprep.mubr.f32.mxu0 0.0
      %v3181 = vand.u32 %v1177, 4294901760
      %3182 = vmatmul.mubr.f32.gmra.mrb[0].mxu0 %v3181
      %v3183 = vpop.f32.mrb[0].mxu0
      %v3184 = vadd.f32 %v3087, %v3183
      %v3185 = vpop.f32.mrb[0].mxu0
      %3186 = vmatprep.mubr.f32.mxu0 0.0
      %v3187 = vand.u32 %v1180, 4294901760
      %3188 = vmatmul.mubr.f32.gmra.mrb[0].mxu0 %v3187
      %v3189 = vpop.f32.mrb[0].mxu0
      %v3190 = vadd.f32 %v3093, %v3189
      %v3191 = vpop.f32.mrb[0].mxu0
      %3192 = vmatprep.mubr.f32.mxu0 0.0
      %v3193 = vand.u32 %v1183, 4294901760
      %3194 = vmatmul.mubr.f32.gmra.mrb[0].mxu0 %v3193
      %v3195 = vpop.f32.mrb[0].mxu0
      %v3196 = vadd.f32 %v3099, %v3195
      %v3197 = vpop.f32.mrb[0].mxu0
      %3198 = vdwg.mxu0
      %v3200 = vsel %vm1172, %v3178, 0
      %v3203 = vsel %vm1172, %v3184, 0
      %v3206 = vsel %vm1172, %v3190, 0
      %v3209 = vsel %vm1172, %v3196, 0
      %3211 = vmatprep.subr.mxu0 0.0
      %v3212 = vand.u32 %v1164, 4294901760
      %3213 = vmatpush1.msra.mxu0 %v3212
      %3214 = vmatprep.subr.mxu0 0.0
      %v3215 = vand.u32 %v1165, 4294901760
      %3216 = vmatpush1.msra.mxu0 %v3215
      %3217 = vmatprep.subr.mxu0 0.0
      %v3218 = vand.u32 %v1166, 4294901760
      %3219 = vmatpush1.msra.mxu0 %v3218
      %3220 = vmatprep.subr.mxu0 0.0
      %v3221 = vand.u32 %v1167, 4294901760
      %3222 = vmatpush1.msra.mxu0 %v3221
      %3223 = vmatprep.subr.mxu0 0.0
      %v3224 = vand.u32 %v1168, 4294901760
      %3225 = vmatpush1.msra.mxu0 %v3224
      %3226 = vmatprep.subr.mxu0 0.0
      %v3227 = vand.u32 %v1169, 4294901760
      %3228 = vmatpush1.msra.mxu0 %v3227
      %3229 = vmatprep.subr.mxu0 0.0
      %v3230 = vand.u32 %v1170, 4294901760
      %3231 = vmatpush1.msra.mxu0 %v3230
      %3232 = vmatprep.subr.mxu0 0.0
      %v3233 = vand.u32 %v1171, 4294901760
      %3234 = vmatpush1.msra.mxu0 %v3233
      %3235 = vmatprep.subr.mxu0 0.0
      %3236 = vmatpush1.msra.mxu0 0.0
      %3237 = vmatprep.subr.mxu0 0.0
      %3238 = vmatpush1.msra.mxu0 0.0
      %3239 = vmatprep.subr.mxu0 0.0
      %3240 = vmatpush1.msra.mxu0 0.0
      %3241 = vmatprep.subr.mxu0 0.0
      %3242 = vmatpush1.msra.mxu0 0.0
      %3243 = vmatprep.subr.mxu0 0.0
      %3244 = vmatpush1.msra.mxu0 0.0
      %3245 = vmatprep.subr.mxu0 0.0
      %3246 = vmatpush1.msra.mxu0 0.0
      %3247 = vmatprep.subr.mxu0 0.0
      %3248 = vmatpush1.msra.mxu0 0.0
      %3249 = vmatprep.subr.mxu0 0.0
      %3250 = vmatpush1.msra.mxu0 0.0
      %3251 = vmatprep.subr.mxu0 0.0
      %3252 = vmatpush1.msra.mxu0 0.0
      %3253 = vmatprep.subr.mxu0 0.0
      %3254 = vmatpush1.msra.mxu0 0.0
      %3255 = vmatprep.subr.mxu0 0.0
      %3256 = vmatpush1.msra.mxu0 0.0
      %3257 = vmatprep.subr.mxu0 0.0
      %3258 = vmatpush1.msra.mxu0 0.0
      %3259 = vmatprep.subr.mxu0 0.0
      %3260 = vmatpush1.msra.mxu0 0.0
      %3261 = vmatprep.subr.mxu0 0.0
      %3262 = vmatpush1.msra.mxu0 0.0
      %3263 = vmatprep.subr.mxu0 0.0
      %3264 = vmatpush1.msra.mxu0 0.0
      %3265 = vmatprep.subr.mxu0 0.0
      %3266 = vmatpush1.msra.mxu0 0.0
      %3267 = vmatprep.subr.mxu0 0.0
      %3268 = vmatpush1.msra.mxu0 0.0
      %3269 = vmatprep.subr.mxu0 0.0
      %3270 = vmatpush1.msra.mxu0 0.0
      %3271 = vmatprep.subr.mxu0 0.0
      %3272 = vmatpush1.msra.mxu0 0.0
      %3273 = vmatprep.subr.mxu0 0.0
      %3274 = vmatpush1.msra.mxu0 0.0
      %3275 = vmatprep.subr.mxu0 0.0
      %3276 = vmatpush1.msra.mxu0 0.0
      %3277 = vmatprep.subr.mxu0 0.0
      %3278 = vmatpush1.msra.mxu0 0.0
      %3279 = vmatprep.subr.mxu0 0.0
      %3280 = vmatpush1.msra.mxu0 0.0
      %3281 = vmatprep.subr.mxu0 0.0
      %3282 = vmatpush1.msra.mxu0 0.0
      %3283 = vmatprep.mubr.f32.mxu0 0.0
      %v3284 = vand.u32 %v3200, 4294901760
      %v3285 = vsub.f32 %v3200, %v3284
      %v3286 = vand.u32 %v3285, 4294901760
      %v3287 = vsub.f32 %v3285, %v3286
      %v3288 = vand.u32 %v3287, 4294901760
      %3289 = vmatmul.mubr.f32.gmra.mrb[0].mxu0 %v3288
      %v3290 = vpop.f32.mrb[0].mxu0
      %v3291 = vadd.f32 0.0, %v3290
      %v3292 = vpop.f32.mrb[0].mxu0
      %3293 = vmatprep.mubr.f32.mxu0 0.0
      %v3294 = vand.u32 %v3203, 4294901760
      %v3295 = vsub.f32 %v3203, %v3294
      %v3296 = vand.u32 %v3295, 4294901760
      %v3297 = vsub.f32 %v3295, %v3296
      %v3298 = vand.u32 %v3297, 4294901760
      %3299 = vmatmul.mubr.f32.gmra.mrb[0].mxu0 %v3298
      %v3300 = vpop.f32.mrb[0].mxu0
      %v3301 = vadd.f32 0.0, %v3300
      %v3302 = vpop.f32.mrb[0].mxu0
      %3303 = vmatprep.mubr.f32.mxu0 0.0
      %v3304 = vand.u32 %v3206, 4294901760
      %v3305 = vsub.f32 %v3206, %v3304
      %v3306 = vand.u32 %v3305, 4294901760
      %v3307 = vsub.f32 %v3305, %v3306
      %v3308 = vand.u32 %v3307, 4294901760
      %3309 = vmatmul.mubr.f32.gmra.mrb[0].mxu0 %v3308
      %v3310 = vpop.f32.mrb[0].mxu0
      %v3311 = vadd.f32 0.0, %v3310
      %v3312 = vpop.f32.mrb[0].mxu0
      %3313 = vmatprep.mubr.f32.mxu0 0.0
      %v3314 = vand.u32 %v3209, 4294901760
      %v3315 = vsub.f32 %v3209, %v3314
      %v3316 = vand.u32 %v3315, 4294901760
      %v3317 = vsub.f32 %v3315, %v3316
      %v3318 = vand.u32 %v3317, 4294901760
      %3319 = vmatmul.mubr.f32.gmra.mrb[0].mxu0 %v3318
      %v3320 = vpop.f32.mrb[0].mxu0
      %v3321 = vadd.f32 0.0, %v3320
      %v3322 = vpop.f32.mrb[0].mxu0
      %3323 = vdwg.mxu0
      %3324 = vmatprep.subr.mxu0 0.0
      %v3325 = vand.u32 %v1164, 4294901760
      %v3326 = vsub.f32 %v1164, %v3325
      %v3327 = vand.u32 %v3326, 4294901760
      %v3328 = vsub.f32 %v3326, %v3327
      %v3329 = vand.u32 %v3328, 4294901760
      %3330 = vmatpush1.msra.mxu0 %v3329
      %3331 = vmatprep.subr.mxu0 0.0
      %v3332 = vand.u32 %v1165, 4294901760
      %v3333 = vsub.f32 %v1165, %v3332
      %v3334 = vand.u32 %v3333, 4294901760
      %v3335 = vsub.f32 %v3333, %v3334
      %v3336 = vand.u32 %v3335, 4294901760
      %3337 = vmatpush1.msra.mxu0 %v3336
      %3338 = vmatprep.subr.mxu0 0.0
      %v3339 = vand.u32 %v1166, 4294901760
      %v3340 = vsub.f32 %v1166, %v3339
      %v3341 = vand.u32 %v3340, 4294901760
      %v3342 = vsub.f32 %v3340, %v3341
      %v3343 = vand.u32 %v3342, 4294901760
      %3344 = vmatpush1.msra.mxu0 %v3343
      %3345 = vmatprep.subr.mxu0 0.0
      %v3346 = vand.u32 %v1167, 4294901760
      %v3347 = vsub.f32 %v1167, %v3346
      %v3348 = vand.u32 %v3347, 4294901760
      %v3349 = vsub.f32 %v3347, %v3348
      %v3350 = vand.u32 %v3349, 4294901760
      %3351 = vmatpush1.msra.mxu0 %v3350
      %3352 = vmatprep.subr.mxu0 0.0
      %v3353 = vand.u32 %v1168, 4294901760
      %v3354 = vsub.f32 %v1168, %v3353
      %v3355 = vand.u32 %v3354, 4294901760
      %v3356 = vsub.f32 %v3354, %v3355
      %v3357 = vand.u32 %v3356, 4294901760
      %3358 = vmatpush1.msra.mxu0 %v3357
      %3359 = vmatprep.subr.mxu0 0.0
      %v3360 = vand.u32 %v1169, 4294901760
      %v3361 = vsub.f32 %v1169, %v3360
      %v3362 = vand.u32 %v3361, 4294901760
      %v3363 = vsub.f32 %v3361, %v3362
      %v3364 = vand.u32 %v3363, 4294901760
      %3365 = vmatpush1.msra.mxu0 %v3364
      %3366 = vmatprep.subr.mxu0 0.0
      %v3367 = vand.u32 %v1170, 4294901760
      %v3368 = vsub.f32 %v1170, %v3367
      %v3369 = vand.u32 %v3368, 4294901760
      %v3370 = vsub.f32 %v3368, %v3369
      %v3371 = vand.u32 %v3370, 4294901760
      %3372 = vmatpush1.msra.mxu0 %v3371
      %3373 = vmatprep.subr.mxu0 0.0
      %v3374 = vand.u32 %v1171, 4294901760
      %v3375 = vsub.f32 %v1171, %v3374
      %v3376 = vand.u32 %v3375, 4294901760
      %v3377 = vsub.f32 %v3375, %v3376
      %v3378 = vand.u32 %v3377, 4294901760
      %3379 = vmatpush1.msra.mxu0 %v3378
      %3380 = vmatprep.subr.mxu0 0.0
      %3381 = vmatpush1.msra.mxu0 0.0
      %3382 = vmatprep.subr.mxu0 0.0
      %3383 = vmatpush1.msra.mxu0 0.0
      %3384 = vmatprep.subr.mxu0 0.0
      %3385 = vmatpush1.msra.mxu0 0.0
      %3386 = vmatprep.subr.mxu0 0.0
      %3387 = vmatpush1.msra.mxu0 0.0
      %3388 = vmatprep.subr.mxu0 0.0
      %3389 = vmatpush1.msra.mxu0 0.0
      %3390 = vmatprep.subr.mxu0 0.0
      %3391 = vmatpush1.msra.mxu0 0.0
      %3392 = vmatprep.subr.mxu0 0.0
      %3393 = vmatpush1.msra.mxu0 0.0
      %3394 = vmatprep.subr.mxu0 0.0
      %3395 = vmatpush1.msra.mxu0 0.0
      %3396 = vmatprep.subr.mxu0 0.0
      %3397 = vmatpush1.msra.mxu0 0.0
      %3398 = vmatprep.subr.mxu0 0.0
      %3399 = vmatpush1.msra.mxu0 0.0
      %3400 = vmatprep.subr.mxu0 0.0
      %3401 = vmatpush1.msra.mxu0 0.0
      %3402 = vmatprep.subr.mxu0 0.0
      %3403 = vmatpush1.msra.mxu0 0.0
      %3404 = vmatprep.subr.mxu0 0.0
      %3405 = vmatpush1.msra.mxu0 0.0
      %3406 = vmatprep.subr.mxu0 0.0
      %3407 = vmatpush1.msra.mxu0 0.0
      %3408 = vmatprep.subr.mxu0 0.0
      %3409 = vmatpush1.msra.mxu0 0.0
      %3410 = vmatprep.subr.mxu0 0.0
      %3411 = vmatpush1.msra.mxu0 0.0
      %3412 = vmatprep.subr.mxu0 0.0
      %3413 = vmatpush1.msra.mxu0 0.0
      %3414 = vmatprep.subr.mxu0 0.0
      %3415 = vmatpush1.msra.mxu0 0.0
      %3416 = vmatprep.subr.mxu0 0.0
      %3417 = vmatpush1.msra.mxu0 0.0
      %3418 = vmatprep.subr.mxu0 0.0
      %3419 = vmatpush1.msra.mxu0 0.0
      %3420 = vmatprep.subr.mxu0 0.0
      %3421 = vmatpush1.msra.mxu0 0.0
      %3422 = vmatprep.subr.mxu0 0.0
      %3423 = vmatpush1.msra.mxu0 0.0
      %3424 = vmatprep.subr.mxu0 0.0
      %3425 = vmatpush1.msra.mxu0 0.0
      %3426 = vmatprep.subr.mxu0 0.0
      %3427 = vmatpush1.msra.mxu0 0.0
      %3428 = vmatprep.mubr.f32.mxu0 0.0
      %v3429 = vand.u32 %v3200, 4294901760
      %3430 = vmatmul.mubr.f32.gmra.mrb[0].mxu0 %v3429
      %v3431 = vpop.f32.mrb[0].mxu0
      %v3432 = vadd.f32 %v3291, %v3431
      %v3433 = vpop.f32.mrb[0].mxu0
      %3434 = vmatprep.mubr.f32.mxu0 0.0
      %v3435 = vand.u32 %v3203, 4294901760
      %3436 = vmatmul.mubr.f32.gmra.mrb[0].mxu0 %v3435
      %v3437 = vpop.f32.mrb[0].mxu0
      %v3438 = vadd.f32 %v3301, %v3437
      %v3439 = vpop.f32.mrb[0].mxu0
      %3440 = vmatprep.mubr.f32.mxu0 0.0
      %v3441 = vand.u32 %v3206, 4294901760
      %3442 = vmatmul.mubr.f32.gmra.mrb[0].mxu0 %v3441
      %v3443 = vpop.f32.mrb[0].mxu0
      %v3444 = vadd.f32 %v3311, %v3443
      %v3445 = vpop.f32.mrb[0].mxu0
      %3446 = vmatprep.mubr.f32.mxu0 0.0
      %v3447 = vand.u32 %v3209, 4294901760
      %3448 = vmatmul.mubr.f32.gmra.mrb[0].mxu0 %v3447
      %v3449 = vpop.f32.mrb[0].mxu0
      %v3450 = vadd.f32 %v3321, %v3449
      %v3451 = vpop.f32.mrb[0].mxu0
      %3452 = vdwg.mxu0
      %3453 = vmatprep.subr.mxu0 0.0
      %v3454 = vand.u32 %v1164, 4294901760
      %v3455 = vsub.f32 %v1164, %v3454
      %3456 = vmatpush1.msra.mxu0 %v3455
      %3457 = vmatprep.subr.mxu0 0.0
      %v3458 = vand.u32 %v1165, 4294901760
      %v3459 = vsub.f32 %v1165, %v3458
      %3460 = vmatpush1.msra.mxu0 %v3459
      %3461 = vmatprep.subr.mxu0 0.0
      %v3462 = vand.u32 %v1166, 4294901760
      %v3463 = vsub.f32 %v1166, %v3462
      %3464 = vmatpush1.msra.mxu0 %v3463
      %3465 = vmatprep.subr.mxu0 0.0
      %v3466 = vand.u32 %v1167, 4294901760
      %v3467 = vsub.f32 %v1167, %v3466
      %3468 = vmatpush1.msra.mxu0 %v3467
      %3469 = vmatprep.subr.mxu0 0.0
      %v3470 = vand.u32 %v1168, 4294901760
      %v3471 = vsub.f32 %v1168, %v3470
      %3472 = vmatpush1.msra.mxu0 %v3471
      %3473 = vmatprep.subr.mxu0 0.0
      %v3474 = vand.u32 %v1169, 4294901760
      %v3475 = vsub.f32 %v1169, %v3474
      %3476 = vmatpush1.msra.mxu0 %v3475
      %3477 = vmatprep.subr.mxu0 0.0
      %v3478 = vand.u32 %v1170, 4294901760
      %v3479 = vsub.f32 %v1170, %v3478
      %3480 = vmatpush1.msra.mxu0 %v3479
      %3481 = vmatprep.subr.mxu0 0.0
      %v3482 = vand.u32 %v1171, 4294901760
      %v3483 = vsub.f32 %v1171, %v3482
      %3484 = vmatpush1.msra.mxu0 %v3483
      %3485 = vmatprep.subr.mxu0 0.0
      %3486 = vmatpush1.msra.mxu0 0.0
      %3487 = vmatprep.subr.mxu0 0.0
      %3488 = vmatpush1.msra.mxu0 0.0
      %3489 = vmatprep.subr.mxu0 0.0
      %3490 = vmatpush1.msra.mxu0 0.0
      %3491 = vmatprep.subr.mxu0 0.0
      %3492 = vmatpush1.msra.mxu0 0.0
      %3493 = vmatprep.subr.mxu0 0.0
      %3494 = vmatpush1.msra.mxu0 0.0
      %3495 = vmatprep.subr.mxu0 0.0
      %3496 = vmatpush1.msra.mxu0 0.0
      %3497 = vmatprep.subr.mxu0 0.0
      %3498 = vmatpush1.msra.mxu0 0.0
      %3499 = vmatprep.subr.mxu0 0.0
      %3500 = vmatpush1.msra.mxu0 0.0
      %3501 = vmatprep.subr.mxu0 0.0
      %3502 = vmatpush1.msra.mxu0 0.0
      %3503 = vmatprep.subr.mxu0 0.0
      %3504 = vmatpush1.msra.mxu0 0.0
      %3505 = vmatprep.subr.mxu0 0.0
      %3506 = vmatpush1.msra.mxu0 0.0
      %3507 = vmatprep.subr.mxu0 0.0
      %3508 = vmatpush1.msra.mxu0 0.0
      %3509 = vmatprep.subr.mxu0 0.0
      %3510 = vmatpush1.msra.mxu0 0.0
      %3511 = vmatprep.subr.mxu0 0.0
      %3512 = vmatpush1.msra.mxu0 0.0
      %3513 = vmatprep.subr.mxu0 0.0
      %3514 = vmatpush1.msra.mxu0 0.0
      %3515 = vmatprep.subr.mxu0 0.0
      %3516 = vmatpush1.msra.mxu0 0.0
      %3517 = vmatprep.subr.mxu0 0.0
      %3518 = vmatpush1.msra.mxu0 0.0
      %3519 = vmatprep.subr.mxu0 0.0
      %3520 = vmatpush1.msra.mxu0 0.0
      %3521 = vmatprep.subr.mxu0 0.0
      %3522 = vmatpush1.msra.mxu0 0.0
      %3523 = vmatprep.subr.mxu0 0.0
      %3524 = vmatpush1.msra.mxu0 0.0
      %3525 = vmatprep.subr.mxu0 0.0
      %3526 = vmatpush1.msra.mxu0 0.0
      %3527 = vmatprep.subr.mxu0 0.0
      %3528 = vmatpush1.msra.mxu0 0.0
      %3529 = vmatprep.subr.mxu0 0.0
      %3530 = vmatpush1.msra.mxu0 0.0
      %3531 = vmatprep.subr.mxu0 0.0
      %3532 = vmatpush1.msra.mxu0 0.0
      %3533 = vmatprep.mubr.f32.mxu0 0.0
      %v3534 = vand.u32 %v3200, 4294901760
      %v3535 = vsub.f32 %v3200, %v3534
      %3536 = vmatmul.mubr.f32.gmra.mrb[0].mxu0 %v3535
      %v3537 = vpop.f32.mrb[0].mxu0
      %v3538 = vadd.f32 %v3432, %v3537
      %v3539 = vpop.f32.mrb[0].mxu0
      %3540 = vmatprep.mubr.f32.mxu0 0.0
      %v3541 = vand.u32 %v3203, 4294901760
      %v3542 = vsub.f32 %v3203, %v3541
      %3543 = vmatmul.mubr.f32.gmra.mrb[0].mxu0 %v3542
      %v3544 = vpop.f32.mrb[0].mxu0
      %v3545 = vadd.f32 %v3438, %v3544
      %v3546 = vpop.f32.mrb[0].mxu0
      %3547 = vmatprep.mubr.f32.mxu0 0.0
      %v3548 = vand.u32 %v3206, 4294901760
      %v3549 = vsub.f32 %v3206, %v3548
      %3550 = vmatmul.mubr.f32.gmra.mrb[0].mxu0 %v3549
      %v3551 = vpop.f32.mrb[0].mxu0
      %v3552 = vadd.f32 %v3444, %v3551
      %v3553 = vpop.f32.mrb[0].mxu0
      %3554 = vmatprep.mubr.f32.mxu0 0.0
      %v3555 = vand.u32 %v3209, 4294901760
      %v3556 = vsub.f32 %v3209, %v3555
      %3557 = vmatmul.mubr.f32.gmra.mrb[0].mxu0 %v3556
      %v3558 = vpop.f32.mrb[0].mxu0
      %v3559 = vadd.f32 %v3450, %v3558
      %v3560 = vpop.f32.mrb[0].mxu0
      %3561 = vdwg.mxu0
      %3562 = vmatprep.subr.mxu0 0.0
      %v3563 = vand.u32 %v1164, 4294901760
      %3564 = vmatpush1.msra.mxu0 %v3563
      %3565 = vmatprep.subr.mxu0 0.0
      %v3566 = vand.u32 %v1165, 4294901760
      %3567 = vmatpush1.msra.mxu0 %v3566
      %3568 = vmatprep.subr.mxu0 0.0
      %v3569 = vand.u32 %v1166, 4294901760
      %3570 = vmatpush1.msra.mxu0 %v3569
      %3571 = vmatprep.subr.mxu0 0.0
      %v3572 = vand.u32 %v1167, 4294901760
      %3573 = vmatpush1.msra.mxu0 %v3572
      %3574 = vmatprep.subr.mxu0 0.0
      %v3575 = vand.u32 %v1168, 4294901760
      %3576 = vmatpush1.msra.mxu0 %v3575
      %3577 = vmatprep.subr.mxu0 0.0
      %v3578 = vand.u32 %v1169, 4294901760
      %3579 = vmatpush1.msra.mxu0 %v3578
      %3580 = vmatprep.subr.mxu0 0.0
      %v3581 = vand.u32 %v1170, 4294901760
      %3582 = vmatpush1.msra.mxu0 %v3581
      %3583 = vmatprep.subr.mxu0 0.0
      %v3584 = vand.u32 %v1171, 4294901760
      %3585 = vmatpush1.msra.mxu0 %v3584
      %3586 = vmatprep.subr.mxu0 0.0
      %3587 = vmatpush1.msra.mxu0 0.0
      %3588 = vmatprep.subr.mxu0 0.0
      %3589 = vmatpush1.msra.mxu0 0.0
      %3590 = vmatprep.subr.mxu0 0.0
      %3591 = vmatpush1.msra.mxu0 0.0
      %3592 = vmatprep.subr.mxu0 0.0
      %3593 = vmatpush1.msra.mxu0 0.0
      %3594 = vmatprep.subr.mxu0 0.0
      %3595 = vmatpush1.msra.mxu0 0.0
      %3596 = vmatprep.subr.mxu0 0.0
      %3597 = vmatpush1.msra.mxu0 0.0
      %3598 = vmatprep.subr.mxu0 0.0
      %3599 = vmatpush1.msra.mxu0 0.0
      %3600 = vmatprep.subr.mxu0 0.0
      %3601 = vmatpush1.msra.mxu0 0.0
      %3602 = vmatprep.subr.mxu0 0.0
      %3603 = vmatpush1.msra.mxu0 0.0
      %3604 = vmatprep.subr.mxu0 0.0
      %3605 = vmatpush1.msra.mxu0 0.0
      %3606 = vmatprep.subr.mxu0 0.0
      %3607 = vmatpush1.msra.mxu0 0.0
      %3608 = vmatprep.subr.mxu0 0.0
      %3609 = vmatpush1.msra.mxu0 0.0
      %3610 = vmatprep.subr.mxu0 0.0
      %3611 = vmatpush1.msra.mxu0 0.0
      %3612 = vmatprep.subr.mxu0 0.0
      %3613 = vmatpush1.msra.mxu0 0.0
      %3614 = vmatprep.subr.mxu0 0.0
      %3615 = vmatpush1.msra.mxu0 0.0
      %3616 = vmatprep.subr.mxu0 0.0
      %3617 = vmatpush1.msra.mxu0 0.0
      %3618 = vmatprep.subr.mxu0 0.0
      %3619 = vmatpush1.msra.mxu0 0.0
      %3620 = vmatprep.subr.mxu0 0.0
      %3621 = vmatpush1.msra.mxu0 0.0
      %3622 = vmatprep.subr.mxu0 0.0
      %3623 = vmatpush1.msra.mxu0 0.0
      %3624 = vmatprep.subr.mxu0 0.0
      %3625 = vmatpush1.msra.mxu0 0.0
      %3626 = vmatprep.subr.mxu0 0.0
      %3627 = vmatpush1.msra.mxu0 0.0
      %3628 = vmatprep.subr.mxu0 0.0
      %3629 = vmatpush1.msra.mxu0 0.0
      %3630 = vmatprep.subr.mxu0 0.0
      %3631 = vmatpush1.msra.mxu0 0.0
      %3632 = vmatprep.subr.mxu0 0.0
      %3633 = vmatpush1.msra.mxu0 0.0
      %3634 = vmatprep.mubr.f32.mxu0 0.0
      %v3635 = vand.u32 %v3200, 4294901760
      %v3636 = vsub.f32 %v3200, %v3635
      %v3637 = vand.u32 %v3636, 4294901760
      %3638 = vmatmul.mubr.f32.gmra.mrb[0].mxu0 %v3637
      %v3639 = vpop.f32.mrb[0].mxu0
      %v3640 = vadd.f32 %v3538, %v3639
      %v3641 = vpop.f32.mrb[0].mxu0
      %3642 = vmatprep.mubr.f32.mxu0 0.0
      %v3643 = vand.u32 %v3203, 4294901760
      %v3644 = vsub.f32 %v3203, %v3643
      %v3645 = vand.u32 %v3644, 4294901760
      %3646 = vmatmul.mubr.f32.gmra.mrb[0].mxu0 %v3645
      %v3647 = vpop.f32.mrb[0].mxu0
      %v3648 = vadd.f32 %v3545, %v3647
      %v3649 = vpop.f32.mrb[0].mxu0
      %3650 = vmatprep.mubr.f32.mxu0 0.0
      %v3651 = vand.u32 %v3206, 4294901760
      %v3652 = vsub.f32 %v3206, %v3651
      %v3653 = vand.u32 %v3652, 4294901760
      %3654 = vmatmul.mubr.f32.gmra.mrb[0].mxu0 %v3653
      %v3655 = vpop.f32.mrb[0].mxu0
      %v3656 = vadd.f32 %v3552, %v3655
      %v3657 = vpop.f32.mrb[0].mxu0
      %3658 = vmatprep.mubr.f32.mxu0 0.0
      %v3659 = vand.u32 %v3209, 4294901760
      %v3660 = vsub.f32 %v3209, %v3659
      %v3661 = vand.u32 %v3660, 4294901760
      %3662 = vmatmul.mubr.f32.gmra.mrb[0].mxu0 %v3661
      %v3663 = vpop.f32.mrb[0].mxu0
      %v3664 = vadd.f32 %v3559, %v3663
      %v3665 = vpop.f32.mrb[0].mxu0
      %3666 = vdwg.mxu0
      %3667 = vmatprep.subr.mxu0 0.0
      %v3668 = vand.u32 %v1164, 4294901760
      %v3669 = vsub.f32 %v1164, %v3668
      %v3670 = vand.u32 %v3669, 4294901760
      %3671 = vmatpush1.msra.mxu0 %v3670
      %3672 = vmatprep.subr.mxu0 0.0
      %v3673 = vand.u32 %v1165, 4294901760
      %v3674 = vsub.f32 %v1165, %v3673
      %v3675 = vand.u32 %v3674, 4294901760
      %3676 = vmatpush1.msra.mxu0 %v3675
      %3677 = vmatprep.subr.mxu0 0.0
      %v3678 = vand.u32 %v1166, 4294901760
      %v3679 = vsub.f32 %v1166, %v3678
      %v3680 = vand.u32 %v3679, 4294901760
      %3681 = vmatpush1.msra.mxu0 %v3680
      %3682 = vmatprep.subr.mxu0 0.0
      %v3683 = vand.u32 %v1167, 4294901760
      %v3684 = vsub.f32 %v1167, %v3683
      %v3685 = vand.u32 %v3684, 4294901760
      %3686 = vmatpush1.msra.mxu0 %v3685
      %3687 = vmatprep.subr.mxu0 0.0
      %v3688 = vand.u32 %v1168, 4294901760
      %v3689 = vsub.f32 %v1168, %v3688
      %v3690 = vand.u32 %v3689, 4294901760
      %3691 = vmatpush1.msra.mxu0 %v3690
      %3692 = vmatprep.subr.mxu0 0.0
      %v3693 = vand.u32 %v1169, 4294901760
      %v3694 = vsub.f32 %v1169, %v3693
      %v3695 = vand.u32 %v3694, 4294901760
      %3696 = vmatpush1.msra.mxu0 %v3695
      %3697 = vmatprep.subr.mxu0 0.0
      %v3698 = vand.u32 %v1170, 4294901760
      %v3699 = vsub.f32 %v1170, %v3698
      %v3700 = vand.u32 %v3699, 4294901760
      %3701 = vmatpush1.msra.mxu0 %v3700
      %3702 = vmatprep.subr.mxu0 0.0
      %v3703 = vand.u32 %v1171, 4294901760
      %v3704 = vsub.f32 %v1171, %v3703
      %v3705 = vand.u32 %v3704, 4294901760
      %3706 = vmatpush1.msra.mxu0 %v3705
      %3707 = vmatprep.subr.mxu0 0.0
      %3708 = vmatpush1.msra.mxu0 0.0
      %3709 = vmatprep.subr.mxu0 0.0
      %3710 = vmatpush1.msra.mxu0 0.0
      %3711 = vmatprep.subr.mxu0 0.0
      %3712 = vmatpush1.msra.mxu0 0.0
      %3713 = vmatprep.subr.mxu0 0.0
      %3714 = vmatpush1.msra.mxu0 0.0
      %3715 = vmatprep.subr.mxu0 0.0
      %3716 = vmatpush1.msra.mxu0 0.0
      %3717 = vmatprep.subr.mxu0 0.0
      %3718 = vmatpush1.msra.mxu0 0.0
      %3719 = vmatprep.subr.mxu0 0.0
      %3720 = vmatpush1.msra.mxu0 0.0
      %3721 = vmatprep.subr.mxu0 0.0
      %3722 = vmatpush1.msra.mxu0 0.0
      %3723 = vmatprep.subr.mxu0 0.0
      %3724 = vmatpush1.msra.mxu0 0.0
      %3725 = vmatprep.subr.mxu0 0.0
      %3726 = vmatpush1.msra.mxu0 0.0
      %3727 = vmatprep.subr.mxu0 0.0
      %3728 = vmatpush1.msra.mxu0 0.0
      %3729 = vmatprep.subr.mxu0 0.0
      %3730 = vmatpush1.msra.mxu0 0.0
      %3731 = vmatprep.subr.mxu0 0.0
      %3732 = vmatpush1.msra.mxu0 0.0
      %3733 = vmatprep.subr.mxu0 0.0
      %3734 = vmatpush1.msra.mxu0 0.0
      %3735 = vmatprep.subr.mxu0 0.0
      %3736 = vmatpush1.msra.mxu0 0.0
      %3737 = vmatprep.subr.mxu0 0.0
      %3738 = vmatpush1.msra.mxu0 0.0
      %3739 = vmatprep.subr.mxu0 0.0
      %3740 = vmatpush1.msra.mxu0 0.0
      %3741 = vmatprep.subr.mxu0 0.0
      %3742 = vmatpush1.msra.mxu0 0.0
      %3743 = vmatprep.subr.mxu0 0.0
      %3744 = vmatpush1.msra.mxu0 0.0
      %3745 = vmatprep.subr.mxu0 0.0
      %3746 = vmatpush1.msra.mxu0 0.0
      %3747 = vmatprep.subr.mxu0 0.0
      %3748 = vmatpush1.msra.mxu0 0.0
      %3749 = vmatprep.subr.mxu0 0.0
      %3750 = vmatpush1.msra.mxu0 0.0
      %3751 = vmatprep.subr.mxu0 0.0
      %3752 = vmatpush1.msra.mxu0 0.0
      %3753 = vmatprep.subr.mxu0 0.0
      %3754 = vmatpush1.msra.mxu0 0.0
      %3755 = vmatprep.mubr.f32.mxu0 0.0
      %v3756 = vand.u32 %v3200, 4294901760
      %3757 = vmatmul.mubr.f32.gmra.mrb[0].mxu0 %v3756
      %v3758 = vpop.f32.mrb[0].mxu0
      %v3759 = vadd.f32 %v3640, %v3758
      %v3760 = vpop.f32.mrb[0].mxu0
      %3761 = vmatprep.mubr.f32.mxu0 0.0
      %v3762 = vand.u32 %v3203, 4294901760
      %3763 = vmatmul.mubr.f32.gmra.mrb[0].mxu0 %v3762
      %v3764 = vpop.f32.mrb[0].mxu0
      %v3765 = vadd.f32 %v3648, %v3764
      %v3766 = vpop.f32.mrb[0].mxu0
      %3767 = vmatprep.mubr.f32.mxu0 0.0
      %v3768 = vand.u32 %v3206, 4294901760
      %3769 = vmatmul.mubr.f32.gmra.mrb[0].mxu0 %v3768
      %v3770 = vpop.f32.mrb[0].mxu0
      %v3771 = vadd.f32 %v3656, %v3770
      %v3772 = vpop.f32.mrb[0].mxu0
      %3773 = vmatprep.mubr.f32.mxu0 0.0
      %v3774 = vand.u32 %v3209, 4294901760
      %3775 = vmatmul.mubr.f32.gmra.mrb[0].mxu0 %v3774
      %v3776 = vpop.f32.mrb[0].mxu0
      %v3777 = vadd.f32 %v3664, %v3776
      %v3778 = vpop.f32.mrb[0].mxu0
      %3779 = vdwg.mxu0
      %3780 = vmatprep.subr.mxu0 0.0
      %v3781 = vand.u32 %v1164, 4294901760
      %3782 = vmatpush1.msra.mxu0 %v3781
      %3783 = vmatprep.subr.mxu0 0.0
      %v3784 = vand.u32 %v1165, 4294901760
      %3785 = vmatpush1.msra.mxu0 %v3784
      %3786 = vmatprep.subr.mxu0 0.0
      %v3787 = vand.u32 %v1166, 4294901760
      %3788 = vmatpush1.msra.mxu0 %v3787
      %3789 = vmatprep.subr.mxu0 0.0
      %v3790 = vand.u32 %v1167, 4294901760
      %3791 = vmatpush1.msra.mxu0 %v3790
      %3792 = vmatprep.subr.mxu0 0.0
      %v3793 = vand.u32 %v1168, 4294901760
      %3794 = vmatpush1.msra.mxu0 %v3793
      %3795 = vmatprep.subr.mxu0 0.0
      %v3796 = vand.u32 %v1169, 4294901760
      %3797 = vmatpush1.msra.mxu0 %v3796
      %3798 = vmatprep.subr.mxu0 0.0
      %v3799 = vand.u32 %v1170, 4294901760
      %3800 = vmatpush1.msra.mxu0 %v3799
      %3801 = vmatprep.subr.mxu0 0.0
      %v3802 = vand.u32 %v1171, 4294901760
      %3803 = vmatpush1.msra.mxu0 %v3802
      %3804 = vmatprep.subr.mxu0 0.0
      %3805 = vmatpush1.msra.mxu0 0.0
      %3806 = vmatprep.subr.mxu0 0.0
      %3807 = vmatpush1.msra.mxu0 0.0
      %3808 = vmatprep.subr.mxu0 0.0
      %3809 = vmatpush1.msra.mxu0 0.0
      %3810 = vmatprep.subr.mxu0 0.0
      %3811 = vmatpush1.msra.mxu0 0.0
      %3812 = vmatprep.subr.mxu0 0.0
      %3813 = vmatpush1.msra.mxu0 0.0
      %3814 = vmatprep.subr.mxu0 0.0
      %3815 = vmatpush1.msra.mxu0 0.0
      %3816 = vmatprep.subr.mxu0 0.0
      %3817 = vmatpush1.msra.mxu0 0.0
      %3818 = vmatprep.subr.mxu0 0.0
      %3819 = vmatpush1.msra.mxu0 0.0
      %3820 = vmatprep.subr.mxu0 0.0
      %3821 = vmatpush1.msra.mxu0 0.0
      %3822 = vmatprep.subr.mxu0 0.0
      %3823 = vmatpush1.msra.mxu0 0.0
      %3824 = vmatprep.subr.mxu0 0.0
      %3825 = vmatpush1.msra.mxu0 0.0
      %3826 = vmatprep.subr.mxu0 0.0
      %3827 = vmatpush1.msra.mxu0 0.0
      %3828 = vmatprep.subr.mxu0 0.0
      %3829 = vmatpush1.msra.mxu0 0.0
      %3830 = vmatprep.subr.mxu0 0.0
      %3831 = vmatpush1.msra.mxu0 0.0
      %3832 = vmatprep.subr.mxu0 0.0
      %3833 = vmatpush1.msra.mxu0 0.0
      %3834 = vmatprep.subr.mxu0 0.0
      %3835 = vmatpush1.msra.mxu0 0.0
      %3836 = vmatprep.subr.mxu0 0.0
      %3837 = vmatpush1.msra.mxu0 0.0
      %3838 = vmatprep.subr.mxu0 0.0
      %3839 = vmatpush1.msra.mxu0 0.0
      %3840 = vmatprep.subr.mxu0 0.0
      %3841 = vmatpush1.msra.mxu0 0.0
      %3842 = vmatprep.subr.mxu0 0.0
      %3843 = vmatpush1.msra.mxu0 0.0
      %3844 = vmatprep.subr.mxu0 0.0
      %3845 = vmatpush1.msra.mxu0 0.0
      %3846 = vmatprep.subr.mxu0 0.0
      %3847 = vmatpush1.msra.mxu0 0.0
      %3848 = vmatprep.subr.mxu0 0.0
      %3849 = vmatpush1.msra.mxu0 0.0
      %3850 = vmatprep.subr.mxu0 0.0
      %3851 = vmatpush1.msra.mxu0 0.0
      %3852 = vmatprep.mubr.f32.mxu0 0.0
      %v3853 = vand.u32 %v3200, 4294901760
      %3854 = vmatmul.mubr.f32.gmra.mrb[0].mxu0 %v3853
      %v3855 = vpop.f32.mrb[0].mxu0
      %v3856 = vadd.f32 %v3759, %v3855
      %v3857 = vpop.f32.mrb[0].mxu0
      %3858 = vmatprep.mubr.f32.mxu0 0.0
      %v3859 = vand.u32 %v3203, 4294901760
      %3860 = vmatmul.mubr.f32.gmra.mrb[0].mxu0 %v3859
      %v3861 = vpop.f32.mrb[0].mxu0
      %v3862 = vadd.f32 %v3765, %v3861
      %v3863 = vpop.f32.mrb[0].mxu0
      %3864 = vmatprep.mubr.f32.mxu0 0.0
      %v3865 = vand.u32 %v3206, 4294901760
      %3866 = vmatmul.mubr.f32.gmra.mrb[0].mxu0 %v3865
      %v3867 = vpop.f32.mrb[0].mxu0
      %v3868 = vadd.f32 %v3771, %v3867
      %v3869 = vpop.f32.mrb[0].mxu0
      %3870 = vmatprep.mubr.f32.mxu0 0.0
      %v3871 = vand.u32 %v3209, 4294901760
      %3872 = vmatmul.mubr.f32.gmra.mrb[0].mxu0 %v3871
      %v3873 = vpop.f32.mrb[0].mxu0
      %v3874 = vadd.f32 %v3777, %v3873
      %v3875 = vpop.f32.mrb[0].mxu0
      %3876 = vdwg.mxu0
      %v3877 = vmul.f32 %v3856, 0.25
      %v3878 = vmul.f32 %v3862, 0.25
      %v3879 = vmul.f32 %v3868, 0.25
      %v3880 = vmul.f32 %v3874, 0.25
      %v3885 = vrot.slane %v2529, 1
      %v3886 = vrot.slane %v2530, 1
      %v3887 = vsel %vm186, %v3885, %v3886
      %v3888 = vrot.slane %v2531, 1
      %v3889 = vsel %vm186, %v3886, %v3888
      %v3890 = vrot.slane %v2532, 1
      %v3891 = vsel %vm186, %v3888, %v3890
      %v3896 = vadd.f32 %v2529, %v3887
      %v3897 = vadd.f32 %v2530, %v3889
      %v3898 = vadd.f32 %v2531, %v3891
      %v3899 = vadd.f32 %v2532, %v3890
      %v3900 = vrot.slane %v2529, 2
      %v3901 = vrot.slane %v2530, 2
      %v3902 = vsel %vm218, %v3900, %v3901
      %v3903 = vrot.slane %v2531, 2
      %v3904 = vsel %vm218, %v3901, %v3903
      %v3905 = vrot.slane %v2532, 2
      %v3906 = vsel %vm218, %v3903, %v3905
      %v3911 = vadd.f32 %v3896, %v3902
      %v3912 = vadd.f32 %v3897, %v3904
      %v3913 = vadd.f32 %v3898, %v3906
      %v3914 = vadd.f32 %v3899, %v3905
      %3919 = vrot.lane.b32.xlu0 %v3911, 127
      %v3920 = vpop.permute.xlu0 %3919
      %3921 = vrot.lane.b32.xlu0 %v3912, 127
      %v3922 = vpop.permute.xlu0 %3921
      %3923 = vrot.lane.b32.xlu0 %v3913, 127
      %v3924 = vpop.permute.xlu0 %3923
      %3925 = vrot.lane.b32.xlu0 %v3914, 127
      %v3926 = vpop.permute.xlu0 %3925
      %v3931 = vadd.f32 %v3911, %v3920
      %v3932 = vadd.f32 %v3912, %v3922
      %v3933 = vadd.f32 %v3913, %v3924
      %v3934 = vadd.f32 %v3914, %v3926
      %3935 = vrot.lane.b32.xlu0 %v3911, 126
      %v3936 = vpop.permute.xlu0 %3935
      %3937 = vrot.lane.b32.xlu0 %v3912, 126
      %v3938 = vpop.permute.xlu0 %3937
      %3939 = vrot.lane.b32.xlu0 %v3913, 126
      %v3940 = vpop.permute.xlu0 %3939
      %3941 = vrot.lane.b32.xlu0 %v3914, 126
      %v3942 = vpop.permute.xlu0 %3941
      %v3947 = vadd.f32 %v3931, %v3936
      %v3948 = vadd.f32 %v3932, %v3938
      %v3949 = vadd.f32 %v3933, %v3940
      %v3950 = vadd.f32 %v3934, %v3942
      %v3951 = vmul.f32 %v3947, 0.11111111
      %v3952 = vmul.f32 %v3948, 0.11111111
      %v3953 = vmul.f32 %v3949, 0.11111111
      %v3954 = vmul.f32 %v3950, 0.11111111
      %v3959 = vrot.slane %v3877, 1
      %v3960 = vrot.slane %v3878, 1
      %v3961 = vsel %vm186, %v3959, %v3960
      %v3962 = vrot.slane %v3879, 1
      %v3963 = vsel %vm186, %v3960, %v3962
      %v3964 = vrot.slane %v3880, 1
      %v3965 = vsel %vm186, %v3962, %v3964
      %v3970 = vadd.f32 %v3877, %v3961
      %v3971 = vadd.f32 %v3878, %v3963
      %v3972 = vadd.f32 %v3879, %v3965
      %v3973 = vadd.f32 %v3880, %v3964
      %v3974 = vrot.slane %v3877, 2
      %v3975 = vrot.slane %v3878, 2
      %v3976 = vsel %vm218, %v3974, %v3975
      %v3977 = vrot.slane %v3879, 2
      %v3978 = vsel %vm218, %v3975, %v3977
      %v3979 = vrot.slane %v3880, 2
      %v3980 = vsel %vm218, %v3977, %v3979
      %v3985 = vadd.f32 %v3970, %v3976
      %v3986 = vadd.f32 %v3971, %v3978
      %v3987 = vadd.f32 %v3972, %v3980
      %v3988 = vadd.f32 %v3973, %v3979
      %3993 = vrot.lane.b32.xlu0 %v3985, 127
      %v3994 = vpop.permute.xlu0 %3993
      %3995 = vrot.lane.b32.xlu0 %v3986, 127
      %v3996 = vpop.permute.xlu0 %3995
      %3997 = vrot.lane.b32.xlu0 %v3987, 127
      %v3998 = vpop.permute.xlu0 %3997
      %3999 = vrot.lane.b32.xlu0 %v3988, 127
      %v4000 = vpop.permute.xlu0 %3999
      %v4005 = vadd.f32 %v3985, %v3994
      %v4006 = vadd.f32 %v3986, %v3996
      %v4007 = vadd.f32 %v3987, %v3998
      %v4008 = vadd.f32 %v3988, %v4000
      %4009 = vrot.lane.b32.xlu0 %v3985, 126
      %v4010 = vpop.permute.xlu0 %4009
      %4011 = vrot.lane.b32.xlu0 %v3986, 126
      %v4012 = vpop.permute.xlu0 %4011
      %4013 = vrot.lane.b32.xlu0 %v3987, 126
      %v4014 = vpop.permute.xlu0 %4013
      %4015 = vrot.lane.b32.xlu0 %v3988, 126
      %v4016 = vpop.permute.xlu0 %4015
      %v4021 = vadd.f32 %v4005, %v4010
      %v4022 = vadd.f32 %v4006, %v4012
      %v4023 = vadd.f32 %v4007, %v4014
      %v4024 = vadd.f32 %v4008, %v4016
      %v4025 = vmul.f32 %v4021, 0.11111111
      %v4026 = vmul.f32 %v4022, 0.11111111
      %v4027 = vmul.f32 %v4023, 0.11111111
      %v4028 = vmul.f32 %v4024, 0.11111111
      %v4029 = vmul.f32 %v2529, %v2529
      %v4030 = vmul.f32 %v2530, %v2530
      %v4031 = vmul.f32 %v2531, %v2531
      %v4032 = vmul.f32 %v2532, %v2532
      %v4037 = vrot.slane %v4029, 1
      %v4038 = vrot.slane %v4030, 1
      %v4039 = vsel %vm186, %v4037, %v4038
      %v4040 = vrot.slane %v4031, 1
      %v4041 = vsel %vm186, %v4038, %v4040
      %v4042 = vrot.slane %v4032, 1
      %v4043 = vsel %vm186, %v4040, %v4042
      %v4048 = vadd.f32 %v4029, %v4039
      %v4049 = vadd.f32 %v4030, %v4041
      %v4050 = vadd.f32 %v4031, %v4043
      %v4051 = vadd.f32 %v4032, %v4042
      %v4052 = vrot.slane %v4029, 2
      %v4053 = vrot.slane %v4030, 2
      %v4054 = vsel %vm218, %v4052, %v4053
      %v4055 = vrot.slane %v4031, 2
      %v4056 = vsel %vm218, %v4053, %v4055
      %v4057 = vrot.slane %v4032, 2
      %v4058 = vsel %vm218, %v4055, %v4057
      %v4063 = vadd.f32 %v4048, %v4054
      %v4064 = vadd.f32 %v4049, %v4056
      %v4065 = vadd.f32 %v4050, %v4058
      %v4066 = vadd.f32 %v4051, %v4057
      %4071 = vrot.lane.b32.xlu0 %v4063, 127
      %v4072 = vpop.permute.xlu0 %4071
      %4073 = vrot.lane.b32.xlu0 %v4064, 127
      %v4074 = vpop.permute.xlu0 %4073
      %4075 = vrot.lane.b32.xlu0 %v4065, 127
      %v4076 = vpop.permute.xlu0 %4075
      %4077 = vrot.lane.b32.xlu0 %v4066, 127
      %v4078 = vpop.permute.xlu0 %4077
      %v4083 = vadd.f32 %v4063, %v4072
      %v4084 = vadd.f32 %v4064, %v4074
      %v4085 = vadd.f32 %v4065, %v4076
      %v4086 = vadd.f32 %v4066, %v4078
      %4087 = vrot.lane.b32.xlu0 %v4063, 126
      %v4088 = vpop.permute.xlu0 %4087
      %4089 = vrot.lane.b32.xlu0 %v4064, 126
      %v4090 = vpop.permute.xlu0 %4089
      %4091 = vrot.lane.b32.xlu0 %v4065, 126
      %v4092 = vpop.permute.xlu0 %4091
      %4093 = vrot.lane.b32.xlu0 %v4066, 126
      %v4094 = vpop.permute.xlu0 %4093
      %v4099 = vadd.f32 %v4083, %v4088
      %v4100 = vadd.f32 %v4084, %v4090
      %v4101 = vadd.f32 %v4085, %v4092
      %v4102 = vadd.f32 %v4086, %v4094
      %v4103 = vmul.f32 %v4099, 0.11111111
      %v4104 = vmul.f32 %v4100, 0.11111111
      %v4105 = vmul.f32 %v4101, 0.11111111
      %v4106 = vmul.f32 %v4102, 0.11111111
      %v4107 = vmul.f32 %v3877, %v3877
      %v4108 = vmul.f32 %v3878, %v3878
      %v4109 = vmul.f32 %v3879, %v3879
      %v4110 = vmul.f32 %v3880, %v3880
      %v4115 = vrot.slane %v4107, 1
      %v4116 = vrot.slane %v4108, 1
      %v4117 = vsel %vm186, %v4115, %v4116
      %v4118 = vrot.slane %v4109, 1
      %v4119 = vsel %vm186, %v4116, %v4118
      %v4120 = vrot.slane %v4110, 1
      %v4121 = vsel %vm186, %v4118, %v4120
      %v4126 = vadd.f32 %v4107, %v4117
      %v4127 = vadd.f32 %v4108, %v4119
      %v4128 = vadd.f32 %v4109, %v4121
      %v4129 = vadd.f32 %v4110, %v4120
      %v4130 = vrot.slane %v4107, 2
      %v4131 = vrot.slane %v4108, 2
      %v4132 = vsel %vm218, %v4130, %v4131
      %v4133 = vrot.slane %v4109, 2
      %v4134 = vsel %vm218, %v4131, %v4133
      %v4135 = vrot.slane %v4110, 2
      %v4136 = vsel %vm218, %v4133, %v4135
      %v4141 = vadd.f32 %v4126, %v4132
      %v4142 = vadd.f32 %v4127, %v4134
      %v4143 = vadd.f32 %v4128, %v4136
      %v4144 = vadd.f32 %v4129, %v4135
      %4149 = vrot.lane.b32.xlu0 %v4141, 127
      %v4150 = vpop.permute.xlu0 %4149
      %4151 = vrot.lane.b32.xlu0 %v4142, 127
      %v4152 = vpop.permute.xlu0 %4151
      %4153 = vrot.lane.b32.xlu0 %v4143, 127
      %v4154 = vpop.permute.xlu0 %4153
      %4155 = vrot.lane.b32.xlu0 %v4144, 127
      %v4156 = vpop.permute.xlu0 %4155
      %v4161 = vadd.f32 %v4141, %v4150
      %v4162 = vadd.f32 %v4142, %v4152
      %v4163 = vadd.f32 %v4143, %v4154
      %v4164 = vadd.f32 %v4144, %v4156
      %4165 = vrot.lane.b32.xlu0 %v4141, 126
      %v4166 = vpop.permute.xlu0 %4165
      %4167 = vrot.lane.b32.xlu0 %v4142, 126
      %v4168 = vpop.permute.xlu0 %4167
      %4169 = vrot.lane.b32.xlu0 %v4143, 126
      %v4170 = vpop.permute.xlu0 %4169
      %4171 = vrot.lane.b32.xlu0 %v4144, 126
      %v4172 = vpop.permute.xlu0 %4171
      %v4177 = vadd.f32 %v4161, %v4166
      %v4178 = vadd.f32 %v4162, %v4168
      %v4179 = vadd.f32 %v4163, %v4170
      %v4180 = vadd.f32 %v4164, %v4172
      %v4181 = vmul.f32 %v4177, 0.11111111
      %v4182 = vmul.f32 %v4178, 0.11111111
      %v4183 = vmul.f32 %v4179, 0.11111111
      %v4184 = vmul.f32 %v4180, 0.11111111
      %v4185 = vmul.f32 %v2529, %v3877
      %v4186 = vmul.f32 %v2530, %v3878
      %v4187 = vmul.f32 %v2531, %v3879
      %v4188 = vmul.f32 %v2532, %v3880
      %v4193 = vrot.slane %v4185, 1
      %v4194 = vrot.slane %v4186, 1
      %v4195 = vsel %vm186, %v4193, %v4194
      %v4196 = vrot.slane %v4187, 1
      %v4197 = vsel %vm186, %v4194, %v4196
      %v4198 = vrot.slane %v4188, 1
      %v4199 = vsel %vm186, %v4196, %v4198
      %v4204 = vadd.f32 %v4185, %v4195
      %v4205 = vadd.f32 %v4186, %v4197
      %v4206 = vadd.f32 %v4187, %v4199
      %v4207 = vadd.f32 %v4188, %v4198
      %v4208 = vrot.slane %v4185, 2
      %v4209 = vrot.slane %v4186, 2
      %v4210 = vsel %vm218, %v4208, %v4209
      %v4211 = vrot.slane %v4187, 2
      %v4212 = vsel %vm218, %v4209, %v4211
      %v4213 = vrot.slane %v4188, 2
      %v4214 = vsel %vm218, %v4211, %v4213
      %v4219 = vadd.f32 %v4204, %v4210
      %v4220 = vadd.f32 %v4205, %v4212
      %v4221 = vadd.f32 %v4206, %v4214
      %v4222 = vadd.f32 %v4207, %v4213
      %4227 = vrot.lane.b32.xlu0 %v4219, 127
      %v4228 = vpop.permute.xlu0 %4227
      %4229 = vrot.lane.b32.xlu0 %v4220, 127
      %v4230 = vpop.permute.xlu0 %4229
      %4231 = vrot.lane.b32.xlu0 %v4221, 127
      %v4232 = vpop.permute.xlu0 %4231
      %4233 = vrot.lane.b32.xlu0 %v4222, 127
      %v4234 = vpop.permute.xlu0 %4233
      %v4239 = vadd.f32 %v4219, %v4228
      %v4240 = vadd.f32 %v4220, %v4230
      %v4241 = vadd.f32 %v4221, %v4232
      %v4242 = vadd.f32 %v4222, %v4234
      %4243 = vrot.lane.b32.xlu0 %v4219, 126
      %v4244 = vpop.permute.xlu0 %4243
      %4245 = vrot.lane.b32.xlu0 %v4220, 126
      %v4246 = vpop.permute.xlu0 %4245
      %4247 = vrot.lane.b32.xlu0 %v4221, 126
      %v4248 = vpop.permute.xlu0 %4247
      %4249 = vrot.lane.b32.xlu0 %v4222, 126
      %v4250 = vpop.permute.xlu0 %4249
      %v4255 = vadd.f32 %v4239, %v4244
      %v4256 = vadd.f32 %v4240, %v4246
      %v4257 = vadd.f32 %v4241, %v4248
      %v4258 = vadd.f32 %v4242, %v4250
      %v4259 = vmul.f32 %v4255, 0.11111111
      %v4260 = vmul.f32 %v4256, 0.11111111
      %v4261 = vmul.f32 %v4257, 0.11111111
      %v4262 = vmul.f32 %v4258, 0.11111111
      %v4263 = vmul.f32 %v3951, %v4025
      %v4264 = vmul.f32 %v3952, %v4026
      %v4265 = vmul.f32 %v3953, %v4027
      %v4266 = vmul.f32 %v3954, %v4028
      %v4267 = vmul.f32 %v3951, %v3951
      %v4268 = vmul.f32 %v3952, %v3952
      %v4269 = vmul.f32 %v3953, %v3953
      %v4270 = vmul.f32 %v3954, %v3954
      %v4271 = vmul.f32 %v4025, %v4025
      %v4272 = vmul.f32 %v4026, %v4026
      %v4273 = vmul.f32 %v4027, %v4027
      %v4274 = vmul.f32 %v4028, %v4028
      %v4275 = vsub.f32 %v4103, %v4267
      %v4276 = vsub.f32 %v4104, %v4268
      %v4277 = vsub.f32 %v4105, %v4269
      %v4278 = vsub.f32 %v4106, %v4270
      %v4279 = vsub.f32 %v4181, %v4271
      %v4280 = vsub.f32 %v4182, %v4272
      %v4281 = vsub.f32 %v4183, %v4273
      %v4282 = vsub.f32 %v4184, %v4274
      %v4283 = vsub.f32 %v4259, %v4263
      %v4284 = vsub.f32 %v4260, %v4264
      %v4285 = vsub.f32 %v4261, %v4265
      %v4286 = vsub.f32 %v4262, %v4266
      %v4287 = vmul.f32 %v4283, 2.0
      %v4288 = vmul.f32 %v4284, 2.0
      %v4289 = vmul.f32 %v4285, 2.0
      %v4290 = vmul.f32 %v4286, 2.0
      %v4291 = vadd.f32 %v4287, 8.1e-07
      %v4292 = vadd.f32 %v4288, 8.1e-07
      %v4293 = vadd.f32 %v4289, 8.1e-07
      %v4294 = vadd.f32 %v4290, 8.1e-07
      %v4295 = vadd.f32 %v4275, %v4279
      %v4296 = vadd.f32 %v4276, %v4280
      %v4297 = vadd.f32 %v4277, %v4281
      %v4298 = vadd.f32 %v4278, %v4282
      %v4299 = vadd.f32 %v4295, 8.1e-07
      %v4300 = vadd.f32 %v4296, 8.1e-07
      %v4301 = vadd.f32 %v4297, 8.1e-07
      %v4302 = vadd.f32 %v4298, 8.1e-07
      %v4303 = vrcp.pop %v4299
      %v4304 = vmul.f32 %v4291, %v4303
      %v4305 = vrcp.pop %v4300
      %v4306 = vmul.f32 %v4292, %v4305
      %v4307 = vrcp.pop %v4301
      %v4308 = vmul.f32 %v4293, %v4307
      %v4309 = vrcp.pop %v4302
      %v4310 = vmul.f32 %v4294, %v4309
      %vm4311 = vcmask 244736
      %v4312 = vsel %vm4311, %v4304, 0.0
      %4313 = vadd.xlane.f32.xlu0 %v4312
      %v4314 = vpop.xlane.xlu0 %4313
      %v4315 = vsel %vm4311, %v4306, 0.0
      %4316 = vadd.xlane.f32.xlu0 %v4315
      %v4317 = vpop.xlane.xlu0 %4316
      %v4318 = vsel %vm4311, %v4308, 0.0
      %4319 = vadd.xlane.f32.xlu0 %v4318
      %v4320 = vpop.xlane.xlu0 %4319
      %vm4321 = vcmask 242688
      %v4322 = vsel %vm4321, %v4310, 0.0
      %4323 = vadd.xlane.f32.xlu0 %v4322
      %v4324 = vpop.xlane.xlu0 %4323
      %v4325 = vadd.f32 %v4314, %v4317
      %v4326 = vadd.f32 %v4325, %v4320
      %v4327 = vsel %vm218, %v4324, 0.0
      %v4328 = vadd.f32 %v4326, %v4327
      %v4329 = vrot.slane %v4328, 4
      %v4330 = vadd.f32 %v4328, %v4329
      %v4331 = vrot.slane %v4330, 2
      %v4332 = vadd.f32 %v4330, %v4331
      %v4333 = vrot.slane %v4332, 1
      %v4334 = vadd.f32 %v4332, %v4333
      %v4335 = vmul.f32 %v4334, 0.0011111111
      %vm4336 = vcmask 261120
      %v4337 = vsel %vm4336, %v1122, 0
      %v4339 = vsel %vm4336, %v1123, 0
      %4341 = vmatprep.subr.mxu0 0.0
      %v4342 = vand.u32 %v2529, 4294901760
      %4343 = vmatpush1.msra.mxu0 %v4342
      %4344 = vmatprep.subr.mxu0 0.0
      %v4345 = vand.u32 %v2530, 4294901760
      %4346 = vmatpush1.msra.mxu0 %v4345
      %4347 = vmatprep.subr.mxu0 0.0
      %v4348 = vand.u32 %v2531, 4294901760
      %4349 = vmatpush1.msra.mxu0 %v4348
      %4350 = vmatprep.subr.mxu0 0.0
      %v4351 = vand.u32 %v2532, 4294901760
      %4352 = vmatpush1.msra.mxu0 %v4351
      %4353 = vmatprep.subr.mxu0 0.0
      %4354 = vmatpush1.msra.mxu0 0.0
      %4355 = vmatprep.subr.mxu0 0.0
      %4356 = vmatpush1.msra.mxu0 0.0
      %4357 = vmatprep.subr.mxu0 0.0
      %4358 = vmatpush1.msra.mxu0 0.0
      %4359 = vmatprep.subr.mxu0 0.0
      %4360 = vmatpush1.msra.mxu0 0.0
      %4361 = vmatprep.subr.mxu0 0.0
      %4362 = vmatpush1.msra.mxu0 0.0
      %4363 = vmatprep.subr.mxu0 0.0
      %4364 = vmatpush1.msra.mxu0 0.0
      %4365 = vmatprep.subr.mxu0 0.0
      %4366 = vmatpush1.msra.mxu0 0.0
      %4367 = vmatprep.subr.mxu0 0.0
      %4368 = vmatpush1.msra.mxu0 0.0
      %4369 = vmatprep.subr.mxu0 0.0
      %4370 = vmatpush1.msra.mxu0 0.0
      %4371 = vmatprep.subr.mxu0 0.0
      %4372 = vmatpush1.msra.mxu0 0.0
      %4373 = vmatprep.subr.mxu0 0.0
      %4374 = vmatpush1.msra.mxu0 0.0
      %4375 = vmatprep.subr.mxu0 0.0
      %4376 = vmatpush1.msra.mxu0 0.0
      %4377 = vmatprep.subr.mxu0 0.0
      %4378 = vmatpush1.msra.mxu0 0.0
      %4379 = vmatprep.subr.mxu0 0.0
      %4380 = vmatpush1.msra.mxu0 0.0
      %4381 = vmatprep.subr.mxu0 0.0
      %4382 = vmatpush1.msra.mxu0 0.0
      %4383 = vmatprep.subr.mxu0 0.0
      %4384 = vmatpush1.msra.mxu0 0.0
      %4385 = vmatprep.subr.mxu0 0.0
      %4386 = vmatpush1.msra.mxu0 0.0
      %4387 = vmatprep.subr.mxu0 0.0
      %4388 = vmatpush1.msra.mxu0 0.0
      %4389 = vmatprep.subr.mxu0 0.0
      %4390 = vmatpush1.msra.mxu0 0.0
      %4391 = vmatprep.subr.mxu0 0.0
      %4392 = vmatpush1.msra.mxu0 0.0
      %4393 = vmatprep.subr.mxu0 0.0
      %4394 = vmatpush1.msra.mxu0 0.0
      %4395 = vmatprep.subr.mxu0 0.0
      %4396 = vmatpush1.msra.mxu0 0.0
      %4397 = vmatprep.subr.mxu0 0.0
      %4398 = vmatpush1.msra.mxu0 0.0
      %4399 = vmatprep.subr.mxu0 0.0
      %4400 = vmatpush1.msra.mxu0 0.0
      %4401 = vmatprep.subr.mxu0 0.0
      %4402 = vmatpush1.msra.mxu0 0.0
      %4403 = vmatprep.subr.mxu0 0.0
      %4404 = vmatpush1.msra.mxu0 0.0
      %4405 = vmatprep.subr.mxu0 0.0
      %4406 = vmatpush1.msra.mxu0 0.0
      %4407 = vmatprep.subr.mxu0 0.0
      %4408 = vmatpush1.msra.mxu0 0.0
      %4409 = vmatprep.mubr.f32.mxu0 0.0
      %v4410 = vand.u32 %v4337, 4294901760
      %v4411 = vsub.f32 %v4337, %v4410
      %v4412 = vand.u32 %v4411, 4294901760
      %v4413 = vsub.f32 %v4411, %v4412
      %v4414 = vand.u32 %v4413, 4294901760
      %4415 = vmatmul.mubr.f32.gmra.mrb[0].mxu0 %v4414
      %v4416 = vpop.f32.mrb[0].mxu0
      %v4417 = vadd.f32 0.0, %v4416
      %v4418 = vpop.f32.mrb[0].mxu0
      %4419 = vmatprep.mubr.f32.mxu0 0.0
      %v4420 = vand.u32 %v4339, 4294901760
      %v4421 = vsub.f32 %v4339, %v4420
      %v4422 = vand.u32 %v4421, 4294901760
      %v4423 = vsub.f32 %v4421, %v4422
      %v4424 = vand.u32 %v4423, 4294901760
      %4425 = vmatmul.mubr.f32.gmra.mrb[0].mxu0 %v4424
      %v4426 = vpop.f32.mrb[0].mxu0
      %v4427 = vadd.f32 0.0, %v4426
      %v4428 = vpop.f32.mrb[0].mxu0
      %4429 = vdwg.mxu0
      %4430 = vmatprep.subr.mxu0 0.0
      %v4431 = vand.u32 %v2529, 4294901760
      %v4432 = vsub.f32 %v2529, %v4431
      %v4433 = vand.u32 %v4432, 4294901760
      %v4434 = vsub.f32 %v4432, %v4433
      %v4435 = vand.u32 %v4434, 4294901760
      %4436 = vmatpush1.msra.mxu0 %v4435
      %4437 = vmatprep.subr.mxu0 0.0
      %v4438 = vand.u32 %v2530, 4294901760
      %v4439 = vsub.f32 %v2530, %v4438
      %v4440 = vand.u32 %v4439, 4294901760
      %v4441 = vsub.f32 %v4439, %v4440
      %v4442 = vand.u32 %v4441, 4294901760
      %4443 = vmatpush1.msra.mxu0 %v4442
      %4444 = vmatprep.subr.mxu0 0.0
      %v4445 = vand.u32 %v2531, 4294901760
      %v4446 = vsub.f32 %v2531, %v4445
      %v4447 = vand.u32 %v4446, 4294901760
      %v4448 = vsub.f32 %v4446, %v4447
      %v4449 = vand.u32 %v4448, 4294901760
      %4450 = vmatpush1.msra.mxu0 %v4449
      %4451 = vmatprep.subr.mxu0 0.0
      %v4452 = vand.u32 %v2532, 4294901760
      %v4453 = vsub.f32 %v2532, %v4452
      %v4454 = vand.u32 %v4453, 4294901760
      %v4455 = vsub.f32 %v4453, %v4454
      %v4456 = vand.u32 %v4455, 4294901760
      %4457 = vmatpush1.msra.mxu0 %v4456
      %4458 = vmatprep.subr.mxu0 0.0
      %4459 = vmatpush1.msra.mxu0 0.0
      %4460 = vmatprep.subr.mxu0 0.0
      %4461 = vmatpush1.msra.mxu0 0.0
      %4462 = vmatprep.subr.mxu0 0.0
      %4463 = vmatpush1.msra.mxu0 0.0
      %4464 = vmatprep.subr.mxu0 0.0
      %4465 = vmatpush1.msra.mxu0 0.0
      %4466 = vmatprep.subr.mxu0 0.0
      %4467 = vmatpush1.msra.mxu0 0.0
      %4468 = vmatprep.subr.mxu0 0.0
      %4469 = vmatpush1.msra.mxu0 0.0
      %4470 = vmatprep.subr.mxu0 0.0
      %4471 = vmatpush1.msra.mxu0 0.0
      %4472 = vmatprep.subr.mxu0 0.0
      %4473 = vmatpush1.msra.mxu0 0.0
      %4474 = vmatprep.subr.mxu0 0.0
      %4475 = vmatpush1.msra.mxu0 0.0
      %4476 = vmatprep.subr.mxu0 0.0
      %4477 = vmatpush1.msra.mxu0 0.0
      %4478 = vmatprep.subr.mxu0 0.0
      %4479 = vmatpush1.msra.mxu0 0.0
      %4480 = vmatprep.subr.mxu0 0.0
      %4481 = vmatpush1.msra.mxu0 0.0
      %4482 = vmatprep.subr.mxu0 0.0
      %4483 = vmatpush1.msra.mxu0 0.0
      %4484 = vmatprep.subr.mxu0 0.0
      %4485 = vmatpush1.msra.mxu0 0.0
      %4486 = vmatprep.subr.mxu0 0.0
      %4487 = vmatpush1.msra.mxu0 0.0
      %4488 = vmatprep.subr.mxu0 0.0
      %4489 = vmatpush1.msra.mxu0 0.0
      %4490 = vmatprep.subr.mxu0 0.0
      %4491 = vmatpush1.msra.mxu0 0.0
      %4492 = vmatprep.subr.mxu0 0.0
      %4493 = vmatpush1.msra.mxu0 0.0
      %4494 = vmatprep.subr.mxu0 0.0
      %4495 = vmatpush1.msra.mxu0 0.0
      %4496 = vmatprep.subr.mxu0 0.0
      %4497 = vmatpush1.msra.mxu0 0.0
      %4498 = vmatprep.subr.mxu0 0.0
      %4499 = vmatpush1.msra.mxu0 0.0
      %4500 = vmatprep.subr.mxu0 0.0
      %4501 = vmatpush1.msra.mxu0 0.0
      %4502 = vmatprep.subr.mxu0 0.0
      %4503 = vmatpush1.msra.mxu0 0.0
      %4504 = vmatprep.subr.mxu0 0.0
      %4505 = vmatpush1.msra.mxu0 0.0
      %4506 = vmatprep.subr.mxu0 0.0
      %4507 = vmatpush1.msra.mxu0 0.0
      %4508 = vmatprep.subr.mxu0 0.0
      %4509 = vmatpush1.msra.mxu0 0.0
      %4510 = vmatprep.subr.mxu0 0.0
      %4511 = vmatpush1.msra.mxu0 0.0
      %4512 = vmatprep.subr.mxu0 0.0
      %4513 = vmatpush1.msra.mxu0 0.0
      %4514 = vmatprep.mubr.f32.mxu0 0.0
      %v4515 = vand.u32 %v4337, 4294901760
      %4516 = vmatmul.mubr.f32.gmra.mrb[0].mxu0 %v4515
      %v4517 = vpop.f32.mrb[0].mxu0
      %v4518 = vadd.f32 %v4417, %v4517
      %v4519 = vpop.f32.mrb[0].mxu0
      %4520 = vmatprep.mubr.f32.mxu0 0.0
      %v4521 = vand.u32 %v4339, 4294901760
      %4522 = vmatmul.mubr.f32.gmra.mrb[0].mxu0 %v4521
      %v4523 = vpop.f32.mrb[0].mxu0
      %v4524 = vadd.f32 %v4427, %v4523
      %v4525 = vpop.f32.mrb[0].mxu0
      %4526 = vdwg.mxu0
      %4527 = vmatprep.subr.mxu0 0.0
      %v4528 = vand.u32 %v2529, 4294901760
      %v4529 = vsub.f32 %v2529, %v4528
      %4530 = vmatpush1.msra.mxu0 %v4529
      %4531 = vmatprep.subr.mxu0 0.0
      %v4532 = vand.u32 %v2530, 4294901760
      %v4533 = vsub.f32 %v2530, %v4532
      %4534 = vmatpush1.msra.mxu0 %v4533
      %4535 = vmatprep.subr.mxu0 0.0
      %v4536 = vand.u32 %v2531, 4294901760
      %v4537 = vsub.f32 %v2531, %v4536
      %4538 = vmatpush1.msra.mxu0 %v4537
      %4539 = vmatprep.subr.mxu0 0.0
      %v4540 = vand.u32 %v2532, 4294901760
      %v4541 = vsub.f32 %v2532, %v4540
      %4542 = vmatpush1.msra.mxu0 %v4541
      %4543 = vmatprep.subr.mxu0 0.0
      %4544 = vmatpush1.msra.mxu0 0.0
      %4545 = vmatprep.subr.mxu0 0.0
      %4546 = vmatpush1.msra.mxu0 0.0
      %4547 = vmatprep.subr.mxu0 0.0
      %4548 = vmatpush1.msra.mxu0 0.0
      %4549 = vmatprep.subr.mxu0 0.0
      %4550 = vmatpush1.msra.mxu0 0.0
      %4551 = vmatprep.subr.mxu0 0.0
      %4552 = vmatpush1.msra.mxu0 0.0
      %4553 = vmatprep.subr.mxu0 0.0
      %4554 = vmatpush1.msra.mxu0 0.0
      %4555 = vmatprep.subr.mxu0 0.0
      %4556 = vmatpush1.msra.mxu0 0.0
      %4557 = vmatprep.subr.mxu0 0.0
      %4558 = vmatpush1.msra.mxu0 0.0
      %4559 = vmatprep.subr.mxu0 0.0
      %4560 = vmatpush1.msra.mxu0 0.0
      %4561 = vmatprep.subr.mxu0 0.0
      %4562 = vmatpush1.msra.mxu0 0.0
      %4563 = vmatprep.subr.mxu0 0.0
      %4564 = vmatpush1.msra.mxu0 0.0
      %4565 = vmatprep.subr.mxu0 0.0
      %4566 = vmatpush1.msra.mxu0 0.0
      %4567 = vmatprep.subr.mxu0 0.0
      %4568 = vmatpush1.msra.mxu0 0.0
      %4569 = vmatprep.subr.mxu0 0.0
      %4570 = vmatpush1.msra.mxu0 0.0
      %4571 = vmatprep.subr.mxu0 0.0
      %4572 = vmatpush1.msra.mxu0 0.0
      %4573 = vmatprep.subr.mxu0 0.0
      %4574 = vmatpush1.msra.mxu0 0.0
      %4575 = vmatprep.subr.mxu0 0.0
      %4576 = vmatpush1.msra.mxu0 0.0
      %4577 = vmatprep.subr.mxu0 0.0
      %4578 = vmatpush1.msra.mxu0 0.0
      %4579 = vmatprep.subr.mxu0 0.0
      %4580 = vmatpush1.msra.mxu0 0.0
      %4581 = vmatprep.subr.mxu0 0.0
      %4582 = vmatpush1.msra.mxu0 0.0
      %4583 = vmatprep.subr.mxu0 0.0
      %4584 = vmatpush1.msra.mxu0 0.0
      %4585 = vmatprep.subr.mxu0 0.0
      %4586 = vmatpush1.msra.mxu0 0.0
      %4587 = vmatprep.subr.mxu0 0.0
      %4588 = vmatpush1.msra.mxu0 0.0
      %4589 = vmatprep.subr.mxu0 0.0
      %4590 = vmatpush1.msra.mxu0 0.0
      %4591 = vmatprep.subr.mxu0 0.0
      %4592 = vmatpush1.msra.mxu0 0.0
      %4593 = vmatprep.subr.mxu0 0.0
      %4594 = vmatpush1.msra.mxu0 0.0
      %4595 = vmatprep.subr.mxu0 0.0
      %4596 = vmatpush1.msra.mxu0 0.0
      %4597 = vmatprep.subr.mxu0 0.0
      %4598 = vmatpush1.msra.mxu0 0.0
      %4599 = vmatprep.mubr.f32.mxu0 0.0
      %v4600 = vand.u32 %v4337, 4294901760
      %v4601 = vsub.f32 %v4337, %v4600
      %4602 = vmatmul.mubr.f32.gmra.mrb[0].mxu0 %v4601
      %v4603 = vpop.f32.mrb[0].mxu0
      %v4604 = vadd.f32 %v4518, %v4603
      %v4605 = vpop.f32.mrb[0].mxu0
      %4606 = vmatprep.mubr.f32.mxu0 0.0
      %v4607 = vand.u32 %v4339, 4294901760
      %v4608 = vsub.f32 %v4339, %v4607
      %4609 = vmatmul.mubr.f32.gmra.mrb[0].mxu0 %v4608
      %v4610 = vpop.f32.mrb[0].mxu0
      %v4611 = vadd.f32 %v4524, %v4610
      %v4612 = vpop.f32.mrb[0].mxu0
      %4613 = vdwg.mxu0
      %4614 = vmatprep.subr.mxu0 0.0
      %v4615 = vand.u32 %v2529, 4294901760
      %4616 = vmatpush1.msra.mxu0 %v4615
      %4617 = vmatprep.subr.mxu0 0.0
      %v4618 = vand.u32 %v2530, 4294901760
      %4619 = vmatpush1.msra.mxu0 %v4618
      %4620 = vmatprep.subr.mxu0 0.0
      %v4621 = vand.u32 %v2531, 4294901760
      %4622 = vmatpush1.msra.mxu0 %v4621
      %4623 = vmatprep.subr.mxu0 0.0
      %v4624 = vand.u32 %v2532, 4294901760
      %4625 = vmatpush1.msra.mxu0 %v4624
      %4626 = vmatprep.subr.mxu0 0.0
      %4627 = vmatpush1.msra.mxu0 0.0
      %4628 = vmatprep.subr.mxu0 0.0
      %4629 = vmatpush1.msra.mxu0 0.0
      %4630 = vmatprep.subr.mxu0 0.0
      %4631 = vmatpush1.msra.mxu0 0.0
      %4632 = vmatprep.subr.mxu0 0.0
      %4633 = vmatpush1.msra.mxu0 0.0
      %4634 = vmatprep.subr.mxu0 0.0
      %4635 = vmatpush1.msra.mxu0 0.0
      %4636 = vmatprep.subr.mxu0 0.0
      %4637 = vmatpush1.msra.mxu0 0.0
      %4638 = vmatprep.subr.mxu0 0.0
      %4639 = vmatpush1.msra.mxu0 0.0
      %4640 = vmatprep.subr.mxu0 0.0
      %4641 = vmatpush1.msra.mxu0 0.0
      %4642 = vmatprep.subr.mxu0 0.0
      %4643 = vmatpush1.msra.mxu0 0.0
      %4644 = vmatprep.subr.mxu0 0.0
      %4645 = vmatpush1.msra.mxu0 0.0
      %4646 = vmatprep.subr.mxu0 0.0
      %4647 = vmatpush1.msra.mxu0 0.0
      %4648 = vmatprep.subr.mxu0 0.0
      %4649 = vmatpush1.msra.mxu0 0.0
      %4650 = vmatprep.subr.mxu0 0.0
      %4651 = vmatpush1.msra.mxu0 0.0
      %4652 = vmatprep.subr.mxu0 0.0
      %4653 = vmatpush1.msra.mxu0 0.0
      %4654 = vmatprep.subr.mxu0 0.0
      %4655 = vmatpush1.msra.mxu0 0.0
      %4656 = vmatprep.subr.mxu0 0.0
      %4657 = vmatpush1.msra.mxu0 0.0
      %4658 = vmatprep.subr.mxu0 0.0
      %4659 = vmatpush1.msra.mxu0 0.0
      %4660 = vmatprep.subr.mxu0 0.0
      %4661 = vmatpush1.msra.mxu0 0.0
      %4662 = vmatprep.subr.mxu0 0.0
      %4663 = vmatpush1.msra.mxu0 0.0
      %4664 = vmatprep.subr.mxu0 0.0
      %4665 = vmatpush1.msra.mxu0 0.0
      %4666 = vmatprep.subr.mxu0 0.0
      %4667 = vmatpush1.msra.mxu0 0.0
      %4668 = vmatprep.subr.mxu0 0.0
      %4669 = vmatpush1.msra.mxu0 0.0
      %4670 = vmatprep.subr.mxu0 0.0
      %4671 = vmatpush1.msra.mxu0 0.0
      %4672 = vmatprep.subr.mxu0 0.0
      %4673 = vmatpush1.msra.mxu0 0.0
      %4674 = vmatprep.subr.mxu0 0.0
      %4675 = vmatpush1.msra.mxu0 0.0
      %4676 = vmatprep.subr.mxu0 0.0
      %4677 = vmatpush1.msra.mxu0 0.0
      %4678 = vmatprep.subr.mxu0 0.0
      %4679 = vmatpush1.msra.mxu0 0.0
      %4680 = vmatprep.subr.mxu0 0.0
      %4681 = vmatpush1.msra.mxu0 0.0
      %4682 = vmatprep.mubr.f32.mxu0 0.0
      %v4683 = vand.u32 %v4337, 4294901760
      %v4684 = vsub.f32 %v4337, %v4683
      %v4685 = vand.u32 %v4684, 4294901760
      %4686 = vmatmul.mubr.f32.gmra.mrb[0].mxu0 %v4685
      %v4687 = vpop.f32.mrb[0].mxu0
      %v4688 = vadd.f32 %v4604, %v4687
      %v4689 = vpop.f32.mrb[0].mxu0
      %4690 = vmatprep.mubr.f32.mxu0 0.0
      %v4691 = vand.u32 %v4339, 4294901760
      %v4692 = vsub.f32 %v4339, %v4691
      %v4693 = vand.u32 %v4692, 4294901760
      %4694 = vmatmul.mubr.f32.gmra.mrb[0].mxu0 %v4693
      %v4695 = vpop.f32.mrb[0].mxu0
      %v4696 = vadd.f32 %v4611, %v4695
      %v4697 = vpop.f32.mrb[0].mxu0
      %4698 = vdwg.mxu0
      %4699 = vmatprep.subr.mxu0 0.0
      %v4700 = vand.u32 %v2529, 4294901760
      %v4701 = vsub.f32 %v2529, %v4700
      %v4702 = vand.u32 %v4701, 4294901760
      %4703 = vmatpush1.msra.mxu0 %v4702
      %4704 = vmatprep.subr.mxu0 0.0
      %v4705 = vand.u32 %v2530, 4294901760
      %v4706 = vsub.f32 %v2530, %v4705
      %v4707 = vand.u32 %v4706, 4294901760
      %4708 = vmatpush1.msra.mxu0 %v4707
      %4709 = vmatprep.subr.mxu0 0.0
      %v4710 = vand.u32 %v2531, 4294901760
      %v4711 = vsub.f32 %v2531, %v4710
      %v4712 = vand.u32 %v4711, 4294901760
      %4713 = vmatpush1.msra.mxu0 %v4712
      %4714 = vmatprep.subr.mxu0 0.0
      %v4715 = vand.u32 %v2532, 4294901760
      %v4716 = vsub.f32 %v2532, %v4715
      %v4717 = vand.u32 %v4716, 4294901760
      %4718 = vmatpush1.msra.mxu0 %v4717
      %4719 = vmatprep.subr.mxu0 0.0
      %4720 = vmatpush1.msra.mxu0 0.0
      %4721 = vmatprep.subr.mxu0 0.0
      %4722 = vmatpush1.msra.mxu0 0.0
      %4723 = vmatprep.subr.mxu0 0.0
      %4724 = vmatpush1.msra.mxu0 0.0
      %4725 = vmatprep.subr.mxu0 0.0
      %4726 = vmatpush1.msra.mxu0 0.0
      %4727 = vmatprep.subr.mxu0 0.0
      %4728 = vmatpush1.msra.mxu0 0.0
      %4729 = vmatprep.subr.mxu0 0.0
      %4730 = vmatpush1.msra.mxu0 0.0
      %4731 = vmatprep.subr.mxu0 0.0
      %4732 = vmatpush1.msra.mxu0 0.0
      %4733 = vmatprep.subr.mxu0 0.0
      %4734 = vmatpush1.msra.mxu0 0.0
      %4735 = vmatprep.subr.mxu0 0.0
      %4736 = vmatpush1.msra.mxu0 0.0
      %4737 = vmatprep.subr.mxu0 0.0
      %4738 = vmatpush1.msra.mxu0 0.0
      %4739 = vmatprep.subr.mxu0 0.0
      %4740 = vmatpush1.msra.mxu0 0.0
      %4741 = vmatprep.subr.mxu0 0.0
      %4742 = vmatpush1.msra.mxu0 0.0
      %4743 = vmatprep.subr.mxu0 0.0
      %4744 = vmatpush1.msra.mxu0 0.0
      %4745 = vmatprep.subr.mxu0 0.0
      %4746 = vmatpush1.msra.mxu0 0.0
      %4747 = vmatprep.subr.mxu0 0.0
      %4748 = vmatpush1.msra.mxu0 0.0
      %4749 = vmatprep.subr.mxu0 0.0
      %4750 = vmatpush1.msra.mxu0 0.0
      %4751 = vmatprep.subr.mxu0 0.0
      %4752 = vmatpush1.msra.mxu0 0.0
      %4753 = vmatprep.subr.mxu0 0.0
      %4754 = vmatpush1.msra.mxu0 0.0
      %4755 = vmatprep.subr.mxu0 0.0
      %4756 = vmatpush1.msra.mxu0 0.0
      %4757 = vmatprep.subr.mxu0 0.0
      %4758 = vmatpush1.msra.mxu0 0.0
      %4759 = vmatprep.subr.mxu0 0.0
      %4760 = vmatpush1.msra.mxu0 0.0
      %4761 = vmatprep.subr.mxu0 0.0
      %4762 = vmatpush1.msra.mxu0 0.0
      %4763 = vmatprep.subr.mxu0 0.0
      %4764 = vmatpush1.msra.mxu0 0.0
      %4765 = vmatprep.subr.mxu0 0.0
      %4766 = vmatpush1.msra.mxu0 0.0
      %4767 = vmatprep.subr.mxu0 0.0
      %4768 = vmatpush1.msra.mxu0 0.0
      %4769 = vmatprep.subr.mxu0 0.0
      %4770 = vmatpush1.msra.mxu0 0.0
      %4771 = vmatprep.subr.mxu0 0.0
      %4772 = vmatpush1.msra.mxu0 0.0
      %4773 = vmatprep.subr.mxu0 0.0
      %4774 = vmatpush1.msra.mxu0 0.0
      %4775 = vmatprep.mubr.f32.mxu0 0.0
      %v4776 = vand.u32 %v4337, 4294901760
      %4777 = vmatmul.mubr.f32.gmra.mrb[0].mxu0 %v4776
      %v4778 = vpop.f32.mrb[0].mxu0
      %v4779 = vadd.f32 %v4688, %v4778
      %v4780 = vpop.f32.mrb[0].mxu0
      %4781 = vmatprep.mubr.f32.mxu0 0.0
      %v4782 = vand.u32 %v4339, 4294901760
      %4783 = vmatmul.mubr.f32.gmra.mrb[0].mxu0 %v4782
      %v4784 = vpop.f32.mrb[0].mxu0
      %v4785 = vadd.f32 %v4696, %v4784
      %v4786 = vpop.f32.mrb[0].mxu0
      %4787 = vdwg.mxu0
      %4788 = vmatprep.subr.mxu0 0.0
      %v4789 = vand.u32 %v2529, 4294901760
      %4790 = vmatpush1.msra.mxu0 %v4789
      %4791 = vmatprep.subr.mxu0 0.0
      %v4792 = vand.u32 %v2530, 4294901760
      %4793 = vmatpush1.msra.mxu0 %v4792
      %4794 = vmatprep.subr.mxu0 0.0
      %v4795 = vand.u32 %v2531, 4294901760
      %4796 = vmatpush1.msra.mxu0 %v4795
      %4797 = vmatprep.subr.mxu0 0.0
      %v4798 = vand.u32 %v2532, 4294901760
      %4799 = vmatpush1.msra.mxu0 %v4798
      %4800 = vmatprep.subr.mxu0 0.0
      %4801 = vmatpush1.msra.mxu0 0.0
      %4802 = vmatprep.subr.mxu0 0.0
      %4803 = vmatpush1.msra.mxu0 0.0
      %4804 = vmatprep.subr.mxu0 0.0
      %4805 = vmatpush1.msra.mxu0 0.0
      %4806 = vmatprep.subr.mxu0 0.0
      %4807 = vmatpush1.msra.mxu0 0.0
      %4808 = vmatprep.subr.mxu0 0.0
      %4809 = vmatpush1.msra.mxu0 0.0
      %4810 = vmatprep.subr.mxu0 0.0
      %4811 = vmatpush1.msra.mxu0 0.0
      %4812 = vmatprep.subr.mxu0 0.0
      %4813 = vmatpush1.msra.mxu0 0.0
      %4814 = vmatprep.subr.mxu0 0.0
      %4815 = vmatpush1.msra.mxu0 0.0
      %4816 = vmatprep.subr.mxu0 0.0
      %4817 = vmatpush1.msra.mxu0 0.0
      %4818 = vmatprep.subr.mxu0 0.0
      %4819 = vmatpush1.msra.mxu0 0.0
      %4820 = vmatprep.subr.mxu0 0.0
      %4821 = vmatpush1.msra.mxu0 0.0
      %4822 = vmatprep.subr.mxu0 0.0
      %4823 = vmatpush1.msra.mxu0 0.0
      %4824 = vmatprep.subr.mxu0 0.0
      %4825 = vmatpush1.msra.mxu0 0.0
      %4826 = vmatprep.subr.mxu0 0.0
      %4827 = vmatpush1.msra.mxu0 0.0
      %4828 = vmatprep.subr.mxu0 0.0
      %4829 = vmatpush1.msra.mxu0 0.0
      %4830 = vmatprep.subr.mxu0 0.0
      %4831 = vmatpush1.msra.mxu0 0.0
      %4832 = vmatprep.subr.mxu0 0.0
      %4833 = vmatpush1.msra.mxu0 0.0
      %4834 = vmatprep.subr.mxu0 0.0
      %4835 = vmatpush1.msra.mxu0 0.0
      %4836 = vmatprep.subr.mxu0 0.0
      %4837 = vmatpush1.msra.mxu0 0.0
      %4838 = vmatprep.subr.mxu0 0.0
      %4839 = vmatpush1.msra.mxu0 0.0
      %4840 = vmatprep.subr.mxu0 0.0
      %4841 = vmatpush1.msra.mxu0 0.0
      %4842 = vmatprep.subr.mxu0 0.0
      %4843 = vmatpush1.msra.mxu0 0.0
      %4844 = vmatprep.subr.mxu0 0.0
      %4845 = vmatpush1.msra.mxu0 0.0
      %4846 = vmatprep.subr.mxu0 0.0
      %4847 = vmatpush1.msra.mxu0 0.0
      %4848 = vmatprep.subr.mxu0 0.0
      %4849 = vmatpush1.msra.mxu0 0.0
      %4850 = vmatprep.subr.mxu0 0.0
      %4851 = vmatpush1.msra.mxu0 0.0
      %4852 = vmatprep.subr.mxu0 0.0
      %4853 = vmatpush1.msra.mxu0 0.0
      %4854 = vmatprep.subr.mxu0 0.0
      %4855 = vmatpush1.msra.mxu0 0.0
      %4856 = vmatprep.mubr.f32.mxu0 0.0
      %v4857 = vand.u32 %v4337, 4294901760
      %4858 = vmatmul.mubr.f32.gmra.mrb[0].mxu0 %v4857
      %v4859 = vpop.f32.mrb[0].mxu0
      %v4860 = vadd.f32 %v4779, %v4859
      %v4861 = vpop.f32.mrb[0].mxu0
      %4862 = vmatprep.mubr.f32.mxu0 0.0
      %v4863 = vand.u32 %v4339, 4294901760
      %4864 = vmatmul.mubr.f32.gmra.mrb[0].mxu0 %v4863
      %v4865 = vpop.f32.mrb[0].mxu0
      %v4866 = vadd.f32 %v4785, %v4865
      %v4867 = vpop.f32.mrb[0].mxu0
      %4868 = vdwg.mxu0
      %v4870 = vsel %vm4336, %v4860, 0
      %v4873 = vsel %vm4336, %v4866, 0
      %4875 = vmatprep.subr.mxu0 0.0
      %v4876 = vand.u32 %v1164, 4294901760
      %4877 = vmatpush1.msra.mxu0 %v4876
      %4878 = vmatprep.subr.mxu0 0.0
      %v4879 = vand.u32 %v1165, 4294901760
      %4880 = vmatpush1.msra.mxu0 %v4879
      %4881 = vmatprep.subr.mxu0 0.0
      %v4882 = vand.u32 %v1166, 4294901760
      %4883 = vmatpush1.msra.mxu0 %v4882
      %4884 = vmatprep.subr.mxu0 0.0
      %v4885 = vand.u32 %v1167, 4294901760
      %4886 = vmatpush1.msra.mxu0 %v4885
      %4887 = vmatprep.subr.mxu0 0.0
      %4888 = vmatpush1.msra.mxu0 0.0
      %4889 = vmatprep.subr.mxu0 0.0
      %4890 = vmatpush1.msra.mxu0 0.0
      %4891 = vmatprep.subr.mxu0 0.0
      %4892 = vmatpush1.msra.mxu0 0.0
      %4893 = vmatprep.subr.mxu0 0.0
      %4894 = vmatpush1.msra.mxu0 0.0
      %4895 = vmatprep.subr.mxu0 0.0
      %4896 = vmatpush1.msra.mxu0 0.0
      %4897 = vmatprep.subr.mxu0 0.0
      %4898 = vmatpush1.msra.mxu0 0.0
      %4899 = vmatprep.subr.mxu0 0.0
      %4900 = vmatpush1.msra.mxu0 0.0
      %4901 = vmatprep.subr.mxu0 0.0
      %4902 = vmatpush1.msra.mxu0 0.0
      %4903 = vmatprep.subr.mxu0 0.0
      %4904 = vmatpush1.msra.mxu0 0.0
      %4905 = vmatprep.subr.mxu0 0.0
      %4906 = vmatpush1.msra.mxu0 0.0
      %4907 = vmatprep.subr.mxu0 0.0
      %4908 = vmatpush1.msra.mxu0 0.0
      %4909 = vmatprep.subr.mxu0 0.0
      %4910 = vmatpush1.msra.mxu0 0.0
      %4911 = vmatprep.subr.mxu0 0.0
      %4912 = vmatpush1.msra.mxu0 0.0
      %4913 = vmatprep.subr.mxu0 0.0
      %4914 = vmatpush1.msra.mxu0 0.0
      %4915 = vmatprep.subr.mxu0 0.0
      %4916 = vmatpush1.msra.mxu0 0.0
      %4917 = vmatprep.subr.mxu0 0.0
      %4918 = vmatpush1.msra.mxu0 0.0
      %4919 = vmatprep.subr.mxu0 0.0
      %4920 = vmatpush1.msra.mxu0 0.0
      %4921 = vmatprep.subr.mxu0 0.0
      %4922 = vmatpush1.msra.mxu0 0.0
      %4923 = vmatprep.subr.mxu0 0.0
      %4924 = vmatpush1.msra.mxu0 0.0
      %4925 = vmatprep.subr.mxu0 0.0
      %4926 = vmatpush1.msra.mxu0 0.0
      %4927 = vmatprep.subr.mxu0 0.0
      %4928 = vmatpush1.msra.mxu0 0.0
      %4929 = vmatprep.subr.mxu0 0.0
      %4930 = vmatpush1.msra.mxu0 0.0
      %4931 = vmatprep.subr.mxu0 0.0
      %4932 = vmatpush1.msra.mxu0 0.0
      %4933 = vmatprep.subr.mxu0 0.0
      %4934 = vmatpush1.msra.mxu0 0.0
      %4935 = vmatprep.subr.mxu0 0.0
      %4936 = vmatpush1.msra.mxu0 0.0
      %4937 = vmatprep.subr.mxu0 0.0
      %4938 = vmatpush1.msra.mxu0 0.0
      %4939 = vmatprep.subr.mxu0 0.0
      %4940 = vmatpush1.msra.mxu0 0.0
      %4941 = vmatprep.subr.mxu0 0.0
      %4942 = vmatpush1.msra.mxu0 0.0
      %4943 = vmatprep.mubr.f32.mxu0 0.0
      %v4944 = vand.u32 %v4870, 4294901760
      %v4945 = vsub.f32 %v4870, %v4944
      %v4946 = vand.u32 %v4945, 4294901760
      %v4947 = vsub.f32 %v4945, %v4946
      %v4948 = vand.u32 %v4947, 4294901760
      %4949 = vmatmul.mubr.f32.gmra.mrb[0].mxu0 %v4948
      %v4950 = vpop.f32.mrb[0].mxu0
      %v4951 = vadd.f32 0.0, %v4950
      %v4952 = vpop.f32.mrb[0].mxu0
      %4953 = vmatprep.mubr.f32.mxu0 0.0
      %v4954 = vand.u32 %v4873, 4294901760
      %v4955 = vsub.f32 %v4873, %v4954
      %v4956 = vand.u32 %v4955, 4294901760
      %v4957 = vsub.f32 %v4955, %v4956
      %v4958 = vand.u32 %v4957, 4294901760
      %4959 = vmatmul.mubr.f32.gmra.mrb[0].mxu0 %v4958
      %v4960 = vpop.f32.mrb[0].mxu0
      %v4961 = vadd.f32 0.0, %v4960
      %v4962 = vpop.f32.mrb[0].mxu0
      %4963 = vdwg.mxu0
      %4964 = vmatprep.subr.mxu0 0.0
      %v4965 = vand.u32 %v1164, 4294901760
      %v4966 = vsub.f32 %v1164, %v4965
      %v4967 = vand.u32 %v4966, 4294901760
      %v4968 = vsub.f32 %v4966, %v4967
      %v4969 = vand.u32 %v4968, 4294901760
      %4970 = vmatpush1.msra.mxu0 %v4969
      %4971 = vmatprep.subr.mxu0 0.0
      %v4972 = vand.u32 %v1165, 4294901760
      %v4973 = vsub.f32 %v1165, %v4972
      %v4974 = vand.u32 %v4973, 4294901760
      %v4975 = vsub.f32 %v4973, %v4974
      %v4976 = vand.u32 %v4975, 4294901760
      %4977 = vmatpush1.msra.mxu0 %v4976
      %4978 = vmatprep.subr.mxu0 0.0
      %v4979 = vand.u32 %v1166, 4294901760
      %v4980 = vsub.f32 %v1166, %v4979
      %v4981 = vand.u32 %v4980, 4294901760
      %v4982 = vsub.f32 %v4980, %v4981
      %v4983 = vand.u32 %v4982, 4294901760
      %4984 = vmatpush1.msra.mxu0 %v4983
      %4985 = vmatprep.subr.mxu0 0.0
      %v4986 = vand.u32 %v1167, 4294901760
      %v4987 = vsub.f32 %v1167, %v4986
      %v4988 = vand.u32 %v4987, 4294901760
      %v4989 = vsub.f32 %v4987, %v4988
      %v4990 = vand.u32 %v4989, 4294901760
      %4991 = vmatpush1.msra.mxu0 %v4990
      %4992 = vmatprep.subr.mxu0 0.0
      %4993 = vmatpush1.msra.mxu0 0.0
      %4994 = vmatprep.subr.mxu0 0.0
      %4995 = vmatpush1.msra.mxu0 0.0
      %4996 = vmatprep.subr.mxu0 0.0
      %4997 = vmatpush1.msra.mxu0 0.0
      %4998 = vmatprep.subr.mxu0 0.0
      %4999 = vmatpush1.msra.mxu0 0.0
      %5000 = vmatprep.subr.mxu0 0.0
      %5001 = vmatpush1.msra.mxu0 0.0
      %5002 = vmatprep.subr.mxu0 0.0
      %5003 = vmatpush1.msra.mxu0 0.0
      %5004 = vmatprep.subr.mxu0 0.0
      %5005 = vmatpush1.msra.mxu0 0.0
      %5006 = vmatprep.subr.mxu0 0.0
      %5007 = vmatpush1.msra.mxu0 0.0
      %5008 = vmatprep.subr.mxu0 0.0
      %5009 = vmatpush1.msra.mxu0 0.0
      %5010 = vmatprep.subr.mxu0 0.0
      %5011 = vmatpush1.msra.mxu0 0.0
      %5012 = vmatprep.subr.mxu0 0.0
      %5013 = vmatpush1.msra.mxu0 0.0
      %5014 = vmatprep.subr.mxu0 0.0
      %5015 = vmatpush1.msra.mxu0 0.0
      %5016 = vmatprep.subr.mxu0 0.0
      %5017 = vmatpush1.msra.mxu0 0.0
      %5018 = vmatprep.subr.mxu0 0.0
      %5019 = vmatpush1.msra.mxu0 0.0
      %5020 = vmatprep.subr.mxu0 0.0
      %5021 = vmatpush1.msra.mxu0 0.0
      %5022 = vmatprep.subr.mxu0 0.0
      %5023 = vmatpush1.msra.mxu0 0.0
      %5024 = vmatprep.subr.mxu0 0.0
      %5025 = vmatpush1.msra.mxu0 0.0
      %5026 = vmatprep.subr.mxu0 0.0
      %5027 = vmatpush1.msra.mxu0 0.0
      %5028 = vmatprep.subr.mxu0 0.0
      %5029 = vmatpush1.msra.mxu0 0.0
      %5030 = vmatprep.subr.mxu0 0.0
      %5031 = vmatpush1.msra.mxu0 0.0
      %5032 = vmatprep.subr.mxu0 0.0
      %5033 = vmatpush1.msra.mxu0 0.0
      %5034 = vmatprep.subr.mxu0 0.0
      %5035 = vmatpush1.msra.mxu0 0.0
      %5036 = vmatprep.subr.mxu0 0.0
      %5037 = vmatpush1.msra.mxu0 0.0
      %5038 = vmatprep.subr.mxu0 0.0
      %5039 = vmatpush1.msra.mxu0 0.0
      %5040 = vmatprep.subr.mxu0 0.0
      %5041 = vmatpush1.msra.mxu0 0.0
      %5042 = vmatprep.subr.mxu0 0.0
      %5043 = vmatpush1.msra.mxu0 0.0
      %5044 = vmatprep.subr.mxu0 0.0
      %5045 = vmatpush1.msra.mxu0 0.0
      %5046 = vmatprep.subr.mxu0 0.0
      %5047 = vmatpush1.msra.mxu0 0.0
      %5048 = vmatprep.mubr.f32.mxu0 0.0
      %v5049 = vand.u32 %v4870, 4294901760
      %5050 = vmatmul.mubr.f32.gmra.mrb[0].mxu0 %v5049
      %v5051 = vpop.f32.mrb[0].mxu0
      %v5052 = vadd.f32 %v4951, %v5051
      %v5053 = vpop.f32.mrb[0].mxu0
      %5054 = vmatprep.mubr.f32.mxu0 0.0
      %v5055 = vand.u32 %v4873, 4294901760
      %5056 = vmatmul.mubr.f32.gmra.mrb[0].mxu0 %v5055
      %v5057 = vpop.f32.mrb[0].mxu0
      %v5058 = vadd.f32 %v4961, %v5057
      %v5059 = vpop.f32.mrb[0].mxu0
      %5060 = vdwg.mxu0
      %5061 = vmatprep.subr.mxu0 0.0
      %v5062 = vand.u32 %v1164, 4294901760
      %v5063 = vsub.f32 %v1164, %v5062
      %5064 = vmatpush1.msra.mxu0 %v5063
      %5065 = vmatprep.subr.mxu0 0.0
      %v5066 = vand.u32 %v1165, 4294901760
      %v5067 = vsub.f32 %v1165, %v5066
      %5068 = vmatpush1.msra.mxu0 %v5067
      %5069 = vmatprep.subr.mxu0 0.0
      %v5070 = vand.u32 %v1166, 4294901760
      %v5071 = vsub.f32 %v1166, %v5070
      %5072 = vmatpush1.msra.mxu0 %v5071
      %5073 = vmatprep.subr.mxu0 0.0
      %v5074 = vand.u32 %v1167, 4294901760
      %v5075 = vsub.f32 %v1167, %v5074
      %5076 = vmatpush1.msra.mxu0 %v5075
      %5077 = vmatprep.subr.mxu0 0.0
      %5078 = vmatpush1.msra.mxu0 0.0
      %5079 = vmatprep.subr.mxu0 0.0
      %5080 = vmatpush1.msra.mxu0 0.0
      %5081 = vmatprep.subr.mxu0 0.0
      %5082 = vmatpush1.msra.mxu0 0.0
      %5083 = vmatprep.subr.mxu0 0.0
      %5084 = vmatpush1.msra.mxu0 0.0
      %5085 = vmatprep.subr.mxu0 0.0
      %5086 = vmatpush1.msra.mxu0 0.0
      %5087 = vmatprep.subr.mxu0 0.0
      %5088 = vmatpush1.msra.mxu0 0.0
      %5089 = vmatprep.subr.mxu0 0.0
      %5090 = vmatpush1.msra.mxu0 0.0
      %5091 = vmatprep.subr.mxu0 0.0
      %5092 = vmatpush1.msra.mxu0 0.0
      %5093 = vmatprep.subr.mxu0 0.0
      %5094 = vmatpush1.msra.mxu0 0.0
      %5095 = vmatprep.subr.mxu0 0.0
      %5096 = vmatpush1.msra.mxu0 0.0
      %5097 = vmatprep.subr.mxu0 0.0
      %5098 = vmatpush1.msra.mxu0 0.0
      %5099 = vmatprep.subr.mxu0 0.0
      %5100 = vmatpush1.msra.mxu0 0.0
      %5101 = vmatprep.subr.mxu0 0.0
      %5102 = vmatpush1.msra.mxu0 0.0
      %5103 = vmatprep.subr.mxu0 0.0
      %5104 = vmatpush1.msra.mxu0 0.0
      %5105 = vmatprep.subr.mxu0 0.0
      %5106 = vmatpush1.msra.mxu0 0.0
      %5107 = vmatprep.subr.mxu0 0.0
      %5108 = vmatpush1.msra.mxu0 0.0
      %5109 = vmatprep.subr.mxu0 0.0
      %5110 = vmatpush1.msra.mxu0 0.0
      %5111 = vmatprep.subr.mxu0 0.0
      %5112 = vmatpush1.msra.mxu0 0.0
      %5113 = vmatprep.subr.mxu0 0.0
      %5114 = vmatpush1.msra.mxu0 0.0
      %5115 = vmatprep.subr.mxu0 0.0
      %5116 = vmatpush1.msra.mxu0 0.0
      %5117 = vmatprep.subr.mxu0 0.0
      %5118 = vmatpush1.msra.mxu0 0.0
      %5119 = vmatprep.subr.mxu0 0.0
      %5120 = vmatpush1.msra.mxu0 0.0
      %5121 = vmatprep.subr.mxu0 0.0
      %5122 = vmatpush1.msra.mxu0 0.0
      %5123 = vmatprep.subr.mxu0 0.0
      %5124 = vmatpush1.msra.mxu0 0.0
      %5125 = vmatprep.subr.mxu0 0.0
      %5126 = vmatpush1.msra.mxu0 0.0
      %5127 = vmatprep.subr.mxu0 0.0
      %5128 = vmatpush1.msra.mxu0 0.0
      %5129 = vmatprep.subr.mxu0 0.0
      %5130 = vmatpush1.msra.mxu0 0.0
      %5131 = vmatprep.subr.mxu0 0.0
      %5132 = vmatpush1.msra.mxu0 0.0
      %5133 = vmatprep.mubr.f32.mxu0 0.0
      %v5134 = vand.u32 %v4870, 4294901760
      %v5135 = vsub.f32 %v4870, %v5134
      %5136 = vmatmul.mubr.f32.gmra.mrb[0].mxu0 %v5135
      %v5137 = vpop.f32.mrb[0].mxu0
      %v5138 = vadd.f32 %v5052, %v5137
      %v5139 = vpop.f32.mrb[0].mxu0
      %5140 = vmatprep.mubr.f32.mxu0 0.0
      %v5141 = vand.u32 %v4873, 4294901760
      %v5142 = vsub.f32 %v4873, %v5141
      %5143 = vmatmul.mubr.f32.gmra.mrb[0].mxu0 %v5142
      %v5144 = vpop.f32.mrb[0].mxu0
      %v5145 = vadd.f32 %v5058, %v5144
      %v5146 = vpop.f32.mrb[0].mxu0
      %5147 = vdwg.mxu0
      %5148 = vmatprep.subr.mxu0 0.0
      %v5149 = vand.u32 %v1164, 4294901760
      %5150 = vmatpush1.msra.mxu0 %v5149
      %5151 = vmatprep.subr.mxu0 0.0
      %v5152 = vand.u32 %v1165, 4294901760
      %5153 = vmatpush1.msra.mxu0 %v5152
      %5154 = vmatprep.subr.mxu0 0.0
      %v5155 = vand.u32 %v1166, 4294901760
      %5156 = vmatpush1.msra.mxu0 %v5155
      %5157 = vmatprep.subr.mxu0 0.0
      %v5158 = vand.u32 %v1167, 4294901760
      %5159 = vmatpush1.msra.mxu0 %v5158
      %5160 = vmatprep.subr.mxu0 0.0
      %5161 = vmatpush1.msra.mxu0 0.0
      %5162 = vmatprep.subr.mxu0 0.0
      %5163 = vmatpush1.msra.mxu0 0.0
      %5164 = vmatprep.subr.mxu0 0.0
      %5165 = vmatpush1.msra.mxu0 0.0
      %5166 = vmatprep.subr.mxu0 0.0
      %5167 = vmatpush1.msra.mxu0 0.0
      %5168 = vmatprep.subr.mxu0 0.0
      %5169 = vmatpush1.msra.mxu0 0.0
      %5170 = vmatprep.subr.mxu0 0.0
      %5171 = vmatpush1.msra.mxu0 0.0
      %5172 = vmatprep.subr.mxu0 0.0
      %5173 = vmatpush1.msra.mxu0 0.0
      %5174 = vmatprep.subr.mxu0 0.0
      %5175 = vmatpush1.msra.mxu0 0.0
      %5176 = vmatprep.subr.mxu0 0.0
      %5177 = vmatpush1.msra.mxu0 0.0
      %5178 = vmatprep.subr.mxu0 0.0
      %5179 = vmatpush1.msra.mxu0 0.0
      %5180 = vmatprep.subr.mxu0 0.0
      %5181 = vmatpush1.msra.mxu0 0.0
      %5182 = vmatprep.subr.mxu0 0.0
      %5183 = vmatpush1.msra.mxu0 0.0
      %5184 = vmatprep.subr.mxu0 0.0
      %5185 = vmatpush1.msra.mxu0 0.0
      %5186 = vmatprep.subr.mxu0 0.0
      %5187 = vmatpush1.msra.mxu0 0.0
      %5188 = vmatprep.subr.mxu0 0.0
      %5189 = vmatpush1.msra.mxu0 0.0
      %5190 = vmatprep.subr.mxu0 0.0
      %5191 = vmatpush1.msra.mxu0 0.0
      %5192 = vmatprep.subr.mxu0 0.0
      %5193 = vmatpush1.msra.mxu0 0.0
      %5194 = vmatprep.subr.mxu0 0.0
      %5195 = vmatpush1.msra.mxu0 0.0
      %5196 = vmatprep.subr.mxu0 0.0
      %5197 = vmatpush1.msra.mxu0 0.0
      %5198 = vmatprep.subr.mxu0 0.0
      %5199 = vmatpush1.msra.mxu0 0.0
      %5200 = vmatprep.subr.mxu0 0.0
      %5201 = vmatpush1.msra.mxu0 0.0
      %5202 = vmatprep.subr.mxu0 0.0
      %5203 = vmatpush1.msra.mxu0 0.0
      %5204 = vmatprep.subr.mxu0 0.0
      %5205 = vmatpush1.msra.mxu0 0.0
      %5206 = vmatprep.subr.mxu0 0.0
      %5207 = vmatpush1.msra.mxu0 0.0
      %5208 = vmatprep.subr.mxu0 0.0
      %5209 = vmatpush1.msra.mxu0 0.0
      %5210 = vmatprep.subr.mxu0 0.0
      %5211 = vmatpush1.msra.mxu0 0.0
      %5212 = vmatprep.subr.mxu0 0.0
      %5213 = vmatpush1.msra.mxu0 0.0
      %5214 = vmatprep.subr.mxu0 0.0
      %5215 = vmatpush1.msra.mxu0 0.0
      %5216 = vmatprep.mubr.f32.mxu0 0.0
      %v5217 = vand.u32 %v4870, 4294901760
      %v5218 = vsub.f32 %v4870, %v5217
      %v5219 = vand.u32 %v5218, 4294901760
      %5220 = vmatmul.mubr.f32.gmra.mrb[0].mxu0 %v5219
      %v5221 = vpop.f32.mrb[0].mxu0
      %v5222 = vadd.f32 %v5138, %v5221
      %v5223 = vpop.f32.mrb[0].mxu0
      %5224 = vmatprep.mubr.f32.mxu0 0.0
      %v5225 = vand.u32 %v4873, 4294901760
      %v5226 = vsub.f32 %v4873, %v5225
      %v5227 = vand.u32 %v5226, 4294901760
      %5228 = vmatmul.mubr.f32.gmra.mrb[0].mxu0 %v5227
      %v5229 = vpop.f32.mrb[0].mxu0
      %v5230 = vadd.f32 %v5145, %v5229
      %v5231 = vpop.f32.mrb[0].mxu0
      %5232 = vdwg.mxu0
      %5233 = vmatprep.subr.mxu0 0.0
      %v5234 = vand.u32 %v1164, 4294901760
      %v5235 = vsub.f32 %v1164, %v5234
      %v5236 = vand.u32 %v5235, 4294901760
      %5237 = vmatpush1.msra.mxu0 %v5236
      %5238 = vmatprep.subr.mxu0 0.0
      %v5239 = vand.u32 %v1165, 4294901760
      %v5240 = vsub.f32 %v1165, %v5239
      %v5241 = vand.u32 %v5240, 4294901760
      %5242 = vmatpush1.msra.mxu0 %v5241
      %5243 = vmatprep.subr.mxu0 0.0
      %v5244 = vand.u32 %v1166, 4294901760
      %v5245 = vsub.f32 %v1166, %v5244
      %v5246 = vand.u32 %v5245, 4294901760
      %5247 = vmatpush1.msra.mxu0 %v5246
      %5248 = vmatprep.subr.mxu0 0.0
      %v5249 = vand.u32 %v1167, 4294901760
      %v5250 = vsub.f32 %v1167, %v5249
      %v5251 = vand.u32 %v5250, 4294901760
      %5252 = vmatpush1.msra.mxu0 %v5251
      %5253 = vmatprep.subr.mxu0 0.0
      %5254 = vmatpush1.msra.mxu0 0.0
      %5255 = vmatprep.subr.mxu0 0.0
      %5256 = vmatpush1.msra.mxu0 0.0
      %5257 = vmatprep.subr.mxu0 0.0
      %5258 = vmatpush1.msra.mxu0 0.0
      %5259 = vmatprep.subr.mxu0 0.0
      %5260 = vmatpush1.msra.mxu0 0.0
      %5261 = vmatprep.subr.mxu0 0.0
      %5262 = vmatpush1.msra.mxu0 0.0
      %5263 = vmatprep.subr.mxu0 0.0
      %5264 = vmatpush1.msra.mxu0 0.0
      %5265 = vmatprep.subr.mxu0 0.0
      %5266 = vmatpush1.msra.mxu0 0.0
      %5267 = vmatprep.subr.mxu0 0.0
      %5268 = vmatpush1.msra.mxu0 0.0
      %5269 = vmatprep.subr.mxu0 0.0
      %5270 = vmatpush1.msra.mxu0 0.0
      %5271 = vmatprep.subr.mxu0 0.0
      %5272 = vmatpush1.msra.mxu0 0.0
      %5273 = vmatprep.subr.mxu0 0.0
      %5274 = vmatpush1.msra.mxu0 0.0
      %5275 = vmatprep.subr.mxu0 0.0
      %5276 = vmatpush1.msra.mxu0 0.0
      %5277 = vmatprep.subr.mxu0 0.0
      %5278 = vmatpush1.msra.mxu0 0.0
      %5279 = vmatprep.subr.mxu0 0.0
      %5280 = vmatpush1.msra.mxu0 0.0
      %5281 = vmatprep.subr.mxu0 0.0
      %5282 = vmatpush1.msra.mxu0 0.0
      %5283 = vmatprep.subr.mxu0 0.0
      %5284 = vmatpush1.msra.mxu0 0.0
      %5285 = vmatprep.subr.mxu0 0.0
      %5286 = vmatpush1.msra.mxu0 0.0
      %5287 = vmatprep.subr.mxu0 0.0
      %5288 = vmatpush1.msra.mxu0 0.0
      %5289 = vmatprep.subr.mxu0 0.0
      %5290 = vmatpush1.msra.mxu0 0.0
      %5291 = vmatprep.subr.mxu0 0.0
      %5292 = vmatpush1.msra.mxu0 0.0
      %5293 = vmatprep.subr.mxu0 0.0
      %5294 = vmatpush1.msra.mxu0 0.0
      %5295 = vmatprep.subr.mxu0 0.0
      %5296 = vmatpush1.msra.mxu0 0.0
      %5297 = vmatprep.subr.mxu0 0.0
      %5298 = vmatpush1.msra.mxu0 0.0
      %5299 = vmatprep.subr.mxu0 0.0
      %5300 = vmatpush1.msra.mxu0 0.0
      %5301 = vmatprep.subr.mxu0 0.0
      %5302 = vmatpush1.msra.mxu0 0.0
      %5303 = vmatprep.subr.mxu0 0.0
      %5304 = vmatpush1.msra.mxu0 0.0
      %5305 = vmatprep.subr.mxu0 0.0
      %5306 = vmatpush1.msra.mxu0 0.0
      %5307 = vmatprep.subr.mxu0 0.0
      %5308 = vmatpush1.msra.mxu0 0.0
      %5309 = vmatprep.mubr.f32.mxu0 0.0
      %v5310 = vand.u32 %v4870, 4294901760
      %5311 = vmatmul.mubr.f32.gmra.mrb[0].mxu0 %v5310
      %v5312 = vpop.f32.mrb[0].mxu0
      %v5313 = vadd.f32 %v5222, %v5312
      %v5314 = vpop.f32.mrb[0].mxu0
      %5315 = vmatprep.mubr.f32.mxu0 0.0
      %v5316 = vand.u32 %v4873, 4294901760
      %5317 = vmatmul.mubr.f32.gmra.mrb[0].mxu0 %v5316
      %v5318 = vpop.f32.mrb[0].mxu0
      %v5319 = vadd.f32 %v5230, %v5318
      %v5320 = vpop.f32.mrb[0].mxu0
      %5321 = vdwg.mxu0
      %5322 = vmatprep.subr.mxu0 0.0
      %v5323 = vand.u32 %v1164, 4294901760
      %5324 = vmatpush1.msra.mxu0 %v5323
      %5325 = vmatprep.subr.mxu0 0.0
      %v5326 = vand.u32 %v1165, 4294901760
      %5327 = vmatpush1.msra.mxu0 %v5326
      %5328 = vmatprep.subr.mxu0 0.0
      %v5329 = vand.u32 %v1166, 4294901760
      %5330 = vmatpush1.msra.mxu0 %v5329
      %5331 = vmatprep.subr.mxu0 0.0
      %v5332 = vand.u32 %v1167, 4294901760
      %5333 = vmatpush1.msra.mxu0 %v5332
      %5334 = vmatprep.subr.mxu0 0.0
      %5335 = vmatpush1.msra.mxu0 0.0
      %5336 = vmatprep.subr.mxu0 0.0
      %5337 = vmatpush1.msra.mxu0 0.0
      %5338 = vmatprep.subr.mxu0 0.0
      %5339 = vmatpush1.msra.mxu0 0.0
      %5340 = vmatprep.subr.mxu0 0.0
      %5341 = vmatpush1.msra.mxu0 0.0
      %5342 = vmatprep.subr.mxu0 0.0
      %5343 = vmatpush1.msra.mxu0 0.0
      %5344 = vmatprep.subr.mxu0 0.0
      %5345 = vmatpush1.msra.mxu0 0.0
      %5346 = vmatprep.subr.mxu0 0.0
      %5347 = vmatpush1.msra.mxu0 0.0
      %5348 = vmatprep.subr.mxu0 0.0
      %5349 = vmatpush1.msra.mxu0 0.0
      %5350 = vmatprep.subr.mxu0 0.0
      %5351 = vmatpush1.msra.mxu0 0.0
      %5352 = vmatprep.subr.mxu0 0.0
      %5353 = vmatpush1.msra.mxu0 0.0
      %5354 = vmatprep.subr.mxu0 0.0
      %5355 = vmatpush1.msra.mxu0 0.0
      %5356 = vmatprep.subr.mxu0 0.0
      %5357 = vmatpush1.msra.mxu0 0.0
      %5358 = vmatprep.subr.mxu0 0.0
      %5359 = vmatpush1.msra.mxu0 0.0
      %5360 = vmatprep.subr.mxu0 0.0
      %5361 = vmatpush1.msra.mxu0 0.0
      %5362 = vmatprep.subr.mxu0 0.0
      %5363 = vmatpush1.msra.mxu0 0.0
      %5364 = vmatprep.subr.mxu0 0.0
      %5365 = vmatpush1.msra.mxu0 0.0
      %5366 = vmatprep.subr.mxu0 0.0
      %5367 = vmatpush1.msra.mxu0 0.0
      %5368 = vmatprep.subr.mxu0 0.0
      %5369 = vmatpush1.msra.mxu0 0.0
      %5370 = vmatprep.subr.mxu0 0.0
      %5371 = vmatpush1.msra.mxu0 0.0
      %5372 = vmatprep.subr.mxu0 0.0
      %5373 = vmatpush1.msra.mxu0 0.0
      %5374 = vmatprep.subr.mxu0 0.0
      %5375 = vmatpush1.msra.mxu0 0.0
      %5376 = vmatprep.subr.mxu0 0.0
      %5377 = vmatpush1.msra.mxu0 0.0
      %5378 = vmatprep.subr.mxu0 0.0
      %5379 = vmatpush1.msra.mxu0 0.0
      %5380 = vmatprep.subr.mxu0 0.0
      %5381 = vmatpush1.msra.mxu0 0.0
      %5382 = vmatprep.subr.mxu0 0.0
      %5383 = vmatpush1.msra.mxu0 0.0
      %5384 = vmatprep.subr.mxu0 0.0
      %5385 = vmatpush1.msra.mxu0 0.0
      %5386 = vmatprep.subr.mxu0 0.0
      %5387 = vmatpush1.msra.mxu0 0.0
      %5388 = vmatprep.subr.mxu0 0.0
      %5389 = vmatpush1.msra.mxu0 0.0
      %5390 = vmatprep.mubr.f32.mxu0 0.0
      %v5391 = vand.u32 %v4870, 4294901760
      %5392 = vmatmul.mubr.f32.gmra.mrb[0].mxu0 %v5391
      %v5393 = vpop.f32.mrb[0].mxu0
      %v5394 = vadd.f32 %v5313, %v5393
      %v5395 = vpop.f32.mrb[0].mxu0
      %5396 = vmatprep.mubr.f32.mxu0 0.0
      %v5397 = vand.u32 %v4873, 4294901760
      %5398 = vmatmul.mubr.f32.gmra.mrb[0].mxu0 %v5397
      %v5399 = vpop.f32.mrb[0].mxu0
      %v5400 = vadd.f32 %v5319, %v5399
      %v5401 = vpop.f32.mrb[0].mxu0
      %5402 = vdwg.mxu0
      %v5403 = vmul.f32 %v5394, 0.25
      %v5404 = vmul.f32 %v5400, 0.25
      %5405 = vmatprep.subr.mxu0 0.0
      %v5406 = vand.u32 %v3877, 4294901760
      %5407 = vmatpush1.msra.mxu0 %v5406
      %5408 = vmatprep.subr.mxu0 0.0
      %v5409 = vand.u32 %v3878, 4294901760
      %5410 = vmatpush1.msra.mxu0 %v5409
      %5411 = vmatprep.subr.mxu0 0.0
      %v5412 = vand.u32 %v3879, 4294901760
      %5413 = vmatpush1.msra.mxu0 %v5412
      %5414 = vmatprep.subr.mxu0 0.0
      %v5415 = vand.u32 %v3880, 4294901760
      %5416 = vmatpush1.msra.mxu0 %v5415
      %5417 = vmatprep.subr.mxu0 0.0
      %5418 = vmatpush1.msra.mxu0 0.0
      %5419 = vmatprep.subr.mxu0 0.0
      %5420 = vmatpush1.msra.mxu0 0.0
      %5421 = vmatprep.subr.mxu0 0.0
      %5422 = vmatpush1.msra.mxu0 0.0
      %5423 = vmatprep.subr.mxu0 0.0
      %5424 = vmatpush1.msra.mxu0 0.0
      %5425 = vmatprep.subr.mxu0 0.0
      %5426 = vmatpush1.msra.mxu0 0.0
      %5427 = vmatprep.subr.mxu0 0.0
      %5428 = vmatpush1.msra.mxu0 0.0
      %5429 = vmatprep.subr.mxu0 0.0
      %5430 = vmatpush1.msra.mxu0 0.0
      %5431 = vmatprep.subr.mxu0 0.0
      %5432 = vmatpush1.msra.mxu0 0.0
      %5433 = vmatprep.subr.mxu0 0.0
      %5434 = vmatpush1.msra.mxu0 0.0
      %5435 = vmatprep.subr.mxu0 0.0
      %5436 = vmatpush1.msra.mxu0 0.0
      %5437 = vmatprep.subr.mxu0 0.0
      %5438 = vmatpush1.msra.mxu0 0.0
      %5439 = vmatprep.subr.mxu0 0.0
      %5440 = vmatpush1.msra.mxu0 0.0
      %5441 = vmatprep.subr.mxu0 0.0
      %5442 = vmatpush1.msra.mxu0 0.0
      %5443 = vmatprep.subr.mxu0 0.0
      %5444 = vmatpush1.msra.mxu0 0.0
      %5445 = vmatprep.subr.mxu0 0.0
      %5446 = vmatpush1.msra.mxu0 0.0
      %5447 = vmatprep.subr.mxu0 0.0
      %5448 = vmatpush1.msra.mxu0 0.0
      %5449 = vmatprep.subr.mxu0 0.0
      %5450 = vmatpush1.msra.mxu0 0.0
      %5451 = vmatprep.subr.mxu0 0.0
      %5452 = vmatpush1.msra.mxu0 0.0
      %5453 = vmatprep.subr.mxu0 0.0
      %5454 = vmatpush1.msra.mxu0 0.0
      %5455 = vmatprep.subr.mxu0 0.0
      %5456 = vmatpush1.msra.mxu0 0.0
      %5457 = vmatprep.subr.mxu0 0.0
      %5458 = vmatpush1.msra.mxu0 0.0
      %5459 = vmatprep.subr.mxu0 0.0
      %5460 = vmatpush1.msra.mxu0 0.0
      %5461 = vmatprep.subr.mxu0 0.0
      %5462 = vmatpush1.msra.mxu0 0.0
      %5463 = vmatprep.subr.mxu0 0.0
      %5464 = vmatpush1.msra.mxu0 0.0
      %5465 = vmatprep.subr.mxu0 0.0
      %5466 = vmatpush1.msra.mxu0 0.0
      %5467 = vmatprep.subr.mxu0 0.0
      %5468 = vmatpush1.msra.mxu0 0.0
      %5469 = vmatprep.subr.mxu0 0.0
      %5470 = vmatpush1.msra.mxu0 0.0
      %5471 = vmatprep.subr.mxu0 0.0
      %5472 = vmatpush1.msra.mxu0 0.0
      %5473 = vmatprep.mubr.f32.mxu0 0.0
      %v5474 = vand.u32 %v4337, 4294901760
      %v5475 = vsub.f32 %v4337, %v5474
      %v5476 = vand.u32 %v5475, 4294901760
      %v5477 = vsub.f32 %v5475, %v5476
      %v5478 = vand.u32 %v5477, 4294901760
      %5479 = vmatmul.mubr.f32.gmra.mrb[0].mxu0 %v5478
      %v5480 = vpop.f32.mrb[0].mxu0
      %v5481 = vadd.f32 0.0, %v5480
      %v5482 = vpop.f32.mrb[0].mxu0
      %5483 = vmatprep.mubr.f32.mxu0 0.0
      %v5484 = vand.u32 %v4339, 4294901760
      %v5485 = vsub.f32 %v4339, %v5484
      %v5486 = vand.u32 %v5485, 4294901760
      %v5487 = vsub.f32 %v5485, %v5486
      %v5488 = vand.u32 %v5487, 4294901760
      %5489 = vmatmul.mubr.f32.gmra.mrb[0].mxu0 %v5488
      %v5490 = vpop.f32.mrb[0].mxu0
      %v5491 = vadd.f32 0.0, %v5490
      %v5492 = vpop.f32.mrb[0].mxu0
      %5493 = vdwg.mxu0
      %5494 = vmatprep.subr.mxu0 0.0
      %v5495 = vand.u32 %v3877, 4294901760
      %v5496 = vsub.f32 %v3877, %v5495
      %v5497 = vand.u32 %v5496, 4294901760
      %v5498 = vsub.f32 %v5496, %v5497
      %v5499 = vand.u32 %v5498, 4294901760
      %5500 = vmatpush1.msra.mxu0 %v5499
      %5501 = vmatprep.subr.mxu0 0.0
      %v5502 = vand.u32 %v3878, 4294901760
      %v5503 = vsub.f32 %v3878, %v5502
      %v5504 = vand.u32 %v5503, 4294901760
      %v5505 = vsub.f32 %v5503, %v5504
      %v5506 = vand.u32 %v5505, 4294901760
      %5507 = vmatpush1.msra.mxu0 %v5506
      %5508 = vmatprep.subr.mxu0 0.0
      %v5509 = vand.u32 %v3879, 4294901760
      %v5510 = vsub.f32 %v3879, %v5509
      %v5511 = vand.u32 %v5510, 4294901760
      %v5512 = vsub.f32 %v5510, %v5511
      %v5513 = vand.u32 %v5512, 4294901760
      %5514 = vmatpush1.msra.mxu0 %v5513
      %5515 = vmatprep.subr.mxu0 0.0
      %v5516 = vand.u32 %v3880, 4294901760
      %v5517 = vsub.f32 %v3880, %v5516
      %v5518 = vand.u32 %v5517, 4294901760
      %v5519 = vsub.f32 %v5517, %v5518
      %v5520 = vand.u32 %v5519, 4294901760
      %5521 = vmatpush1.msra.mxu0 %v5520
      %5522 = vmatprep.subr.mxu0 0.0
      %5523 = vmatpush1.msra.mxu0 0.0
      %5524 = vmatprep.subr.mxu0 0.0
      %5525 = vmatpush1.msra.mxu0 0.0
      %5526 = vmatprep.subr.mxu0 0.0
      %5527 = vmatpush1.msra.mxu0 0.0
      %5528 = vmatprep.subr.mxu0 0.0
      %5529 = vmatpush1.msra.mxu0 0.0
      %5530 = vmatprep.subr.mxu0 0.0
      %5531 = vmatpush1.msra.mxu0 0.0
      %5532 = vmatprep.subr.mxu0 0.0
      %5533 = vmatpush1.msra.mxu0 0.0
      %5534 = vmatprep.subr.mxu0 0.0
      %5535 = vmatpush1.msra.mxu0 0.0
      %5536 = vmatprep.subr.mxu0 0.0
      %5537 = vmatpush1.msra.mxu0 0.0
      %5538 = vmatprep.subr.mxu0 0.0
      %5539 = vmatpush1.msra.mxu0 0.0
      %5540 = vmatprep.subr.mxu0 0.0
      %5541 = vmatpush1.msra.mxu0 0.0
      %5542 = vmatprep.subr.mxu0 0.0
      %5543 = vmatpush1.msra.mxu0 0.0
      %5544 = vmatprep.subr.mxu0 0.0
      %5545 = vmatpush1.msra.mxu0 0.0
      %5546 = vmatprep.subr.mxu0 0.0
      %5547 = vmatpush1.msra.mxu0 0.0
      %5548 = vmatprep.subr.mxu0 0.0
      %5549 = vmatpush1.msra.mxu0 0.0
      %5550 = vmatprep.subr.mxu0 0.0
      %5551 = vmatpush1.msra.mxu0 0.0
      %5552 = vmatprep.subr.mxu0 0.0
      %5553 = vmatpush1.msra.mxu0 0.0
      %5554 = vmatprep.subr.mxu0 0.0
      %5555 = vmatpush1.msra.mxu0 0.0
      %5556 = vmatprep.subr.mxu0 0.0
      %5557 = vmatpush1.msra.mxu0 0.0
      %5558 = vmatprep.subr.mxu0 0.0
      %5559 = vmatpush1.msra.mxu0 0.0
      %5560 = vmatprep.subr.mxu0 0.0
      %5561 = vmatpush1.msra.mxu0 0.0
      %5562 = vmatprep.subr.mxu0 0.0
      %5563 = vmatpush1.msra.mxu0 0.0
      %5564 = vmatprep.subr.mxu0 0.0
      %5565 = vmatpush1.msra.mxu0 0.0
      %5566 = vmatprep.subr.mxu0 0.0
      %5567 = vmatpush1.msra.mxu0 0.0
      %5568 = vmatprep.subr.mxu0 0.0
      %5569 = vmatpush1.msra.mxu0 0.0
      %5570 = vmatprep.subr.mxu0 0.0
      %5571 = vmatpush1.msra.mxu0 0.0
      %5572 = vmatprep.subr.mxu0 0.0
      %5573 = vmatpush1.msra.mxu0 0.0
      %5574 = vmatprep.subr.mxu0 0.0
      %5575 = vmatpush1.msra.mxu0 0.0
      %5576 = vmatprep.subr.mxu0 0.0
      %5577 = vmatpush1.msra.mxu0 0.0
      %5578 = vmatprep.mubr.f32.mxu0 0.0
      %v5579 = vand.u32 %v4337, 4294901760
      %5580 = vmatmul.mubr.f32.gmra.mrb[0].mxu0 %v5579
      %v5581 = vpop.f32.mrb[0].mxu0
      %v5582 = vadd.f32 %v5481, %v5581
      %v5583 = vpop.f32.mrb[0].mxu0
      %5584 = vmatprep.mubr.f32.mxu0 0.0
      %v5585 = vand.u32 %v4339, 4294901760
      %5586 = vmatmul.mubr.f32.gmra.mrb[0].mxu0 %v5585
      %v5587 = vpop.f32.mrb[0].mxu0
      %v5588 = vadd.f32 %v5491, %v5587
      %v5589 = vpop.f32.mrb[0].mxu0
      %5590 = vdwg.mxu0
      %5591 = vmatprep.subr.mxu0 0.0
      %v5592 = vand.u32 %v3877, 4294901760
      %v5593 = vsub.f32 %v3877, %v5592
      %5594 = vmatpush1.msra.mxu0 %v5593
      %5595 = vmatprep.subr.mxu0 0.0
      %v5596 = vand.u32 %v3878, 4294901760
      %v5597 = vsub.f32 %v3878, %v5596
      %5598 = vmatpush1.msra.mxu0 %v5597
      %5599 = vmatprep.subr.mxu0 0.0
      %v5600 = vand.u32 %v3879, 4294901760
      %v5601 = vsub.f32 %v3879, %v5600
      %5602 = vmatpush1.msra.mxu0 %v5601
      %5603 = vmatprep.subr.mxu0 0.0
      %v5604 = vand.u32 %v3880, 4294901760
      %v5605 = vsub.f32 %v3880, %v5604
      %5606 = vmatpush1.msra.mxu0 %v5605
      %5607 = vmatprep.subr.mxu0 0.0
      %5608 = vmatpush1.msra.mxu0 0.0
      %5609 = vmatprep.subr.mxu0 0.0
      %5610 = vmatpush1.msra.mxu0 0.0
      %5611 = vmatprep.subr.mxu0 0.0
      %5612 = vmatpush1.msra.mxu0 0.0
      %5613 = vmatprep.subr.mxu0 0.0
      %5614 = vmatpush1.msra.mxu0 0.0
      %5615 = vmatprep.subr.mxu0 0.0
      %5616 = vmatpush1.msra.mxu0 0.0
      %5617 = vmatprep.subr.mxu0 0.0
      %5618 = vmatpush1.msra.mxu0 0.0
      %5619 = vmatprep.subr.mxu0 0.0
      %5620 = vmatpush1.msra.mxu0 0.0
      %5621 = vmatprep.subr.mxu0 0.0
      %5622 = vmatpush1.msra.mxu0 0.0
      %5623 = vmatprep.subr.mxu0 0.0
      %5624 = vmatpush1.msra.mxu0 0.0
      %5625 = vmatprep.subr.mxu0 0.0
      %5626 = vmatpush1.msra.mxu0 0.0
      %5627 = vmatprep.subr.mxu0 0.0
      %5628 = vmatpush1.msra.mxu0 0.0
      %5629 = vmatprep.subr.mxu0 0.0
      %5630 = vmatpush1.msra.mxu0 0.0
      %5631 = vmatprep.subr.mxu0 0.0
      %5632 = vmatpush1.msra.mxu0 0.0
      %5633 = vmatprep.subr.mxu0 0.0
      %5634 = vmatpush1.msra.mxu0 0.0
      %5635 = vmatprep.subr.mxu0 0.0
      %5636 = vmatpush1.msra.mxu0 0.0
      %5637 = vmatprep.subr.mxu0 0.0
      %5638 = vmatpush1.msra.mxu0 0.0
      %5639 = vmatprep.subr.mxu0 0.0
      %5640 = vmatpush1.msra.mxu0 0.0
      %5641 = vmatprep.subr.mxu0 0.0
      %5642 = vmatpush1.msra.mxu0 0.0
      %5643 = vmatprep.subr.mxu0 0.0
      %5644 = vmatpush1.msra.mxu0 0.0
      %5645 = vmatprep.subr.mxu0 0.0
      %5646 = vmatpush1.msra.mxu0 0.0
      %5647 = vmatprep.subr.mxu0 0.0
      %5648 = vmatpush1.msra.mxu0 0.0
      %5649 = vmatprep.subr.mxu0 0.0
      %5650 = vmatpush1.msra.mxu0 0.0
      %5651 = vmatprep.subr.mxu0 0.0
      %5652 = vmatpush1.msra.mxu0 0.0
      %5653 = vmatprep.subr.mxu0 0.0
      %5654 = vmatpush1.msra.mxu0 0.0
      %5655 = vmatprep.subr.mxu0 0.0
      %5656 = vmatpush1.msra.mxu0 0.0
      %5657 = vmatprep.subr.mxu0 0.0
      %5658 = vmatpush1.msra.mxu0 0.0
      %5659 = vmatprep.subr.mxu0 0.0
      %5660 = vmatpush1.msra.mxu0 0.0
      %5661 = vmatprep.subr.mxu0 0.0
      %5662 = vmatpush1.msra.mxu0 0.0
      %5663 = vmatprep.mubr.f32.mxu0 0.0
      %v5664 = vand.u32 %v4337, 4294901760
      %v5665 = vsub.f32 %v4337, %v5664
      %5666 = vmatmul.mubr.f32.gmra.mrb[0].mxu0 %v5665
      %v5667 = vpop.f32.mrb[0].mxu0
      %v5668 = vadd.f32 %v5582, %v5667
      %v5669 = vpop.f32.mrb[0].mxu0
      %5670 = vmatprep.mubr.f32.mxu0 0.0
      %v5671 = vand.u32 %v4339, 4294901760
      %v5672 = vsub.f32 %v4339, %v5671
      %5673 = vmatmul.mubr.f32.gmra.mrb[0].mxu0 %v5672
      %v5674 = vpop.f32.mrb[0].mxu0
      %v5675 = vadd.f32 %v5588, %v5674
      %v5676 = vpop.f32.mrb[0].mxu0
      %5677 = vdwg.mxu0
      %5678 = vmatprep.subr.mxu0 0.0
      %v5679 = vand.u32 %v3877, 4294901760
      %5680 = vmatpush1.msra.mxu0 %v5679
      %5681 = vmatprep.subr.mxu0 0.0
      %v5682 = vand.u32 %v3878, 4294901760
      %5683 = vmatpush1.msra.mxu0 %v5682
      %5684 = vmatprep.subr.mxu0 0.0
      %v5685 = vand.u32 %v3879, 4294901760
      %5686 = vmatpush1.msra.mxu0 %v5685
      %5687 = vmatprep.subr.mxu0 0.0
      %v5688 = vand.u32 %v3880, 4294901760
      %5689 = vmatpush1.msra.mxu0 %v5688
      %5690 = vmatprep.subr.mxu0 0.0
      %5691 = vmatpush1.msra.mxu0 0.0
      %5692 = vmatprep.subr.mxu0 0.0
      %5693 = vmatpush1.msra.mxu0 0.0
      %5694 = vmatprep.subr.mxu0 0.0
      %5695 = vmatpush1.msra.mxu0 0.0
      %5696 = vmatprep.subr.mxu0 0.0
      %5697 = vmatpush1.msra.mxu0 0.0
      %5698 = vmatprep.subr.mxu0 0.0
      %5699 = vmatpush1.msra.mxu0 0.0
      %5700 = vmatprep.subr.mxu0 0.0
      %5701 = vmatpush1.msra.mxu0 0.0
      %5702 = vmatprep.subr.mxu0 0.0
      %5703 = vmatpush1.msra.mxu0 0.0
      %5704 = vmatprep.subr.mxu0 0.0
      %5705 = vmatpush1.msra.mxu0 0.0
      %5706 = vmatprep.subr.mxu0 0.0
      %5707 = vmatpush1.msra.mxu0 0.0
      %5708 = vmatprep.subr.mxu0 0.0
      %5709 = vmatpush1.msra.mxu0 0.0
      %5710 = vmatprep.subr.mxu0 0.0
      %5711 = vmatpush1.msra.mxu0 0.0
      %5712 = vmatprep.subr.mxu0 0.0
      %5713 = vmatpush1.msra.mxu0 0.0
      %5714 = vmatprep.subr.mxu0 0.0
      %5715 = vmatpush1.msra.mxu0 0.0
      %5716 = vmatprep.subr.mxu0 0.0
      %5717 = vmatpush1.msra.mxu0 0.0
      %5718 = vmatprep.subr.mxu0 0.0
      %5719 = vmatpush1.msra.mxu0 0.0
      %5720 = vmatprep.subr.mxu0 0.0
      %5721 = vmatpush1.msra.mxu0 0.0
      %5722 = vmatprep.subr.mxu0 0.0
      %5723 = vmatpush1.msra.mxu0 0.0
      %5724 = vmatprep.subr.mxu0 0.0
      %5725 = vmatpush1.msra.mxu0 0.0
      %5726 = vmatprep.subr.mxu0 0.0
      %5727 = vmatpush1.msra.mxu0 0.0
      %5728 = vmatprep.subr.mxu0 0.0
      %5729 = vmatpush1.msra.mxu0 0.0
      %5730 = vmatprep.subr.mxu0 0.0
      %5731 = vmatpush1.msra.mxu0 0.0
      %5732 = vmatprep.subr.mxu0 0.0
      %5733 = vmatpush1.msra.mxu0 0.0
      %5734 = vmatprep.subr.mxu0 0.0
      %5735 = vmatpush1.msra.mxu0 0.0
      %5736 = vmatprep.subr.mxu0 0.0
      %5737 = vmatpush1.msra.mxu0 0.0
      %5738 = vmatprep.subr.mxu0 0.0
      %5739 = vmatpush1.msra.mxu0 0.0
      %5740 = vmatprep.subr.mxu0 0.0
      %5741 = vmatpush1.msra.mxu0 0.0
      %5742 = vmatprep.subr.mxu0 0.0
      %5743 = vmatpush1.msra.mxu0 0.0
      %5744 = vmatprep.subr.mxu0 0.0
      %5745 = vmatpush1.msra.mxu0 0.0
      %5746 = vmatprep.mubr.f32.mxu0 0.0
      %v5747 = vand.u32 %v4337, 4294901760
      %v5748 = vsub.f32 %v4337, %v5747
      %v5749 = vand.u32 %v5748, 4294901760
      %5750 = vmatmul.mubr.f32.gmra.mrb[0].mxu0 %v5749
      %v5751 = vpop.f32.mrb[0].mxu0
      %v5752 = vadd.f32 %v5668, %v5751
      %v5753 = vpop.f32.mrb[0].mxu0
      %5754 = vmatprep.mubr.f32.mxu0 0.0
      %v5755 = vand.u32 %v4339, 4294901760
      %v5756 = vsub.f32 %v4339, %v5755
      %v5757 = vand.u32 %v5756, 4294901760
      %5758 = vmatmul.mubr.f32.gmra.mrb[0].mxu0 %v5757
      %v5759 = vpop.f32.mrb[0].mxu0
      %v5760 = vadd.f32 %v5675, %v5759
      %v5761 = vpop.f32.mrb[0].mxu0
      %5762 = vdwg.mxu0
      %5763 = vmatprep.subr.mxu0 0.0
      %v5764 = vand.u32 %v3877, 4294901760
      %v5765 = vsub.f32 %v3877, %v5764
      %v5766 = vand.u32 %v5765, 4294901760
      %5767 = vmatpush1.msra.mxu0 %v5766
      %5768 = vmatprep.subr.mxu0 0.0
      %v5769 = vand.u32 %v3878, 4294901760
      %v5770 = vsub.f32 %v3878, %v5769
      %v5771 = vand.u32 %v5770, 4294901760
      %5772 = vmatpush1.msra.mxu0 %v5771
      %5773 = vmatprep.subr.mxu0 0.0
      %v5774 = vand.u32 %v3879, 4294901760
      %v5775 = vsub.f32 %v3879, %v5774
      %v5776 = vand.u32 %v5775, 4294901760
      %5777 = vmatpush1.msra.mxu0 %v5776
      %5778 = vmatprep.subr.mxu0 0.0
      %v5779 = vand.u32 %v3880, 4294901760
      %v5780 = vsub.f32 %v3880, %v5779
      %v5781 = vand.u32 %v5780, 4294901760
      %5782 = vmatpush1.msra.mxu0 %v5781
      %5783 = vmatprep.subr.mxu0 0.0
      %5784 = vmatpush1.msra.mxu0 0.0
      %5785 = vmatprep.subr.mxu0 0.0
      %5786 = vmatpush1.msra.mxu0 0.0
      %5787 = vmatprep.subr.mxu0 0.0
      %5788 = vmatpush1.msra.mxu0 0.0
      %5789 = vmatprep.subr.mxu0 0.0
      %5790 = vmatpush1.msra.mxu0 0.0
      %5791 = vmatprep.subr.mxu0 0.0
      %5792 = vmatpush1.msra.mxu0 0.0
      %5793 = vmatprep.subr.mxu0 0.0
      %5794 = vmatpush1.msra.mxu0 0.0
      %5795 = vmatprep.subr.mxu0 0.0
      %5796 = vmatpush1.msra.mxu0 0.0
      %5797 = vmatprep.subr.mxu0 0.0
      %5798 = vmatpush1.msra.mxu0 0.0
      %5799 = vmatprep.subr.mxu0 0.0
      %5800 = vmatpush1.msra.mxu0 0.0
      %5801 = vmatprep.subr.mxu0 0.0
      %5802 = vmatpush1.msra.mxu0 0.0
      %5803 = vmatprep.subr.mxu0 0.0
      %5804 = vmatpush1.msra.mxu0 0.0
      %5805 = vmatprep.subr.mxu0 0.0
      %5806 = vmatpush1.msra.mxu0 0.0
      %5807 = vmatprep.subr.mxu0 0.0
      %5808 = vmatpush1.msra.mxu0 0.0
      %5809 = vmatprep.subr.mxu0 0.0
      %5810 = vmatpush1.msra.mxu0 0.0
      %5811 = vmatprep.subr.mxu0 0.0
      %5812 = vmatpush1.msra.mxu0 0.0
      %5813 = vmatprep.subr.mxu0 0.0
      %5814 = vmatpush1.msra.mxu0 0.0
      %5815 = vmatprep.subr.mxu0 0.0
      %5816 = vmatpush1.msra.mxu0 0.0
      %5817 = vmatprep.subr.mxu0 0.0
      %5818 = vmatpush1.msra.mxu0 0.0
      %5819 = vmatprep.subr.mxu0 0.0
      %5820 = vmatpush1.msra.mxu0 0.0
      %5821 = vmatprep.subr.mxu0 0.0
      %5822 = vmatpush1.msra.mxu0 0.0
      %5823 = vmatprep.subr.mxu0 0.0
      %5824 = vmatpush1.msra.mxu0 0.0
      %5825 = vmatprep.subr.mxu0 0.0
      %5826 = vmatpush1.msra.mxu0 0.0
      %5827 = vmatprep.subr.mxu0 0.0
      %5828 = vmatpush1.msra.mxu0 0.0
      %5829 = vmatprep.subr.mxu0 0.0
      %5830 = vmatpush1.msra.mxu0 0.0
      %5831 = vmatprep.subr.mxu0 0.0
      %5832 = vmatpush1.msra.mxu0 0.0
      %5833 = vmatprep.subr.mxu0 0.0
      %5834 = vmatpush1.msra.mxu0 0.0
      %5835 = vmatprep.subr.mxu0 0.0
      %5836 = vmatpush1.msra.mxu0 0.0
      %5837 = vmatprep.subr.mxu0 0.0
      %5838 = vmatpush1.msra.mxu0 0.0
      %5839 = vmatprep.mubr.f32.mxu0 0.0
      %v5840 = vand.u32 %v4337, 4294901760
      %5841 = vmatmul.mubr.f32.gmra.mrb[0].mxu0 %v5840
      %v5842 = vpop.f32.mrb[0].mxu0
      %v5843 = vadd.f32 %v5752, %v5842
      %v5844 = vpop.f32.mrb[0].mxu0
      %5845 = vmatprep.mubr.f32.mxu0 0.0
      %v5846 = vand.u32 %v4339, 4294901760
      %5847 = vmatmul.mubr.f32.gmra.mrb[0].mxu0 %v5846
      %v5848 = vpop.f32.mrb[0].mxu0
      %v5849 = vadd.f32 %v5760, %v5848
      %v5850 = vpop.f32.mrb[0].mxu0
      %5851 = vdwg.mxu0
      %5852 = vmatprep.subr.mxu0 0.0
      %v5853 = vand.u32 %v3877, 4294901760
      %5854 = vmatpush1.msra.mxu0 %v5853
      %5855 = vmatprep.subr.mxu0 0.0
      %v5856 = vand.u32 %v3878, 4294901760
      %5857 = vmatpush1.msra.mxu0 %v5856
      %5858 = vmatprep.subr.mxu0 0.0
      %v5859 = vand.u32 %v3879, 4294901760
      %5860 = vmatpush1.msra.mxu0 %v5859
      %5861 = vmatprep.subr.mxu0 0.0
      %v5862 = vand.u32 %v3880, 4294901760
      %5863 = vmatpush1.msra.mxu0 %v5862
      %5864 = vmatprep.subr.mxu0 0.0
      %5865 = vmatpush1.msra.mxu0 0.0
      %5866 = vmatprep.subr.mxu0 0.0
      %5867 = vmatpush1.msra.mxu0 0.0
      %5868 = vmatprep.subr.mxu0 0.0
      %5869 = vmatpush1.msra.mxu0 0.0
      %5870 = vmatprep.subr.mxu0 0.0
      %5871 = vmatpush1.msra.mxu0 0.0
      %5872 = vmatprep.subr.mxu0 0.0
      %5873 = vmatpush1.msra.mxu0 0.0
      %5874 = vmatprep.subr.mxu0 0.0
      %5875 = vmatpush1.msra.mxu0 0.0
      %5876 = vmatprep.subr.mxu0 0.0
      %5877 = vmatpush1.msra.mxu0 0.0
      %5878 = vmatprep.subr.mxu0 0.0
      %5879 = vmatpush1.msra.mxu0 0.0
      %5880 = vmatprep.subr.mxu0 0.0
      %5881 = vmatpush1.msra.mxu0 0.0
      %5882 = vmatprep.subr.mxu0 0.0
      %5883 = vmatpush1.msra.mxu0 0.0
      %5884 = vmatprep.subr.mxu0 0.0
      %5885 = vmatpush1.msra.mxu0 0.0
      %5886 = vmatprep.subr.mxu0 0.0
      %5887 = vmatpush1.msra.mxu0 0.0
      %5888 = vmatprep.subr.mxu0 0.0
      %5889 = vmatpush1.msra.mxu0 0.0
      %5890 = vmatprep.subr.mxu0 0.0
      %5891 = vmatpush1.msra.mxu0 0.0
      %5892 = vmatprep.subr.mxu0 0.0
      %5893 = vmatpush1.msra.mxu0 0.0
      %5894 = vmatprep.subr.mxu0 0.0
      %5895 = vmatpush1.msra.mxu0 0.0
      %5896 = vmatprep.subr.mxu0 0.0
      %5897 = vmatpush1.msra.mxu0 0.0
      %5898 = vmatprep.subr.mxu0 0.0
      %5899 = vmatpush1.msra.mxu0 0.0
      %5900 = vmatprep.subr.mxu0 0.0
      %5901 = vmatpush1.msra.mxu0 0.0
      %5902 = vmatprep.subr.mxu0 0.0
      %5903 = vmatpush1.msra.mxu0 0.0
      %5904 = vmatprep.subr.mxu0 0.0
      %5905 = vmatpush1.msra.mxu0 0.0
      %5906 = vmatprep.subr.mxu0 0.0
      %5907 = vmatpush1.msra.mxu0 0.0
      %5908 = vmatprep.subr.mxu0 0.0
      %5909 = vmatpush1.msra.mxu0 0.0
      %5910 = vmatprep.subr.mxu0 0.0
      %5911 = vmatpush1.msra.mxu0 0.0
      %5912 = vmatprep.subr.mxu0 0.0
      %5913 = vmatpush1.msra.mxu0 0.0
      %5914 = vmatprep.subr.mxu0 0.0
      %5915 = vmatpush1.msra.mxu0 0.0
      %5916 = vmatprep.subr.mxu0 0.0
      %5917 = vmatpush1.msra.mxu0 0.0
      %5918 = vmatprep.subr.mxu0 0.0
      %5919 = vmatpush1.msra.mxu0 0.0
      %5920 = vmatprep.mubr.f32.mxu0 0.0
      %v5921 = vand.u32 %v4337, 4294901760
      %5922 = vmatmul.mubr.f32.gmra.mrb[0].mxu0 %v5921
      %v5923 = vpop.f32.mrb[0].mxu0
      %v5924 = vadd.f32 %v5843, %v5923
      %v5925 = vpop.f32.mrb[0].mxu0
      %5926 = vmatprep.mubr.f32.mxu0 0.0
      %v5927 = vand.u32 %v4339, 4294901760
      %5928 = vmatmul.mubr.f32.gmra.mrb[0].mxu0 %v5927
      %v5929 = vpop.f32.mrb[0].mxu0
      %v5930 = vadd.f32 %v5849, %v5929
      %v5931 = vpop.f32.mrb[0].mxu0
      %5932 = vdwg.mxu0
      %v5934 = vsel %vm4336, %v5924, 0
      %v5937 = vsel %vm4336, %v5930, 0
      %5939 = vmatprep.subr.mxu0 0.0
      %v5940 = vand.u32 %v1164, 4294901760
      %5941 = vmatpush1.msra.mxu0 %v5940
      %5942 = vmatprep.subr.mxu0 0.0
      %v5943 = vand.u32 %v1165, 4294901760
      %5944 = vmatpush1.msra.mxu0 %v5943
      %5945 = vmatprep.subr.mxu0 0.0
      %v5946 = vand.u32 %v1166, 4294901760
      %5947 = vmatpush1.msra.mxu0 %v5946
      %5948 = vmatprep.subr.mxu0 0.0
      %v5949 = vand.u32 %v1167, 4294901760
      %5950 = vmatpush1.msra.mxu0 %v5949
      %5951 = vmatprep.subr.mxu0 0.0
      %5952 = vmatpush1.msra.mxu0 0.0
      %5953 = vmatprep.subr.mxu0 0.0
      %5954 = vmatpush1.msra.mxu0 0.0
      %5955 = vmatprep.subr.mxu0 0.0
      %5956 = vmatpush1.msra.mxu0 0.0
      %5957 = vmatprep.subr.mxu0 0.0
      %5958 = vmatpush1.msra.mxu0 0.0
      %5959 = vmatprep.subr.mxu0 0.0
      %5960 = vmatpush1.msra.mxu0 0.0
      %5961 = vmatprep.subr.mxu0 0.0
      %5962 = vmatpush1.msra.mxu0 0.0
      %5963 = vmatprep.subr.mxu0 0.0
      %5964 = vmatpush1.msra.mxu0 0.0
      %5965 = vmatprep.subr.mxu0 0.0
      %5966 = vmatpush1.msra.mxu0 0.0
      %5967 = vmatprep.subr.mxu0 0.0
      %5968 = vmatpush1.msra.mxu0 0.0
      %5969 = vmatprep.subr.mxu0 0.0
      %5970 = vmatpush1.msra.mxu0 0.0
      %5971 = vmatprep.subr.mxu0 0.0
      %5972 = vmatpush1.msra.mxu0 0.0
      %5973 = vmatprep.subr.mxu0 0.0
      %5974 = vmatpush1.msra.mxu0 0.0
      %5975 = vmatprep.subr.mxu0 0.0
      %5976 = vmatpush1.msra.mxu0 0.0
      %5977 = vmatprep.subr.mxu0 0.0
      %5978 = vmatpush1.msra.mxu0 0.0
      %5979 = vmatprep.subr.mxu0 0.0
      %5980 = vmatpush1.msra.mxu0 0.0
      %5981 = vmatprep.subr.mxu0 0.0
      %5982 = vmatpush1.msra.mxu0 0.0
      %5983 = vmatprep.subr.mxu0 0.0
      %5984 = vmatpush1.msra.mxu0 0.0
      %5985 = vmatprep.subr.mxu0 0.0
      %5986 = vmatpush1.msra.mxu0 0.0
      %5987 = vmatprep.subr.mxu0 0.0
      %5988 = vmatpush1.msra.mxu0 0.0
      %5989 = vmatprep.subr.mxu0 0.0
      %5990 = vmatpush1.msra.mxu0 0.0
      %5991 = vmatprep.subr.mxu0 0.0
      %5992 = vmatpush1.msra.mxu0 0.0
      %5993 = vmatprep.subr.mxu0 0.0
      %5994 = vmatpush1.msra.mxu0 0.0
      %5995 = vmatprep.subr.mxu0 0.0
      %5996 = vmatpush1.msra.mxu0 0.0
      %5997 = vmatprep.subr.mxu0 0.0
      %5998 = vmatpush1.msra.mxu0 0.0
      %5999 = vmatprep.subr.mxu0 0.0
      %6000 = vmatpush1.msra.mxu0 0.0
      %6001 = vmatprep.subr.mxu0 0.0
      %6002 = vmatpush1.msra.mxu0 0.0
      %6003 = vmatprep.subr.mxu0 0.0
      %6004 = vmatpush1.msra.mxu0 0.0
      %6005 = vmatprep.subr.mxu0 0.0
      %6006 = vmatpush1.msra.mxu0 0.0
      %6007 = vmatprep.mubr.f32.mxu0 0.0
      %v6008 = vand.u32 %v5934, 4294901760
      %v6009 = vsub.f32 %v5934, %v6008
      %v6010 = vand.u32 %v6009, 4294901760
      %v6011 = vsub.f32 %v6009, %v6010
      %v6012 = vand.u32 %v6011, 4294901760
      %6013 = vmatmul.mubr.f32.gmra.mrb[0].mxu0 %v6012
      %v6014 = vpop.f32.mrb[0].mxu0
      %v6015 = vadd.f32 0.0, %v6014
      %v6016 = vpop.f32.mrb[0].mxu0
      %6017 = vmatprep.mubr.f32.mxu0 0.0
      %v6018 = vand.u32 %v5937, 4294901760
      %v6019 = vsub.f32 %v5937, %v6018
      %v6020 = vand.u32 %v6019, 4294901760
      %v6021 = vsub.f32 %v6019, %v6020
      %v6022 = vand.u32 %v6021, 4294901760
      %6023 = vmatmul.mubr.f32.gmra.mrb[0].mxu0 %v6022
      %v6024 = vpop.f32.mrb[0].mxu0
      %v6025 = vadd.f32 0.0, %v6024
      %v6026 = vpop.f32.mrb[0].mxu0
      %6027 = vdwg.mxu0
      %6028 = vmatprep.subr.mxu0 0.0
      %v6029 = vand.u32 %v1164, 4294901760
      %v6030 = vsub.f32 %v1164, %v6029
      %v6031 = vand.u32 %v6030, 4294901760
      %v6032 = vsub.f32 %v6030, %v6031
      %v6033 = vand.u32 %v6032, 4294901760
      %6034 = vmatpush1.msra.mxu0 %v6033
      %6035 = vmatprep.subr.mxu0 0.0
      %v6036 = vand.u32 %v1165, 4294901760
      %v6037 = vsub.f32 %v1165, %v6036
      %v6038 = vand.u32 %v6037, 4294901760
      %v6039 = vsub.f32 %v6037, %v6038
      %v6040 = vand.u32 %v6039, 4294901760
      %6041 = vmatpush1.msra.mxu0 %v6040
      %6042 = vmatprep.subr.mxu0 0.0
      %v6043 = vand.u32 %v1166, 4294901760
      %v6044 = vsub.f32 %v1166, %v6043
      %v6045 = vand.u32 %v6044, 4294901760
      %v6046 = vsub.f32 %v6044, %v6045
      %v6047 = vand.u32 %v6046, 4294901760
      %6048 = vmatpush1.msra.mxu0 %v6047
      %6049 = vmatprep.subr.mxu0 0.0
      %v6050 = vand.u32 %v1167, 4294901760
      %v6051 = vsub.f32 %v1167, %v6050
      %v6052 = vand.u32 %v6051, 4294901760
      %v6053 = vsub.f32 %v6051, %v6052
      %v6054 = vand.u32 %v6053, 4294901760
      %6055 = vmatpush1.msra.mxu0 %v6054
      %6056 = vmatprep.subr.mxu0 0.0
      %6057 = vmatpush1.msra.mxu0 0.0
      %6058 = vmatprep.subr.mxu0 0.0
      %6059 = vmatpush1.msra.mxu0 0.0
      %6060 = vmatprep.subr.mxu0 0.0
      %6061 = vmatpush1.msra.mxu0 0.0
      %6062 = vmatprep.subr.mxu0 0.0
      %6063 = vmatpush1.msra.mxu0 0.0
      %6064 = vmatprep.subr.mxu0 0.0
      %6065 = vmatpush1.msra.mxu0 0.0
      %6066 = vmatprep.subr.mxu0 0.0
      %6067 = vmatpush1.msra.mxu0 0.0
      %6068 = vmatprep.subr.mxu0 0.0
      %6069 = vmatpush1.msra.mxu0 0.0
      %6070 = vmatprep.subr.mxu0 0.0
      %6071 = vmatpush1.msra.mxu0 0.0
      %6072 = vmatprep.subr.mxu0 0.0
      %6073 = vmatpush1.msra.mxu0 0.0
      %6074 = vmatprep.subr.mxu0 0.0
      %6075 = vmatpush1.msra.mxu0 0.0
      %6076 = vmatprep.subr.mxu0 0.0
      %6077 = vmatpush1.msra.mxu0 0.0
      %6078 = vmatprep.subr.mxu0 0.0
      %6079 = vmatpush1.msra.mxu0 0.0
      %6080 = vmatprep.subr.mxu0 0.0
      %6081 = vmatpush1.msra.mxu0 0.0
      %6082 = vmatprep.subr.mxu0 0.0
      %6083 = vmatpush1.msra.mxu0 0.0
      %6084 = vmatprep.subr.mxu0 0.0
      %6085 = vmatpush1.msra.mxu0 0.0
      %6086 = vmatprep.subr.mxu0 0.0
      %6087 = vmatpush1.msra.mxu0 0.0
      %6088 = vmatprep.subr.mxu0 0.0
      %6089 = vmatpush1.msra.mxu0 0.0
      %6090 = vmatprep.subr.mxu0 0.0
      %6091 = vmatpush1.msra.mxu0 0.0
      %6092 = vmatprep.subr.mxu0 0.0
      %6093 = vmatpush1.msra.mxu0 0.0
      %6094 = vmatprep.subr.mxu0 0.0
      %6095 = vmatpush1.msra.mxu0 0.0
      %6096 = vmatprep.subr.mxu0 0.0
      %6097 = vmatpush1.msra.mxu0 0.0
      %6098 = vmatprep.subr.mxu0 0.0
      %6099 = vmatpush1.msra.mxu0 0.0
      %6100 = vmatprep.subr.mxu0 0.0
      %6101 = vmatpush1.msra.mxu0 0.0
      %6102 = vmatprep.subr.mxu0 0.0
      %6103 = vmatpush1.msra.mxu0 0.0
      %6104 = vmatprep.subr.mxu0 0.0
      %6105 = vmatpush1.msra.mxu0 0.0
      %6106 = vmatprep.subr.mxu0 0.0
      %6107 = vmatpush1.msra.mxu0 0.0
      %6108 = vmatprep.subr.mxu0 0.0
      %6109 = vmatpush1.msra.mxu0 0.0
      %6110 = vmatprep.subr.mxu0 0.0
      %6111 = vmatpush1.msra.mxu0 0.0
      %6112 = vmatprep.mubr.f32.mxu0 0.0
      %v6113 = vand.u32 %v5934, 4294901760
      %6114 = vmatmul.mubr.f32.gmra.mrb[0].mxu0 %v6113
      %v6115 = vpop.f32.mrb[0].mxu0
      %v6116 = vadd.f32 %v6015, %v6115
      %v6117 = vpop.f32.mrb[0].mxu0
      %6118 = vmatprep.mubr.f32.mxu0 0.0
      %v6119 = vand.u32 %v5937, 4294901760
      %6120 = vmatmul.mubr.f32.gmra.mrb[0].mxu0 %v6119
      %v6121 = vpop.f32.mrb[0].mxu0
      %v6122 = vadd.f32 %v6025, %v6121
      %v6123 = vpop.f32.mrb[0].mxu0
      %6124 = vdwg.mxu0
      %6125 = vmatprep.subr.mxu0 0.0
      %v6126 = vand.u32 %v1164, 4294901760
      %v6127 = vsub.f32 %v1164, %v6126
      %6128 = vmatpush1.msra.mxu0 %v6127
      %6129 = vmatprep.subr.mxu0 0.0
      %v6130 = vand.u32 %v1165, 4294901760
      %v6131 = vsub.f32 %v1165, %v6130
      %6132 = vmatpush1.msra.mxu0 %v6131
      %6133 = vmatprep.subr.mxu0 0.0
      %v6134 = vand.u32 %v1166, 4294901760
      %v6135 = vsub.f32 %v1166, %v6134
      %6136 = vmatpush1.msra.mxu0 %v6135
      %6137 = vmatprep.subr.mxu0 0.0
      %v6138 = vand.u32 %v1167, 4294901760
      %v6139 = vsub.f32 %v1167, %v6138
      %6140 = vmatpush1.msra.mxu0 %v6139
      %6141 = vmatprep.subr.mxu0 0.0
      %6142 = vmatpush1.msra.mxu0 0.0
      %6143 = vmatprep.subr.mxu0 0.0
      %6144 = vmatpush1.msra.mxu0 0.0
      %6145 = vmatprep.subr.mxu0 0.0
      %6146 = vmatpush1.msra.mxu0 0.0
      %6147 = vmatprep.subr.mxu0 0.0
      %6148 = vmatpush1.msra.mxu0 0.0
      %6149 = vmatprep.subr.mxu0 0.0
      %6150 = vmatpush1.msra.mxu0 0.0
      %6151 = vmatprep.subr.mxu0 0.0
      %6152 = vmatpush1.msra.mxu0 0.0
      %6153 = vmatprep.subr.mxu0 0.0
      %6154 = vmatpush1.msra.mxu0 0.0
      %6155 = vmatprep.subr.mxu0 0.0
      %6156 = vmatpush1.msra.mxu0 0.0
      %6157 = vmatprep.subr.mxu0 0.0
      %6158 = vmatpush1.msra.mxu0 0.0
      %6159 = vmatprep.subr.mxu0 0.0
      %6160 = vmatpush1.msra.mxu0 0.0
      %6161 = vmatprep.subr.mxu0 0.0
      %6162 = vmatpush1.msra.mxu0 0.0
      %6163 = vmatprep.subr.mxu0 0.0
      %6164 = vmatpush1.msra.mxu0 0.0
      %6165 = vmatprep.subr.mxu0 0.0
      %6166 = vmatpush1.msra.mxu0 0.0
      %6167 = vmatprep.subr.mxu0 0.0
      %6168 = vmatpush1.msra.mxu0 0.0
      %6169 = vmatprep.subr.mxu0 0.0
      %6170 = vmatpush1.msra.mxu0 0.0
      %6171 = vmatprep.subr.mxu0 0.0
      %6172 = vmatpush1.msra.mxu0 0.0
      %6173 = vmatprep.subr.mxu0 0.0
      %6174 = vmatpush1.msra.mxu0 0.0
      %6175 = vmatprep.subr.mxu0 0.0
      %6176 = vmatpush1.msra.mxu0 0.0
      %6177 = vmatprep.subr.mxu0 0.0
      %6178 = vmatpush1.msra.mxu0 0.0
      %6179 = vmatprep.subr.mxu0 0.0
      %6180 = vmatpush1.msra.mxu0 0.0
      %6181 = vmatprep.subr.mxu0 0.0
      %6182 = vmatpush1.msra.mxu0 0.0
      %6183 = vmatprep.subr.mxu0 0.0
      %6184 = vmatpush1.msra.mxu0 0.0
      %6185 = vmatprep.subr.mxu0 0.0
      %6186 = vmatpush1.msra.mxu0 0.0
      %6187 = vmatprep.subr.mxu0 0.0
      %6188 = vmatpush1.msra.mxu0 0.0
      %6189 = vmatprep.subr.mxu0 0.0
      %6190 = vmatpush1.msra.mxu0 0.0
      %6191 = vmatprep.subr.mxu0 0.0
      %6192 = vmatpush1.msra.mxu0 0.0
      %6193 = vmatprep.subr.mxu0 0.0
      %6194 = vmatpush1.msra.mxu0 0.0
      %6195 = vmatprep.subr.mxu0 0.0
      %6196 = vmatpush1.msra.mxu0 0.0
      %6197 = vmatprep.mubr.f32.mxu0 0.0
      %v6198 = vand.u32 %v5934, 4294901760
      %v6199 = vsub.f32 %v5934, %v6198
      %6200 = vmatmul.mubr.f32.gmra.mrb[0].mxu0 %v6199
      %v6201 = vpop.f32.mrb[0].mxu0
      %v6202 = vadd.f32 %v6116, %v6201
      %v6203 = vpop.f32.mrb[0].mxu0
      %6204 = vmatprep.mubr.f32.mxu0 0.0
      %v6205 = vand.u32 %v5937, 4294901760
      %v6206 = vsub.f32 %v5937, %v6205
      %6207 = vmatmul.mubr.f32.gmra.mrb[0].mxu0 %v6206
      %v6208 = vpop.f32.mrb[0].mxu0
      %v6209 = vadd.f32 %v6122, %v6208
      %v6210 = vpop.f32.mrb[0].mxu0
      %6211 = vdwg.mxu0
      %6212 = vmatprep.subr.mxu0 0.0
      %v6213 = vand.u32 %v1164, 4294901760
      %6214 = vmatpush1.msra.mxu0 %v6213
      %6215 = vmatprep.subr.mxu0 0.0
      %v6216 = vand.u32 %v1165, 4294901760
      %6217 = vmatpush1.msra.mxu0 %v6216
      %6218 = vmatprep.subr.mxu0 0.0
      %v6219 = vand.u32 %v1166, 4294901760
      %6220 = vmatpush1.msra.mxu0 %v6219
      %6221 = vmatprep.subr.mxu0 0.0
      %v6222 = vand.u32 %v1167, 4294901760
      %6223 = vmatpush1.msra.mxu0 %v6222
      %6224 = vmatprep.subr.mxu0 0.0
      %6225 = vmatpush1.msra.mxu0 0.0
      %6226 = vmatprep.subr.mxu0 0.0
      %6227 = vmatpush1.msra.mxu0 0.0
      %6228 = vmatprep.subr.mxu0 0.0
      %6229 = vmatpush1.msra.mxu0 0.0
      %6230 = vmatprep.subr.mxu0 0.0
      %6231 = vmatpush1.msra.mxu0 0.0
      %6232 = vmatprep.subr.mxu0 0.0
      %6233 = vmatpush1.msra.mxu0 0.0
      %6234 = vmatprep.subr.mxu0 0.0
      %6235 = vmatpush1.msra.mxu0 0.0
      %6236 = vmatprep.subr.mxu0 0.0
      %6237 = vmatpush1.msra.mxu0 0.0
      %6238 = vmatprep.subr.mxu0 0.0
      %6239 = vmatpush1.msra.mxu0 0.0
      %6240 = vmatprep.subr.mxu0 0.0
      %6241 = vmatpush1.msra.mxu0 0.0
      %6242 = vmatprep.subr.mxu0 0.0
      %6243 = vmatpush1.msra.mxu0 0.0
      %6244 = vmatprep.subr.mxu0 0.0
      %6245 = vmatpush1.msra.mxu0 0.0
      %6246 = vmatprep.subr.mxu0 0.0
      %6247 = vmatpush1.msra.mxu0 0.0
      %6248 = vmatprep.subr.mxu0 0.0
      %6249 = vmatpush1.msra.mxu0 0.0
      %6250 = vmatprep.subr.mxu0 0.0
      %6251 = vmatpush1.msra.mxu0 0.0
      %6252 = vmatprep.subr.mxu0 0.0
      %6253 = vmatpush1.msra.mxu0 0.0
      %6254 = vmatprep.subr.mxu0 0.0
      %6255 = vmatpush1.msra.mxu0 0.0
      %6256 = vmatprep.subr.mxu0 0.0
      %6257 = vmatpush1.msra.mxu0 0.0
      %6258 = vmatprep.subr.mxu0 0.0
      %6259 = vmatpush1.msra.mxu0 0.0
      %6260 = vmatprep.subr.mxu0 0.0
      %6261 = vmatpush1.msra.mxu0 0.0
      %6262 = vmatprep.subr.mxu0 0.0
      %6263 = vmatpush1.msra.mxu0 0.0
      %6264 = vmatprep.subr.mxu0 0.0
      %6265 = vmatpush1.msra.mxu0 0.0
      %6266 = vmatprep.subr.mxu0 0.0
      %6267 = vmatpush1.msra.mxu0 0.0
      %6268 = vmatprep.subr.mxu0 0.0
      %6269 = vmatpush1.msra.mxu0 0.0
      %6270 = vmatprep.subr.mxu0 0.0
      %6271 = vmatpush1.msra.mxu0 0.0
      %6272 = vmatprep.subr.mxu0 0.0
      %6273 = vmatpush1.msra.mxu0 0.0
      %6274 = vmatprep.subr.mxu0 0.0
      %6275 = vmatpush1.msra.mxu0 0.0
      %6276 = vmatprep.subr.mxu0 0.0
      %6277 = vmatpush1.msra.mxu0 0.0
      %6278 = vmatprep.subr.mxu0 0.0
      %6279 = vmatpush1.msra.mxu0 0.0
      %6280 = vmatprep.mubr.f32.mxu0 0.0
      %v6281 = vand.u32 %v5934, 4294901760
      %v6282 = vsub.f32 %v5934, %v6281
      %v6283 = vand.u32 %v6282, 4294901760
      %6284 = vmatmul.mubr.f32.gmra.mrb[0].mxu0 %v6283
      %v6285 = vpop.f32.mrb[0].mxu0
      %v6286 = vadd.f32 %v6202, %v6285
      %v6287 = vpop.f32.mrb[0].mxu0
      %6288 = vmatprep.mubr.f32.mxu0 0.0
      %v6289 = vand.u32 %v5937, 4294901760
      %v6290 = vsub.f32 %v5937, %v6289
      %v6291 = vand.u32 %v6290, 4294901760
      %6292 = vmatmul.mubr.f32.gmra.mrb[0].mxu0 %v6291
      %v6293 = vpop.f32.mrb[0].mxu0
      %v6294 = vadd.f32 %v6209, %v6293
      %v6295 = vpop.f32.mrb[0].mxu0
      %6296 = vdwg.mxu0
      %6297 = vmatprep.subr.mxu0 0.0
      %v6298 = vand.u32 %v1164, 4294901760
      %v6299 = vsub.f32 %v1164, %v6298
      %v6300 = vand.u32 %v6299, 4294901760
      %6301 = vmatpush1.msra.mxu0 %v6300
      %6302 = vmatprep.subr.mxu0 0.0
      %v6303 = vand.u32 %v1165, 4294901760
      %v6304 = vsub.f32 %v1165, %v6303
      %v6305 = vand.u32 %v6304, 4294901760
      %6306 = vmatpush1.msra.mxu0 %v6305
      %6307 = vmatprep.subr.mxu0 0.0
      %v6308 = vand.u32 %v1166, 4294901760
      %v6309 = vsub.f32 %v1166, %v6308
      %v6310 = vand.u32 %v6309, 4294901760
      %6311 = vmatpush1.msra.mxu0 %v6310
      %6312 = vmatprep.subr.mxu0 0.0
      %v6313 = vand.u32 %v1167, 4294901760
      %v6314 = vsub.f32 %v1167, %v6313
      %v6315 = vand.u32 %v6314, 4294901760
      %6316 = vmatpush1.msra.mxu0 %v6315
      %6317 = vmatprep.subr.mxu0 0.0
      %6318 = vmatpush1.msra.mxu0 0.0
      %6319 = vmatprep.subr.mxu0 0.0
      %6320 = vmatpush1.msra.mxu0 0.0
      %6321 = vmatprep.subr.mxu0 0.0
      %6322 = vmatpush1.msra.mxu0 0.0
      %6323 = vmatprep.subr.mxu0 0.0
      %6324 = vmatpush1.msra.mxu0 0.0
      %6325 = vmatprep.subr.mxu0 0.0
      %6326 = vmatpush1.msra.mxu0 0.0
      %6327 = vmatprep.subr.mxu0 0.0
      %6328 = vmatpush1.msra.mxu0 0.0
      %6329 = vmatprep.subr.mxu0 0.0
      %6330 = vmatpush1.msra.mxu0 0.0
      %6331 = vmatprep.subr.mxu0 0.0
      %6332 = vmatpush1.msra.mxu0 0.0
      %6333 = vmatprep.subr.mxu0 0.0
      %6334 = vmatpush1.msra.mxu0 0.0
      %6335 = vmatprep.subr.mxu0 0.0
      %6336 = vmatpush1.msra.mxu0 0.0
      %6337 = vmatprep.subr.mxu0 0.0
      %6338 = vmatpush1.msra.mxu0 0.0
      %6339 = vmatprep.subr.mxu0 0.0
      %6340 = vmatpush1.msra.mxu0 0.0
      %6341 = vmatprep.subr.mxu0 0.0
      %6342 = vmatpush1.msra.mxu0 0.0
      %6343 = vmatprep.subr.mxu0 0.0
      %6344 = vmatpush1.msra.mxu0 0.0
      %6345 = vmatprep.subr.mxu0 0.0
      %6346 = vmatpush1.msra.mxu0 0.0
      %6347 = vmatprep.subr.mxu0 0.0
      %6348 = vmatpush1.msra.mxu0 0.0
      %6349 = vmatprep.subr.mxu0 0.0
      %6350 = vmatpush1.msra.mxu0 0.0
      %6351 = vmatprep.subr.mxu0 0.0
      %6352 = vmatpush1.msra.mxu0 0.0
      %6353 = vmatprep.subr.mxu0 0.0
      %6354 = vmatpush1.msra.mxu0 0.0
      %6355 = vmatprep.subr.mxu0 0.0
      %6356 = vmatpush1.msra.mxu0 0.0
      %6357 = vmatprep.subr.mxu0 0.0
      %6358 = vmatpush1.msra.mxu0 0.0
      %6359 = vmatprep.subr.mxu0 0.0
      %6360 = vmatpush1.msra.mxu0 0.0
      %6361 = vmatprep.subr.mxu0 0.0
      %6362 = vmatpush1.msra.mxu0 0.0
      %6363 = vmatprep.subr.mxu0 0.0
      %6364 = vmatpush1.msra.mxu0 0.0
      %6365 = vmatprep.subr.mxu0 0.0
      %6366 = vmatpush1.msra.mxu0 0.0
      %6367 = vmatprep.subr.mxu0 0.0
      %6368 = vmatpush1.msra.mxu0 0.0
      %6369 = vmatprep.subr.mxu0 0.0
      %6370 = vmatpush1.msra.mxu0 0.0
      %6371 = vmatprep.subr.mxu0 0.0
      %6372 = vmatpush1.msra.mxu0 0.0
      %6373 = vmatprep.mubr.f32.mxu0 0.0
      %v6374 = vand.u32 %v5934, 4294901760
      %6375 = vmatmul.mubr.f32.gmra.mrb[0].mxu0 %v6374
      %v6376 = vpop.f32.mrb[0].mxu0
      %v6377 = vadd.f32 %v6286, %v6376
      %v6378 = vpop.f32.mrb[0].mxu0
      %6379 = vmatprep.mubr.f32.mxu0 0.0
      %v6380 = vand.u32 %v5937, 4294901760
      %6381 = vmatmul.mubr.f32.gmra.mrb[0].mxu0 %v6380
      %v6382 = vpop.f32.mrb[0].mxu0
      %v6383 = vadd.f32 %v6294, %v6382
      %v6384 = vpop.f32.mrb[0].mxu0
      %6385 = vdwg.mxu0
      %6386 = vmatprep.subr.mxu0 0.0
      %v6387 = vand.u32 %v1164, 4294901760
      %6388 = vmatpush1.msra.mxu0 %v6387
      %6389 = vmatprep.subr.mxu0 0.0
      %v6390 = vand.u32 %v1165, 4294901760
      %6391 = vmatpush1.msra.mxu0 %v6390
      %6392 = vmatprep.subr.mxu0 0.0
      %v6393 = vand.u32 %v1166, 4294901760
      %6394 = vmatpush1.msra.mxu0 %v6393
      %6395 = vmatprep.subr.mxu0 0.0
      %v6396 = vand.u32 %v1167, 4294901760
      %6397 = vmatpush1.msra.mxu0 %v6396
      %6398 = vmatprep.subr.mxu0 0.0
      %6399 = vmatpush1.msra.mxu0 0.0
      %6400 = vmatprep.subr.mxu0 0.0
      %6401 = vmatpush1.msra.mxu0 0.0
      %6402 = vmatprep.subr.mxu0 0.0
      %6403 = vmatpush1.msra.mxu0 0.0
      %6404 = vmatprep.subr.mxu0 0.0
      %6405 = vmatpush1.msra.mxu0 0.0
      %6406 = vmatprep.subr.mxu0 0.0
      %6407 = vmatpush1.msra.mxu0 0.0
      %6408 = vmatprep.subr.mxu0 0.0
      %6409 = vmatpush1.msra.mxu0 0.0
      %6410 = vmatprep.subr.mxu0 0.0
      %6411 = vmatpush1.msra.mxu0 0.0
      %6412 = vmatprep.subr.mxu0 0.0
      %6413 = vmatpush1.msra.mxu0 0.0
      %6414 = vmatprep.subr.mxu0 0.0
      %6415 = vmatpush1.msra.mxu0 0.0
      %6416 = vmatprep.subr.mxu0 0.0
      %6417 = vmatpush1.msra.mxu0 0.0
      %6418 = vmatprep.subr.mxu0 0.0
      %6419 = vmatpush1.msra.mxu0 0.0
      %6420 = vmatprep.subr.mxu0 0.0
      %6421 = vmatpush1.msra.mxu0 0.0
      %6422 = vmatprep.subr.mxu0 0.0
      %6423 = vmatpush1.msra.mxu0 0.0
      %6424 = vmatprep.subr.mxu0 0.0
      %6425 = vmatpush1.msra.mxu0 0.0
      %6426 = vmatprep.subr.mxu0 0.0
      %6427 = vmatpush1.msra.mxu0 0.0
      %6428 = vmatprep.subr.mxu0 0.0
      %6429 = vmatpush1.msra.mxu0 0.0
      %6430 = vmatprep.subr.mxu0 0.0
      %6431 = vmatpush1.msra.mxu0 0.0
      %6432 = vmatprep.subr.mxu0 0.0
      %6433 = vmatpush1.msra.mxu0 0.0
      %6434 = vmatprep.subr.mxu0 0.0
      %6435 = vmatpush1.msra.mxu0 0.0
      %6436 = vmatprep.subr.mxu0 0.0
      %6437 = vmatpush1.msra.mxu0 0.0
      %6438 = vmatprep.subr.mxu0 0.0
      %6439 = vmatpush1.msra.mxu0 0.0
      %6440 = vmatprep.subr.mxu0 0.0
      %6441 = vmatpush1.msra.mxu0 0.0
      %6442 = vmatprep.subr.mxu0 0.0
      %6443 = vmatpush1.msra.mxu0 0.0
      %6444 = vmatprep.subr.mxu0 0.0
      %6445 = vmatpush1.msra.mxu0 0.0
      %6446 = vmatprep.subr.mxu0 0.0
      %6447 = vmatpush1.msra.mxu0 0.0
      %6448 = vmatprep.subr.mxu0 0.0
      %6449 = vmatpush1.msra.mxu0 0.0
      %6450 = vmatprep.subr.mxu0 0.0
      %6451 = vmatpush1.msra.mxu0 0.0
      %6452 = vmatprep.subr.mxu0 0.0
      %6453 = vmatpush1.msra.mxu0 0.0
      %6454 = vmatprep.mubr.f32.mxu0 0.0
      %v6455 = vand.u32 %v5934, 4294901760
      %6456 = vmatmul.mubr.f32.gmra.mrb[0].mxu0 %v6455
      %v6457 = vpop.f32.mrb[0].mxu0
      %v6458 = vadd.f32 %v6377, %v6457
      %v6459 = vpop.f32.mrb[0].mxu0
      %6460 = vmatprep.mubr.f32.mxu0 0.0
      %v6461 = vand.u32 %v5937, 4294901760
      %6462 = vmatmul.mubr.f32.gmra.mrb[0].mxu0 %v6461
      %v6463 = vpop.f32.mrb[0].mxu0
      %v6464 = vadd.f32 %v6383, %v6463
      %v6465 = vpop.f32.mrb[0].mxu0
      %6466 = vdwg.mxu0
      %v6467 = vmul.f32 %v6458, 0.25
      %v6468 = vmul.f32 %v6464, 0.25
      %v6471 = vrot.slane %v5403, 1
      %v6472 = vrot.slane %v5404, 1
      %v6473 = vsel %vm186, %v6471, %v6472
      %v6476 = vadd.f32 %v5403, %v6473
      %v6477 = vadd.f32 %v5404, %v6472
      %v6478 = vrot.slane %v5403, 2
      %v6479 = vrot.slane %v5404, 2
      %v6480 = vsel %vm218, %v6478, %v6479
      %v6483 = vadd.f32 %v6476, %v6480
      %v6484 = vadd.f32 %v6477, %v6479
      %6487 = vrot.lane.b32.xlu0 %v6483, 127
      %v6488 = vpop.permute.xlu0 %6487
      %6489 = vrot.lane.b32.xlu0 %v6484, 127
      %v6490 = vpop.permute.xlu0 %6489
      %v6493 = vadd.f32 %v6483, %v6488
      %v6494 = vadd.f32 %v6484, %v6490
      %6495 = vrot.lane.b32.xlu0 %v6483, 126
      %v6496 = vpop.permute.xlu0 %6495
      %6497 = vrot.lane.b32.xlu0 %v6484, 126
      %v6498 = vpop.permute.xlu0 %6497
      %v6501 = vadd.f32 %v6493, %v6496
      %v6502 = vadd.f32 %v6494, %v6498
      %v6503 = vmul.f32 %v6501, 0.11111111
      %v6504 = vmul.f32 %v6502, 0.11111111
      %v6507 = vrot.slane %v6467, 1
      %v6508 = vrot.slane %v6468, 1
      %v6509 = vsel %vm186, %v6507, %v6508
      %v6512 = vadd.f32 %v6467, %v6509
      %v6513 = vadd.f32 %v6468, %v6508
      %v6514 = vrot.slane %v6467, 2
      %v6515 = vrot.slane %v6468, 2
      %v6516 = vsel %vm218, %v6514, %v6515
      %v6519 = vadd.f32 %v6512, %v6516
      %v6520 = vadd.f32 %v6513, %v6515
      %6523 = vrot.lane.b32.xlu0 %v6519, 127
      %v6524 = vpop.permute.xlu0 %6523
      %6525 = vrot.lane.b32.xlu0 %v6520, 127
      %v6526 = vpop.permute.xlu0 %6525
      %v6529 = vadd.f32 %v6519, %v6524
      %v6530 = vadd.f32 %v6520, %v6526
      %6531 = vrot.lane.b32.xlu0 %v6519, 126
      %v6532 = vpop.permute.xlu0 %6531
      %6533 = vrot.lane.b32.xlu0 %v6520, 126
      %v6534 = vpop.permute.xlu0 %6533
      %v6537 = vadd.f32 %v6529, %v6532
      %v6538 = vadd.f32 %v6530, %v6534
      %v6539 = vmul.f32 %v6537, 0.11111111
      %v6540 = vmul.f32 %v6538, 0.11111111
      %v6541 = vmul.f32 %v5403, %v5403
      %v6542 = vmul.f32 %v5404, %v5404
      %v6545 = vrot.slane %v6541, 1
      %v6546 = vrot.slane %v6542, 1
      %v6547 = vsel %vm186, %v6545, %v6546
      %v6550 = vadd.f32 %v6541, %v6547
      %v6551 = vadd.f32 %v6542, %v6546
      %v6552 = vrot.slane %v6541, 2
      %v6553 = vrot.slane %v6542, 2
      %v6554 = vsel %vm218, %v6552, %v6553
      %v6557 = vadd.f32 %v6550, %v6554
      %v6558 = vadd.f32 %v6551, %v6553
      %6561 = vrot.lane.b32.xlu0 %v6557, 127
      %v6562 = vpop.permute.xlu0 %6561
      %6563 = vrot.lane.b32.xlu0 %v6558, 127
      %v6564 = vpop.permute.xlu0 %6563
      %v6567 = vadd.f32 %v6557, %v6562
      %v6568 = vadd.f32 %v6558, %v6564
      %6569 = vrot.lane.b32.xlu0 %v6557, 126
      %v6570 = vpop.permute.xlu0 %6569
      %6571 = vrot.lane.b32.xlu0 %v6558, 126
      %v6572 = vpop.permute.xlu0 %6571
      %v6575 = vadd.f32 %v6567, %v6570
      %v6576 = vadd.f32 %v6568, %v6572
      %v6577 = vmul.f32 %v6575, 0.11111111
      %v6578 = vmul.f32 %v6576, 0.11111111
      %v6579 = vmul.f32 %v6467, %v6467
      %v6580 = vmul.f32 %v6468, %v6468
      %v6583 = vrot.slane %v6579, 1
      %v6584 = vrot.slane %v6580, 1
      %v6585 = vsel %vm186, %v6583, %v6584
      %v6588 = vadd.f32 %v6579, %v6585
      %v6589 = vadd.f32 %v6580, %v6584
      %v6590 = vrot.slane %v6579, 2
      %v6591 = vrot.slane %v6580, 2
      %v6592 = vsel %vm218, %v6590, %v6591
      %v6595 = vadd.f32 %v6588, %v6592
      %v6596 = vadd.f32 %v6589, %v6591
      %6599 = vrot.lane.b32.xlu0 %v6595, 127
      %v6600 = vpop.permute.xlu0 %6599
      %6601 = vrot.lane.b32.xlu0 %v6596, 127
      %v6602 = vpop.permute.xlu0 %6601
      %v6605 = vadd.f32 %v6595, %v6600
      %v6606 = vadd.f32 %v6596, %v6602
      %6607 = vrot.lane.b32.xlu0 %v6595, 126
      %v6608 = vpop.permute.xlu0 %6607
      %6609 = vrot.lane.b32.xlu0 %v6596, 126
      %v6610 = vpop.permute.xlu0 %6609
      %v6613 = vadd.f32 %v6605, %v6608
      %v6614 = vadd.f32 %v6606, %v6610
      %v6615 = vmul.f32 %v6613, 0.11111111
      %v6616 = vmul.f32 %v6614, 0.11111111
      %v6617 = vmul.f32 %v5403, %v6467
      %v6618 = vmul.f32 %v5404, %v6468
      %v6621 = vrot.slane %v6617, 1
      %v6622 = vrot.slane %v6618, 1
      %v6623 = vsel %vm186, %v6621, %v6622
      %v6626 = vadd.f32 %v6617, %v6623
      %v6627 = vadd.f32 %v6618, %v6622
      %v6628 = vrot.slane %v6617, 2
      %v6629 = vrot.slane %v6618, 2
      %v6630 = vsel %vm218, %v6628, %v6629
      %v6633 = vadd.f32 %v6626, %v6630
      %v6634 = vadd.f32 %v6627, %v6629
      %6637 = vrot.lane.b32.xlu0 %v6633, 127
      %v6638 = vpop.permute.xlu0 %6637
      %6639 = vrot.lane.b32.xlu0 %v6634, 127
      %v6640 = vpop.permute.xlu0 %6639
      %v6643 = vadd.f32 %v6633, %v6638
      %v6644 = vadd.f32 %v6634, %v6640
      %6645 = vrot.lane.b32.xlu0 %v6633, 126
      %v6646 = vpop.permute.xlu0 %6645
      %6647 = vrot.lane.b32.xlu0 %v6634, 126
      %v6648 = vpop.permute.xlu0 %6647
      %v6651 = vadd.f32 %v6643, %v6646
      %v6652 = vadd.f32 %v6644, %v6648
      %v6653 = vmul.f32 %v6651, 0.11111111
      %v6654 = vmul.f32 %v6652, 0.11111111
      %v6655 = vmul.f32 %v6503, %v6539
      %v6656 = vmul.f32 %v6504, %v6540
      %v6657 = vmul.f32 %v6503, %v6503
      %v6658 = vmul.f32 %v6504, %v6504
      %v6659 = vmul.f32 %v6539, %v6539
      %v6660 = vmul.f32 %v6540, %v6540
      %v6661 = vsub.f32 %v6577, %v6657
      %v6662 = vsub.f32 %v6578, %v6658
      %v6663 = vsub.f32 %v6615, %v6659
      %v6664 = vsub.f32 %v6616, %v6660
      %v6665 = vsub.f32 %v6653, %v6655
      %v6666 = vsub.f32 %v6654, %v6656
      %v6667 = vmul.f32 %v6665, 2.0
      %v6668 = vmul.f32 %v6666, 2.0
      %v6669 = vadd.f32 %v6667, 8.1e-07
      %v6670 = vadd.f32 %v6668, 8.1e-07
      %v6671 = vadd.f32 %v6661, %v6663
      %v6672 = vadd.f32 %v6662, %v6664
      %v6673 = vadd.f32 %v6671, 8.1e-07
      %v6674 = vadd.f32 %v6672, 8.1e-07
      %v6675 = vrcp.pop %v6673
      %v6676 = vmul.f32 %v6669, %v6675
      %v6677 = vrcp.pop %v6674
      %v6678 = vmul.f32 %v6670, %v6677
      %vm6679 = vcmask 113664
      %v6680 = vsel %vm6679, %v6676, 0.0
      %6681 = vadd.xlane.f32.xlu0 %v6680
      %v6682 = vpop.xlane.xlu0 %6681
      %vm6683 = vcmask 111616
      %v6684 = vsel %vm6683, %v6678, 0.0
      %6685 = vadd.xlane.f32.xlu0 %v6684
      %v6686 = vpop.xlane.xlu0 %6685
      %v6687 = vsel %vm218, %v6686, 0.0
      %v6688 = vadd.f32 %v6682, %v6687
      %v6689 = vrot.slane %v6688, 4
      %v6690 = vadd.f32 %v6688, %v6689
      %v6691 = vrot.slane %v6690, 2
      %v6692 = vadd.f32 %v6690, %v6691
      %v6693 = vrot.slane %v6692, 1
      %v6694 = vadd.f32 %v6692, %v6693
      %v6695 = vmul.f32 %v6694, 0.0051020407
      %vm6696 = vcmask 130048
      %v6697 = vsel %vm6696, %v1122, 0
      %6699 = vmatprep.subr.mxu0 0.0
      %v6700 = vand.u32 %v5403, 4294901760
      %6701 = vmatpush1.msra.mxu0 %v6700
      %6702 = vmatprep.subr.mxu0 0.0
      %v6703 = vand.u32 %v5404, 4294901760
      %6704 = vmatpush1.msra.mxu0 %v6703
      %6705 = vmatprep.subr.mxu0 0.0
      %6706 = vmatpush1.msra.mxu0 0.0
      %6707 = vmatprep.subr.mxu0 0.0
      %6708 = vmatpush1.msra.mxu0 0.0
      %6709 = vmatprep.subr.mxu0 0.0
      %6710 = vmatpush1.msra.mxu0 0.0
      %6711 = vmatprep.subr.mxu0 0.0
      %6712 = vmatpush1.msra.mxu0 0.0
      %6713 = vmatprep.subr.mxu0 0.0
      %6714 = vmatpush1.msra.mxu0 0.0
      %6715 = vmatprep.subr.mxu0 0.0
      %6716 = vmatpush1.msra.mxu0 0.0
      %6717 = vmatprep.subr.mxu0 0.0
      %6718 = vmatpush1.msra.mxu0 0.0
      %6719 = vmatprep.subr.mxu0 0.0
      %6720 = vmatpush1.msra.mxu0 0.0
      %6721 = vmatprep.subr.mxu0 0.0
      %6722 = vmatpush1.msra.mxu0 0.0
      %6723 = vmatprep.subr.mxu0 0.0
      %6724 = vmatpush1.msra.mxu0 0.0
      %6725 = vmatprep.subr.mxu0 0.0
      %6726 = vmatpush1.msra.mxu0 0.0
      %6727 = vmatprep.subr.mxu0 0.0
      %6728 = vmatpush1.msra.mxu0 0.0
      %6729 = vmatprep.subr.mxu0 0.0
      %6730 = vmatpush1.msra.mxu0 0.0
      %6731 = vmatprep.subr.mxu0 0.0
      %6732 = vmatpush1.msra.mxu0 0.0
      %6733 = vmatprep.subr.mxu0 0.0
      %6734 = vmatpush1.msra.mxu0 0.0
      %6735 = vmatprep.subr.mxu0 0.0
      %6736 = vmatpush1.msra.mxu0 0.0
      %6737 = vmatprep.subr.mxu0 0.0
      %6738 = vmatpush1.msra.mxu0 0.0
      %6739 = vmatprep.subr.mxu0 0.0
      %6740 = vmatpush1.msra.mxu0 0.0
      %6741 = vmatprep.subr.mxu0 0.0
      %6742 = vmatpush1.msra.mxu0 0.0
      %6743 = vmatprep.subr.mxu0 0.0
      %6744 = vmatpush1.msra.mxu0 0.0
      %6745 = vmatprep.subr.mxu0 0.0
      %6746 = vmatpush1.msra.mxu0 0.0
      %6747 = vmatprep.subr.mxu0 0.0
      %6748 = vmatpush1.msra.mxu0 0.0
      %6749 = vmatprep.subr.mxu0 0.0
      %6750 = vmatpush1.msra.mxu0 0.0
      %6751 = vmatprep.subr.mxu0 0.0
      %6752 = vmatpush1.msra.mxu0 0.0
      %6753 = vmatprep.subr.mxu0 0.0
      %6754 = vmatpush1.msra.mxu0 0.0
      %6755 = vmatprep.subr.mxu0 0.0
      %6756 = vmatpush1.msra.mxu0 0.0
      %6757 = vmatprep.subr.mxu0 0.0
      %6758 = vmatpush1.msra.mxu0 0.0
      %6759 = vmatprep.subr.mxu0 0.0
      %6760 = vmatpush1.msra.mxu0 0.0
      %6761 = vmatprep.subr.mxu0 0.0
      %6762 = vmatpush1.msra.mxu0 0.0
      %6763 = vmatprep.subr.mxu0 0.0
      %6764 = vmatpush1.msra.mxu0 0.0
      %6765 = vmatprep.mubr.f32.mxu0 0.0
      %v6766 = vand.u32 %v6697, 4294901760
      %v6767 = vsub.f32 %v6697, %v6766
      %v6768 = vand.u32 %v6767, 4294901760
      %v6769 = vsub.f32 %v6767, %v6768
      %v6770 = vand.u32 %v6769, 4294901760
      %6771 = vmatmul.mubr.f32.gmra.mrb[0].mxu0 %v6770
      %v6772 = vpop.f32.mrb[0].mxu0
      %v6773 = vadd.f32 0.0, %v6772
      %v6774 = vpop.f32.mrb[0].mxu0
      %6775 = vdwg.mxu0
      %6776 = vmatprep.subr.mxu0 0.0
      %v6777 = vand.u32 %v5403, 4294901760
      %v6778 = vsub.f32 %v5403, %v6777
      %v6779 = vand.u32 %v6778, 4294901760
      %v6780 = vsub.f32 %v6778, %v6779
      %v6781 = vand.u32 %v6780, 4294901760
      %6782 = vmatpush1.msra.mxu0 %v6781
      %6783 = vmatprep.subr.mxu0 0.0
      %v6784 = vand.u32 %v5404, 4294901760
      %v6785 = vsub.f32 %v5404, %v6784
      %v6786 = vand.u32 %v6785, 4294901760
      %v6787 = vsub.f32 %v6785, %v6786
      %v6788 = vand.u32 %v6787, 4294901760
      %6789 = vmatpush1.msra.mxu0 %v6788
      %6790 = vmatprep.subr.mxu0 0.0
      %6791 = vmatpush1.msra.mxu0 0.0
      %6792 = vmatprep.subr.mxu0 0.0
      %6793 = vmatpush1.msra.mxu0 0.0
      %6794 = vmatprep.subr.mxu0 0.0
      %6795 = vmatpush1.msra.mxu0 0.0
      %6796 = vmatprep.subr.mxu0 0.0
      %6797 = vmatpush1.msra.mxu0 0.0
      %6798 = vmatprep.subr.mxu0 0.0
      %6799 = vmatpush1.msra.mxu0 0.0
      %6800 = vmatprep.subr.mxu0 0.0
      %6801 = vmatpush1.msra.mxu0 0.0
      %6802 = vmatprep.subr.mxu0 0.0
      %6803 = vmatpush1.msra.mxu0 0.0
      %6804 = vmatprep.subr.mxu0 0.0
      %6805 = vmatpush1.msra.mxu0 0.0
      %6806 = vmatprep.subr.mxu0 0.0
      %6807 = vmatpush1.msra.mxu0 0.0
      %6808 = vmatprep.subr.mxu0 0.0
      %6809 = vmatpush1.msra.mxu0 0.0
      %6810 = vmatprep.subr.mxu0 0.0
      %6811 = vmatpush1.msra.mxu0 0.0
      %6812 = vmatprep.subr.mxu0 0.0
      %6813 = vmatpush1.msra.mxu0 0.0
      %6814 = vmatprep.subr.mxu0 0.0
      %6815 = vmatpush1.msra.mxu0 0.0
      %6816 = vmatprep.subr.mxu0 0.0
      %6817 = vmatpush1.msra.mxu0 0.0
      %6818 = vmatprep.subr.mxu0 0.0
      %6819 = vmatpush1.msra.mxu0 0.0
      %6820 = vmatprep.subr.mxu0 0.0
      %6821 = vmatpush1.msra.mxu0 0.0
      %6822 = vmatprep.subr.mxu0 0.0
      %6823 = vmatpush1.msra.mxu0 0.0
      %6824 = vmatprep.subr.mxu0 0.0
      %6825 = vmatpush1.msra.mxu0 0.0
      %6826 = vmatprep.subr.mxu0 0.0
      %6827 = vmatpush1.msra.mxu0 0.0
      %6828 = vmatprep.subr.mxu0 0.0
      %6829 = vmatpush1.msra.mxu0 0.0
      %6830 = vmatprep.subr.mxu0 0.0
      %6831 = vmatpush1.msra.mxu0 0.0
      %6832 = vmatprep.subr.mxu0 0.0
      %6833 = vmatpush1.msra.mxu0 0.0
      %6834 = vmatprep.subr.mxu0 0.0
      %6835 = vmatpush1.msra.mxu0 0.0
      %6836 = vmatprep.subr.mxu0 0.0
      %6837 = vmatpush1.msra.mxu0 0.0
      %6838 = vmatprep.subr.mxu0 0.0
      %6839 = vmatpush1.msra.mxu0 0.0
      %6840 = vmatprep.subr.mxu0 0.0
      %6841 = vmatpush1.msra.mxu0 0.0
      %6842 = vmatprep.subr.mxu0 0.0
      %6843 = vmatpush1.msra.mxu0 0.0
      %6844 = vmatprep.subr.mxu0 0.0
      %6845 = vmatpush1.msra.mxu0 0.0
      %6846 = vmatprep.subr.mxu0 0.0
      %6847 = vmatpush1.msra.mxu0 0.0
      %6848 = vmatprep.subr.mxu0 0.0
      %6849 = vmatpush1.msra.mxu0 0.0
      %6850 = vmatprep.mubr.f32.mxu0 0.0
      %v6851 = vand.u32 %v6697, 4294901760
      %6852 = vmatmul.mubr.f32.gmra.mrb[0].mxu0 %v6851
      %v6853 = vpop.f32.mrb[0].mxu0
      %v6854 = vadd.f32 %v6773, %v6853
      %v6855 = vpop.f32.mrb[0].mxu0
      %6856 = vdwg.mxu0
      %6857 = vmatprep.subr.mxu0 0.0
      %v6858 = vand.u32 %v5403, 4294901760
      %v6859 = vsub.f32 %v5403, %v6858
      %6860 = vmatpush1.msra.mxu0 %v6859
      %6861 = vmatprep.subr.mxu0 0.0
      %v6862 = vand.u32 %v5404, 4294901760
      %v6863 = vsub.f32 %v5404, %v6862
      %6864 = vmatpush1.msra.mxu0 %v6863
      %6865 = vmatprep.subr.mxu0 0.0
      %6866 = vmatpush1.msra.mxu0 0.0
      %6867 = vmatprep.subr.mxu0 0.0
      %6868 = vmatpush1.msra.mxu0 0.0
      %6869 = vmatprep.subr.mxu0 0.0
      %6870 = vmatpush1.msra.mxu0 0.0
      %6871 = vmatprep.subr.mxu0 0.0
      %6872 = vmatpush1.msra.mxu0 0.0
      %6873 = vmatprep.subr.mxu0 0.0
      %6874 = vmatpush1.msra.mxu0 0.0
      %6875 = vmatprep.subr.mxu0 0.0
      %6876 = vmatpush1.msra.mxu0 0.0
      %6877 = vmatprep.subr.mxu0 0.0
      %6878 = vmatpush1.msra.mxu0 0.0
      %6879 = vmatprep.subr.mxu0 0.0
      %6880 = vmatpush1.msra.mxu0 0.0
      %6881 = vmatprep.subr.mxu0 0.0
      %6882 = vmatpush1.msra.mxu0 0.0
      %6883 = vmatprep.subr.mxu0 0.0
      %6884 = vmatpush1.msra.mxu0 0.0
      %6885 = vmatprep.subr.mxu0 0.0
      %6886 = vmatpush1.msra.mxu0 0.0
      %6887 = vmatprep.subr.mxu0 0.0
      %6888 = vmatpush1.msra.mxu0 0.0
      %6889 = vmatprep.subr.mxu0 0.0
      %6890 = vmatpush1.msra.mxu0 0.0
      %6891 = vmatprep.subr.mxu0 0.0
      %6892 = vmatpush1.msra.mxu0 0.0
      %6893 = vmatprep.subr.mxu0 0.0
      %6894 = vmatpush1.msra.mxu0 0.0
      %6895 = vmatprep.subr.mxu0 0.0
      %6896 = vmatpush1.msra.mxu0 0.0
      %6897 = vmatprep.subr.mxu0 0.0
      %6898 = vmatpush1.msra.mxu0 0.0
      %6899 = vmatprep.subr.mxu0 0.0
      %6900 = vmatpush1.msra.mxu0 0.0
      %6901 = vmatprep.subr.mxu0 0.0
      %6902 = vmatpush1.msra.mxu0 0.0
      %6903 = vmatprep.subr.mxu0 0.0
      %6904 = vmatpush1.msra.mxu0 0.0
      %6905 = vmatprep.subr.mxu0 0.0
      %6906 = vmatpush1.msra.mxu0 0.0
      %6907 = vmatprep.subr.mxu0 0.0
      %6908 = vmatpush1.msra.mxu0 0.0
      %6909 = vmatprep.subr.mxu0 0.0
      %6910 = vmatpush1.msra.mxu0 0.0
      %6911 = vmatprep.subr.mxu0 0.0
      %6912 = vmatpush1.msra.mxu0 0.0
      %6913 = vmatprep.subr.mxu0 0.0
      %6914 = vmatpush1.msra.mxu0 0.0
      %6915 = vmatprep.subr.mxu0 0.0
      %6916 = vmatpush1.msra.mxu0 0.0
      %6917 = vmatprep.subr.mxu0 0.0
      %6918 = vmatpush1.msra.mxu0 0.0
      %6919 = vmatprep.subr.mxu0 0.0
      %6920 = vmatpush1.msra.mxu0 0.0
      %6921 = vmatprep.subr.mxu0 0.0
      %6922 = vmatpush1.msra.mxu0 0.0
      %6923 = vmatprep.subr.mxu0 0.0
      %6924 = vmatpush1.msra.mxu0 0.0
      %6925 = vmatprep.mubr.f32.mxu0 0.0
      %v6926 = vand.u32 %v6697, 4294901760
      %v6927 = vsub.f32 %v6697, %v6926
      %6928 = vmatmul.mubr.f32.gmra.mrb[0].mxu0 %v6927
      %v6929 = vpop.f32.mrb[0].mxu0
      %v6930 = vadd.f32 %v6854, %v6929
      %v6931 = vpop.f32.mrb[0].mxu0
      %6932 = vdwg.mxu0
      %6933 = vmatprep.subr.mxu0 0.0
      %v6934 = vand.u32 %v5403, 4294901760
      %6935 = vmatpush1.msra.mxu0 %v6934
      %6936 = vmatprep.subr.mxu0 0.0
      %v6937 = vand.u32 %v5404, 4294901760
      %6938 = vmatpush1.msra.mxu0 %v6937
      %6939 = vmatprep.subr.mxu0 0.0
      %6940 = vmatpush1.msra.mxu0 0.0
      %6941 = vmatprep.subr.mxu0 0.0
      %6942 = vmatpush1.msra.mxu0 0.0
      %6943 = vmatprep.subr.mxu0 0.0
      %6944 = vmatpush1.msra.mxu0 0.0
      %6945 = vmatprep.subr.mxu0 0.0
      %6946 = vmatpush1.msra.mxu0 0.0
      %6947 = vmatprep.subr.mxu0 0.0
      %6948 = vmatpush1.msra.mxu0 0.0
      %6949 = vmatprep.subr.mxu0 0.0
      %6950 = vmatpush1.msra.mxu0 0.0
      %6951 = vmatprep.subr.mxu0 0.0
      %6952 = vmatpush1.msra.mxu0 0.0
      %6953 = vmatprep.subr.mxu0 0.0
      %6954 = vmatpush1.msra.mxu0 0.0
      %6955 = vmatprep.subr.mxu0 0.0
      %6956 = vmatpush1.msra.mxu0 0.0
      %6957 = vmatprep.subr.mxu0 0.0
      %6958 = vmatpush1.msra.mxu0 0.0
      %6959 = vmatprep.subr.mxu0 0.0
      %6960 = vmatpush1.msra.mxu0 0.0
      %6961 = vmatprep.subr.mxu0 0.0
      %6962 = vmatpush1.msra.mxu0 0.0
      %6963 = vmatprep.subr.mxu0 0.0
      %6964 = vmatpush1.msra.mxu0 0.0
      %6965 = vmatprep.subr.mxu0 0.0
      %6966 = vmatpush1.msra.mxu0 0.0
      %6967 = vmatprep.subr.mxu0 0.0
      %6968 = vmatpush1.msra.mxu0 0.0
      %6969 = vmatprep.subr.mxu0 0.0
      %6970 = vmatpush1.msra.mxu0 0.0
      %6971 = vmatprep.subr.mxu0 0.0
      %6972 = vmatpush1.msra.mxu0 0.0
      %6973 = vmatprep.subr.mxu0 0.0
      %6974 = vmatpush1.msra.mxu0 0.0
      %6975 = vmatprep.subr.mxu0 0.0
      %6976 = vmatpush1.msra.mxu0 0.0
      %6977 = vmatprep.subr.mxu0 0.0
      %6978 = vmatpush1.msra.mxu0 0.0
      %6979 = vmatprep.subr.mxu0 0.0
      %6980 = vmatpush1.msra.mxu0 0.0
      %6981 = vmatprep.subr.mxu0 0.0
      %6982 = vmatpush1.msra.mxu0 0.0
      %6983 = vmatprep.subr.mxu0 0.0
      %6984 = vmatpush1.msra.mxu0 0.0
      %6985 = vmatprep.subr.mxu0 0.0
      %6986 = vmatpush1.msra.mxu0 0.0
      %6987 = vmatprep.subr.mxu0 0.0
      %6988 = vmatpush1.msra.mxu0 0.0
      %6989 = vmatprep.subr.mxu0 0.0
      %6990 = vmatpush1.msra.mxu0 0.0
      %6991 = vmatprep.subr.mxu0 0.0
      %6992 = vmatpush1.msra.mxu0 0.0
      %6993 = vmatprep.subr.mxu0 0.0
      %6994 = vmatpush1.msra.mxu0 0.0
      %6995 = vmatprep.subr.mxu0 0.0
      %6996 = vmatpush1.msra.mxu0 0.0
      %6997 = vmatprep.subr.mxu0 0.0
      %6998 = vmatpush1.msra.mxu0 0.0
      %6999 = vmatprep.mubr.f32.mxu0 0.0
      %v7000 = vand.u32 %v6697, 4294901760
      %v7001 = vsub.f32 %v6697, %v7000
      %v7002 = vand.u32 %v7001, 4294901760
      %7003 = vmatmul.mubr.f32.gmra.mrb[0].mxu0 %v7002
      %v7004 = vpop.f32.mrb[0].mxu0
      %v7005 = vadd.f32 %v6930, %v7004
      %v7006 = vpop.f32.mrb[0].mxu0
      %7007 = vdwg.mxu0
      %7008 = vmatprep.subr.mxu0 0.0
      %v7009 = vand.u32 %v5403, 4294901760
      %v7010 = vsub.f32 %v5403, %v7009
      %v7011 = vand.u32 %v7010, 4294901760
      %7012 = vmatpush1.msra.mxu0 %v7011
      %7013 = vmatprep.subr.mxu0 0.0
      %v7014 = vand.u32 %v5404, 4294901760
      %v7015 = vsub.f32 %v5404, %v7014
      %v7016 = vand.u32 %v7015, 4294901760
      %7017 = vmatpush1.msra.mxu0 %v7016
      %7018 = vmatprep.subr.mxu0 0.0
      %7019 = vmatpush1.msra.mxu0 0.0
      %7020 = vmatprep.subr.mxu0 0.0
      %7021 = vmatpush1.msra.mxu0 0.0
      %7022 = vmatprep.subr.mxu0 0.0
      %7023 = vmatpush1.msra.mxu0 0.0
      %7024 = vmatprep.subr.mxu0 0.0
      %7025 = vmatpush1.msra.mxu0 0.0
      %7026 = vmatprep.subr.mxu0 0.0
      %7027 = vmatpush1.msra.mxu0 0.0
      %7028 = vmatprep.subr.mxu0 0.0
      %7029 = vmatpush1.msra.mxu0 0.0
      %7030 = vmatprep.subr.mxu0 0.0
      %7031 = vmatpush1.msra.mxu0 0.0
      %7032 = vmatprep.subr.mxu0 0.0
      %7033 = vmatpush1.msra.mxu0 0.0
      %7034 = vmatprep.subr.mxu0 0.0
      %7035 = vmatpush1.msra.mxu0 0.0
      %7036 = vmatprep.subr.mxu0 0.0
      %7037 = vmatpush1.msra.mxu0 0.0
      %7038 = vmatprep.subr.mxu0 0.0
      %7039 = vmatpush1.msra.mxu0 0.0
      %7040 = vmatprep.subr.mxu0 0.0
      %7041 = vmatpush1.msra.mxu0 0.0
      %7042 = vmatprep.subr.mxu0 0.0
      %7043 = vmatpush1.msra.mxu0 0.0
      %7044 = vmatprep.subr.mxu0 0.0
      %7045 = vmatpush1.msra.mxu0 0.0
      %7046 = vmatprep.subr.mxu0 0.0
      %7047 = vmatpush1.msra.mxu0 0.0
      %7048 = vmatprep.subr.mxu0 0.0
      %7049 = vmatpush1.msra.mxu0 0.0
      %7050 = vmatprep.subr.mxu0 0.0
      %7051 = vmatpush1.msra.mxu0 0.0
      %7052 = vmatprep.subr.mxu0 0.0
      %7053 = vmatpush1.msra.mxu0 0.0
      %7054 = vmatprep.subr.mxu0 0.0
      %7055 = vmatpush1.msra.mxu0 0.0
      %7056 = vmatprep.subr.mxu0 0.0
      %7057 = vmatpush1.msra.mxu0 0.0
      %7058 = vmatprep.subr.mxu0 0.0
      %7059 = vmatpush1.msra.mxu0 0.0
      %7060 = vmatprep.subr.mxu0 0.0
      %7061 = vmatpush1.msra.mxu0 0.0
      %7062 = vmatprep.subr.mxu0 0.0
      %7063 = vmatpush1.msra.mxu0 0.0
      %7064 = vmatprep.subr.mxu0 0.0
      %7065 = vmatpush1.msra.mxu0 0.0
      %7066 = vmatprep.subr.mxu0 0.0
      %7067 = vmatpush1.msra.mxu0 0.0
      %7068 = vmatprep.subr.mxu0 0.0
      %7069 = vmatpush1.msra.mxu0 0.0
      %7070 = vmatprep.subr.mxu0 0.0
      %7071 = vmatpush1.msra.mxu0 0.0
      %7072 = vmatprep.subr.mxu0 0.0
      %7073 = vmatpush1.msra.mxu0 0.0
      %7074 = vmatprep.subr.mxu0 0.0
      %7075 = vmatpush1.msra.mxu0 0.0
      %7076 = vmatprep.subr.mxu0 0.0
      %7077 = vmatpush1.msra.mxu0 0.0
      %7078 = vmatprep.mubr.f32.mxu0 0.0
      %v7079 = vand.u32 %v6697, 4294901760
      %7080 = vmatmul.mubr.f32.gmra.mrb[0].mxu0 %v7079
      %v7081 = vpop.f32.mrb[0].mxu0
      %v7082 = vadd.f32 %v7005, %v7081
      %v7083 = vpop.f32.mrb[0].mxu0
      %7084 = vdwg.mxu0
      %7085 = vmatprep.subr.mxu0 0.0
      %v7086 = vand.u32 %v5403, 4294901760
      %7087 = vmatpush1.msra.mxu0 %v7086
      %7088 = vmatprep.subr.mxu0 0.0
      %v7089 = vand.u32 %v5404, 4294901760
      %7090 = vmatpush1.msra.mxu0 %v7089
      %7091 = vmatprep.subr.mxu0 0.0
      %7092 = vmatpush1.msra.mxu0 0.0
      %7093 = vmatprep.subr.mxu0 0.0
      %7094 = vmatpush1.msra.mxu0 0.0
      %7095 = vmatprep.subr.mxu0 0.0
      %7096 = vmatpush1.msra.mxu0 0.0
      %7097 = vmatprep.subr.mxu0 0.0
      %7098 = vmatpush1.msra.mxu0 0.0
      %7099 = vmatprep.subr.mxu0 0.0
      %7100 = vmatpush1.msra.mxu0 0.0
      %7101 = vmatprep.subr.mxu0 0.0
      %7102 = vmatpush1.msra.mxu0 0.0
      %7103 = vmatprep.subr.mxu0 0.0
      %7104 = vmatpush1.msra.mxu0 0.0
      %7105 = vmatprep.subr.mxu0 0.0
      %7106 = vmatpush1.msra.mxu0 0.0
      %7107 = vmatprep.subr.mxu0 0.0
      %7108 = vmatpush1.msra.mxu0 0.0
      %7109 = vmatprep.subr.mxu0 0.0
      %7110 = vmatpush1.msra.mxu0 0.0
      %7111 = vmatprep.subr.mxu0 0.0
      %7112 = vmatpush1.msra.mxu0 0.0
      %7113 = vmatprep.subr.mxu0 0.0
      %7114 = vmatpush1.msra.mxu0 0.0
      %7115 = vmatprep.subr.mxu0 0.0
      %7116 = vmatpush1.msra.mxu0 0.0
      %7117 = vmatprep.subr.mxu0 0.0
      %7118 = vmatpush1.msra.mxu0 0.0
      %7119 = vmatprep.subr.mxu0 0.0
      %7120 = vmatpush1.msra.mxu0 0.0
      %7121 = vmatprep.subr.mxu0 0.0
      %7122 = vmatpush1.msra.mxu0 0.0
      %7123 = vmatprep.subr.mxu0 0.0
      %7124 = vmatpush1.msra.mxu0 0.0
      %7125 = vmatprep.subr.mxu0 0.0
      %7126 = vmatpush1.msra.mxu0 0.0
      %7127 = vmatprep.subr.mxu0 0.0
      %7128 = vmatpush1.msra.mxu0 0.0
      %7129 = vmatprep.subr.mxu0 0.0
      %7130 = vmatpush1.msra.mxu0 0.0
      %7131 = vmatprep.subr.mxu0 0.0
      %7132 = vmatpush1.msra.mxu0 0.0
      %7133 = vmatprep.subr.mxu0 0.0
      %7134 = vmatpush1.msra.mxu0 0.0
      %7135 = vmatprep.subr.mxu0 0.0
      %7136 = vmatpush1.msra.mxu0 0.0
      %7137 = vmatprep.subr.mxu0 0.0
      %7138 = vmatpush1.msra.mxu0 0.0
      %7139 = vmatprep.subr.mxu0 0.0
      %7140 = vmatpush1.msra.mxu0 0.0
      %7141 = vmatprep.subr.mxu0 0.0
      %7142 = vmatpush1.msra.mxu0 0.0
      %7143 = vmatprep.subr.mxu0 0.0
      %7144 = vmatpush1.msra.mxu0 0.0
      %7145 = vmatprep.subr.mxu0 0.0
      %7146 = vmatpush1.msra.mxu0 0.0
      %7147 = vmatprep.subr.mxu0 0.0
      %7148 = vmatpush1.msra.mxu0 0.0
      %7149 = vmatprep.subr.mxu0 0.0
      %7150 = vmatpush1.msra.mxu0 0.0
      %7151 = vmatprep.mubr.f32.mxu0 0.0
      %v7152 = vand.u32 %v6697, 4294901760
      %7153 = vmatmul.mubr.f32.gmra.mrb[0].mxu0 %v7152
      %v7154 = vpop.f32.mrb[0].mxu0
      %v7155 = vadd.f32 %v7082, %v7154
      %v7156 = vpop.f32.mrb[0].mxu0
      %7157 = vdwg.mxu0
      %v7159 = vsel %vm6696, %v7155, 0
      %7161 = vmatprep.subr.mxu0 0.0
      %v7162 = vand.u32 %v1164, 4294901760
      %7163 = vmatpush1.msra.mxu0 %v7162
      %7164 = vmatprep.subr.mxu0 0.0
      %v7165 = vand.u32 %v1165, 4294901760
      %7166 = vmatpush1.msra.mxu0 %v7165
      %7167 = vmatprep.subr.mxu0 0.0
      %7168 = vmatpush1.msra.mxu0 0.0
      %7169 = vmatprep.subr.mxu0 0.0
      %7170 = vmatpush1.msra.mxu0 0.0
      %7171 = vmatprep.subr.mxu0 0.0
      %7172 = vmatpush1.msra.mxu0 0.0
      %7173 = vmatprep.subr.mxu0 0.0
      %7174 = vmatpush1.msra.mxu0 0.0
      %7175 = vmatprep.subr.mxu0 0.0
      %7176 = vmatpush1.msra.mxu0 0.0
      %7177 = vmatprep.subr.mxu0 0.0
      %7178 = vmatpush1.msra.mxu0 0.0
      %7179 = vmatprep.subr.mxu0 0.0
      %7180 = vmatpush1.msra.mxu0 0.0
      %7181 = vmatprep.subr.mxu0 0.0
      %7182 = vmatpush1.msra.mxu0 0.0
      %7183 = vmatprep.subr.mxu0 0.0
      %7184 = vmatpush1.msra.mxu0 0.0
      %7185 = vmatprep.subr.mxu0 0.0
      %7186 = vmatpush1.msra.mxu0 0.0
      %7187 = vmatprep.subr.mxu0 0.0
      %7188 = vmatpush1.msra.mxu0 0.0
      %7189 = vmatprep.subr.mxu0 0.0
      %7190 = vmatpush1.msra.mxu0 0.0
      %7191 = vmatprep.subr.mxu0 0.0
      %7192 = vmatpush1.msra.mxu0 0.0
      %7193 = vmatprep.subr.mxu0 0.0
      %7194 = vmatpush1.msra.mxu0 0.0
      %7195 = vmatprep.subr.mxu0 0.0
      %7196 = vmatpush1.msra.mxu0 0.0
      %7197 = vmatprep.subr.mxu0 0.0
      %7198 = vmatpush1.msra.mxu0 0.0
      %7199 = vmatprep.subr.mxu0 0.0
      %7200 = vmatpush1.msra.mxu0 0.0
      %7201 = vmatprep.subr.mxu0 0.0
      %7202 = vmatpush1.msra.mxu0 0.0
      %7203 = vmatprep.subr.mxu0 0.0
      %7204 = vmatpush1.msra.mxu0 0.0
      %7205 = vmatprep.subr.mxu0 0.0
      %7206 = vmatpush1.msra.mxu0 0.0
      %7207 = vmatprep.subr.mxu0 0.0
      %7208 = vmatpush1.msra.mxu0 0.0
      %7209 = vmatprep.subr.mxu0 0.0
      %7210 = vmatpush1.msra.mxu0 0.0
      %7211 = vmatprep.subr.mxu0 0.0
      %7212 = vmatpush1.msra.mxu0 0.0
      %7213 = vmatprep.subr.mxu0 0.0
      %7214 = vmatpush1.msra.mxu0 0.0
      %7215 = vmatprep.subr.mxu0 0.0
      %7216 = vmatpush1.msra.mxu0 0.0
      %7217 = vmatprep.subr.mxu0 0.0
      %7218 = vmatpush1.msra.mxu0 0.0
      %7219 = vmatprep.subr.mxu0 0.0
      %7220 = vmatpush1.msra.mxu0 0.0
      %7221 = vmatprep.subr.mxu0 0.0
      %7222 = vmatpush1.msra.mxu0 0.0
      %7223 = vmatprep.subr.mxu0 0.0
      %7224 = vmatpush1.msra.mxu0 0.0
      %7225 = vmatprep.subr.mxu0 0.0
      %7226 = vmatpush1.msra.mxu0 0.0
      %7227 = vmatprep.mubr.f32.mxu0 0.0
      %v7228 = vand.u32 %v7159, 4294901760
      %v7229 = vsub.f32 %v7159, %v7228
      %v7230 = vand.u32 %v7229, 4294901760
      %v7231 = vsub.f32 %v7229, %v7230
      %v7232 = vand.u32 %v7231, 4294901760
      %7233 = vmatmul.mubr.f32.gmra.mrb[0].mxu0 %v7232
      %v7234 = vpop.f32.mrb[0].mxu0
      %v7235 = vadd.f32 0.0, %v7234
      %v7236 = vpop.f32.mrb[0].mxu0
      %7237 = vdwg.mxu0
      %7238 = vmatprep.subr.mxu0 0.0
      %v7239 = vand.u32 %v1164, 4294901760
      %v7240 = vsub.f32 %v1164, %v7239
      %v7241 = vand.u32 %v7240, 4294901760
      %v7242 = vsub.f32 %v7240, %v7241
      %v7243 = vand.u32 %v7242, 4294901760
      %7244 = vmatpush1.msra.mxu0 %v7243
      %7245 = vmatprep.subr.mxu0 0.0
      %v7246 = vand.u32 %v1165, 4294901760
      %v7247 = vsub.f32 %v1165, %v7246
      %v7248 = vand.u32 %v7247, 4294901760
      %v7249 = vsub.f32 %v7247, %v7248
      %v7250 = vand.u32 %v7249, 4294901760
      %7251 = vmatpush1.msra.mxu0 %v7250
      %7252 = vmatprep.subr.mxu0 0.0
      %7253 = vmatpush1.msra.mxu0 0.0
      %7254 = vmatprep.subr.mxu0 0.0
      %7255 = vmatpush1.msra.mxu0 0.0
      %7256 = vmatprep.subr.mxu0 0.0
      %7257 = vmatpush1.msra.mxu0 0.0
      %7258 = vmatprep.subr.mxu0 0.0
      %7259 = vmatpush1.msra.mxu0 0.0
      %7260 = vmatprep.subr.mxu0 0.0
      %7261 = vmatpush1.msra.mxu0 0.0
      %7262 = vmatprep.subr.mxu0 0.0
      %7263 = vmatpush1.msra.mxu0 0.0
      %7264 = vmatprep.subr.mxu0 0.0
      %7265 = vmatpush1.msra.mxu0 0.0
      %7266 = vmatprep.subr.mxu0 0.0
      %7267 = vmatpush1.msra.mxu0 0.0
      %7268 = vmatprep.subr.mxu0 0.0
      %7269 = vmatpush1.msra.mxu0 0.0
      %7270 = vmatprep.subr.mxu0 0.0
      %7271 = vmatpush1.msra.mxu0 0.0
      %7272 = vmatprep.subr.mxu0 0.0
      %7273 = vmatpush1.msra.mxu0 0.0
      %7274 = vmatprep.subr.mxu0 0.0
      %7275 = vmatpush1.msra.mxu0 0.0
      %7276 = vmatprep.subr.mxu0 0.0
      %7277 = vmatpush1.msra.mxu0 0.0
      %7278 = vmatprep.subr.mxu0 0.0
      %7279 = vmatpush1.msra.mxu0 0.0
      %7280 = vmatprep.subr.mxu0 0.0
      %7281 = vmatpush1.msra.mxu0 0.0
      %7282 = vmatprep.subr.mxu0 0.0
      %7283 = vmatpush1.msra.mxu0 0.0
      %7284 = vmatprep.subr.mxu0 0.0
      %7285 = vmatpush1.msra.mxu0 0.0
      %7286 = vmatprep.subr.mxu0 0.0
      %7287 = vmatpush1.msra.mxu0 0.0
      %7288 = vmatprep.subr.mxu0 0.0
      %7289 = vmatpush1.msra.mxu0 0.0
      %7290 = vmatprep.subr.mxu0 0.0
      %7291 = vmatpush1.msra.mxu0 0.0
      %7292 = vmatprep.subr.mxu0 0.0
      %7293 = vmatpush1.msra.mxu0 0.0
      %7294 = vmatprep.subr.mxu0 0.0
      %7295 = vmatpush1.msra.mxu0 0.0
      %7296 = vmatprep.subr.mxu0 0.0
      %7297 = vmatpush1.msra.mxu0 0.0
      %7298 = vmatprep.subr.mxu0 0.0
      %7299 = vmatpush1.msra.mxu0 0.0
      %7300 = vmatprep.subr.mxu0 0.0
      %7301 = vmatpush1.msra.mxu0 0.0
      %7302 = vmatprep.subr.mxu0 0.0
      %7303 = vmatpush1.msra.mxu0 0.0
      %7304 = vmatprep.subr.mxu0 0.0
      %7305 = vmatpush1.msra.mxu0 0.0
      %7306 = vmatprep.subr.mxu0 0.0
      %7307 = vmatpush1.msra.mxu0 0.0
      %7308 = vmatprep.subr.mxu0 0.0
      %7309 = vmatpush1.msra.mxu0 0.0
      %7310 = vmatprep.subr.mxu0 0.0
      %7311 = vmatpush1.msra.mxu0 0.0
      %7312 = vmatprep.mubr.f32.mxu0 0.0
      %v7313 = vand.u32 %v7159, 4294901760
      %7314 = vmatmul.mubr.f32.gmra.mrb[0].mxu0 %v7313
      %v7315 = vpop.f32.mrb[0].mxu0
      %v7316 = vadd.f32 %v7235, %v7315
      %v7317 = vpop.f32.mrb[0].mxu0
      %7318 = vdwg.mxu0
      %7319 = vmatprep.subr.mxu0 0.0
      %v7320 = vand.u32 %v1164, 4294901760
      %v7321 = vsub.f32 %v1164, %v7320
      %7322 = vmatpush1.msra.mxu0 %v7321
      %7323 = vmatprep.subr.mxu0 0.0
      %v7324 = vand.u32 %v1165, 4294901760
      %v7325 = vsub.f32 %v1165, %v7324
      %7326 = vmatpush1.msra.mxu0 %v7325
      %7327 = vmatprep.subr.mxu0 0.0
      %7328 = vmatpush1.msra.mxu0 0.0
      %7329 = vmatprep.subr.mxu0 0.0
      %7330 = vmatpush1.msra.mxu0 0.0
      %7331 = vmatprep.subr.mxu0 0.0
      %7332 = vmatpush1.msra.mxu0 0.0
      %7333 = vmatprep.subr.mxu0 0.0
      %7334 = vmatpush1.msra.mxu0 0.0
      %7335 = vmatprep.subr.mxu0 0.0
      %7336 = vmatpush1.msra.mxu0 0.0
      %7337 = vmatprep.subr.mxu0 0.0
      %7338 = vmatpush1.msra.mxu0 0.0
      %7339 = vmatprep.subr.mxu0 0.0
      %7340 = vmatpush1.msra.mxu0 0.0
      %7341 = vmatprep.subr.mxu0 0.0
      %7342 = vmatpush1.msra.mxu0 0.0
      %7343 = vmatprep.subr.mxu0 0.0
      %7344 = vmatpush1.msra.mxu0 0.0
      %7345 = vmatprep.subr.mxu0 0.0
      %7346 = vmatpush1.msra.mxu0 0.0
      %7347 = vmatprep.subr.mxu0 0.0
      %7348 = vmatpush1.msra.mxu0 0.0
      %7349 = vmatprep.subr.mxu0 0.0
      %7350 = vmatpush1.msra.mxu0 0.0
      %7351 = vmatprep.subr.mxu0 0.0
      %7352 = vmatpush1.msra.mxu0 0.0
      %7353 = vmatprep.subr.mxu0 0.0
      %7354 = vmatpush1.msra.mxu0 0.0
      %7355 = vmatprep.subr.mxu0 0.0
      %7356 = vmatpush1.msra.mxu0 0.0
      %7357 = vmatprep.subr.mxu0 0.0
      %7358 = vmatpush1.msra.mxu0 0.0
      %7359 = vmatprep.subr.mxu0 0.0
      %7360 = vmatpush1.msra.mxu0 0.0
      %7361 = vmatprep.subr.mxu0 0.0
      %7362 = vmatpush1.msra.mxu0 0.0
      %7363 = vmatprep.subr.mxu0 0.0
      %7364 = vmatpush1.msra.mxu0 0.0
      %7365 = vmatprep.subr.mxu0 0.0
      %7366 = vmatpush1.msra.mxu0 0.0
      %7367 = vmatprep.subr.mxu0 0.0
      %7368 = vmatpush1.msra.mxu0 0.0
      %7369 = vmatprep.subr.mxu0 0.0
      %7370 = vmatpush1.msra.mxu0 0.0
      %7371 = vmatprep.subr.mxu0 0.0
      %7372 = vmatpush1.msra.mxu0 0.0
      %7373 = vmatprep.subr.mxu0 0.0
      %7374 = vmatpush1.msra.mxu0 0.0
      %7375 = vmatprep.subr.mxu0 0.0
      %7376 = vmatpush1.msra.mxu0 0.0
      %7377 = vmatprep.subr.mxu0 0.0
      %7378 = vmatpush1.msra.mxu0 0.0
      %7379 = vmatprep.subr.mxu0 0.0
      %7380 = vmatpush1.msra.mxu0 0.0
      %7381 = vmatprep.subr.mxu0 0.0
      %7382 = vmatpush1.msra.mxu0 0.0
      %7383 = vmatprep.subr.mxu0 0.0
      %7384 = vmatpush1.msra.mxu0 0.0
      %7385 = vmatprep.subr.mxu0 0.0
      %7386 = vmatpush1.msra.mxu0 0.0
      %7387 = vmatprep.mubr.f32.mxu0 0.0
      %v7388 = vand.u32 %v7159, 4294901760
      %v7389 = vsub.f32 %v7159, %v7388
      %7390 = vmatmul.mubr.f32.gmra.mrb[0].mxu0 %v7389
      %v7391 = vpop.f32.mrb[0].mxu0
      %v7392 = vadd.f32 %v7316, %v7391
      %v7393 = vpop.f32.mrb[0].mxu0
      %7394 = vdwg.mxu0
      %7395 = vmatprep.subr.mxu0 0.0
      %v7396 = vand.u32 %v1164, 4294901760
      %7397 = vmatpush1.msra.mxu0 %v7396
      %7398 = vmatprep.subr.mxu0 0.0
      %v7399 = vand.u32 %v1165, 4294901760
      %7400 = vmatpush1.msra.mxu0 %v7399
      %7401 = vmatprep.subr.mxu0 0.0
      %7402 = vmatpush1.msra.mxu0 0.0
      %7403 = vmatprep.subr.mxu0 0.0
      %7404 = vmatpush1.msra.mxu0 0.0
      %7405 = vmatprep.subr.mxu0 0.0
      %7406 = vmatpush1.msra.mxu0 0.0
      %7407 = vmatprep.subr.mxu0 0.0
      %7408 = vmatpush1.msra.mxu0 0.0
      %7409 = vmatprep.subr.mxu0 0.0
      %7410 = vmatpush1.msra.mxu0 0.0
      %7411 = vmatprep.subr.mxu0 0.0
      %7412 = vmatpush1.msra.mxu0 0.0
      %7413 = vmatprep.subr.mxu0 0.0
      %7414 = vmatpush1.msra.mxu0 0.0
      %7415 = vmatprep.subr.mxu0 0.0
      %7416 = vmatpush1.msra.mxu0 0.0
      %7417 = vmatprep.subr.mxu0 0.0
      %7418 = vmatpush1.msra.mxu0 0.0
      %7419 = vmatprep.subr.mxu0 0.0
      %7420 = vmatpush1.msra.mxu0 0.0
      %7421 = vmatprep.subr.mxu0 0.0
      %7422 = vmatpush1.msra.mxu0 0.0
      %7423 = vmatprep.subr.mxu0 0.0
      %7424 = vmatpush1.msra.mxu0 0.0
      %7425 = vmatprep.subr.mxu0 0.0
      %7426 = vmatpush1.msra.mxu0 0.0
      %7427 = vmatprep.subr.mxu0 0.0
      %7428 = vmatpush1.msra.mxu0 0.0
      %7429 = vmatprep.subr.mxu0 0.0
      %7430 = vmatpush1.msra.mxu0 0.0
      %7431 = vmatprep.subr.mxu0 0.0
      %7432 = vmatpush1.msra.mxu0 0.0
      %7433 = vmatprep.subr.mxu0 0.0
      %7434 = vmatpush1.msra.mxu0 0.0
      %7435 = vmatprep.subr.mxu0 0.0
      %7436 = vmatpush1.msra.mxu0 0.0
      %7437 = vmatprep.subr.mxu0 0.0
      %7438 = vmatpush1.msra.mxu0 0.0
      %7439 = vmatprep.subr.mxu0 0.0
      %7440 = vmatpush1.msra.mxu0 0.0
      %7441 = vmatprep.subr.mxu0 0.0
      %7442 = vmatpush1.msra.mxu0 0.0
      %7443 = vmatprep.subr.mxu0 0.0
      %7444 = vmatpush1.msra.mxu0 0.0
      %7445 = vmatprep.subr.mxu0 0.0
      %7446 = vmatpush1.msra.mxu0 0.0
      %7447 = vmatprep.subr.mxu0 0.0
      %7448 = vmatpush1.msra.mxu0 0.0
      %7449 = vmatprep.subr.mxu0 0.0
      %7450 = vmatpush1.msra.mxu0 0.0
      %7451 = vmatprep.subr.mxu0 0.0
      %7452 = vmatpush1.msra.mxu0 0.0
      %7453 = vmatprep.subr.mxu0 0.0
      %7454 = vmatpush1.msra.mxu0 0.0
      %7455 = vmatprep.subr.mxu0 0.0
      %7456 = vmatpush1.msra.mxu0 0.0
      %7457 = vmatprep.subr.mxu0 0.0
      %7458 = vmatpush1.msra.mxu0 0.0
      %7459 = vmatprep.subr.mxu0 0.0
      %7460 = vmatpush1.msra.mxu0 0.0
      %7461 = vmatprep.mubr.f32.mxu0 0.0
      %v7462 = vand.u32 %v7159, 4294901760
      %v7463 = vsub.f32 %v7159, %v7462
      %v7464 = vand.u32 %v7463, 4294901760
      %7465 = vmatmul.mubr.f32.gmra.mrb[0].mxu0 %v7464
      %v7466 = vpop.f32.mrb[0].mxu0
      %v7467 = vadd.f32 %v7392, %v7466
      %v7468 = vpop.f32.mrb[0].mxu0
      %7469 = vdwg.mxu0
      %7470 = vmatprep.subr.mxu0 0.0
      %v7471 = vand.u32 %v1164, 4294901760
      %v7472 = vsub.f32 %v1164, %v7471
      %v7473 = vand.u32 %v7472, 4294901760
      %7474 = vmatpush1.msra.mxu0 %v7473
      %7475 = vmatprep.subr.mxu0 0.0
      %v7476 = vand.u32 %v1165, 4294901760
      %v7477 = vsub.f32 %v1165, %v7476
      %v7478 = vand.u32 %v7477, 4294901760
      %7479 = vmatpush1.msra.mxu0 %v7478
      %7480 = vmatprep.subr.mxu0 0.0
      %7481 = vmatpush1.msra.mxu0 0.0
      %7482 = vmatprep.subr.mxu0 0.0
      %7483 = vmatpush1.msra.mxu0 0.0
      %7484 = vmatprep.subr.mxu0 0.0
      %7485 = vmatpush1.msra.mxu0 0.0
      %7486 = vmatprep.subr.mxu0 0.0
      %7487 = vmatpush1.msra.mxu0 0.0
      %7488 = vmatprep.subr.mxu0 0.0
      %7489 = vmatpush1.msra.mxu0 0.0
      %7490 = vmatprep.subr.mxu0 0.0
      %7491 = vmatpush1.msra.mxu0 0.0
      %7492 = vmatprep.subr.mxu0 0.0
      %7493 = vmatpush1.msra.mxu0 0.0
      %7494 = vmatprep.subr.mxu0 0.0
      %7495 = vmatpush1.msra.mxu0 0.0
      %7496 = vmatprep.subr.mxu0 0.0
      %7497 = vmatpush1.msra.mxu0 0.0
      %7498 = vmatprep.subr.mxu0 0.0
      %7499 = vmatpush1.msra.mxu0 0.0
      %7500 = vmatprep.subr.mxu0 0.0
      %7501 = vmatpush1.msra.mxu0 0.0
      %7502 = vmatprep.subr.mxu0 0.0
      %7503 = vmatpush1.msra.mxu0 0.0
      %7504 = vmatprep.subr.mxu0 0.0
      %7505 = vmatpush1.msra.mxu0 0.0
      %7506 = vmatprep.subr.mxu0 0.0
      %7507 = vmatpush1.msra.mxu0 0.0
      %7508 = vmatprep.subr.mxu0 0.0
      %7509 = vmatpush1.msra.mxu0 0.0
      %7510 = vmatprep.subr.mxu0 0.0
      %7511 = vmatpush1.msra.mxu0 0.0
      %7512 = vmatprep.subr.mxu0 0.0
      %7513 = vmatpush1.msra.mxu0 0.0
      %7514 = vmatprep.subr.mxu0 0.0
      %7515 = vmatpush1.msra.mxu0 0.0
      %7516 = vmatprep.subr.mxu0 0.0
      %7517 = vmatpush1.msra.mxu0 0.0
      %7518 = vmatprep.subr.mxu0 0.0
      %7519 = vmatpush1.msra.mxu0 0.0
      %7520 = vmatprep.subr.mxu0 0.0
      %7521 = vmatpush1.msra.mxu0 0.0
      %7522 = vmatprep.subr.mxu0 0.0
      %7523 = vmatpush1.msra.mxu0 0.0
      %7524 = vmatprep.subr.mxu0 0.0
      %7525 = vmatpush1.msra.mxu0 0.0
      %7526 = vmatprep.subr.mxu0 0.0
      %7527 = vmatpush1.msra.mxu0 0.0
      %7528 = vmatprep.subr.mxu0 0.0
      %7529 = vmatpush1.msra.mxu0 0.0
      %7530 = vmatprep.subr.mxu0 0.0
      %7531 = vmatpush1.msra.mxu0 0.0
      %7532 = vmatprep.subr.mxu0 0.0
      %7533 = vmatpush1.msra.mxu0 0.0
      %7534 = vmatprep.subr.mxu0 0.0
      %7535 = vmatpush1.msra.mxu0 0.0
      %7536 = vmatprep.subr.mxu0 0.0
      %7537 = vmatpush1.msra.mxu0 0.0
      %7538 = vmatprep.subr.mxu0 0.0
      %7539 = vmatpush1.msra.mxu0 0.0
      %7540 = vmatprep.mubr.f32.mxu0 0.0
      %v7541 = vand.u32 %v7159, 4294901760
      %7542 = vmatmul.mubr.f32.gmra.mrb[0].mxu0 %v7541
      %v7543 = vpop.f32.mrb[0].mxu0
      %v7544 = vadd.f32 %v7467, %v7543
      %v7545 = vpop.f32.mrb[0].mxu0
      %7546 = vdwg.mxu0
      %7547 = vmatprep.subr.mxu0 0.0
      %v7548 = vand.u32 %v1164, 4294901760
      %7549 = vmatpush1.msra.mxu0 %v7548
      %7550 = vmatprep.subr.mxu0 0.0
      %v7551 = vand.u32 %v1165, 4294901760
      %7552 = vmatpush1.msra.mxu0 %v7551
      %7553 = vmatprep.subr.mxu0 0.0
      %7554 = vmatpush1.msra.mxu0 0.0
      %7555 = vmatprep.subr.mxu0 0.0
      %7556 = vmatpush1.msra.mxu0 0.0
      %7557 = vmatprep.subr.mxu0 0.0
      %7558 = vmatpush1.msra.mxu0 0.0
      %7559 = vmatprep.subr.mxu0 0.0
      %7560 = vmatpush1.msra.mxu0 0.0
      %7561 = vmatprep.subr.mxu0 0.0
      %7562 = vmatpush1.msra.mxu0 0.0
      %7563 = vmatprep.subr.mxu0 0.0
      %7564 = vmatpush1.msra.mxu0 0.0
      %7565 = vmatprep.subr.mxu0 0.0
      %7566 = vmatpush1.msra.mxu0 0.0
      %7567 = vmatprep.subr.mxu0 0.0
      %7568 = vmatpush1.msra.mxu0 0.0
      %7569 = vmatprep.subr.mxu0 0.0
      %7570 = vmatpush1.msra.mxu0 0.0
      %7571 = vmatprep.subr.mxu0 0.0
      %7572 = vmatpush1.msra.mxu0 0.0
      %7573 = vmatprep.subr.mxu0 0.0
      %7574 = vmatpush1.msra.mxu0 0.0
      %7575 = vmatprep.subr.mxu0 0.0
      %7576 = vmatpush1.msra.mxu0 0.0
      %7577 = vmatprep.subr.mxu0 0.0
      %7578 = vmatpush1.msra.mxu0 0.0
      %7579 = vmatprep.subr.mxu0 0.0
      %7580 = vmatpush1.msra.mxu0 0.0
      %7581 = vmatprep.subr.mxu0 0.0
      %7582 = vmatpush1.msra.mxu0 0.0
      %7583 = vmatprep.subr.mxu0 0.0
      %7584 = vmatpush1.msra.mxu0 0.0
      %7585 = vmatprep.subr.mxu0 0.0
      %7586 = vmatpush1.msra.mxu0 0.0
      %7587 = vmatprep.subr.mxu0 0.0
      %7588 = vmatpush1.msra.mxu0 0.0
      %7589 = vmatprep.subr.mxu0 0.0
      %7590 = vmatpush1.msra.mxu0 0.0
      %7591 = vmatprep.subr.mxu0 0.0
      %7592 = vmatpush1.msra.mxu0 0.0
      %7593 = vmatprep.subr.mxu0 0.0
      %7594 = vmatpush1.msra.mxu0 0.0
      %7595 = vmatprep.subr.mxu0 0.0
      %7596 = vmatpush1.msra.mxu0 0.0
      %7597 = vmatprep.subr.mxu0 0.0
      %7598 = vmatpush1.msra.mxu0 0.0
      %7599 = vmatprep.subr.mxu0 0.0
      %7600 = vmatpush1.msra.mxu0 0.0
      %7601 = vmatprep.subr.mxu0 0.0
      %7602 = vmatpush1.msra.mxu0 0.0
      %7603 = vmatprep.subr.mxu0 0.0
      %7604 = vmatpush1.msra.mxu0 0.0
      %7605 = vmatprep.subr.mxu0 0.0
      %7606 = vmatpush1.msra.mxu0 0.0
      %7607 = vmatprep.subr.mxu0 0.0
      %7608 = vmatpush1.msra.mxu0 0.0
      %7609 = vmatprep.subr.mxu0 0.0
      %7610 = vmatpush1.msra.mxu0 0.0
      %7611 = vmatprep.subr.mxu0 0.0
      %7612 = vmatpush1.msra.mxu0 0.0
      %7613 = vmatprep.mubr.f32.mxu0 0.0
      %v7614 = vand.u32 %v7159, 4294901760
      %7615 = vmatmul.mubr.f32.gmra.mrb[0].mxu0 %v7614
      %v7616 = vpop.f32.mrb[0].mxu0
      %v7617 = vadd.f32 %v7544, %v7616
      %v7618 = vpop.f32.mrb[0].mxu0
      %7619 = vdwg.mxu0
      %v7620 = vmul.f32 %v7617, 0.25
      %7621 = vmatprep.subr.mxu0 0.0
      %v7622 = vand.u32 %v6467, 4294901760
      %7623 = vmatpush1.msra.mxu0 %v7622
      %7624 = vmatprep.subr.mxu0 0.0
      %v7625 = vand.u32 %v6468, 4294901760
      %7626 = vmatpush1.msra.mxu0 %v7625
      %7627 = vmatprep.subr.mxu0 0.0
      %7628 = vmatpush1.msra.mxu0 0.0
      %7629 = vmatprep.subr.mxu0 0.0
      %7630 = vmatpush1.msra.mxu0 0.0
      %7631 = vmatprep.subr.mxu0 0.0
      %7632 = vmatpush1.msra.mxu0 0.0
      %7633 = vmatprep.subr.mxu0 0.0
      %7634 = vmatpush1.msra.mxu0 0.0
      %7635 = vmatprep.subr.mxu0 0.0
      %7636 = vmatpush1.msra.mxu0 0.0
      %7637 = vmatprep.subr.mxu0 0.0
      %7638 = vmatpush1.msra.mxu0 0.0
      %7639 = vmatprep.subr.mxu0 0.0
      %7640 = vmatpush1.msra.mxu0 0.0
      %7641 = vmatprep.subr.mxu0 0.0
      %7642 = vmatpush1.msra.mxu0 0.0
      %7643 = vmatprep.subr.mxu0 0.0
      %7644 = vmatpush1.msra.mxu0 0.0
      %7645 = vmatprep.subr.mxu0 0.0
      %7646 = vmatpush1.msra.mxu0 0.0
      %7647 = vmatprep.subr.mxu0 0.0
      %7648 = vmatpush1.msra.mxu0 0.0
      %7649 = vmatprep.subr.mxu0 0.0
      %7650 = vmatpush1.msra.mxu0 0.0
      %7651 = vmatprep.subr.mxu0 0.0
      %7652 = vmatpush1.msra.mxu0 0.0
      %7653 = vmatprep.subr.mxu0 0.0
      %7654 = vmatpush1.msra.mxu0 0.0
      %7655 = vmatprep.subr.mxu0 0.0
      %7656 = vmatpush1.msra.mxu0 0.0
      %7657 = vmatprep.subr.mxu0 0.0
      %7658 = vmatpush1.msra.mxu0 0.0
      %7659 = vmatprep.subr.mxu0 0.0
      %7660 = vmatpush1.msra.mxu0 0.0
      %7661 = vmatprep.subr.mxu0 0.0
      %7662 = vmatpush1.msra.mxu0 0.0
      %7663 = vmatprep.subr.mxu0 0.0
      %7664 = vmatpush1.msra.mxu0 0.0
      %7665 = vmatprep.subr.mxu0 0.0
      %7666 = vmatpush1.msra.mxu0 0.0
      %7667 = vmatprep.subr.mxu0 0.0
      %7668 = vmatpush1.msra.mxu0 0.0
      %7669 = vmatprep.subr.mxu0 0.0
      %7670 = vmatpush1.msra.mxu0 0.0
      %7671 = vmatprep.subr.mxu0 0.0
      %7672 = vmatpush1.msra.mxu0 0.0
      %7673 = vmatprep.subr.mxu0 0.0
      %7674 = vmatpush1.msra.mxu0 0.0
      %7675 = vmatprep.subr.mxu0 0.0
      %7676 = vmatpush1.msra.mxu0 0.0
      %7677 = vmatprep.subr.mxu0 0.0
      %7678 = vmatpush1.msra.mxu0 0.0
      %7679 = vmatprep.subr.mxu0 0.0
      %7680 = vmatpush1.msra.mxu0 0.0
      %7681 = vmatprep.subr.mxu0 0.0
      %7682 = vmatpush1.msra.mxu0 0.0
      %7683 = vmatprep.subr.mxu0 0.0
      %7684 = vmatpush1.msra.mxu0 0.0
      %7685 = vmatprep.subr.mxu0 0.0
      %7686 = vmatpush1.msra.mxu0 0.0
      %7687 = vmatprep.mubr.f32.mxu0 0.0
      %v7688 = vand.u32 %v6697, 4294901760
      %v7689 = vsub.f32 %v6697, %v7688
      %v7690 = vand.u32 %v7689, 4294901760
      %v7691 = vsub.f32 %v7689, %v7690
      %v7692 = vand.u32 %v7691, 4294901760
      %7693 = vmatmul.mubr.f32.gmra.mrb[0].mxu0 %v7692
      %v7694 = vpop.f32.mrb[0].mxu0
      %v7695 = vadd.f32 0.0, %v7694
      %v7696 = vpop.f32.mrb[0].mxu0
      %7697 = vdwg.mxu0
      %7698 = vmatprep.subr.mxu0 0.0
      %v7699 = vand.u32 %v6467, 4294901760
      %v7700 = vsub.f32 %v6467, %v7699
      %v7701 = vand.u32 %v7700, 4294901760
      %v7702 = vsub.f32 %v7700, %v7701
      %v7703 = vand.u32 %v7702, 4294901760
      %7704 = vmatpush1.msra.mxu0 %v7703
      %7705 = vmatprep.subr.mxu0 0.0
      %v7706 = vand.u32 %v6468, 4294901760
      %v7707 = vsub.f32 %v6468, %v7706
      %v7708 = vand.u32 %v7707, 4294901760
      %v7709 = vsub.f32 %v7707, %v7708
      %v7710 = vand.u32 %v7709, 4294901760
      %7711 = vmatpush1.msra.mxu0 %v7710
      %7712 = vmatprep.subr.mxu0 0.0
      %7713 = vmatpush1.msra.mxu0 0.0
      %7714 = vmatprep.subr.mxu0 0.0
      %7715 = vmatpush1.msra.mxu0 0.0
      %7716 = vmatprep.subr.mxu0 0.0
      %7717 = vmatpush1.msra.mxu0 0.0
      %7718 = vmatprep.subr.mxu0 0.0
      %7719 = vmatpush1.msra.mxu0 0.0
      %7720 = vmatprep.subr.mxu0 0.0
      %7721 = vmatpush1.msra.mxu0 0.0
      %7722 = vmatprep.subr.mxu0 0.0
      %7723 = vmatpush1.msra.mxu0 0.0
      %7724 = vmatprep.subr.mxu0 0.0
      %7725 = vmatpush1.msra.mxu0 0.0
      %7726 = vmatprep.subr.mxu0 0.0
      %7727 = vmatpush1.msra.mxu0 0.0
      %7728 = vmatprep.subr.mxu0 0.0
      %7729 = vmatpush1.msra.mxu0 0.0
      %7730 = vmatprep.subr.mxu0 0.0
      %7731 = vmatpush1.msra.mxu0 0.0
      %7732 = vmatprep.subr.mxu0 0.0
      %7733 = vmatpush1.msra.mxu0 0.0
      %7734 = vmatprep.subr.mxu0 0.0
      %7735 = vmatpush1.msra.mxu0 0.0
      %7736 = vmatprep.subr.mxu0 0.0
      %7737 = vmatpush1.msra.mxu0 0.0
      %7738 = vmatprep.subr.mxu0 0.0
      %7739 = vmatpush1.msra.mxu0 0.0
      %7740 = vmatprep.subr.mxu0 0.0
      %7741 = vmatpush1.msra.mxu0 0.0
      %7742 = vmatprep.subr.mxu0 0.0
      %7743 = vmatpush1.msra.mxu0 0.0
      %7744 = vmatprep.subr.mxu0 0.0
      %7745 = vmatpush1.msra.mxu0 0.0
      %7746 = vmatprep.subr.mxu0 0.0
      %7747 = vmatpush1.msra.mxu0 0.0
      %7748 = vmatprep.subr.mxu0 0.0
      %7749 = vmatpush1.msra.mxu0 0.0
      %7750 = vmatprep.subr.mxu0 0.0
      %7751 = vmatpush1.msra.mxu0 0.0
      %7752 = vmatprep.subr.mxu0 0.0
      %7753 = vmatpush1.msra.mxu0 0.0
      %7754 = vmatprep.subr.mxu0 0.0
      %7755 = vmatpush1.msra.mxu0 0.0
      %7756 = vmatprep.subr.mxu0 0.0
      %7757 = vmatpush1.msra.mxu0 0.0
      %7758 = vmatprep.subr.mxu0 0.0
      %7759 = vmatpush1.msra.mxu0 0.0
      %7760 = vmatprep.subr.mxu0 0.0
      %7761 = vmatpush1.msra.mxu0 0.0
      %7762 = vmatprep.subr.mxu0 0.0
      %7763 = vmatpush1.msra.mxu0 0.0
      %7764 = vmatprep.subr.mxu0 0.0
      %7765 = vmatpush1.msra.mxu0 0.0
      %7766 = vmatprep.subr.mxu0 0.0
      %7767 = vmatpush1.msra.mxu0 0.0
      %7768 = vmatprep.subr.mxu0 0.0
      %7769 = vmatpush1.msra.mxu0 0.0
      %7770 = vmatprep.subr.mxu0 0.0
      %7771 = vmatpush1.msra.mxu0 0.0
      %7772 = vmatprep.mubr.f32.mxu0 0.0
      %v7773 = vand.u32 %v6697, 4294901760
      %7774 = vmatmul.mubr.f32.gmra.mrb[0].mxu0 %v7773
      %v7775 = vpop.f32.mrb[0].mxu0
      %v7776 = vadd.f32 %v7695, %v7775
      %v7777 = vpop.f32.mrb[0].mxu0
      %7778 = vdwg.mxu0
      %7779 = vmatprep.subr.mxu0 0.0
      %v7780 = vand.u32 %v6467, 4294901760
      %v7781 = vsub.f32 %v6467, %v7780
      %7782 = vmatpush1.msra.mxu0 %v7781
      %7783 = vmatprep.subr.mxu0 0.0
      %v7784 = vand.u32 %v6468, 4294901760
      %v7785 = vsub.f32 %v6468, %v7784
      %7786 = vmatpush1.msra.mxu0 %v7785
      %7787 = vmatprep.subr.mxu0 0.0
      %7788 = vmatpush1.msra.mxu0 0.0
      %7789 = vmatprep.subr.mxu0 0.0
      %7790 = vmatpush1.msra.mxu0 0.0
      %7791 = vmatprep.subr.mxu0 0.0
      %7792 = vmatpush1.msra.mxu0 0.0
      %7793 = vmatprep.subr.mxu0 0.0
      %7794 = vmatpush1.msra.mxu0 0.0
      %7795 = vmatprep.subr.mxu0 0.0
      %7796 = vmatpush1.msra.mxu0 0.0
      %7797 = vmatprep.subr.mxu0 0.0
      %7798 = vmatpush1.msra.mxu0 0.0
      %7799 = vmatprep.subr.mxu0 0.0
      %7800 = vmatpush1.msra.mxu0 0.0
      %7801 = vmatprep.subr.mxu0 0.0
      %7802 = vmatpush1.msra.mxu0 0.0
      %7803 = vmatprep.subr.mxu0 0.0
      %7804 = vmatpush1.msra.mxu0 0.0
      %7805 = vmatprep.subr.mxu0 0.0
      %7806 = vmatpush1.msra.mxu0 0.0
      %7807 = vmatprep.subr.mxu0 0.0
      %7808 = vmatpush1.msra.mxu0 0.0
      %7809 = vmatprep.subr.mxu0 0.0
      %7810 = vmatpush1.msra.mxu0 0.0
      %7811 = vmatprep.subr.mxu0 0.0
      %7812 = vmatpush1.msra.mxu0 0.0
      %7813 = vmatprep.subr.mxu0 0.0
      %7814 = vmatpush1.msra.mxu0 0.0
      %7815 = vmatprep.subr.mxu0 0.0
      %7816 = vmatpush1.msra.mxu0 0.0
      %7817 = vmatprep.subr.mxu0 0.0
      %7818 = vmatpush1.msra.mxu0 0.0
      %7819 = vmatprep.subr.mxu0 0.0
      %7820 = vmatpush1.msra.mxu0 0.0
      %7821 = vmatprep.subr.mxu0 0.0
      %7822 = vmatpush1.msra.mxu0 0.0
      %7823 = vmatprep.subr.mxu0 0.0
      %7824 = vmatpush1.msra.mxu0 0.0
      %7825 = vmatprep.subr.mxu0 0.0
      %7826 = vmatpush1.msra.mxu0 0.0
      %7827 = vmatprep.subr.mxu0 0.0
      %7828 = vmatpush1.msra.mxu0 0.0
      %7829 = vmatprep.subr.mxu0 0.0
      %7830 = vmatpush1.msra.mxu0 0.0
      %7831 = vmatprep.subr.mxu0 0.0
      %7832 = vmatpush1.msra.mxu0 0.0
      %7833 = vmatprep.subr.mxu0 0.0
      %7834 = vmatpush1.msra.mxu0 0.0
      %7835 = vmatprep.subr.mxu0 0.0
      %7836 = vmatpush1.msra.mxu0 0.0
      %7837 = vmatprep.subr.mxu0 0.0
      %7838 = vmatpush1.msra.mxu0 0.0
      %7839 = vmatprep.subr.mxu0 0.0
      %7840 = vmatpush1.msra.mxu0 0.0
      %7841 = vmatprep.subr.mxu0 0.0
      %7842 = vmatpush1.msra.mxu0 0.0
      %7843 = vmatprep.subr.mxu0 0.0
      %7844 = vmatpush1.msra.mxu0 0.0
      %7845 = vmatprep.subr.mxu0 0.0
      %7846 = vmatpush1.msra.mxu0 0.0
      %7847 = vmatprep.mubr.f32.mxu0 0.0
      %v7848 = vand.u32 %v6697, 4294901760
      %v7849 = vsub.f32 %v6697, %v7848
      %7850 = vmatmul.mubr.f32.gmra.mrb[0].mxu0 %v7849
      %v7851 = vpop.f32.mrb[0].mxu0
      %v7852 = vadd.f32 %v7776, %v7851
      %v7853 = vpop.f32.mrb[0].mxu0
      %7854 = vdwg.mxu0
      %7855 = vmatprep.subr.mxu0 0.0
      %v7856 = vand.u32 %v6467, 4294901760
      %7857 = vmatpush1.msra.mxu0 %v7856
      %7858 = vmatprep.subr.mxu0 0.0
      %v7859 = vand.u32 %v6468, 4294901760
      %7860 = vmatpush1.msra.mxu0 %v7859
      %7861 = vmatprep.subr.mxu0 0.0
      %7862 = vmatpush1.msra.mxu0 0.0
      %7863 = vmatprep.subr.mxu0 0.0
      %7864 = vmatpush1.msra.mxu0 0.0
      %7865 = vmatprep.subr.mxu0 0.0
      %7866 = vmatpush1.msra.mxu0 0.0
      %7867 = vmatprep.subr.mxu0 0.0
      %7868 = vmatpush1.msra.mxu0 0.0
      %7869 = vmatprep.subr.mxu0 0.0
      %7870 = vmatpush1.msra.mxu0 0.0
      %7871 = vmatprep.subr.mxu0 0.0
      %7872 = vmatpush1.msra.mxu0 0.0
      %7873 = vmatprep.subr.mxu0 0.0
      %7874 = vmatpush1.msra.mxu0 0.0
      %7875 = vmatprep.subr.mxu0 0.0
      %7876 = vmatpush1.msra.mxu0 0.0
      %7877 = vmatprep.subr.mxu0 0.0
      %7878 = vmatpush1.msra.mxu0 0.0
      %7879 = vmatprep.subr.mxu0 0.0
      %7880 = vmatpush1.msra.mxu0 0.0
      %7881 = vmatprep.subr.mxu0 0.0
      %7882 = vmatpush1.msra.mxu0 0.0
      %7883 = vmatprep.subr.mxu0 0.0
      %7884 = vmatpush1.msra.mxu0 0.0
      %7885 = vmatprep.subr.mxu0 0.0
      %7886 = vmatpush1.msra.mxu0 0.0
      %7887 = vmatprep.subr.mxu0 0.0
      %7888 = vmatpush1.msra.mxu0 0.0
      %7889 = vmatprep.subr.mxu0 0.0
      %7890 = vmatpush1.msra.mxu0 0.0
      %7891 = vmatprep.subr.mxu0 0.0
      %7892 = vmatpush1.msra.mxu0 0.0
      %7893 = vmatprep.subr.mxu0 0.0
      %7894 = vmatpush1.msra.mxu0 0.0
      %7895 = vmatprep.subr.mxu0 0.0
      %7896 = vmatpush1.msra.mxu0 0.0
      %7897 = vmatprep.subr.mxu0 0.0
      %7898 = vmatpush1.msra.mxu0 0.0
      %7899 = vmatprep.subr.mxu0 0.0
      %7900 = vmatpush1.msra.mxu0 0.0
      %7901 = vmatprep.subr.mxu0 0.0
      %7902 = vmatpush1.msra.mxu0 0.0
      %7903 = vmatprep.subr.mxu0 0.0
      %7904 = vmatpush1.msra.mxu0 0.0
      %7905 = vmatprep.subr.mxu0 0.0
      %7906 = vmatpush1.msra.mxu0 0.0
      %7907 = vmatprep.subr.mxu0 0.0
      %7908 = vmatpush1.msra.mxu0 0.0
      %7909 = vmatprep.subr.mxu0 0.0
      %7910 = vmatpush1.msra.mxu0 0.0
      %7911 = vmatprep.subr.mxu0 0.0
      %7912 = vmatpush1.msra.mxu0 0.0
      %7913 = vmatprep.subr.mxu0 0.0
      %7914 = vmatpush1.msra.mxu0 0.0
      %7915 = vmatprep.subr.mxu0 0.0
      %7916 = vmatpush1.msra.mxu0 0.0
      %7917 = vmatprep.subr.mxu0 0.0
      %7918 = vmatpush1.msra.mxu0 0.0
      %7919 = vmatprep.subr.mxu0 0.0
      %7920 = vmatpush1.msra.mxu0 0.0
      %7921 = vmatprep.mubr.f32.mxu0 0.0
      %v7922 = vand.u32 %v6697, 4294901760
      %v7923 = vsub.f32 %v6697, %v7922
      %v7924 = vand.u32 %v7923, 4294901760
      %7925 = vmatmul.mubr.f32.gmra.mrb[0].mxu0 %v7924
      %v7926 = vpop.f32.mrb[0].mxu0
      %v7927 = vadd.f32 %v7852, %v7926
      %v7928 = vpop.f32.mrb[0].mxu0
      %7929 = vdwg.mxu0
      %7930 = vmatprep.subr.mxu0 0.0
      %v7931 = vand.u32 %v6467, 4294901760
      %v7932 = vsub.f32 %v6467, %v7931
      %v7933 = vand.u32 %v7932, 4294901760
      %7934 = vmatpush1.msra.mxu0 %v7933
      %7935 = vmatprep.subr.mxu0 0.0
      %v7936 = vand.u32 %v6468, 4294901760
      %v7937 = vsub.f32 %v6468, %v7936
      %v7938 = vand.u32 %v7937, 4294901760
      %7939 = vmatpush1.msra.mxu0 %v7938
      %7940 = vmatprep.subr.mxu0 0.0
      %7941 = vmatpush1.msra.mxu0 0.0
      %7942 = vmatprep.subr.mxu0 0.0
      %7943 = vmatpush1.msra.mxu0 0.0
      %7944 = vmatprep.subr.mxu0 0.0
      %7945 = vmatpush1.msra.mxu0 0.0
      %7946 = vmatprep.subr.mxu0 0.0
      %7947 = vmatpush1.msra.mxu0 0.0
      %7948 = vmatprep.subr.mxu0 0.0
      %7949 = vmatpush1.msra.mxu0 0.0
      %7950 = vmatprep.subr.mxu0 0.0
      %7951 = vmatpush1.msra.mxu0 0.0
      %7952 = vmatprep.subr.mxu0 0.0
      %7953 = vmatpush1.msra.mxu0 0.0
      %7954 = vmatprep.subr.mxu0 0.0
      %7955 = vmatpush1.msra.mxu0 0.0
      %7956 = vmatprep.subr.mxu0 0.0
      %7957 = vmatpush1.msra.mxu0 0.0
      %7958 = vmatprep.subr.mxu0 0.0
      %7959 = vmatpush1.msra.mxu0 0.0
      %7960 = vmatprep.subr.mxu0 0.0
      %7961 = vmatpush1.msra.mxu0 0.0
      %7962 = vmatprep.subr.mxu0 0.0
      %7963 = vmatpush1.msra.mxu0 0.0
      %7964 = vmatprep.subr.mxu0 0.0
      %7965 = vmatpush1.msra.mxu0 0.0
      %7966 = vmatprep.subr.mxu0 0.0
      %7967 = vmatpush1.msra.mxu0 0.0
      %7968 = vmatprep.subr.mxu0 0.0
      %7969 = vmatpush1.msra.mxu0 0.0
      %7970 = vmatprep.subr.mxu0 0.0
      %7971 = vmatpush1.msra.mxu0 0.0
      %7972 = vmatprep.subr.mxu0 0.0
      %7973 = vmatpush1.msra.mxu0 0.0
      %7974 = vmatprep.subr.mxu0 0.0
      %7975 = vmatpush1.msra.mxu0 0.0
      %7976 = vmatprep.subr.mxu0 0.0
      %7977 = vmatpush1.msra.mxu0 0.0
      %7978 = vmatprep.subr.mxu0 0.0
      %7979 = vmatpush1.msra.mxu0 0.0
      %7980 = vmatprep.subr.mxu0 0.0
      %7981 = vmatpush1.msra.mxu0 0.0
      %7982 = vmatprep.subr.mxu0 0.0
      %7983 = vmatpush1.msra.mxu0 0.0
      %7984 = vmatprep.subr.mxu0 0.0
      %7985 = vmatpush1.msra.mxu0 0.0
      %7986 = vmatprep.subr.mxu0 0.0
      %7987 = vmatpush1.msra.mxu0 0.0
      %7988 = vmatprep.subr.mxu0 0.0
      %7989 = vmatpush1.msra.mxu0 0.0
      %7990 = vmatprep.subr.mxu0 0.0
      %7991 = vmatpush1.msra.mxu0 0.0
      %7992 = vmatprep.subr.mxu0 0.0
      %7993 = vmatpush1.msra.mxu0 0.0
      %7994 = vmatprep.subr.mxu0 0.0
      %7995 = vmatpush1.msra.mxu0 0.0
      %7996 = vmatprep.subr.mxu0 0.0
      %7997 = vmatpush1.msra.mxu0 0.0
      %7998 = vmatprep.subr.mxu0 0.0
      %7999 = vmatpush1.msra.mxu0 0.0
      %8000 = vmatprep.mubr.f32.mxu0 0.0
      %v8001 = vand.u32 %v6697, 4294901760
      %8002 = vmatmul.mubr.f32.gmra.mrb[0].mxu0 %v8001
      %v8003 = vpop.f32.mrb[0].mxu0
      %v8004 = vadd.f32 %v7927, %v8003
      %v8005 = vpop.f32.mrb[0].mxu0
      %8006 = vdwg.mxu0
      %8007 = vmatprep.subr.mxu0 0.0
      %v8008 = vand.u32 %v6467, 4294901760
      %8009 = vmatpush1.msra.mxu0 %v8008
      %8010 = vmatprep.subr.mxu0 0.0
      %v8011 = vand.u32 %v6468, 4294901760
      %8012 = vmatpush1.msra.mxu0 %v8011
      %8013 = vmatprep.subr.mxu0 0.0
      %8014 = vmatpush1.msra.mxu0 0.0
      %8015 = vmatprep.subr.mxu0 0.0
      %8016 = vmatpush1.msra.mxu0 0.0
      %8017 = vmatprep.subr.mxu0 0.0
      %8018 = vmatpush1.msra.mxu0 0.0
      %8019 = vmatprep.subr.mxu0 0.0
      %8020 = vmatpush1.msra.mxu0 0.0
      %8021 = vmatprep.subr.mxu0 0.0
      %8022 = vmatpush1.msra.mxu0 0.0
      %8023 = vmatprep.subr.mxu0 0.0
      %8024 = vmatpush1.msra.mxu0 0.0
      %8025 = vmatprep.subr.mxu0 0.0
      %8026 = vmatpush1.msra.mxu0 0.0
      %8027 = vmatprep.subr.mxu0 0.0
      %8028 = vmatpush1.msra.mxu0 0.0
      %8029 = vmatprep.subr.mxu0 0.0
      %8030 = vmatpush1.msra.mxu0 0.0
      %8031 = vmatprep.subr.mxu0 0.0
      %8032 = vmatpush1.msra.mxu0 0.0
      %8033 = vmatprep.subr.mxu0 0.0
      %8034 = vmatpush1.msra.mxu0 0.0
      %8035 = vmatprep.subr.mxu0 0.0
      %8036 = vmatpush1.msra.mxu0 0.0
      %8037 = vmatprep.subr.mxu0 0.0
      %8038 = vmatpush1.msra.mxu0 0.0
      %8039 = vmatprep.subr.mxu0 0.0
      %8040 = vmatpush1.msra.mxu0 0.0
      %8041 = vmatprep.subr.mxu0 0.0
      %8042 = vmatpush1.msra.mxu0 0.0
      %8043 = vmatprep.subr.mxu0 0.0
      %8044 = vmatpush1.msra.mxu0 0.0
      %8045 = vmatprep.subr.mxu0 0.0
      %8046 = vmatpush1.msra.mxu0 0.0
      %8047 = vmatprep.subr.mxu0 0.0
      %8048 = vmatpush1.msra.mxu0 0.0
      %8049 = vmatprep.subr.mxu0 0.0
      %8050 = vmatpush1.msra.mxu0 0.0
      %8051 = vmatprep.subr.mxu0 0.0
      %8052 = vmatpush1.msra.mxu0 0.0
      %8053 = vmatprep.subr.mxu0 0.0
      %8054 = vmatpush1.msra.mxu0 0.0
      %8055 = vmatprep.subr.mxu0 0.0
      %8056 = vmatpush1.msra.mxu0 0.0
      %8057 = vmatprep.subr.mxu0 0.0
      %8058 = vmatpush1.msra.mxu0 0.0
      %8059 = vmatprep.subr.mxu0 0.0
      %8060 = vmatpush1.msra.mxu0 0.0
      %8061 = vmatprep.subr.mxu0 0.0
      %8062 = vmatpush1.msra.mxu0 0.0
      %8063 = vmatprep.subr.mxu0 0.0
      %8064 = vmatpush1.msra.mxu0 0.0
      %8065 = vmatprep.subr.mxu0 0.0
      %8066 = vmatpush1.msra.mxu0 0.0
      %8067 = vmatprep.subr.mxu0 0.0
      %8068 = vmatpush1.msra.mxu0 0.0
      %8069 = vmatprep.subr.mxu0 0.0
      %8070 = vmatpush1.msra.mxu0 0.0
      %8071 = vmatprep.subr.mxu0 0.0
      %8072 = vmatpush1.msra.mxu0 0.0
      %8073 = vmatprep.mubr.f32.mxu0 0.0
      %v8074 = vand.u32 %v6697, 4294901760
      %8075 = vmatmul.mubr.f32.gmra.mrb[0].mxu0 %v8074
      %v8076 = vpop.f32.mrb[0].mxu0
      %v8077 = vadd.f32 %v8004, %v8076
      %v8078 = vpop.f32.mrb[0].mxu0
      %8079 = vdwg.mxu0
      %v8081 = vsel %vm6696, %v8077, 0
      %8083 = vmatprep.subr.mxu0 0.0
      %v8084 = vand.u32 %v1164, 4294901760
      %8085 = vmatpush1.msra.mxu0 %v8084
      %8086 = vmatprep.subr.mxu0 0.0
      %v8087 = vand.u32 %v1165, 4294901760
      %8088 = vmatpush1.msra.mxu0 %v8087
      %8089 = vmatprep.subr.mxu0 0.0
      %8090 = vmatpush1.msra.mxu0 0.0
      %8091 = vmatprep.subr.mxu0 0.0
      %8092 = vmatpush1.msra.mxu0 0.0
      %8093 = vmatprep.subr.mxu0 0.0
      %8094 = vmatpush1.msra.mxu0 0.0
      %8095 = vmatprep.subr.mxu0 0.0
      %8096 = vmatpush1.msra.mxu0 0.0
      %8097 = vmatprep.subr.mxu0 0.0
      %8098 = vmatpush1.msra.mxu0 0.0
      %8099 = vmatprep.subr.mxu0 0.0
      %8100 = vmatpush1.msra.mxu0 0.0
      %8101 = vmatprep.subr.mxu0 0.0
      %8102 = vmatpush1.msra.mxu0 0.0
      %8103 = vmatprep.subr.mxu0 0.0
      %8104 = vmatpush1.msra.mxu0 0.0
      %8105 = vmatprep.subr.mxu0 0.0
      %8106 = vmatpush1.msra.mxu0 0.0
      %8107 = vmatprep.subr.mxu0 0.0
      %8108 = vmatpush1.msra.mxu0 0.0
      %8109 = vmatprep.subr.mxu0 0.0
      %8110 = vmatpush1.msra.mxu0 0.0
      %8111 = vmatprep.subr.mxu0 0.0
      %8112 = vmatpush1.msra.mxu0 0.0
      %8113 = vmatprep.subr.mxu0 0.0
      %8114 = vmatpush1.msra.mxu0 0.0
      %8115 = vmatprep.subr.mxu0 0.0
      %8116 = vmatpush1.msra.mxu0 0.0
      %8117 = vmatprep.subr.mxu0 0.0
      %8118 = vmatpush1.msra.mxu0 0.0
      %8119 = vmatprep.subr.mxu0 0.0
      %8120 = vmatpush1.msra.mxu0 0.0
      %8121 = vmatprep.subr.mxu0 0.0
      %8122 = vmatpush1.msra.mxu0 0.0
      %8123 = vmatprep.subr.mxu0 0.0
      %8124 = vmatpush1.msra.mxu0 0.0
      %8125 = vmatprep.subr.mxu0 0.0
      %8126 = vmatpush1.msra.mxu0 0.0
      %8127 = vmatprep.subr.mxu0 0.0
      %8128 = vmatpush1.msra.mxu0 0.0
      %8129 = vmatprep.subr.mxu0 0.0
      %8130 = vmatpush1.msra.mxu0 0.0
      %8131 = vmatprep.subr.mxu0 0.0
      %8132 = vmatpush1.msra.mxu0 0.0
      %8133 = vmatprep.subr.mxu0 0.0
      %8134 = vmatpush1.msra.mxu0 0.0
      %8135 = vmatprep.subr.mxu0 0.0
      %8136 = vmatpush1.msra.mxu0 0.0
      %8137 = vmatprep.subr.mxu0 0.0
      %8138 = vmatpush1.msra.mxu0 0.0
      %8139 = vmatprep.subr.mxu0 0.0
      %8140 = vmatpush1.msra.mxu0 0.0
      %8141 = vmatprep.subr.mxu0 0.0
      %8142 = vmatpush1.msra.mxu0 0.0
      %8143 = vmatprep.subr.mxu0 0.0
      %8144 = vmatpush1.msra.mxu0 0.0
      %8145 = vmatprep.subr.mxu0 0.0
      %8146 = vmatpush1.msra.mxu0 0.0
      %8147 = vmatprep.subr.mxu0 0.0
      %8148 = vmatpush1.msra.mxu0 0.0
      %8149 = vmatprep.mubr.f32.mxu0 0.0
      %v8150 = vand.u32 %v8081, 4294901760
      %v8151 = vsub.f32 %v8081, %v8150
      %v8152 = vand.u32 %v8151, 4294901760
      %v8153 = vsub.f32 %v8151, %v8152
      %v8154 = vand.u32 %v8153, 4294901760
      %8155 = vmatmul.mubr.f32.gmra.mrb[0].mxu0 %v8154
      %v8156 = vpop.f32.mrb[0].mxu0
      %v8157 = vadd.f32 0.0, %v8156
      %v8158 = vpop.f32.mrb[0].mxu0
      %8159 = vdwg.mxu0
      %8160 = vmatprep.subr.mxu0 0.0
      %v8161 = vand.u32 %v1164, 4294901760
      %v8162 = vsub.f32 %v1164, %v8161
      %v8163 = vand.u32 %v8162, 4294901760
      %v8164 = vsub.f32 %v8162, %v8163
      %v8165 = vand.u32 %v8164, 4294901760
      %8166 = vmatpush1.msra.mxu0 %v8165
      %8167 = vmatprep.subr.mxu0 0.0
      %v8168 = vand.u32 %v1165, 4294901760
      %v8169 = vsub.f32 %v1165, %v8168
      %v8170 = vand.u32 %v8169, 4294901760
      %v8171 = vsub.f32 %v8169, %v8170
      %v8172 = vand.u32 %v8171, 4294901760
      %8173 = vmatpush1.msra.mxu0 %v8172
      %8174 = vmatprep.subr.mxu0 0.0
      %8175 = vmatpush1.msra.mxu0 0.0
      %8176 = vmatprep.subr.mxu0 0.0
      %8177 = vmatpush1.msra.mxu0 0.0
      %8178 = vmatprep.subr.mxu0 0.0
      %8179 = vmatpush1.msra.mxu0 0.0
      %8180 = vmatprep.subr.mxu0 0.0
      %8181 = vmatpush1.msra.mxu0 0.0
      %8182 = vmatprep.subr.mxu0 0.0
      %8183 = vmatpush1.msra.mxu0 0.0
      %8184 = vmatprep.subr.mxu0 0.0
      %8185 = vmatpush1.msra.mxu0 0.0
      %8186 = vmatprep.subr.mxu0 0.0
      %8187 = vmatpush1.msra.mxu0 0.0
      %8188 = vmatprep.subr.mxu0 0.0
      %8189 = vmatpush1.msra.mxu0 0.0
      %8190 = vmatprep.subr.mxu0 0.0
      %8191 = vmatpush1.msra.mxu0 0.0
      %8192 = vmatprep.subr.mxu0 0.0
      %8193 = vmatpush1.msra.mxu0 0.0
      %8194 = vmatprep.subr.mxu0 0.0
      %8195 = vmatpush1.msra.mxu0 0.0
      %8196 = vmatprep.subr.mxu0 0.0
      %8197 = vmatpush1.msra.mxu0 0.0
      %8198 = vmatprep.subr.mxu0 0.0
      %8199 = vmatpush1.msra.mxu0 0.0
      %8200 = vmatprep.subr.mxu0 0.0
      %8201 = vmatpush1.msra.mxu0 0.0
      %8202 = vmatprep.subr.mxu0 0.0
      %8203 = vmatpush1.msra.mxu0 0.0
      %8204 = vmatprep.subr.mxu0 0.0
      %8205 = vmatpush1.msra.mxu0 0.0
      %8206 = vmatprep.subr.mxu0 0.0
      %8207 = vmatpush1.msra.mxu0 0.0
      %8208 = vmatprep.subr.mxu0 0.0
      %8209 = vmatpush1.msra.mxu0 0.0
      %8210 = vmatprep.subr.mxu0 0.0
      %8211 = vmatpush1.msra.mxu0 0.0
      %8212 = vmatprep.subr.mxu0 0.0
      %8213 = vmatpush1.msra.mxu0 0.0
      %8214 = vmatprep.subr.mxu0 0.0
      %8215 = vmatpush1.msra.mxu0 0.0
      %8216 = vmatprep.subr.mxu0 0.0
      %8217 = vmatpush1.msra.mxu0 0.0
      %8218 = vmatprep.subr.mxu0 0.0
      %8219 = vmatpush1.msra.mxu0 0.0
      %8220 = vmatprep.subr.mxu0 0.0
      %8221 = vmatpush1.msra.mxu0 0.0
      %8222 = vmatprep.subr.mxu0 0.0
      %8223 = vmatpush1.msra.mxu0 0.0
      %8224 = vmatprep.subr.mxu0 0.0
      %8225 = vmatpush1.msra.mxu0 0.0
      %8226 = vmatprep.subr.mxu0 0.0
      %8227 = vmatpush1.msra.mxu0 0.0
      %8228 = vmatprep.subr.mxu0 0.0
      %8229 = vmatpush1.msra.mxu0 0.0
      %8230 = vmatprep.subr.mxu0 0.0
      %8231 = vmatpush1.msra.mxu0 0.0
      %8232 = vmatprep.subr.mxu0 0.0
      %8233 = vmatpush1.msra.mxu0 0.0
      %8234 = vmatprep.mubr.f32.mxu0 0.0
      %v8235 = vand.u32 %v8081, 4294901760
      %8236 = vmatmul.mubr.f32.gmra.mrb[0].mxu0 %v8235
      %v8237 = vpop.f32.mrb[0].mxu0
      %v8238 = vadd.f32 %v8157, %v8237
      %v8239 = vpop.f32.mrb[0].mxu0
      %8240 = vdwg.mxu0
      %8241 = vmatprep.subr.mxu0 0.0
      %v8242 = vand.u32 %v1164, 4294901760
      %v8243 = vsub.f32 %v1164, %v8242
      %8244 = vmatpush1.msra.mxu0 %v8243
      %8245 = vmatprep.subr.mxu0 0.0
      %v8246 = vand.u32 %v1165, 4294901760
      %v8247 = vsub.f32 %v1165, %v8246
      %8248 = vmatpush1.msra.mxu0 %v8247
      %8249 = vmatprep.subr.mxu0 0.0
      %8250 = vmatpush1.msra.mxu0 0.0
      %8251 = vmatprep.subr.mxu0 0.0
      %8252 = vmatpush1.msra.mxu0 0.0
      %8253 = vmatprep.subr.mxu0 0.0
      %8254 = vmatpush1.msra.mxu0 0.0
      %8255 = vmatprep.subr.mxu0 0.0
      %8256 = vmatpush1.msra.mxu0 0.0
      %8257 = vmatprep.subr.mxu0 0.0
      %8258 = vmatpush1.msra.mxu0 0.0
      %8259 = vmatprep.subr.mxu0 0.0
      %8260 = vmatpush1.msra.mxu0 0.0
      %8261 = vmatprep.subr.mxu0 0.0
      %8262 = vmatpush1.msra.mxu0 0.0
      %8263 = vmatprep.subr.mxu0 0.0
      %8264 = vmatpush1.msra.mxu0 0.0
      %8265 = vmatprep.subr.mxu0 0.0
      %8266 = vmatpush1.msra.mxu0 0.0
      %8267 = vmatprep.subr.mxu0 0.0
      %8268 = vmatpush1.msra.mxu0 0.0
      %8269 = vmatprep.subr.mxu0 0.0
      %8270 = vmatpush1.msra.mxu0 0.0
      %8271 = vmatprep.subr.mxu0 0.0
      %8272 = vmatpush1.msra.mxu0 0.0
      %8273 = vmatprep.subr.mxu0 0.0
      %8274 = vmatpush1.msra.mxu0 0.0
      %8275 = vmatprep.subr.mxu0 0.0
      %8276 = vmatpush1.msra.mxu0 0.0
      %8277 = vmatprep.subr.mxu0 0.0
      %8278 = vmatpush1.msra.mxu0 0.0
      %8279 = vmatprep.subr.mxu0 0.0
      %8280 = vmatpush1.msra.mxu0 0.0
      %8281 = vmatprep.subr.mxu0 0.0
      %8282 = vmatpush1.msra.mxu0 0.0
      %8283 = vmatprep.subr.mxu0 0.0
      %8284 = vmatpush1.msra.mxu0 0.0
      %8285 = vmatprep.subr.mxu0 0.0
      %8286 = vmatpush1.msra.mxu0 0.0
      %8287 = vmatprep.subr.mxu0 0.0
      %8288 = vmatpush1.msra.mxu0 0.0
      %8289 = vmatprep.subr.mxu0 0.0
      %8290 = vmatpush1.msra.mxu0 0.0
      %8291 = vmatprep.subr.mxu0 0.0
      %8292 = vmatpush1.msra.mxu0 0.0
      %8293 = vmatprep.subr.mxu0 0.0
      %8294 = vmatpush1.msra.mxu0 0.0
      %8295 = vmatprep.subr.mxu0 0.0
      %8296 = vmatpush1.msra.mxu0 0.0
      %8297 = vmatprep.subr.mxu0 0.0
      %8298 = vmatpush1.msra.mxu0 0.0
      %8299 = vmatprep.subr.mxu0 0.0
      %8300 = vmatpush1.msra.mxu0 0.0
      %8301 = vmatprep.subr.mxu0 0.0
      %8302 = vmatpush1.msra.mxu0 0.0
      %8303 = vmatprep.subr.mxu0 0.0
      %8304 = vmatpush1.msra.mxu0 0.0
      %8305 = vmatprep.subr.mxu0 0.0
      %8306 = vmatpush1.msra.mxu0 0.0
      %8307 = vmatprep.subr.mxu0 0.0
      %8308 = vmatpush1.msra.mxu0 0.0
      %8309 = vmatprep.mubr.f32.mxu0 0.0
      %v8310 = vand.u32 %v8081, 4294901760
      %v8311 = vsub.f32 %v8081, %v8310
      %8312 = vmatmul.mubr.f32.gmra.mrb[0].mxu0 %v8311
      %v8313 = vpop.f32.mrb[0].mxu0
      %v8314 = vadd.f32 %v8238, %v8313
      %v8315 = vpop.f32.mrb[0].mxu0
      %8316 = vdwg.mxu0
      %8317 = vmatprep.subr.mxu0 0.0
      %v8318 = vand.u32 %v1164, 4294901760
      %8319 = vmatpush1.msra.mxu0 %v8318
      %8320 = vmatprep.subr.mxu0 0.0
      %v8321 = vand.u32 %v1165, 4294901760
      %8322 = vmatpush1.msra.mxu0 %v8321
      %8323 = vmatprep.subr.mxu0 0.0
      %8324 = vmatpush1.msra.mxu0 0.0
      %8325 = vmatprep.subr.mxu0 0.0
      %8326 = vmatpush1.msra.mxu0 0.0
      %8327 = vmatprep.subr.mxu0 0.0
      %8328 = vmatpush1.msra.mxu0 0.0
      %8329 = vmatprep.subr.mxu0 0.0
      %8330 = vmatpush1.msra.mxu0 0.0
      %8331 = vmatprep.subr.mxu0 0.0
      %8332 = vmatpush1.msra.mxu0 0.0
      %8333 = vmatprep.subr.mxu0 0.0
      %8334 = vmatpush1.msra.mxu0 0.0
      %8335 = vmatprep.subr.mxu0 0.0
      %8336 = vmatpush1.msra.mxu0 0.0
      %8337 = vmatprep.subr.mxu0 0.0
      %8338 = vmatpush1.msra.mxu0 0.0
      %8339 = vmatprep.subr.mxu0 0.0
      %8340 = vmatpush1.msra.mxu0 0.0
      %8341 = vmatprep.subr.mxu0 0.0
      %8342 = vmatpush1.msra.mxu0 0.0
      %8343 = vmatprep.subr.mxu0 0.0
      %8344 = vmatpush1.msra.mxu0 0.0
      %8345 = vmatprep.subr.mxu0 0.0
      %8346 = vmatpush1.msra.mxu0 0.0
      %8347 = vmatprep.subr.mxu0 0.0
      %8348 = vmatpush1.msra.mxu0 0.0
      %8349 = vmatprep.subr.mxu0 0.0
      %8350 = vmatpush1.msra.mxu0 0.0
      %8351 = vmatprep.subr.mxu0 0.0
      %8352 = vmatpush1.msra.mxu0 0.0
      %8353 = vmatprep.subr.mxu0 0.0
      %8354 = vmatpush1.msra.mxu0 0.0
      %8355 = vmatprep.subr.mxu0 0.0
      %8356 = vmatpush1.msra.mxu0 0.0
      %8357 = vmatprep.subr.mxu0 0.0
      %8358 = vmatpush1.msra.mxu0 0.0
      %8359 = vmatprep.subr.mxu0 0.0
      %8360 = vmatpush1.msra.mxu0 0.0
      %8361 = vmatprep.subr.mxu0 0.0
      %8362 = vmatpush1.msra.mxu0 0.0
      %8363 = vmatprep.subr.mxu0 0.0
      %8364 = vmatpush1.msra.mxu0 0.0
      %8365 = vmatprep.subr.mxu0 0.0
      %8366 = vmatpush1.msra.mxu0 0.0
      %8367 = vmatprep.subr.mxu0 0.0
      %8368 = vmatpush1.msra.mxu0 0.0
      %8369 = vmatprep.subr.mxu0 0.0
      %8370 = vmatpush1.msra.mxu0 0.0
      %8371 = vmatprep.subr.mxu0 0.0
      %8372 = vmatpush1.msra.mxu0 0.0
      %8373 = vmatprep.subr.mxu0 0.0
      %8374 = vmatpush1.msra.mxu0 0.0
      %8375 = vmatprep.subr.mxu0 0.0
      %8376 = vmatpush1.msra.mxu0 0.0
      %8377 = vmatprep.subr.mxu0 0.0
      %8378 = vmatpush1.msra.mxu0 0.0
      %8379 = vmatprep.subr.mxu0 0.0
      %8380 = vmatpush1.msra.mxu0 0.0
      %8381 = vmatprep.subr.mxu0 0.0
      %8382 = vmatpush1.msra.mxu0 0.0
      %8383 = vmatprep.mubr.f32.mxu0 0.0
      %v8384 = vand.u32 %v8081, 4294901760
      %v8385 = vsub.f32 %v8081, %v8384
      %v8386 = vand.u32 %v8385, 4294901760
      %8387 = vmatmul.mubr.f32.gmra.mrb[0].mxu0 %v8386
      %v8388 = vpop.f32.mrb[0].mxu0
      %v8389 = vadd.f32 %v8314, %v8388
      %v8390 = vpop.f32.mrb[0].mxu0
      %8391 = vdwg.mxu0
      %8392 = vmatprep.subr.mxu0 0.0
      %v8393 = vand.u32 %v1164, 4294901760
      %v8394 = vsub.f32 %v1164, %v8393
      %v8395 = vand.u32 %v8394, 4294901760
      %8396 = vmatpush1.msra.mxu0 %v8395
      %8397 = vmatprep.subr.mxu0 0.0
      %v8398 = vand.u32 %v1165, 4294901760
      %v8399 = vsub.f32 %v1165, %v8398
      %v8400 = vand.u32 %v8399, 4294901760
      %8401 = vmatpush1.msra.mxu0 %v8400
      %8402 = vmatprep.subr.mxu0 0.0
      %8403 = vmatpush1.msra.mxu0 0.0
      %8404 = vmatprep.subr.mxu0 0.0
      %8405 = vmatpush1.msra.mxu0 0.0
      %8406 = vmatprep.subr.mxu0 0.0
      %8407 = vmatpush1.msra.mxu0 0.0
      %8408 = vmatprep.subr.mxu0 0.0
      %8409 = vmatpush1.msra.mxu0 0.0
      %8410 = vmatprep.subr.mxu0 0.0
      %8411 = vmatpush1.msra.mxu0 0.0
      %8412 = vmatprep.subr.mxu0 0.0
      %8413 = vmatpush1.msra.mxu0 0.0
      %8414 = vmatprep.subr.mxu0 0.0
      %8415 = vmatpush1.msra.mxu0 0.0
      %8416 = vmatprep.subr.mxu0 0.0
      %8417 = vmatpush1.msra.mxu0 0.0
      %8418 = vmatprep.subr.mxu0 0.0
      %8419 = vmatpush1.msra.mxu0 0.0
      %8420 = vmatprep.subr.mxu0 0.0
      %8421 = vmatpush1.msra.mxu0 0.0
      %8422 = vmatprep.subr.mxu0 0.0
      %8423 = vmatpush1.msra.mxu0 0.0
      %8424 = vmatprep.subr.mxu0 0.0
      %8425 = vmatpush1.msra.mxu0 0.0
      %8426 = vmatprep.subr.mxu0 0.0
      %8427 = vmatpush1.msra.mxu0 0.0
      %8428 = vmatprep.subr.mxu0 0.0
      %8429 = vmatpush1.msra.mxu0 0.0
      %8430 = vmatprep.subr.mxu0 0.0
      %8431 = vmatpush1.msra.mxu0 0.0
      %8432 = vmatprep.subr.mxu0 0.0
      %8433 = vmatpush1.msra.mxu0 0.0
      %8434 = vmatprep.subr.mxu0 0.0
      %8435 = vmatpush1.msra.mxu0 0.0
      %8436 = vmatprep.subr.mxu0 0.0
      %8437 = vmatpush1.msra.mxu0 0.0
      %8438 = vmatprep.subr.mxu0 0.0
      %8439 = vmatpush1.msra.mxu0 0.0
      %8440 = vmatprep.subr.mxu0 0.0
      %8441 = vmatpush1.msra.mxu0 0.0
      %8442 = vmatprep.subr.mxu0 0.0
      %8443 = vmatpush1.msra.mxu0 0.0
      %8444 = vmatprep.subr.mxu0 0.0
      %8445 = vmatpush1.msra.mxu0 0.0
      %8446 = vmatprep.subr.mxu0 0.0
      %8447 = vmatpush1.msra.mxu0 0.0
      %8448 = vmatprep.subr.mxu0 0.0
      %8449 = vmatpush1.msra.mxu0 0.0
      %8450 = vmatprep.subr.mxu0 0.0
      %8451 = vmatpush1.msra.mxu0 0.0
      %8452 = vmatprep.subr.mxu0 0.0
      %8453 = vmatpush1.msra.mxu0 0.0
      %8454 = vmatprep.subr.mxu0 0.0
      %8455 = vmatpush1.msra.mxu0 0.0
      %8456 = vmatprep.subr.mxu0 0.0
      %8457 = vmatpush1.msra.mxu0 0.0
      %8458 = vmatprep.subr.mxu0 0.0
      %8459 = vmatpush1.msra.mxu0 0.0
      %8460 = vmatprep.subr.mxu0 0.0
      %8461 = vmatpush1.msra.mxu0 0.0
      %8462 = vmatprep.mubr.f32.mxu0 0.0
      %v8463 = vand.u32 %v8081, 4294901760
      %8464 = vmatmul.mubr.f32.gmra.mrb[0].mxu0 %v8463
      %v8465 = vpop.f32.mrb[0].mxu0
      %v8466 = vadd.f32 %v8389, %v8465
      %v8467 = vpop.f32.mrb[0].mxu0
      %8468 = vdwg.mxu0
      %8469 = vmatprep.subr.mxu0 0.0
      %v8470 = vand.u32 %v1164, 4294901760
      %8471 = vmatpush1.msra.mxu0 %v8470
      %8472 = vmatprep.subr.mxu0 0.0
      %v8473 = vand.u32 %v1165, 4294901760
      %8474 = vmatpush1.msra.mxu0 %v8473
      %8475 = vmatprep.subr.mxu0 0.0
      %8476 = vmatpush1.msra.mxu0 0.0
      %8477 = vmatprep.subr.mxu0 0.0
      %8478 = vmatpush1.msra.mxu0 0.0
      %8479 = vmatprep.subr.mxu0 0.0
      %8480 = vmatpush1.msra.mxu0 0.0
      %8481 = vmatprep.subr.mxu0 0.0
      %8482 = vmatpush1.msra.mxu0 0.0
      %8483 = vmatprep.subr.mxu0 0.0
      %8484 = vmatpush1.msra.mxu0 0.0
      %8485 = vmatprep.subr.mxu0 0.0
      %8486 = vmatpush1.msra.mxu0 0.0
      %8487 = vmatprep.subr.mxu0 0.0
      %8488 = vmatpush1.msra.mxu0 0.0
      %8489 = vmatprep.subr.mxu0 0.0
      %8490 = vmatpush1.msra.mxu0 0.0
      %8491 = vmatprep.subr.mxu0 0.0
      %8492 = vmatpush1.msra.mxu0 0.0
      %8493 = vmatprep.subr.mxu0 0.0
      %8494 = vmatpush1.msra.mxu0 0.0
      %8495 = vmatprep.subr.mxu0 0.0
      %8496 = vmatpush1.msra.mxu0 0.0
      %8497 = vmatprep.subr.mxu0 0.0
      %8498 = vmatpush1.msra.mxu0 0.0
      %8499 = vmatprep.subr.mxu0 0.0
      %8500 = vmatpush1.msra.mxu0 0.0
      %8501 = vmatprep.subr.mxu0 0.0
      %8502 = vmatpush1.msra.mxu0 0.0
      %8503 = vmatprep.subr.mxu0 0.0
      %8504 = vmatpush1.msra.mxu0 0.0
      %8505 = vmatprep.subr.mxu0 0.0
      %8506 = vmatpush1.msra.mxu0 0.0
      %8507 = vmatprep.subr.mxu0 0.0
      %8508 = vmatpush1.msra.mxu0 0.0
      %8509 = vmatprep.subr.mxu0 0.0
      %8510 = vmatpush1.msra.mxu0 0.0
      %8511 = vmatprep.subr.mxu0 0.0
      %8512 = vmatpush1.msra.mxu0 0.0
      %8513 = vmatprep.subr.mxu0 0.0
      %8514 = vmatpush1.msra.mxu0 0.0
      %8515 = vmatprep.subr.mxu0 0.0
      %8516 = vmatpush1.msra.mxu0 0.0
      %8517 = vmatprep.subr.mxu0 0.0
      %8518 = vmatpush1.msra.mxu0 0.0
      %8519 = vmatprep.subr.mxu0 0.0
      %8520 = vmatpush1.msra.mxu0 0.0
      %8521 = vmatprep.subr.mxu0 0.0
      %8522 = vmatpush1.msra.mxu0 0.0
      %8523 = vmatprep.subr.mxu0 0.0
      %8524 = vmatpush1.msra.mxu0 0.0
      %8525 = vmatprep.subr.mxu0 0.0
      %8526 = vmatpush1.msra.mxu0 0.0
      %8527 = vmatprep.subr.mxu0 0.0
      %8528 = vmatpush1.msra.mxu0 0.0
      %8529 = vmatprep.subr.mxu0 0.0
      %8530 = vmatpush1.msra.mxu0 0.0
      %8531 = vmatprep.subr.mxu0 0.0
      %8532 = vmatpush1.msra.mxu0 0.0
      %8533 = vmatprep.subr.mxu0 0.0
      %8534 = vmatpush1.msra.mxu0 0.0
      %8535 = vmatprep.mubr.f32.mxu0 0.0
      %v8536 = vand.u32 %v8081, 4294901760
      %8537 = vmatmul.mubr.f32.gmra.mrb[0].mxu0 %v8536
      %v8538 = vpop.f32.mrb[0].mxu0
      %v8539 = vadd.f32 %v8466, %v8538
      %v8540 = vpop.f32.mrb[0].mxu0
      %8541 = vdwg.mxu0
      %v8542 = vmul.f32 %v8539, 0.25
      %v8544 = vrot.slane %v7620, 1
      %v8546 = vadd.f32 %v7620, %v8544
      %v8547 = vrot.slane %v7620, 2
      %v8549 = vadd.f32 %v8546, %v8547
      %8551 = vrot.lane.b32.xlu0 %v8549, 127
      %v8552 = vpop.permute.xlu0 %8551
      %v8554 = vadd.f32 %v8549, %v8552
      %8555 = vrot.lane.b32.xlu0 %v8549, 126
      %v8556 = vpop.permute.xlu0 %8555
      %v8558 = vadd.f32 %v8554, %v8556
      %v8559 = vmul.f32 %v8558, 0.11111111
      %v8561 = vrot.slane %v8542, 1
      %v8563 = vadd.f32 %v8542, %v8561
      %v8564 = vrot.slane %v8542, 2
      %v8566 = vadd.f32 %v8563, %v8564
      %8568 = vrot.lane.b32.xlu0 %v8566, 127
      %v8569 = vpop.permute.xlu0 %8568
      %v8571 = vadd.f32 %v8566, %v8569
      %8572 = vrot.lane.b32.xlu0 %v8566, 126
      %v8573 = vpop.permute.xlu0 %8572
      %v8575 = vadd.f32 %v8571, %v8573
      %v8576 = vmul.f32 %v8575, 0.11111111
      %v8577 = vmul.f32 %v7620, %v7620
      %v8579 = vrot.slane %v8577, 1
      %v8581 = vadd.f32 %v8577, %v8579
      %v8582 = vrot.slane %v8577, 2
      %v8584 = vadd.f32 %v8581, %v8582
      %8586 = vrot.lane.b32.xlu0 %v8584, 127
      %v8587 = vpop.permute.xlu0 %8586
      %v8589 = vadd.f32 %v8584, %v8587
      %8590 = vrot.lane.b32.xlu0 %v8584, 126
      %v8591 = vpop.permute.xlu0 %8590
      %v8593 = vadd.f32 %v8589, %v8591
      %v8594 = vmul.f32 %v8593, 0.11111111
      %v8595 = vmul.f32 %v8542, %v8542
      %v8597 = vrot.slane %v8595, 1
      %v8599 = vadd.f32 %v8595, %v8597
      %v8600 = vrot.slane %v8595, 2
      %v8602 = vadd.f32 %v8599, %v8600
      %8604 = vrot.lane.b32.xlu0 %v8602, 127
      %v8605 = vpop.permute.xlu0 %8604
      %v8607 = vadd.f32 %v8602, %v8605
      %8608 = vrot.lane.b32.xlu0 %v8602, 126
      %v8609 = vpop.permute.xlu0 %8608
      %v8611 = vadd.f32 %v8607, %v8609
      %v8612 = vmul.f32 %v8611, 0.11111111
      %v8613 = vmul.f32 %v7620, %v8542
      %v8615 = vrot.slane %v8613, 1
      %v8617 = vadd.f32 %v8613, %v8615
      %v8618 = vrot.slane %v8613, 2
      %v8620 = vadd.f32 %v8617, %v8618
      %8622 = vrot.lane.b32.xlu0 %v8620, 127
      %v8623 = vpop.permute.xlu0 %8622
      %v8625 = vadd.f32 %v8620, %v8623
      %8626 = vrot.lane.b32.xlu0 %v8620, 126
      %v8627 = vpop.permute.xlu0 %8626
      %v8629 = vadd.f32 %v8625, %v8627
      %v8630 = vmul.f32 %v8629, 0.11111111
      %v8631 = vmul.f32 %v8559, %v8576
      %v8632 = vmul.f32 %v8559, %v8559
      %v8633 = vmul.f32 %v8576, %v8576
      %v8634 = vsub.f32 %v8594, %v8632
      %v8635 = vsub.f32 %v8612, %v8633
      %v8636 = vsub.f32 %v8630, %v8631
      %v8637 = vmul.f32 %v8636, 2.0
      %v8638 = vadd.f32 %v8637, 8.1e-07
      %v8639 = vadd.f32 %v8634, %v8635
      %v8640 = vadd.f32 %v8639, 8.1e-07
      %v8641 = vrcp.pop %v8640
      %v8642 = vmul.f32 %v8638, %v8641
      %vm8643 = vcmask 46080
      %v8644 = vsel %vm8643, %v8642, 0.0
      %8645 = vadd.xlane.f32.xlu0 %v8644
      %v8646 = vpop.xlane.xlu0 %8645
      %v8647 = vsel %vm218, %v8646, 0.0
      %v8648 = vrot.slane %v8647, 4
      %v8649 = vadd.f32 %v8647, %v8648
      %v8650 = vrot.slane %v8649, 2
      %v8651 = vadd.f32 %v8649, %v8650
      %v8652 = vrot.slane %v8651, 1
      %v8653 = vadd.f32 %v8651, %v8652
      %v8654 = vmul.f32 %v8653, 0.027777778
      %vm8655 = vcmask 64512
      %v8656 = vsel %vm8655, %v1122, 0
      %8658 = vmatprep.subr.mxu0 0.0
      %v8659 = vand.u32 %v7620, 4294901760
      %8660 = vmatpush1.msra.mxu0 %v8659
      %8661 = vmatprep.subr.mxu0 0.0
      %8662 = vmatpush1.msra.mxu0 0.0
      %8663 = vmatprep.subr.mxu0 0.0
      %8664 = vmatpush1.msra.mxu0 0.0
      %8665 = vmatprep.subr.mxu0 0.0
      %8666 = vmatpush1.msra.mxu0 0.0
      %8667 = vmatprep.subr.mxu0 0.0
      %8668 = vmatpush1.msra.mxu0 0.0
      %8669 = vmatprep.subr.mxu0 0.0
      %8670 = vmatpush1.msra.mxu0 0.0
      %8671 = vmatprep.subr.mxu0 0.0
      %8672 = vmatpush1.msra.mxu0 0.0
      %8673 = vmatprep.subr.mxu0 0.0
      %8674 = vmatpush1.msra.mxu0 0.0
      %8675 = vmatprep.subr.mxu0 0.0
      %8676 = vmatpush1.msra.mxu0 0.0
      %8677 = vmatprep.subr.mxu0 0.0
      %8678 = vmatpush1.msra.mxu0 0.0
      %8679 = vmatprep.subr.mxu0 0.0
      %8680 = vmatpush1.msra.mxu0 0.0
      %8681 = vmatprep.subr.mxu0 0.0
      %8682 = vmatpush1.msra.mxu0 0.0
      %8683 = vmatprep.subr.mxu0 0.0
      %8684 = vmatpush1.msra.mxu0 0.0
      %8685 = vmatprep.subr.mxu0 0.0
      %8686 = vmatpush1.msra.mxu0 0.0
      %8687 = vmatprep.subr.mxu0 0.0
      %8688 = vmatpush1.msra.mxu0 0.0
      %8689 = vmatprep.subr.mxu0 0.0
      %8690 = vmatpush1.msra.mxu0 0.0
      %8691 = vmatprep.subr.mxu0 0.0
      %8692 = vmatpush1.msra.mxu0 0.0
      %8693 = vmatprep.subr.mxu0 0.0
      %8694 = vmatpush1.msra.mxu0 0.0
      %8695 = vmatprep.subr.mxu0 0.0
      %8696 = vmatpush1.msra.mxu0 0.0
      %8697 = vmatprep.subr.mxu0 0.0
      %8698 = vmatpush1.msra.mxu0 0.0
      %8699 = vmatprep.subr.mxu0 0.0
      %8700 = vmatpush1.msra.mxu0 0.0
      %8701 = vmatprep.subr.mxu0 0.0
      %8702 = vmatpush1.msra.mxu0 0.0
      %8703 = vmatprep.subr.mxu0 0.0
      %8704 = vmatpush1.msra.mxu0 0.0
      %8705 = vmatprep.subr.mxu0 0.0
      %8706 = vmatpush1.msra.mxu0 0.0
      %8707 = vmatprep.subr.mxu0 0.0
      %8708 = vmatpush1.msra.mxu0 0.0
      %8709 = vmatprep.subr.mxu0 0.0
      %8710 = vmatpush1.msra.mxu0 0.0
      %8711 = vmatprep.subr.mxu0 0.0
      %8712 = vmatpush1.msra.mxu0 0.0
      %8713 = vmatprep.subr.mxu0 0.0
      %8714 = vmatpush1.msra.mxu0 0.0
      %8715 = vmatprep.subr.mxu0 0.0
      %8716 = vmatpush1.msra.mxu0 0.0
      %8717 = vmatprep.subr.mxu0 0.0
      %8718 = vmatpush1.msra.mxu0 0.0
      %8719 = vmatprep.subr.mxu0 0.0
      %8720 = vmatpush1.msra.mxu0 0.0
      %8721 = vmatprep.subr.mxu0 0.0
      %8722 = vmatpush1.msra.mxu0 0.0
      %8723 = vmatprep.mubr.f32.mxu0 0.0
      %v8724 = vand.u32 %v8656, 4294901760
      %v8725 = vsub.f32 %v8656, %v8724
      %v8726 = vand.u32 %v8725, 4294901760
      %v8727 = vsub.f32 %v8725, %v8726
      %v8728 = vand.u32 %v8727, 4294901760
      %8729 = vmatmul.mubr.f32.gmra.mrb[0].mxu0 %v8728
      %v8730 = vpop.f32.mrb[0].mxu0
      %v8731 = vadd.f32 0.0, %v8730
      %v8732 = vpop.f32.mrb[0].mxu0
      %8733 = vdwg.mxu0
      %8734 = vmatprep.subr.mxu0 0.0
      %v8735 = vand.u32 %v7620, 4294901760
      %v8736 = vsub.f32 %v7620, %v8735
      %v8737 = vand.u32 %v8736, 4294901760
      %v8738 = vsub.f32 %v8736, %v8737
      %v8739 = vand.u32 %v8738, 4294901760
      %8740 = vmatpush1.msra.mxu0 %v8739
      %8741 = vmatprep.subr.mxu0 0.0
      %8742 = vmatpush1.msra.mxu0 0.0
      %8743 = vmatprep.subr.mxu0 0.0
      %8744 = vmatpush1.msra.mxu0 0.0
      %8745 = vmatprep.subr.mxu0 0.0
      %8746 = vmatpush1.msra.mxu0 0.0
      %8747 = vmatprep.subr.mxu0 0.0
      %8748 = vmatpush1.msra.mxu0 0.0
      %8749 = vmatprep.subr.mxu0 0.0
      %8750 = vmatpush1.msra.mxu0 0.0
      %8751 = vmatprep.subr.mxu0 0.0
      %8752 = vmatpush1.msra.mxu0 0.0
      %8753 = vmatprep.subr.mxu0 0.0
      %8754 = vmatpush1.msra.mxu0 0.0
      %8755 = vmatprep.subr.mxu0 0.0
      %8756 = vmatpush1.msra.mxu0 0.0
      %8757 = vmatprep.subr.mxu0 0.0
      %8758 = vmatpush1.msra.mxu0 0.0
      %8759 = vmatprep.subr.mxu0 0.0
      %8760 = vmatpush1.msra.mxu0 0.0
      %8761 = vmatprep.subr.mxu0 0.0
      %8762 = vmatpush1.msra.mxu0 0.0
      %8763 = vmatprep.subr.mxu0 0.0
      %8764 = vmatpush1.msra.mxu0 0.0
      %8765 = vmatprep.subr.mxu0 0.0
      %8766 = vmatpush1.msra.mxu0 0.0
      %8767 = vmatprep.subr.mxu0 0.0
      %8768 = vmatpush1.msra.mxu0 0.0
      %8769 = vmatprep.subr.mxu0 0.0
      %8770 = vmatpush1.msra.mxu0 0.0
      %8771 = vmatprep.subr.mxu0 0.0
      %8772 = vmatpush1.msra.mxu0 0.0
      %8773 = vmatprep.subr.mxu0 0.0
      %8774 = vmatpush1.msra.mxu0 0.0
      %8775 = vmatprep.subr.mxu0 0.0
      %8776 = vmatpush1.msra.mxu0 0.0
      %8777 = vmatprep.subr.mxu0 0.0
      %8778 = vmatpush1.msra.mxu0 0.0
      %8779 = vmatprep.subr.mxu0 0.0
      %8780 = vmatpush1.msra.mxu0 0.0
      %8781 = vmatprep.subr.mxu0 0.0
      %8782 = vmatpush1.msra.mxu0 0.0
      %8783 = vmatprep.subr.mxu0 0.0
      %8784 = vmatpush1.msra.mxu0 0.0
      %8785 = vmatprep.subr.mxu0 0.0
      %8786 = vmatpush1.msra.mxu0 0.0
      %8787 = vmatprep.subr.mxu0 0.0
      %8788 = vmatpush1.msra.mxu0 0.0
      %8789 = vmatprep.subr.mxu0 0.0
      %8790 = vmatpush1.msra.mxu0 0.0
      %8791 = vmatprep.subr.mxu0 0.0
      %8792 = vmatpush1.msra.mxu0 0.0
      %8793 = vmatprep.subr.mxu0 0.0
      %8794 = vmatpush1.msra.mxu0 0.0
      %8795 = vmatprep.subr.mxu0 0.0
      %8796 = vmatpush1.msra.mxu0 0.0
      %8797 = vmatprep.subr.mxu0 0.0
      %8798 = vmatpush1.msra.mxu0 0.0
      %8799 = vmatprep.subr.mxu0 0.0
      %8800 = vmatpush1.msra.mxu0 0.0
      %8801 = vmatprep.subr.mxu0 0.0
      %8802 = vmatpush1.msra.mxu0 0.0
      %8803 = vmatprep.mubr.f32.mxu0 0.0
      %v8804 = vand.u32 %v8656, 4294901760
      %8805 = vmatmul.mubr.f32.gmra.mrb[0].mxu0 %v8804
      %v8806 = vpop.f32.mrb[0].mxu0
      %v8807 = vadd.f32 %v8731, %v8806
      %v8808 = vpop.f32.mrb[0].mxu0
      %8809 = vdwg.mxu0
      %8810 = vmatprep.subr.mxu0 0.0
      %v8811 = vand.u32 %v7620, 4294901760
      %v8812 = vsub.f32 %v7620, %v8811
      %8813 = vmatpush1.msra.mxu0 %v8812
      %8814 = vmatprep.subr.mxu0 0.0
      %8815 = vmatpush1.msra.mxu0 0.0
      %8816 = vmatprep.subr.mxu0 0.0
      %8817 = vmatpush1.msra.mxu0 0.0
      %8818 = vmatprep.subr.mxu0 0.0
      %8819 = vmatpush1.msra.mxu0 0.0
      %8820 = vmatprep.subr.mxu0 0.0
      %8821 = vmatpush1.msra.mxu0 0.0
      %8822 = vmatprep.subr.mxu0 0.0
      %8823 = vmatpush1.msra.mxu0 0.0
      %8824 = vmatprep.subr.mxu0 0.0
      %8825 = vmatpush1.msra.mxu0 0.0
      %8826 = vmatprep.subr.mxu0 0.0
      %8827 = vmatpush1.msra.mxu0 0.0
      %8828 = vmatprep.subr.mxu0 0.0
      %8829 = vmatpush1.msra.mxu0 0.0
      %8830 = vmatprep.subr.mxu0 0.0
      %8831 = vmatpush1.msra.mxu0 0.0
      %8832 = vmatprep.subr.mxu0 0.0
      %8833 = vmatpush1.msra.mxu0 0.0
      %8834 = vmatprep.subr.mxu0 0.0
      %8835 = vmatpush1.msra.mxu0 0.0
      %8836 = vmatprep.subr.mxu0 0.0
      %8837 = vmatpush1.msra.mxu0 0.0
      %8838 = vmatprep.subr.mxu0 0.0
      %8839 = vmatpush1.msra.mxu0 0.0
      %8840 = vmatprep.subr.mxu0 0.0
      %8841 = vmatpush1.msra.mxu0 0.0
      %8842 = vmatprep.subr.mxu0 0.0
      %8843 = vmatpush1.msra.mxu0 0.0
      %8844 = vmatprep.subr.mxu0 0.0
      %8845 = vmatpush1.msra.mxu0 0.0
      %8846 = vmatprep.subr.mxu0 0.0
      %8847 = vmatpush1.msra.mxu0 0.0
      %8848 = vmatprep.subr.mxu0 0.0
      %8849 = vmatpush1.msra.mxu0 0.0
      %8850 = vmatprep.subr.mxu0 0.0
      %8851 = vmatpush1.msra.mxu0 0.0
      %8852 = vmatprep.subr.mxu0 0.0
      %8853 = vmatpush1.msra.mxu0 0.0
      %8854 = vmatprep.subr.mxu0 0.0
      %8855 = vmatpush1.msra.mxu0 0.0
      %8856 = vmatprep.subr.mxu0 0.0
      %8857 = vmatpush1.msra.mxu0 0.0
      %8858 = vmatprep.subr.mxu0 0.0
      %8859 = vmatpush1.msra.mxu0 0.0
      %8860 = vmatprep.subr.mxu0 0.0
      %8861 = vmatpush1.msra.mxu0 0.0
      %8862 = vmatprep.subr.mxu0 0.0
      %8863 = vmatpush1.msra.mxu0 0.0
      %8864 = vmatprep.subr.mxu0 0.0
      %8865 = vmatpush1.msra.mxu0 0.0
      %8866 = vmatprep.subr.mxu0 0.0
      %8867 = vmatpush1.msra.mxu0 0.0
      %8868 = vmatprep.subr.mxu0 0.0
      %8869 = vmatpush1.msra.mxu0 0.0
      %8870 = vmatprep.subr.mxu0 0.0
      %8871 = vmatpush1.msra.mxu0 0.0
      %8872 = vmatprep.subr.mxu0 0.0
      %8873 = vmatpush1.msra.mxu0 0.0
      %8874 = vmatprep.subr.mxu0 0.0
      %8875 = vmatpush1.msra.mxu0 0.0
      %8876 = vmatprep.mubr.f32.mxu0 0.0
      %v8877 = vand.u32 %v8656, 4294901760
      %v8878 = vsub.f32 %v8656, %v8877
      %8879 = vmatmul.mubr.f32.gmra.mrb[0].mxu0 %v8878
      %v8880 = vpop.f32.mrb[0].mxu0
      %v8881 = vadd.f32 %v8807, %v8880
      %v8882 = vpop.f32.mrb[0].mxu0
      %8883 = vdwg.mxu0
      %8884 = vmatprep.subr.mxu0 0.0
      %v8885 = vand.u32 %v7620, 4294901760
      %8886 = vmatpush1.msra.mxu0 %v8885
      %8887 = vmatprep.subr.mxu0 0.0
      %8888 = vmatpush1.msra.mxu0 0.0
      %8889 = vmatprep.subr.mxu0 0.0
      %8890 = vmatpush1.msra.mxu0 0.0
      %8891 = vmatprep.subr.mxu0 0.0
      %8892 = vmatpush1.msra.mxu0 0.0
      %8893 = vmatprep.subr.mxu0 0.0
      %8894 = vmatpush1.msra.mxu0 0.0
      %8895 = vmatprep.subr.mxu0 0.0
      %8896 = vmatpush1.msra.mxu0 0.0
      %8897 = vmatprep.subr.mxu0 0.0
      %8898 = vmatpush1.msra.mxu0 0.0
      %8899 = vmatprep.subr.mxu0 0.0
      %8900 = vmatpush1.msra.mxu0 0.0
      %8901 = vmatprep.subr.mxu0 0.0
      %8902 = vmatpush1.msra.mxu0 0.0
      %8903 = vmatprep.subr.mxu0 0.0
      %8904 = vmatpush1.msra.mxu0 0.0
      %8905 = vmatprep.subr.mxu0 0.0
      %8906 = vmatpush1.msra.mxu0 0.0
      %8907 = vmatprep.subr.mxu0 0.0
      %8908 = vmatpush1.msra.mxu0 0.0
      %8909 = vmatprep.subr.mxu0 0.0
      %8910 = vmatpush1.msra.mxu0 0.0
      %8911 = vmatprep.subr.mxu0 0.0
      %8912 = vmatpush1.msra.mxu0 0.0
      %8913 = vmatprep.subr.mxu0 0.0
      %8914 = vmatpush1.msra.mxu0 0.0
      %8915 = vmatprep.subr.mxu0 0.0
      %8916 = vmatpush1.msra.mxu0 0.0
      %8917 = vmatprep.subr.mxu0 0.0
      %8918 = vmatpush1.msra.mxu0 0.0
      %8919 = vmatprep.subr.mxu0 0.0
      %8920 = vmatpush1.msra.mxu0 0.0
      %8921 = vmatprep.subr.mxu0 0.0
      %8922 = vmatpush1.msra.mxu0 0.0
      %8923 = vmatprep.subr.mxu0 0.0
      %8924 = vmatpush1.msra.mxu0 0.0
      %8925 = vmatprep.subr.mxu0 0.0
      %8926 = vmatpush1.msra.mxu0 0.0
      %8927 = vmatprep.subr.mxu0 0.0
      %8928 = vmatpush1.msra.mxu0 0.0
      %8929 = vmatprep.subr.mxu0 0.0
      %8930 = vmatpush1.msra.mxu0 0.0
      %8931 = vmatprep.subr.mxu0 0.0
      %8932 = vmatpush1.msra.mxu0 0.0
      %8933 = vmatprep.subr.mxu0 0.0
      %8934 = vmatpush1.msra.mxu0 0.0
      %8935 = vmatprep.subr.mxu0 0.0
      %8936 = vmatpush1.msra.mxu0 0.0
      %8937 = vmatprep.subr.mxu0 0.0
      %8938 = vmatpush1.msra.mxu0 0.0
      %8939 = vmatprep.subr.mxu0 0.0
      %8940 = vmatpush1.msra.mxu0 0.0
      %8941 = vmatprep.subr.mxu0 0.0
      %8942 = vmatpush1.msra.mxu0 0.0
      %8943 = vmatprep.subr.mxu0 0.0
      %8944 = vmatpush1.msra.mxu0 0.0
      %8945 = vmatprep.subr.mxu0 0.0
      %8946 = vmatpush1.msra.mxu0 0.0
      %8947 = vmatprep.subr.mxu0 0.0
      %8948 = vmatpush1.msra.mxu0 0.0
      %8949 = vmatprep.mubr.f32.mxu0 0.0
      %v8950 = vand.u32 %v8656, 4294901760
      %v8951 = vsub.f32 %v8656, %v8950
      %v8952 = vand.u32 %v8951, 4294901760
      %8953 = vmatmul.mubr.f32.gmra.mrb[0].mxu0 %v8952
      %v8954 = vpop.f32.mrb[0].mxu0
      %v8955 = vadd.f32 %v8881, %v8954
      %v8956 = vpop.f32.mrb[0].mxu0
      %8957 = vdwg.mxu0
      %8958 = vmatprep.subr.mxu0 0.0
      %v8959 = vand.u32 %v7620, 4294901760
      %v8960 = vsub.f32 %v7620, %v8959
      %v8961 = vand.u32 %v8960, 4294901760
      %8962 = vmatpush1.msra.mxu0 %v8961
      %8963 = vmatprep.subr.mxu0 0.0
      %8964 = vmatpush1.msra.mxu0 0.0
      %8965 = vmatprep.subr.mxu0 0.0
      %8966 = vmatpush1.msra.mxu0 0.0
      %8967 = vmatprep.subr.mxu0 0.0
      %8968 = vmatpush1.msra.mxu0 0.0
      %8969 = vmatprep.subr.mxu0 0.0
      %8970 = vmatpush1.msra.mxu0 0.0
      %8971 = vmatprep.subr.mxu0 0.0
      %8972 = vmatpush1.msra.mxu0 0.0
      %8973 = vmatprep.subr.mxu0 0.0
      %8974 = vmatpush1.msra.mxu0 0.0
      %8975 = vmatprep.subr.mxu0 0.0
      %8976 = vmatpush1.msra.mxu0 0.0
      %8977 = vmatprep.subr.mxu0 0.0
      %8978 = vmatpush1.msra.mxu0 0.0
      %8979 = vmatprep.subr.mxu0 0.0
      %8980 = vmatpush1.msra.mxu0 0.0
      %8981 = vmatprep.subr.mxu0 0.0
      %8982 = vmatpush1.msra.mxu0 0.0
      %8983 = vmatprep.subr.mxu0 0.0
      %8984 = vmatpush1.msra.mxu0 0.0
      %8985 = vmatprep.subr.mxu0 0.0
      %8986 = vmatpush1.msra.mxu0 0.0
      %8987 = vmatprep.subr.mxu0 0.0
      %8988 = vmatpush1.msra.mxu0 0.0
      %8989 = vmatprep.subr.mxu0 0.0
      %8990 = vmatpush1.msra.mxu0 0.0
      %8991 = vmatprep.subr.mxu0 0.0
      %8992 = vmatpush1.msra.mxu0 0.0
      %8993 = vmatprep.subr.mxu0 0.0
      %8994 = vmatpush1.msra.mxu0 0.0
      %8995 = vmatprep.subr.mxu0 0.0
      %8996 = vmatpush1.msra.mxu0 0.0
      %8997 = vmatprep.subr.mxu0 0.0
      %8998 = vmatpush1.msra.mxu0 0.0
      %8999 = vmatprep.subr.mxu0 0.0
      %9000 = vmatpush1.msra.mxu0 0.0
      %9001 = vmatprep.subr.mxu0 0.0
      %9002 = vmatpush1.msra.mxu0 0.0
      %9003 = vmatprep.subr.mxu0 0.0
      %9004 = vmatpush1.msra.mxu0 0.0
      %9005 = vmatprep.subr.mxu0 0.0
      %9006 = vmatpush1.msra.mxu0 0.0
      %9007 = vmatprep.subr.mxu0 0.0
      %9008 = vmatpush1.msra.mxu0 0.0
      %9009 = vmatprep.subr.mxu0 0.0
      %9010 = vmatpush1.msra.mxu0 0.0
      %9011 = vmatprep.subr.mxu0 0.0
      %9012 = vmatpush1.msra.mxu0 0.0
      %9013 = vmatprep.subr.mxu0 0.0
      %9014 = vmatpush1.msra.mxu0 0.0
      %9015 = vmatprep.subr.mxu0 0.0
      %9016 = vmatpush1.msra.mxu0 0.0
      %9017 = vmatprep.subr.mxu0 0.0
      %9018 = vmatpush1.msra.mxu0 0.0
      %9019 = vmatprep.subr.mxu0 0.0
      %9020 = vmatpush1.msra.mxu0 0.0
      %9021 = vmatprep.subr.mxu0 0.0
      %9022 = vmatpush1.msra.mxu0 0.0
      %9023 = vmatprep.subr.mxu0 0.0
      %9024 = vmatpush1.msra.mxu0 0.0
      %9025 = vmatprep.mubr.f32.mxu0 0.0
      %v9026 = vand.u32 %v8656, 4294901760
      %9027 = vmatmul.mubr.f32.gmra.mrb[0].mxu0 %v9026
      %v9028 = vpop.f32.mrb[0].mxu0
      %v9029 = vadd.f32 %v8955, %v9028
      %v9030 = vpop.f32.mrb[0].mxu0
      %9031 = vdwg.mxu0
      %9032 = vmatprep.subr.mxu0 0.0
      %v9033 = vand.u32 %v7620, 4294901760
      %9034 = vmatpush1.msra.mxu0 %v9033
      %9035 = vmatprep.subr.mxu0 0.0
      %9036 = vmatpush1.msra.mxu0 0.0
      %9037 = vmatprep.subr.mxu0 0.0
      %9038 = vmatpush1.msra.mxu0 0.0
      %9039 = vmatprep.subr.mxu0 0.0
      %9040 = vmatpush1.msra.mxu0 0.0
      %9041 = vmatprep.subr.mxu0 0.0
      %9042 = vmatpush1.msra.mxu0 0.0
      %9043 = vmatprep.subr.mxu0 0.0
      %9044 = vmatpush1.msra.mxu0 0.0
      %9045 = vmatprep.subr.mxu0 0.0
      %9046 = vmatpush1.msra.mxu0 0.0
      %9047 = vmatprep.subr.mxu0 0.0
      %9048 = vmatpush1.msra.mxu0 0.0
      %9049 = vmatprep.subr.mxu0 0.0
      %9050 = vmatpush1.msra.mxu0 0.0
      %9051 = vmatprep.subr.mxu0 0.0
      %9052 = vmatpush1.msra.mxu0 0.0
      %9053 = vmatprep.subr.mxu0 0.0
      %9054 = vmatpush1.msra.mxu0 0.0
      %9055 = vmatprep.subr.mxu0 0.0
      %9056 = vmatpush1.msra.mxu0 0.0
      %9057 = vmatprep.subr.mxu0 0.0
      %9058 = vmatpush1.msra.mxu0 0.0
      %9059 = vmatprep.subr.mxu0 0.0
      %9060 = vmatpush1.msra.mxu0 0.0
      %9061 = vmatprep.subr.mxu0 0.0
      %9062 = vmatpush1.msra.mxu0 0.0
      %9063 = vmatprep.subr.mxu0 0.0
      %9064 = vmatpush1.msra.mxu0 0.0
      %9065 = vmatprep.subr.mxu0 0.0
      %9066 = vmatpush1.msra.mxu0 0.0
      %9067 = vmatprep.subr.mxu0 0.0
      %9068 = vmatpush1.msra.mxu0 0.0
      %9069 = vmatprep.subr.mxu0 0.0
      %9070 = vmatpush1.msra.mxu0 0.0
      %9071 = vmatprep.subr.mxu0 0.0
      %9072 = vmatpush1.msra.mxu0 0.0
      %9073 = vmatprep.subr.mxu0 0.0
      %9074 = vmatpush1.msra.mxu0 0.0
      %9075 = vmatprep.subr.mxu0 0.0
      %9076 = vmatpush1.msra.mxu0 0.0
      %9077 = vmatprep.subr.mxu0 0.0
      %9078 = vmatpush1.msra.mxu0 0.0
      %9079 = vmatprep.subr.mxu0 0.0
      %9080 = vmatpush1.msra.mxu0 0.0
      %9081 = vmatprep.subr.mxu0 0.0
      %9082 = vmatpush1.msra.mxu0 0.0
      %9083 = vmatprep.subr.mxu0 0.0
      %9084 = vmatpush1.msra.mxu0 0.0
      %9085 = vmatprep.subr.mxu0 0.0
      %9086 = vmatpush1.msra.mxu0 0.0
      %9087 = vmatprep.subr.mxu0 0.0
      %9088 = vmatpush1.msra.mxu0 0.0
      %9089 = vmatprep.subr.mxu0 0.0
      %9090 = vmatpush1.msra.mxu0 0.0
      %9091 = vmatprep.subr.mxu0 0.0
      %9092 = vmatpush1.msra.mxu0 0.0
      %9093 = vmatprep.subr.mxu0 0.0
      %9094 = vmatpush1.msra.mxu0 0.0
      %9095 = vmatprep.subr.mxu0 0.0
      %9096 = vmatpush1.msra.mxu0 0.0
      %9097 = vmatprep.mubr.f32.mxu0 0.0
      %v9098 = vand.u32 %v8656, 4294901760
      %9099 = vmatmul.mubr.f32.gmra.mrb[0].mxu0 %v9098
      %v9100 = vpop.f32.mrb[0].mxu0
      %v9101 = vadd.f32 %v9029, %v9100
      %v9102 = vpop.f32.mrb[0].mxu0
      %9103 = vdwg.mxu0
      %v9105 = vsel %vm8655, %v9101, 0
      %9107 = vmatprep.subr.mxu0 0.0
      %v9108 = vand.u32 %v1164, 4294901760
      %9109 = vmatpush1.msra.mxu0 %v9108
      %9110 = vmatprep.subr.mxu0 0.0
      %9111 = vmatpush1.msra.mxu0 0.0
      %9112 = vmatprep.subr.mxu0 0.0
      %9113 = vmatpush1.msra.mxu0 0.0
      %9114 = vmatprep.subr.mxu0 0.0
      %9115 = vmatpush1.msra.mxu0 0.0
      %9116 = vmatprep.subr.mxu0 0.0
      %9117 = vmatpush1.msra.mxu0 0.0
      %9118 = vmatprep.subr.mxu0 0.0
      %9119 = vmatpush1.msra.mxu0 0.0
      %9120 = vmatprep.subr.mxu0 0.0
      %9121 = vmatpush1.msra.mxu0 0.0
      %9122 = vmatprep.subr.mxu0 0.0
      %9123 = vmatpush1.msra.mxu0 0.0
      %9124 = vmatprep.subr.mxu0 0.0
      %9125 = vmatpush1.msra.mxu0 0.0
      %9126 = vmatprep.subr.mxu0 0.0
      %9127 = vmatpush1.msra.mxu0 0.0
      %9128 = vmatprep.subr.mxu0 0.0
      %9129 = vmatpush1.msra.mxu0 0.0
      %9130 = vmatprep.subr.mxu0 0.0
      %9131 = vmatpush1.msra.mxu0 0.0
      %9132 = vmatprep.subr.mxu0 0.0
      %9133 = vmatpush1.msra.mxu0 0.0
      %9134 = vmatprep.subr.mxu0 0.0
      %9135 = vmatpush1.msra.mxu0 0.0
      %9136 = vmatprep.subr.mxu0 0.0
      %9137 = vmatpush1.msra.mxu0 0.0
      %9138 = vmatprep.subr.mxu0 0.0
      %9139 = vmatpush1.msra.mxu0 0.0
      %9140 = vmatprep.subr.mxu0 0.0
      %9141 = vmatpush1.msra.mxu0 0.0
      %9142 = vmatprep.subr.mxu0 0.0
      %9143 = vmatpush1.msra.mxu0 0.0
      %9144 = vmatprep.subr.mxu0 0.0
      %9145 = vmatpush1.msra.mxu0 0.0
      %9146 = vmatprep.subr.mxu0 0.0
      %9147 = vmatpush1.msra.mxu0 0.0
      %9148 = vmatprep.subr.mxu0 0.0
      %9149 = vmatpush1.msra.mxu0 0.0
      %9150 = vmatprep.subr.mxu0 0.0
      %9151 = vmatpush1.msra.mxu0 0.0
      %9152 = vmatprep.subr.mxu0 0.0
      %9153 = vmatpush1.msra.mxu0 0.0
      %9154 = vmatprep.subr.mxu0 0.0
      %9155 = vmatpush1.msra.mxu0 0.0
      %9156 = vmatprep.subr.mxu0 0.0
      %9157 = vmatpush1.msra.mxu0 0.0
      %9158 = vmatprep.subr.mxu0 0.0
      %9159 = vmatpush1.msra.mxu0 0.0
      %9160 = vmatprep.subr.mxu0 0.0
      %9161 = vmatpush1.msra.mxu0 0.0
      %9162 = vmatprep.subr.mxu0 0.0
      %9163 = vmatpush1.msra.mxu0 0.0
      %9164 = vmatprep.subr.mxu0 0.0
      %9165 = vmatpush1.msra.mxu0 0.0
      %9166 = vmatprep.subr.mxu0 0.0
      %9167 = vmatpush1.msra.mxu0 0.0
      %9168 = vmatprep.subr.mxu0 0.0
      %9169 = vmatpush1.msra.mxu0 0.0
      %9170 = vmatprep.subr.mxu0 0.0
      %9171 = vmatpush1.msra.mxu0 0.0
      %9172 = vmatprep.mubr.f32.mxu0 0.0
      %v9173 = vand.u32 %v9105, 4294901760
      %v9174 = vsub.f32 %v9105, %v9173
      %v9175 = vand.u32 %v9174, 4294901760
      %v9176 = vsub.f32 %v9174, %v9175
      %v9177 = vand.u32 %v9176, 4294901760
      %9178 = vmatmul.mubr.f32.gmra.mrb[0].mxu0 %v9177
      %v9179 = vpop.f32.mrb[0].mxu0
      %v9180 = vadd.f32 0.0, %v9179
      %v9181 = vpop.f32.mrb[0].mxu0
      %9182 = vdwg.mxu0
      %9183 = vmatprep.subr.mxu0 0.0
      %v9184 = vand.u32 %v1164, 4294901760
      %v9185 = vsub.f32 %v1164, %v9184
      %v9186 = vand.u32 %v9185, 4294901760
      %v9187 = vsub.f32 %v9185, %v9186
      %v9188 = vand.u32 %v9187, 4294901760
      %9189 = vmatpush1.msra.mxu0 %v9188
      %9190 = vmatprep.subr.mxu0 0.0
      %9191 = vmatpush1.msra.mxu0 0.0
      %9192 = vmatprep.subr.mxu0 0.0
      %9193 = vmatpush1.msra.mxu0 0.0
      %9194 = vmatprep.subr.mxu0 0.0
      %9195 = vmatpush1.msra.mxu0 0.0
      %9196 = vmatprep.subr.mxu0 0.0
      %9197 = vmatpush1.msra.mxu0 0.0
      %9198 = vmatprep.subr.mxu0 0.0
      %9199 = vmatpush1.msra.mxu0 0.0
      %9200 = vmatprep.subr.mxu0 0.0
      %9201 = vmatpush1.msra.mxu0 0.0
      %9202 = vmatprep.subr.mxu0 0.0
      %9203 = vmatpush1.msra.mxu0 0.0
      %9204 = vmatprep.subr.mxu0 0.0
      %9205 = vmatpush1.msra.mxu0 0.0
      %9206 = vmatprep.subr.mxu0 0.0
      %9207 = vmatpush1.msra.mxu0 0.0
      %9208 = vmatprep.subr.mxu0 0.0
      %9209 = vmatpush1.msra.mxu0 0.0
      %9210 = vmatprep.subr.mxu0 0.0
      %9211 = vmatpush1.msra.mxu0 0.0
      %9212 = vmatprep.subr.mxu0 0.0
      %9213 = vmatpush1.msra.mxu0 0.0
      %9214 = vmatprep.subr.mxu0 0.0
      %9215 = vmatpush1.msra.mxu0 0.0
      %9216 = vmatprep.subr.mxu0 0.0
      %9217 = vmatpush1.msra.mxu0 0.0
      %9218 = vmatprep.subr.mxu0 0.0
      %9219 = vmatpush1.msra.mxu0 0.0
      %9220 = vmatprep.subr.mxu0 0.0
      %9221 = vmatpush1.msra.mxu0 0.0
      %9222 = vmatprep.subr.mxu0 0.0
      %9223 = vmatpush1.msra.mxu0 0.0
      %9224 = vmatprep.subr.mxu0 0.0
      %9225 = vmatpush1.msra.mxu0 0.0
      %9226 = vmatprep.subr.mxu0 0.0
      %9227 = vmatpush1.msra.mxu0 0.0
      %9228 = vmatprep.subr.mxu0 0.0
      %9229 = vmatpush1.msra.mxu0 0.0
      %9230 = vmatprep.subr.mxu0 0.0
      %9231 = vmatpush1.msra.mxu0 0.0
      %9232 = vmatprep.subr.mxu0 0.0
      %9233 = vmatpush1.msra.mxu0 0.0
      %9234 = vmatprep.subr.mxu0 0.0
      %9235 = vmatpush1.msra.mxu0 0.0
      %9236 = vmatprep.subr.mxu0 0.0
      %9237 = vmatpush1.msra.mxu0 0.0
      %9238 = vmatprep.subr.mxu0 0.0
      %9239 = vmatpush1.msra.mxu0 0.0
      %9240 = vmatprep.subr.mxu0 0.0
      %9241 = vmatpush1.msra.mxu0 0.0
      %9242 = vmatprep.subr.mxu0 0.0
      %9243 = vmatpush1.msra.mxu0 0.0
      %9244 = vmatprep.subr.mxu0 0.0
      %9245 = vmatpush1.msra.mxu0 0.0
      %9246 = vmatprep.subr.mxu0 0.0
      %9247 = vmatpush1.msra.mxu0 0.0
      %9248 = vmatprep.subr.mxu0 0.0
      %9249 = vmatpush1.msra.mxu0 0.0
      %9250 = vmatprep.subr.mxu0 0.0
      %9251 = vmatpush1.msra.mxu0 0.0
      %9252 = vmatprep.mubr.f32.mxu0 0.0
      %v9253 = vand.u32 %v9105, 4294901760
      %9254 = vmatmul.mubr.f32.gmra.mrb[0].mxu0 %v9253
      %v9255 = vpop.f32.mrb[0].mxu0
      %v9256 = vadd.f32 %v9180, %v9255
      %v9257 = vpop.f32.mrb[0].mxu0
      %9258 = vdwg.mxu0
      %9259 = vmatprep.subr.mxu0 0.0
      %v9260 = vand.u32 %v1164, 4294901760
      %v9261 = vsub.f32 %v1164, %v9260
      %9262 = vmatpush1.msra.mxu0 %v9261
      %9263 = vmatprep.subr.mxu0 0.0
      %9264 = vmatpush1.msra.mxu0 0.0
      %9265 = vmatprep.subr.mxu0 0.0
      %9266 = vmatpush1.msra.mxu0 0.0
      %9267 = vmatprep.subr.mxu0 0.0
      %9268 = vmatpush1.msra.mxu0 0.0
      %9269 = vmatprep.subr.mxu0 0.0
      %9270 = vmatpush1.msra.mxu0 0.0
      %9271 = vmatprep.subr.mxu0 0.0
      %9272 = vmatpush1.msra.mxu0 0.0
      %9273 = vmatprep.subr.mxu0 0.0
      %9274 = vmatpush1.msra.mxu0 0.0
      %9275 = vmatprep.subr.mxu0 0.0
      %9276 = vmatpush1.msra.mxu0 0.0
      %9277 = vmatprep.subr.mxu0 0.0
      %9278 = vmatpush1.msra.mxu0 0.0
      %9279 = vmatprep.subr.mxu0 0.0
      %9280 = vmatpush1.msra.mxu0 0.0
      %9281 = vmatprep.subr.mxu0 0.0
      %9282 = vmatpush1.msra.mxu0 0.0
      %9283 = vmatprep.subr.mxu0 0.0
      %9284 = vmatpush1.msra.mxu0 0.0
      %9285 = vmatprep.subr.mxu0 0.0
      %9286 = vmatpush1.msra.mxu0 0.0
      %9287 = vmatprep.subr.mxu0 0.0
      %9288 = vmatpush1.msra.mxu0 0.0
      %9289 = vmatprep.subr.mxu0 0.0
      %9290 = vmatpush1.msra.mxu0 0.0
      %9291 = vmatprep.subr.mxu0 0.0
      %9292 = vmatpush1.msra.mxu0 0.0
      %9293 = vmatprep.subr.mxu0 0.0
      %9294 = vmatpush1.msra.mxu0 0.0
      %9295 = vmatprep.subr.mxu0 0.0
      %9296 = vmatpush1.msra.mxu0 0.0
      %9297 = vmatprep.subr.mxu0 0.0
      %9298 = vmatpush1.msra.mxu0 0.0
      %9299 = vmatprep.subr.mxu0 0.0
      %9300 = vmatpush1.msra.mxu0 0.0
      %9301 = vmatprep.subr.mxu0 0.0
      %9302 = vmatpush1.msra.mxu0 0.0
      %9303 = vmatprep.subr.mxu0 0.0
      %9304 = vmatpush1.msra.mxu0 0.0
      %9305 = vmatprep.subr.mxu0 0.0
      %9306 = vmatpush1.msra.mxu0 0.0
      %9307 = vmatprep.subr.mxu0 0.0
      %9308 = vmatpush1.msra.mxu0 0.0
      %9309 = vmatprep.subr.mxu0 0.0
      %9310 = vmatpush1.msra.mxu0 0.0
      %9311 = vmatprep.subr.mxu0 0.0
      %9312 = vmatpush1.msra.mxu0 0.0
      %9313 = vmatprep.subr.mxu0 0.0
      %9314 = vmatpush1.msra.mxu0 0.0
      %9315 = vmatprep.subr.mxu0 0.0
      %9316 = vmatpush1.msra.mxu0 0.0
      %9317 = vmatprep.subr.mxu0 0.0
      %9318 = vmatpush1.msra.mxu0 0.0
      %9319 = vmatprep.subr.mxu0 0.0
      %9320 = vmatpush1.msra.mxu0 0.0
      %9321 = vmatprep.subr.mxu0 0.0
      %9322 = vmatpush1.msra.mxu0 0.0
      %9323 = vmatprep.subr.mxu0 0.0
      %9324 = vmatpush1.msra.mxu0 0.0
      %9325 = vmatprep.mubr.f32.mxu0 0.0
      %v9326 = vand.u32 %v9105, 4294901760
      %v9327 = vsub.f32 %v9105, %v9326
      %9328 = vmatmul.mubr.f32.gmra.mrb[0].mxu0 %v9327
      %v9329 = vpop.f32.mrb[0].mxu0
      %v9330 = vadd.f32 %v9256, %v9329
      %v9331 = vpop.f32.mrb[0].mxu0
      %9332 = vdwg.mxu0
      %9333 = vmatprep.subr.mxu0 0.0
      %v9334 = vand.u32 %v1164, 4294901760
      %9335 = vmatpush1.msra.mxu0 %v9334
      %9336 = vmatprep.subr.mxu0 0.0
      %9337 = vmatpush1.msra.mxu0 0.0
      %9338 = vmatprep.subr.mxu0 0.0
      %9339 = vmatpush1.msra.mxu0 0.0
      %9340 = vmatprep.subr.mxu0 0.0
      %9341 = vmatpush1.msra.mxu0 0.0
      %9342 = vmatprep.subr.mxu0 0.0
      %9343 = vmatpush1.msra.mxu0 0.0
      %9344 = vmatprep.subr.mxu0 0.0
      %9345 = vmatpush1.msra.mxu0 0.0
      %9346 = vmatprep.subr.mxu0 0.0
      %9347 = vmatpush1.msra.mxu0 0.0
      %9348 = vmatprep.subr.mxu0 0.0
      %9349 = vmatpush1.msra.mxu0 0.0
      %9350 = vmatprep.subr.mxu0 0.0
      %9351 = vmatpush1.msra.mxu0 0.0
      %9352 = vmatprep.subr.mxu0 0.0
      %9353 = vmatpush1.msra.mxu0 0.0
      %9354 = vmatprep.subr.mxu0 0.0
      %9355 = vmatpush1.msra.mxu0 0.0
      %9356 = vmatprep.subr.mxu0 0.0
      %9357 = vmatpush1.msra.mxu0 0.0
      %9358 = vmatprep.subr.mxu0 0.0
      %9359 = vmatpush1.msra.mxu0 0.0
      %9360 = vmatprep.subr.mxu0 0.0
      %9361 = vmatpush1.msra.mxu0 0.0
      %9362 = vmatprep.subr.mxu0 0.0
      %9363 = vmatpush1.msra.mxu0 0.0
      %9364 = vmatprep.subr.mxu0 0.0
      %9365 = vmatpush1.msra.mxu0 0.0
      %9366 = vmatprep.subr.mxu0 0.0
      %9367 = vmatpush1.msra.mxu0 0.0
      %9368 = vmatprep.subr.mxu0 0.0
      %9369 = vmatpush1.msra.mxu0 0.0
      %9370 = vmatprep.subr.mxu0 0.0
      %9371 = vmatpush1.msra.mxu0 0.0
      %9372 = vmatprep.subr.mxu0 0.0
      %9373 = vmatpush1.msra.mxu0 0.0
      %9374 = vmatprep.subr.mxu0 0.0
      %9375 = vmatpush1.msra.mxu0 0.0
      %9376 = vmatprep.subr.mxu0 0.0
      %9377 = vmatpush1.msra.mxu0 0.0
      %9378 = vmatprep.subr.mxu0 0.0
      %9379 = vmatpush1.msra.mxu0 0.0
      %9380 = vmatprep.subr.mxu0 0.0
      %9381 = vmatpush1.msra.mxu0 0.0
      %9382 = vmatprep.subr.mxu0 0.0
      %9383 = vmatpush1.msra.mxu0 0.0
      %9384 = vmatprep.subr.mxu0 0.0
      %9385 = vmatpush1.msra.mxu0 0.0
      %9386 = vmatprep.subr.mxu0 0.0
      %9387 = vmatpush1.msra.mxu0 0.0
      %9388 = vmatprep.subr.mxu0 0.0
      %9389 = vmatpush1.msra.mxu0 0.0
      %9390 = vmatprep.subr.mxu0 0.0
      %9391 = vmatpush1.msra.mxu0 0.0
      %9392 = vmatprep.subr.mxu0 0.0
      %9393 = vmatpush1.msra.mxu0 0.0
      %9394 = vmatprep.subr.mxu0 0.0
      %9395 = vmatpush1.msra.mxu0 0.0
      %9396 = vmatprep.subr.mxu0 0.0
      %9397 = vmatpush1.msra.mxu0 0.0
      %9398 = vmatprep.mubr.f32.mxu0 0.0
      %v9399 = vand.u32 %v9105, 4294901760
      %v9400 = vsub.f32 %v9105, %v9399
      %v9401 = vand.u32 %v9400, 4294901760
      %9402 = vmatmul.mubr.f32.gmra.mrb[0].mxu0 %v9401
      %v9403 = vpop.f32.mrb[0].mxu0
      %v9404 = vadd.f32 %v9330, %v9403
      %v9405 = vpop.f32.mrb[0].mxu0
      %9406 = vdwg.mxu0
      %9407 = vmatprep.subr.mxu0 0.0
      %v9408 = vand.u32 %v1164, 4294901760
      %v9409 = vsub.f32 %v1164, %v9408
      %v9410 = vand.u32 %v9409, 4294901760
      %9411 = vmatpush1.msra.mxu0 %v9410
      %9412 = vmatprep.subr.mxu0 0.0
      %9413 = vmatpush1.msra.mxu0 0.0
      %9414 = vmatprep.subr.mxu0 0.0
      %9415 = vmatpush1.msra.mxu0 0.0
      %9416 = vmatprep.subr.mxu0 0.0
      %9417 = vmatpush1.msra.mxu0 0.0
      %9418 = vmatprep.subr.mxu0 0.0
      %9419 = vmatpush1.msra.mxu0 0.0
      %9420 = vmatprep.subr.mxu0 0.0
      %9421 = vmatpush1.msra.mxu0 0.0
      %9422 = vmatprep.subr.mxu0 0.0
      %9423 = vmatpush1.msra.mxu0 0.0
      %9424 = vmatprep.subr.mxu0 0.0
      %9425 = vmatpush1.msra.mxu0 0.0
      %9426 = vmatprep.subr.mxu0 0.0
      %9427 = vmatpush1.msra.mxu0 0.0
      %9428 = vmatprep.subr.mxu0 0.0
      %9429 = vmatpush1.msra.mxu0 0.0
      %9430 = vmatprep.subr.mxu0 0.0
      %9431 = vmatpush1.msra.mxu0 0.0
      %9432 = vmatprep.subr.mxu0 0.0
      %9433 = vmatpush1.msra.mxu0 0.0
      %9434 = vmatprep.subr.mxu0 0.0
      %9435 = vmatpush1.msra.mxu0 0.0
      %9436 = vmatprep.subr.mxu0 0.0
      %9437 = vmatpush1.msra.mxu0 0.0
      %9438 = vmatprep.subr.mxu0 0.0
      %9439 = vmatpush1.msra.mxu0 0.0
      %9440 = vmatprep.subr.mxu0 0.0
      %9441 = vmatpush1.msra.mxu0 0.0
      %9442 = vmatprep.subr.mxu0 0.0
      %9443 = vmatpush1.msra.mxu0 0.0
      %9444 = vmatprep.subr.mxu0 0.0
      %9445 = vmatpush1.msra.mxu0 0.0
      %9446 = vmatprep.subr.mxu0 0.0
      %9447 = vmatpush1.msra.mxu0 0.0
      %9448 = vmatprep.subr.mxu0 0.0
      %9449 = vmatpush1.msra.mxu0 0.0
      %9450 = vmatprep.subr.mxu0 0.0
      %9451 = vmatpush1.msra.mxu0 0.0
      %9452 = vmatprep.subr.mxu0 0.0
      %9453 = vmatpush1.msra.mxu0 0.0
      %9454 = vmatprep.subr.mxu0 0.0
      %9455 = vmatpush1.msra.mxu0 0.0
      %9456 = vmatprep.subr.mxu0 0.0
      %9457 = vmatpush1.msra.mxu0 0.0
      %9458 = vmatprep.subr.mxu0 0.0
      %9459 = vmatpush1.msra.mxu0 0.0
      %9460 = vmatprep.subr.mxu0 0.0
      %9461 = vmatpush1.msra.mxu0 0.0
      %9462 = vmatprep.subr.mxu0 0.0
      %9463 = vmatpush1.msra.mxu0 0.0
      %9464 = vmatprep.subr.mxu0 0.0
      %9465 = vmatpush1.msra.mxu0 0.0
      %9466 = vmatprep.subr.mxu0 0.0
      %9467 = vmatpush1.msra.mxu0 0.0
      %9468 = vmatprep.subr.mxu0 0.0
      %9469 = vmatpush1.msra.mxu0 0.0
      %9470 = vmatprep.subr.mxu0 0.0
      %9471 = vmatpush1.msra.mxu0 0.0
      %9472 = vmatprep.subr.mxu0 0.0
      %9473 = vmatpush1.msra.mxu0 0.0
      %9474 = vmatprep.mubr.f32.mxu0 0.0
      %v9475 = vand.u32 %v9105, 4294901760
      %9476 = vmatmul.mubr.f32.gmra.mrb[0].mxu0 %v9475
      %v9477 = vpop.f32.mrb[0].mxu0
      %v9478 = vadd.f32 %v9404, %v9477
      %v9479 = vpop.f32.mrb[0].mxu0
      %9480 = vdwg.mxu0
      %9481 = vmatprep.subr.mxu0 0.0
      %v9482 = vand.u32 %v1164, 4294901760
      %9483 = vmatpush1.msra.mxu0 %v9482
      %9484 = vmatprep.subr.mxu0 0.0
      %9485 = vmatpush1.msra.mxu0 0.0
      %9486 = vmatprep.subr.mxu0 0.0
      %9487 = vmatpush1.msra.mxu0 0.0
      %9488 = vmatprep.subr.mxu0 0.0
      %9489 = vmatpush1.msra.mxu0 0.0
      %9490 = vmatprep.subr.mxu0 0.0
      %9491 = vmatpush1.msra.mxu0 0.0
      %9492 = vmatprep.subr.mxu0 0.0
      %9493 = vmatpush1.msra.mxu0 0.0
      %9494 = vmatprep.subr.mxu0 0.0
      %9495 = vmatpush1.msra.mxu0 0.0
      %9496 = vmatprep.subr.mxu0 0.0
      %9497 = vmatpush1.msra.mxu0 0.0
      %9498 = vmatprep.subr.mxu0 0.0
      %9499 = vmatpush1.msra.mxu0 0.0
      %9500 = vmatprep.subr.mxu0 0.0
      %9501 = vmatpush1.msra.mxu0 0.0
      %9502 = vmatprep.subr.mxu0 0.0
      %9503 = vmatpush1.msra.mxu0 0.0
      %9504 = vmatprep.subr.mxu0 0.0
      %9505 = vmatpush1.msra.mxu0 0.0
      %9506 = vmatprep.subr.mxu0 0.0
      %9507 = vmatpush1.msra.mxu0 0.0
      %9508 = vmatprep.subr.mxu0 0.0
      %9509 = vmatpush1.msra.mxu0 0.0
      %9510 = vmatprep.subr.mxu0 0.0
      %9511 = vmatpush1.msra.mxu0 0.0
      %9512 = vmatprep.subr.mxu0 0.0
      %9513 = vmatpush1.msra.mxu0 0.0
      %9514 = vmatprep.subr.mxu0 0.0
      %9515 = vmatpush1.msra.mxu0 0.0
      %9516 = vmatprep.subr.mxu0 0.0
      %9517 = vmatpush1.msra.mxu0 0.0
      %9518 = vmatprep.subr.mxu0 0.0
      %9519 = vmatpush1.msra.mxu0 0.0
      %9520 = vmatprep.subr.mxu0 0.0
      %9521 = vmatpush1.msra.mxu0 0.0
      %9522 = vmatprep.subr.mxu0 0.0
      %9523 = vmatpush1.msra.mxu0 0.0
      %9524 = vmatprep.subr.mxu0 0.0
      %9525 = vmatpush1.msra.mxu0 0.0
      %9526 = vmatprep.subr.mxu0 0.0
      %9527 = vmatpush1.msra.mxu0 0.0
      %9528 = vmatprep.subr.mxu0 0.0
      %9529 = vmatpush1.msra.mxu0 0.0
      %9530 = vmatprep.subr.mxu0 0.0
      %9531 = vmatpush1.msra.mxu0 0.0
      %9532 = vmatprep.subr.mxu0 0.0
      %9533 = vmatpush1.msra.mxu0 0.0
      %9534 = vmatprep.subr.mxu0 0.0
      %9535 = vmatpush1.msra.mxu0 0.0
      %9536 = vmatprep.subr.mxu0 0.0
      %9537 = vmatpush1.msra.mxu0 0.0
      %9538 = vmatprep.subr.mxu0 0.0
      %9539 = vmatpush1.msra.mxu0 0.0
      %9540 = vmatprep.subr.mxu0 0.0
      %9541 = vmatpush1.msra.mxu0 0.0
      %9542 = vmatprep.subr.mxu0 0.0
      %9543 = vmatpush1.msra.mxu0 0.0
      %9544 = vmatprep.subr.mxu0 0.0
      %9545 = vmatpush1.msra.mxu0 0.0
      %9546 = vmatprep.mubr.f32.mxu0 0.0
      %v9547 = vand.u32 %v9105, 4294901760
      %9548 = vmatmul.mubr.f32.gmra.mrb[0].mxu0 %v9547
      %v9549 = vpop.f32.mrb[0].mxu0
      %v9550 = vadd.f32 %v9478, %v9549
      %v9551 = vpop.f32.mrb[0].mxu0
      %9552 = vdwg.mxu0
      %v9553 = vmul.f32 %v9550, 0.25
      %9554 = vmatprep.subr.mxu0 0.0
      %v9555 = vand.u32 %v8542, 4294901760
      %9556 = vmatpush1.msra.mxu0 %v9555
      %9557 = vmatprep.subr.mxu0 0.0
      %9558 = vmatpush1.msra.mxu0 0.0
      %9559 = vmatprep.subr.mxu0 0.0
      %9560 = vmatpush1.msra.mxu0 0.0
      %9561 = vmatprep.subr.mxu0 0.0
      %9562 = vmatpush1.msra.mxu0 0.0
      %9563 = vmatprep.subr.mxu0 0.0
      %9564 = vmatpush1.msra.mxu0 0.0
      %9565 = vmatprep.subr.mxu0 0.0
      %9566 = vmatpush1.msra.mxu0 0.0
      %9567 = vmatprep.subr.mxu0 0.0
      %9568 = vmatpush1.msra.mxu0 0.0
      %9569 = vmatprep.subr.mxu0 0.0
      %9570 = vmatpush1.msra.mxu0 0.0
      %9571 = vmatprep.subr.mxu0 0.0
      %9572 = vmatpush1.msra.mxu0 0.0
      %9573 = vmatprep.subr.mxu0 0.0
      %9574 = vmatpush1.msra.mxu0 0.0
      %9575 = vmatprep.subr.mxu0 0.0
      %9576 = vmatpush1.msra.mxu0 0.0
      %9577 = vmatprep.subr.mxu0 0.0
      %9578 = vmatpush1.msra.mxu0 0.0
      %9579 = vmatprep.subr.mxu0 0.0
      %9580 = vmatpush1.msra.mxu0 0.0
      %9581 = vmatprep.subr.mxu0 0.0
      %9582 = vmatpush1.msra.mxu0 0.0
      %9583 = vmatprep.subr.mxu0 0.0
      %9584 = vmatpush1.msra.mxu0 0.0
      %9585 = vmatprep.subr.mxu0 0.0
      %9586 = vmatpush1.msra.mxu0 0.0
      %9587 = vmatprep.subr.mxu0 0.0
      %9588 = vmatpush1.msra.mxu0 0.0
      %9589 = vmatprep.subr.mxu0 0.0
      %9590 = vmatpush1.msra.mxu0 0.0
      %9591 = vmatprep.subr.mxu0 0.0
      %9592 = vmatpush1.msra.mxu0 0.0
      %9593 = vmatprep.subr.mxu0 0.0
      %9594 = vmatpush1.msra.mxu0 0.0
      %9595 = vmatprep.subr.mxu0 0.0
      %9596 = vmatpush1.msra.mxu0 0.0
      %9597 = vmatprep.subr.mxu0 0.0
      %9598 = vmatpush1.msra.mxu0 0.0
      %9599 = vmatprep.subr.mxu0 0.0
      %9600 = vmatpush1.msra.mxu0 0.0
      %9601 = vmatprep.subr.mxu0 0.0
      %9602 = vmatpush1.msra.mxu0 0.0
      %9603 = vmatprep.subr.mxu0 0.0
      %9604 = vmatpush1.msra.mxu0 0.0
      %9605 = vmatprep.subr.mxu0 0.0
      %9606 = vmatpush1.msra.mxu0 0.0
      %9607 = vmatprep.subr.mxu0 0.0
      %9608 = vmatpush1.msra.mxu0 0.0
      %9609 = vmatprep.subr.mxu0 0.0
      %9610 = vmatpush1.msra.mxu0 0.0
      %9611 = vmatprep.subr.mxu0 0.0
      %9612 = vmatpush1.msra.mxu0 0.0
      %9613 = vmatprep.subr.mxu0 0.0
      %9614 = vmatpush1.msra.mxu0 0.0
      %9615 = vmatprep.subr.mxu0 0.0
      %9616 = vmatpush1.msra.mxu0 0.0
      %9617 = vmatprep.subr.mxu0 0.0
      %9618 = vmatpush1.msra.mxu0 0.0
      %9619 = vmatprep.mubr.f32.mxu0 0.0
      %v9620 = vand.u32 %v8656, 4294901760
      %v9621 = vsub.f32 %v8656, %v9620
      %v9622 = vand.u32 %v9621, 4294901760
      %v9623 = vsub.f32 %v9621, %v9622
      %v9624 = vand.u32 %v9623, 4294901760
      %9625 = vmatmul.mubr.f32.gmra.mrb[0].mxu0 %v9624
      %v9626 = vpop.f32.mrb[0].mxu0
      %v9627 = vadd.f32 0.0, %v9626
      %v9628 = vpop.f32.mrb[0].mxu0
      %9629 = vdwg.mxu0
      %9630 = vmatprep.subr.mxu0 0.0
      %v9631 = vand.u32 %v8542, 4294901760
      %v9632 = vsub.f32 %v8542, %v9631
      %v9633 = vand.u32 %v9632, 4294901760
      %v9634 = vsub.f32 %v9632, %v9633
      %v9635 = vand.u32 %v9634, 4294901760
      %9636 = vmatpush1.msra.mxu0 %v9635
      %9637 = vmatprep.subr.mxu0 0.0
      %9638 = vmatpush1.msra.mxu0 0.0
      %9639 = vmatprep.subr.mxu0 0.0
      %9640 = vmatpush1.msra.mxu0 0.0
      %9641 = vmatprep.subr.mxu0 0.0
      %9642 = vmatpush1.msra.mxu0 0.0
      %9643 = vmatprep.subr.mxu0 0.0
      %9644 = vmatpush1.msra.mxu0 0.0
      %9645 = vmatprep.subr.mxu0 0.0
      %9646 = vmatpush1.msra.mxu0 0.0
      %9647 = vmatprep.subr.mxu0 0.0
      %9648 = vmatpush1.msra.mxu0 0.0
      %9649 = vmatprep.subr.mxu0 0.0
      %9650 = vmatpush1.msra.mxu0 0.0
      %9651 = vmatprep.subr.mxu0 0.0
      %9652 = vmatpush1.msra.mxu0 0.0
      %9653 = vmatprep.subr.mxu0 0.0
      %9654 = vmatpush1.msra.mxu0 0.0
      %9655 = vmatprep.subr.mxu0 0.0
      %9656 = vmatpush1.msra.mxu0 0.0
      %9657 = vmatprep.subr.mxu0 0.0
      %9658 = vmatpush1.msra.mxu0 0.0
      %9659 = vmatprep.subr.mxu0 0.0
      %9660 = vmatpush1.msra.mxu0 0.0
      %9661 = vmatprep.subr.mxu0 0.0
      %9662 = vmatpush1.msra.mxu0 0.0
      %9663 = vmatprep.subr.mxu0 0.0
      %9664 = vmatpush1.msra.mxu0 0.0
      %9665 = vmatprep.subr.mxu0 0.0
      %9666 = vmatpush1.msra.mxu0 0.0
      %9667 = vmatprep.subr.mxu0 0.0
      %9668 = vmatpush1.msra.mxu0 0.0
      %9669 = vmatprep.subr.mxu0 0.0
      %9670 = vmatpush1.msra.mxu0 0.0
      %9671 = vmatprep.subr.mxu0 0.0
      %9672 = vmatpush1.msra.mxu0 0.0
      %9673 = vmatprep.subr.mxu0 0.0
      %9674 = vmatpush1.msra.mxu0 0.0
      %9675 = vmatprep.subr.mxu0 0.0
      %9676 = vmatpush1.msra.mxu0 0.0
      %9677 = vmatprep.subr.mxu0 0.0
      %9678 = vmatpush1.msra.mxu0 0.0
      %9679 = vmatprep.subr.mxu0 0.0
      %9680 = vmatpush1.msra.mxu0 0.0
      %9681 = vmatprep.subr.mxu0 0.0
      %9682 = vmatpush1.msra.mxu0 0.0
      %9683 = vmatprep.subr.mxu0 0.0
      %9684 = vmatpush1.msra.mxu0 0.0
      %9685 = vmatprep.subr.mxu0 0.0
      %9686 = vmatpush1.msra.mxu0 0.0
      %9687 = vmatprep.subr.mxu0 0.0
      %9688 = vmatpush1.msra.mxu0 0.0
      %9689 = vmatprep.subr.mxu0 0.0
      %9690 = vmatpush1.msra.mxu0 0.0
      %9691 = vmatprep.subr.mxu0 0.0
      %9692 = vmatpush1.msra.mxu0 0.0
      %9693 = vmatprep.subr.mxu0 0.0
      %9694 = vmatpush1.msra.mxu0 0.0
      %9695 = vmatprep.subr.mxu0 0.0
      %9696 = vmatpush1.msra.mxu0 0.0
      %9697 = vmatprep.subr.mxu0 0.0
      %9698 = vmatpush1.msra.mxu0 0.0
      %9699 = vmatprep.mubr.f32.mxu0 0.0
      %v9700 = vand.u32 %v8656, 4294901760
      %9701 = vmatmul.mubr.f32.gmra.mrb[0].mxu0 %v9700
      %v9702 = vpop.f32.mrb[0].mxu0
      %v9703 = vadd.f32 %v9627, %v9702
      %v9704 = vpop.f32.mrb[0].mxu0
      %9705 = vdwg.mxu0
      %9706 = vmatprep.subr.mxu0 0.0
      %v9707 = vand.u32 %v8542, 4294901760
      %v9708 = vsub.f32 %v8542, %v9707
      %9709 = vmatpush1.msra.mxu0 %v9708
      %9710 = vmatprep.subr.mxu0 0.0
      %9711 = vmatpush1.msra.mxu0 0.0
      %9712 = vmatprep.subr.mxu0 0.0
      %9713 = vmatpush1.msra.mxu0 0.0
      %9714 = vmatprep.subr.mxu0 0.0
      %9715 = vmatpush1.msra.mxu0 0.0
      %9716 = vmatprep.subr.mxu0 0.0
      %9717 = vmatpush1.msra.mxu0 0.0
      %9718 = vmatprep.subr.mxu0 0.0
      %9719 = vmatpush1.msra.mxu0 0.0
      %9720 = vmatprep.subr.mxu0 0.0
      %9721 = vmatpush1.msra.mxu0 0.0
      %9722 = vmatprep.subr.mxu0 0.0
      %9723 = vmatpush1.msra.mxu0 0.0
      %9724 = vmatprep.subr.mxu0 0.0
      %9725 = vmatpush1.msra.mxu0 0.0
      %9726 = vmatprep.subr.mxu0 0.0
      %9727 = vmatpush1.msra.mxu0 0.0
      %9728 = vmatprep.subr.mxu0 0.0
      %9729 = vmatpush1.msra.mxu0 0.0
      %9730 = vmatprep.subr.mxu0 0.0
      %9731 = vmatpush1.msra.mxu0 0.0
      %9732 = vmatprep.subr.mxu0 0.0
      %9733 = vmatpush1.msra.mxu0 0.0
      %9734 = vmatprep.subr.mxu0 0.0
      %9735 = vmatpush1.msra.mxu0 0.0
      %9736 = vmatprep.subr.mxu0 0.0
      %9737 = vmatpush1.msra.mxu0 0.0
      %9738 = vmatprep.subr.mxu0 0.0
      %9739 = vmatpush1.msra.mxu0 0.0
      %9740 = vmatprep.subr.mxu0 0.0
      %9741 = vmatpush1.msra.mxu0 0.0
      %9742 = vmatprep.subr.mxu0 0.0
      %9743 = vmatpush1.msra.mxu0 0.0
      %9744 = vmatprep.subr.mxu0 0.0
      %9745 = vmatpush1.msra.mxu0 0.0
      %9746 = vmatprep.subr.mxu0 0.0
      %9747 = vmatpush1.msra.mxu0 0.0
      %9748 = vmatprep.subr.mxu0 0.0
      %9749 = vmatpush1.msra.mxu0 0.0
      %9750 = vmatprep.subr.mxu0 0.0
      %9751 = vmatpush1.msra.mxu0 0.0
      %9752 = vmatprep.subr.mxu0 0.0
      %9753 = vmatpush1.msra.mxu0 0.0
      %9754 = vmatprep.subr.mxu0 0.0
      %9755 = vmatpush1.msra.mxu0 0.0
      %9756 = vmatprep.subr.mxu0 0.0
      %9757 = vmatpush1.msra.mxu0 0.0
      %9758 = vmatprep.subr.mxu0 0.0
      %9759 = vmatpush1.msra.mxu0 0.0
      %9760 = vmatprep.subr.mxu0 0.0
      %9761 = vmatpush1.msra.mxu0 0.0
      %9762 = vmatprep.subr.mxu0 0.0
      %9763 = vmatpush1.msra.mxu0 0.0
      %9764 = vmatprep.subr.mxu0 0.0
      %9765 = vmatpush1.msra.mxu0 0.0
      %9766 = vmatprep.subr.mxu0 0.0
      %9767 = vmatpush1.msra.mxu0 0.0
      %9768 = vmatprep.subr.mxu0 0.0
      %9769 = vmatpush1.msra.mxu0 0.0
      %9770 = vmatprep.subr.mxu0 0.0
      %9771 = vmatpush1.msra.mxu0 0.0
      %9772 = vmatprep.mubr.f32.mxu0 0.0
      %v9773 = vand.u32 %v8656, 4294901760
      %v9774 = vsub.f32 %v8656, %v9773
      %9775 = vmatmul.mubr.f32.gmra.mrb[0].mxu0 %v9774
      %v9776 = vpop.f32.mrb[0].mxu0
      %v9777 = vadd.f32 %v9703, %v9776
      %v9778 = vpop.f32.mrb[0].mxu0
      %9779 = vdwg.mxu0
      %9780 = vmatprep.subr.mxu0 0.0
      %v9781 = vand.u32 %v8542, 4294901760
      %9782 = vmatpush1.msra.mxu0 %v9781
      %9783 = vmatprep.subr.mxu0 0.0
      %9784 = vmatpush1.msra.mxu0 0.0
      %9785 = vmatprep.subr.mxu0 0.0
      %9786 = vmatpush1.msra.mxu0 0.0
      %9787 = vmatprep.subr.mxu0 0.0
      %9788 = vmatpush1.msra.mxu0 0.0
      %9789 = vmatprep.subr.mxu0 0.0
      %9790 = vmatpush1.msra.mxu0 0.0
      %9791 = vmatprep.subr.mxu0 0.0
      %9792 = vmatpush1.msra.mxu0 0.0
      %9793 = vmatprep.subr.mxu0 0.0
      %9794 = vmatpush1.msra.mxu0 0.0
      %9795 = vmatprep.subr.mxu0 0.0
      %9796 = vmatpush1.msra.mxu0 0.0
      %9797 = vmatprep.subr.mxu0 0.0
      %9798 = vmatpush1.msra.mxu0 0.0
      %9799 = vmatprep.subr.mxu0 0.0
      %9800 = vmatpush1.msra.mxu0 0.0
      %9801 = vmatprep.subr.mxu0 0.0
      %9802 = vmatpush1.msra.mxu0 0.0
      %9803 = vmatprep.subr.mxu0 0.0
      %9804 = vmatpush1.msra.mxu0 0.0
      %9805 = vmatprep.subr.mxu0 0.0
      %9806 = vmatpush1.msra.mxu0 0.0
      %9807 = vmatprep.subr.mxu0 0.0
      %9808 = vmatpush1.msra.mxu0 0.0
      %9809 = vmatprep.subr.mxu0 0.0
      %9810 = vmatpush1.msra.mxu0 0.0
      %9811 = vmatprep.subr.mxu0 0.0
      %9812 = vmatpush1.msra.mxu0 0.0
      %9813 = vmatprep.subr.mxu0 0.0
      %9814 = vmatpush1.msra.mxu0 0.0
      %9815 = vmatprep.subr.mxu0 0.0
      %9816 = vmatpush1.msra.mxu0 0.0
      %9817 = vmatprep.subr.mxu0 0.0
      %9818 = vmatpush1.msra.mxu0 0.0
      %9819 = vmatprep.subr.mxu0 0.0
      %9820 = vmatpush1.msra.mxu0 0.0
      %9821 = vmatprep.subr.mxu0 0.0
      %9822 = vmatpush1.msra.mxu0 0.0
      %9823 = vmatprep.subr.mxu0 0.0
      %9824 = vmatpush1.msra.mxu0 0.0
      %9825 = vmatprep.subr.mxu0 0.0
      %9826 = vmatpush1.msra.mxu0 0.0
      %9827 = vmatprep.subr.mxu0 0.0
      %9828 = vmatpush1.msra.mxu0 0.0
      %9829 = vmatprep.subr.mxu0 0.0
      %9830 = vmatpush1.msra.mxu0 0.0
      %9831 = vmatprep.subr.mxu0 0.0
      %9832 = vmatpush1.msra.mxu0 0.0
      %9833 = vmatprep.subr.mxu0 0.0
      %9834 = vmatpush1.msra.mxu0 0.0
      %9835 = vmatprep.subr.mxu0 0.0
      %9836 = vmatpush1.msra.mxu0 0.0
      %9837 = vmatprep.subr.mxu0 0.0
      %9838 = vmatpush1.msra.mxu0 0.0
      %9839 = vmatprep.subr.mxu0 0.0
      %9840 = vmatpush1.msra.mxu0 0.0
      %9841 = vmatprep.subr.mxu0 0.0
      %9842 = vmatpush1.msra.mxu0 0.0
      %9843 = vmatprep.subr.mxu0 0.0
      %9844 = vmatpush1.msra.mxu0 0.0
      %9845 = vmatprep.mubr.f32.mxu0 0.0
      %v9846 = vand.u32 %v8656, 4294901760
      %v9847 = vsub.f32 %v8656, %v9846
      %v9848 = vand.u32 %v9847, 4294901760
      %9849 = vmatmul.mubr.f32.gmra.mrb[0].mxu0 %v9848
      %v9850 = vpop.f32.mrb[0].mxu0
      %v9851 = vadd.f32 %v9777, %v9850
      %v9852 = vpop.f32.mrb[0].mxu0
      %9853 = vdwg.mxu0
      %9854 = vmatprep.subr.mxu0 0.0
      %v9855 = vand.u32 %v8542, 4294901760
      %v9856 = vsub.f32 %v8542, %v9855
      %v9857 = vand.u32 %v9856, 4294901760
      %9858 = vmatpush1.msra.mxu0 %v9857
      %9859 = vmatprep.subr.mxu0 0.0
      %9860 = vmatpush1.msra.mxu0 0.0
      %9861 = vmatprep.subr.mxu0 0.0
      %9862 = vmatpush1.msra.mxu0 0.0
      %9863 = vmatprep.subr.mxu0 0.0
      %9864 = vmatpush1.msra.mxu0 0.0
      %9865 = vmatprep.subr.mxu0 0.0
      %9866 = vmatpush1.msra.mxu0 0.0
      %9867 = vmatprep.subr.mxu0 0.0
      %9868 = vmatpush1.msra.mxu0 0.0
      %9869 = vmatprep.subr.mxu0 0.0
      %9870 = vmatpush1.msra.mxu0 0.0
      %9871 = vmatprep.subr.mxu0 0.0
      %9872 = vmatpush1.msra.mxu0 0.0
      %9873 = vmatprep.subr.mxu0 0.0
      %9874 = vmatpush1.msra.mxu0 0.0
      %9875 = vmatprep.subr.mxu0 0.0
      %9876 = vmatpush1.msra.mxu0 0.0
      %9877 = vmatprep.subr.mxu0 0.0
      %9878 = vmatpush1.msra.mxu0 0.0
      %9879 = vmatprep.subr.mxu0 0.0
      %9880 = vmatpush1.msra.mxu0 0.0
      %9881 = vmatprep.subr.mxu0 0.0
      %9882 = vmatpush1.msra.mxu0 0.0
      %9883 = vmatprep.subr.mxu0 0.0
      %9884 = vmatpush1.msra.mxu0 0.0
      %9885 = vmatprep.subr.mxu0 0.0
      %9886 = vmatpush1.msra.mxu0 0.0
      %9887 = vmatprep.subr.mxu0 0.0
      %9888 = vmatpush1.msra.mxu0 0.0
      %9889 = vmatprep.subr.mxu0 0.0
      %9890 = vmatpush1.msra.mxu0 0.0
      %9891 = vmatprep.subr.mxu0 0.0
      %9892 = vmatpush1.msra.mxu0 0.0
      %9893 = vmatprep.subr.mxu0 0.0
      %9894 = vmatpush1.msra.mxu0 0.0
      %9895 = vmatprep.subr.mxu0 0.0
      %9896 = vmatpush1.msra.mxu0 0.0
      %9897 = vmatprep.subr.mxu0 0.0
      %9898 = vmatpush1.msra.mxu0 0.0
      %9899 = vmatprep.subr.mxu0 0.0
      %9900 = vmatpush1.msra.mxu0 0.0
      %9901 = vmatprep.subr.mxu0 0.0
      %9902 = vmatpush1.msra.mxu0 0.0
      %9903 = vmatprep.subr.mxu0 0.0
      %9904 = vmatpush1.msra.mxu0 0.0
      %9905 = vmatprep.subr.mxu0 0.0
      %9906 = vmatpush1.msra.mxu0 0.0
      %9907 = vmatprep.subr.mxu0 0.0
      %9908 = vmatpush1.msra.mxu0 0.0
      %9909 = vmatprep.subr.mxu0 0.0
      %9910 = vmatpush1.msra.mxu0 0.0
      %9911 = vmatprep.subr.mxu0 0.0
      %9912 = vmatpush1.msra.mxu0 0.0
      %9913 = vmatprep.subr.mxu0 0.0
      %9914 = vmatpush1.msra.mxu0 0.0
      %9915 = vmatprep.subr.mxu0 0.0
      %9916 = vmatpush1.msra.mxu0 0.0
      %9917 = vmatprep.subr.mxu0 0.0
      %9918 = vmatpush1.msra.mxu0 0.0
      %9919 = vmatprep.subr.mxu0 0.0
      %9920 = vmatpush1.msra.mxu0 0.0
      %9921 = vmatprep.mubr.f32.mxu0 0.0
      %v9922 = vand.u32 %v8656, 4294901760
      %9923 = vmatmul.mubr.f32.gmra.mrb[0].mxu0 %v9922
      %v9924 = vpop.f32.mrb[0].mxu0
      %v9925 = vadd.f32 %v9851, %v9924
      %v9926 = vpop.f32.mrb[0].mxu0
      %9927 = vdwg.mxu0
      %9928 = vmatprep.subr.mxu0 0.0
      %v9929 = vand.u32 %v8542, 4294901760
      %9930 = vmatpush1.msra.mxu0 %v9929
      %9931 = vmatprep.subr.mxu0 0.0
      %9932 = vmatpush1.msra.mxu0 0.0
      %9933 = vmatprep.subr.mxu0 0.0
      %9934 = vmatpush1.msra.mxu0 0.0
      %9935 = vmatprep.subr.mxu0 0.0
      %9936 = vmatpush1.msra.mxu0 0.0
      %9937 = vmatprep.subr.mxu0 0.0
      %9938 = vmatpush1.msra.mxu0 0.0
      %9939 = vmatprep.subr.mxu0 0.0
      %9940 = vmatpush1.msra.mxu0 0.0
      %9941 = vmatprep.subr.mxu0 0.0
      %9942 = vmatpush1.msra.mxu0 0.0
      %9943 = vmatprep.subr.mxu0 0.0
      %9944 = vmatpush1.msra.mxu0 0.0
      %9945 = vmatprep.subr.mxu0 0.0
      %9946 = vmatpush1.msra.mxu0 0.0
      %9947 = vmatprep.subr.mxu0 0.0
      %9948 = vmatpush1.msra.mxu0 0.0
      %9949 = vmatprep.subr.mxu0 0.0
      %9950 = vmatpush1.msra.mxu0 0.0
      %9951 = vmatprep.subr.mxu0 0.0
      %9952 = vmatpush1.msra.mxu0 0.0
      %9953 = vmatprep.subr.mxu0 0.0
      %9954 = vmatpush1.msra.mxu0 0.0
      %9955 = vmatprep.subr.mxu0 0.0
      %9956 = vmatpush1.msra.mxu0 0.0
      %9957 = vmatprep.subr.mxu0 0.0
      %9958 = vmatpush1.msra.mxu0 0.0
      %9959 = vmatprep.subr.mxu0 0.0
      %9960 = vmatpush1.msra.mxu0 0.0
      %9961 = vmatprep.subr.mxu0 0.0
      %9962 = vmatpush1.msra.mxu0 0.0
      %9963 = vmatprep.subr.mxu0 0.0
      %9964 = vmatpush1.msra.mxu0 0.0
      %9965 = vmatprep.subr.mxu0 0.0
      %9966 = vmatpush1.msra.mxu0 0.0
      %9967 = vmatprep.subr.mxu0 0.0
      %9968 = vmatpush1.msra.mxu0 0.0
      %9969 = vmatprep.subr.mxu0 0.0
      %9970 = vmatpush1.msra.mxu0 0.0
      %9971 = vmatprep.subr.mxu0 0.0
      %9972 = vmatpush1.msra.mxu0 0.0
      %9973 = vmatprep.subr.mxu0 0.0
      %9974 = vmatpush1.msra.mxu0 0.0
      %9975 = vmatprep.subr.mxu0 0.0
      %9976 = vmatpush1.msra.mxu0 0.0
      %9977 = vmatprep.subr.mxu0 0.0
      %9978 = vmatpush1.msra.mxu0 0.0
      %9979 = vmatprep.subr.mxu0 0.0
      %9980 = vmatpush1.msra.mxu0 0.0
      %9981 = vmatprep.subr.mxu0 0.0
      %9982 = vmatpush1.msra.mxu0 0.0
      %9983 = vmatprep.subr.mxu0 0.0
      %9984 = vmatpush1.msra.mxu0 0.0
      %9985 = vmatprep.subr.mxu0 0.0
      %9986 = vmatpush1.msra.mxu0 0.0
      %9987 = vmatprep.subr.mxu0 0.0
      %9988 = vmatpush1.msra.mxu0 0.0
      %9989 = vmatprep.subr.mxu0 0.0
      %9990 = vmatpush1.msra.mxu0 0.0
      %9991 = vmatprep.subr.mxu0 0.0
      %9992 = vmatpush1.msra.mxu0 0.0
      %9993 = vmatprep.mubr.f32.mxu0 0.0
      %v9994 = vand.u32 %v8656, 4294901760
      %9995 = vmatmul.mubr.f32.gmra.mrb[0].mxu0 %v9994
      %v9996 = vpop.f32.mrb[0].mxu0
      %v9997 = vadd.f32 %v9925, %v9996
      %v9998 = vpop.f32.mrb[0].mxu0
      %9999 = vdwg.mxu0
      %v10001 = vsel %vm8655, %v9997, 0
      %10003 = vmatprep.subr.mxu0 0.0
      %v10004 = vand.u32 %v1164, 4294901760
      %10005 = vmatpush1.msra.mxu0 %v10004
      %10006 = vmatprep.subr.mxu0 0.0
      %10007 = vmatpush1.msra.mxu0 0.0
      %10008 = vmatprep.subr.mxu0 0.0
      %10009 = vmatpush1.msra.mxu0 0.0
      %10010 = vmatprep.subr.mxu0 0.0
      %10011 = vmatpush1.msra.mxu0 0.0
      %10012 = vmatprep.subr.mxu0 0.0
      %10013 = vmatpush1.msra.mxu0 0.0
      %10014 = vmatprep.subr.mxu0 0.0
      %10015 = vmatpush1.msra.mxu0 0.0
      %10016 = vmatprep.subr.mxu0 0.0
      %10017 = vmatpush1.msra.mxu0 0.0
      %10018 = vmatprep.subr.mxu0 0.0
      %10019 = vmatpush1.msra.mxu0 0.0
      %10020 = vmatprep.subr.mxu0 0.0
      %10021 = vmatpush1.msra.mxu0 0.0
      %10022 = vmatprep.subr.mxu0 0.0
      %10023 = vmatpush1.msra.mxu0 0.0
      %10024 = vmatprep.subr.mxu0 0.0
      %10025 = vmatpush1.msra.mxu0 0.0
      %10026 = vmatprep.subr.mxu0 0.0
      %10027 = vmatpush1.msra.mxu0 0.0
      %10028 = vmatprep.subr.mxu0 0.0
      %10029 = vmatpush1.msra.mxu0 0.0
      %10030 = vmatprep.subr.mxu0 0.0
      %10031 = vmatpush1.msra.mxu0 0.0
      %10032 = vmatprep.subr.mxu0 0.0
      %10033 = vmatpush1.msra.mxu0 0.0
      %10034 = vmatprep.subr.mxu0 0.0
      %10035 = vmatpush1.msra.mxu0 0.0
      %10036 = vmatprep.subr.mxu0 0.0
      %10037 = vmatpush1.msra.mxu0 0.0
      %10038 = vmatprep.subr.mxu0 0.0
      %10039 = vmatpush1.msra.mxu0 0.0
      %10040 = vmatprep.subr.mxu0 0.0
      %10041 = vmatpush1.msra.mxu0 0.0
      %10042 = vmatprep.subr.mxu0 0.0
      %10043 = vmatpush1.msra.mxu0 0.0
      %10044 = vmatprep.subr.mxu0 0.0
      %10045 = vmatpush1.msra.mxu0 0.0
      %10046 = vmatprep.subr.mxu0 0.0
      %10047 = vmatpush1.msra.mxu0 0.0
      %10048 = vmatprep.subr.mxu0 0.0
      %10049 = vmatpush1.msra.mxu0 0.0
      %10050 = vmatprep.subr.mxu0 0.0
      %10051 = vmatpush1.msra.mxu0 0.0
      %10052 = vmatprep.subr.mxu0 0.0
      %10053 = vmatpush1.msra.mxu0 0.0
      %10054 = vmatprep.subr.mxu0 0.0
      %10055 = vmatpush1.msra.mxu0 0.0
      %10056 = vmatprep.subr.mxu0 0.0
      %10057 = vmatpush1.msra.mxu0 0.0
      %10058 = vmatprep.subr.mxu0 0.0
      %10059 = vmatpush1.msra.mxu0 0.0
      %10060 = vmatprep.subr.mxu0 0.0
      %10061 = vmatpush1.msra.mxu0 0.0
      %10062 = vmatprep.subr.mxu0 0.0
      %10063 = vmatpush1.msra.mxu0 0.0
      %10064 = vmatprep.subr.mxu0 0.0
      %10065 = vmatpush1.msra.mxu0 0.0
      %10066 = vmatprep.subr.mxu0 0.0
      %10067 = vmatpush1.msra.mxu0 0.0
      %10068 = vmatprep.mubr.f32.mxu0 0.0
      %v10069 = vand.u32 %v10001, 4294901760
      %v10070 = vsub.f32 %v10001, %v10069
      %v10071 = vand.u32 %v10070, 4294901760
      %v10072 = vsub.f32 %v10070, %v10071
      %v10073 = vand.u32 %v10072, 4294901760
      %10074 = vmatmul.mubr.f32.gmra.mrb[0].mxu0 %v10073
      %v10075 = vpop.f32.mrb[0].mxu0
      %v10076 = vadd.f32 0.0, %v10075
      %v10077 = vpop.f32.mrb[0].mxu0
      %10078 = vdwg.mxu0
      %10079 = vmatprep.subr.mxu0 0.0
      %v10080 = vand.u32 %v1164, 4294901760
      %v10081 = vsub.f32 %v1164, %v10080
      %v10082 = vand.u32 %v10081, 4294901760
      %v10083 = vsub.f32 %v10081, %v10082
      %v10084 = vand.u32 %v10083, 4294901760
      %10085 = vmatpush1.msra.mxu0 %v10084
      %10086 = vmatprep.subr.mxu0 0.0
      %10087 = vmatpush1.msra.mxu0 0.0
      %10088 = vmatprep.subr.mxu0 0.0
      %10089 = vmatpush1.msra.mxu0 0.0
      %10090 = vmatprep.subr.mxu0 0.0
      %10091 = vmatpush1.msra.mxu0 0.0
      %10092 = vmatprep.subr.mxu0 0.0
      %10093 = vmatpush1.msra.mxu0 0.0
      %10094 = vmatprep.subr.mxu0 0.0
      %10095 = vmatpush1.msra.mxu0 0.0
      %10096 = vmatprep.subr.mxu0 0.0
      %10097 = vmatpush1.msra.mxu0 0.0
      %10098 = vmatprep.subr.mxu0 0.0
      %10099 = vmatpush1.msra.mxu0 0.0
      %10100 = vmatprep.subr.mxu0 0.0
      %10101 = vmatpush1.msra.mxu0 0.0
      %10102 = vmatprep.subr.mxu0 0.0
      %10103 = vmatpush1.msra.mxu0 0.0
      %10104 = vmatprep.subr.mxu0 0.0
      %10105 = vmatpush1.msra.mxu0 0.0
      %10106 = vmatprep.subr.mxu0 0.0
      %10107 = vmatpush1.msra.mxu0 0.0
      %10108 = vmatprep.subr.mxu0 0.0
      %10109 = vmatpush1.msra.mxu0 0.0
      %10110 = vmatprep.subr.mxu0 0.0
      %10111 = vmatpush1.msra.mxu0 0.0
      %10112 = vmatprep.subr.mxu0 0.0
      %10113 = vmatpush1.msra.mxu0 0.0
      %10114 = vmatprep.subr.mxu0 0.0
      %10115 = vmatpush1.msra.mxu0 0.0
      %10116 = vmatprep.subr.mxu0 0.0
      %10117 = vmatpush1.msra.mxu0 0.0
      %10118 = vmatprep.subr.mxu0 0.0
      %10119 = vmatpush1.msra.mxu0 0.0
      %10120 = vmatprep.subr.mxu0 0.0
      %10121 = vmatpush1.msra.mxu0 0.0
      %10122 = vmatprep.subr.mxu0 0.0
      %10123 = vmatpush1.msra.mxu0 0.0
      %10124 = vmatprep.subr.mxu0 0.0
      %10125 = vmatpush1.msra.mxu0 0.0
      %10126 = vmatprep.subr.mxu0 0.0
      %10127 = vmatpush1.msra.mxu0 0.0
      %10128 = vmatprep.subr.mxu0 0.0
      %10129 = vmatpush1.msra.mxu0 0.0
      %10130 = vmatprep.subr.mxu0 0.0
      %10131 = vmatpush1.msra.mxu0 0.0
      %10132 = vmatprep.subr.mxu0 0.0
      %10133 = vmatpush1.msra.mxu0 0.0
      %10134 = vmatprep.subr.mxu0 0.0
      %10135 = vmatpush1.msra.mxu0 0.0
      %10136 = vmatprep.subr.mxu0 0.0
      %10137 = vmatpush1.msra.mxu0 0.0
      %10138 = vmatprep.subr.mxu0 0.0
      %10139 = vmatpush1.msra.mxu0 0.0
      %10140 = vmatprep.subr.mxu0 0.0
      %10141 = vmatpush1.msra.mxu0 0.0
      %10142 = vmatprep.subr.mxu0 0.0
      %10143 = vmatpush1.msra.mxu0 0.0
      %10144 = vmatprep.subr.mxu0 0.0
      %10145 = vmatpush1.msra.mxu0 0.0
      %10146 = vmatprep.subr.mxu0 0.0
      %10147 = vmatpush1.msra.mxu0 0.0
      %10148 = vmatprep.mubr.f32.mxu0 0.0
      %v10149 = vand.u32 %v10001, 4294901760
      %10150 = vmatmul.mubr.f32.gmra.mrb[0].mxu0 %v10149
      %v10151 = vpop.f32.mrb[0].mxu0
      %v10152 = vadd.f32 %v10076, %v10151
      %v10153 = vpop.f32.mrb[0].mxu0
      %10154 = vdwg.mxu0
      %10155 = vmatprep.subr.mxu0 0.0
      %v10156 = vand.u32 %v1164, 4294901760
      %v10157 = vsub.f32 %v1164, %v10156
      %10158 = vmatpush1.msra.mxu0 %v10157
      %10159 = vmatprep.subr.mxu0 0.0
      %10160 = vmatpush1.msra.mxu0 0.0
      %10161 = vmatprep.subr.mxu0 0.0
      %10162 = vmatpush1.msra.mxu0 0.0
      %10163 = vmatprep.subr.mxu0 0.0
      %10164 = vmatpush1.msra.mxu0 0.0
      %10165 = vmatprep.subr.mxu0 0.0
      %10166 = vmatpush1.msra.mxu0 0.0
      %10167 = vmatprep.subr.mxu0 0.0
      %10168 = vmatpush1.msra.mxu0 0.0
      %10169 = vmatprep.subr.mxu0 0.0
      %10170 = vmatpush1.msra.mxu0 0.0
      %10171 = vmatprep.subr.mxu0 0.0
      %10172 = vmatpush1.msra.mxu0 0.0
      %10173 = vmatprep.subr.mxu0 0.0
      %10174 = vmatpush1.msra.mxu0 0.0
      %10175 = vmatprep.subr.mxu0 0.0
      %10176 = vmatpush1.msra.mxu0 0.0
      %10177 = vmatprep.subr.mxu0 0.0
      %10178 = vmatpush1.msra.mxu0 0.0
      %10179 = vmatprep.subr.mxu0 0.0
      %10180 = vmatpush1.msra.mxu0 0.0
      %10181 = vmatprep.subr.mxu0 0.0
      %10182 = vmatpush1.msra.mxu0 0.0
      %10183 = vmatprep.subr.mxu0 0.0
      %10184 = vmatpush1.msra.mxu0 0.0
      %10185 = vmatprep.subr.mxu0 0.0
      %10186 = vmatpush1.msra.mxu0 0.0
      %10187 = vmatprep.subr.mxu0 0.0
      %10188 = vmatpush1.msra.mxu0 0.0
      %10189 = vmatprep.subr.mxu0 0.0
      %10190 = vmatpush1.msra.mxu0 0.0
      %10191 = vmatprep.subr.mxu0 0.0
      %10192 = vmatpush1.msra.mxu0 0.0
      %10193 = vmatprep.subr.mxu0 0.0
      %10194 = vmatpush1.msra.mxu0 0.0
      %10195 = vmatprep.subr.mxu0 0.0
      %10196 = vmatpush1.msra.mxu0 0.0
      %10197 = vmatprep.subr.mxu0 0.0
      %10198 = vmatpush1.msra.mxu0 0.0
      %10199 = vmatprep.subr.mxu0 0.0
      %10200 = vmatpush1.msra.mxu0 0.0
      %10201 = vmatprep.subr.mxu0 0.0
      %10202 = vmatpush1.msra.mxu0 0.0
      %10203 = vmatprep.subr.mxu0 0.0
      %10204 = vmatpush1.msra.mxu0 0.0
      %10205 = vmatprep.subr.mxu0 0.0
      %10206 = vmatpush1.msra.mxu0 0.0
      %10207 = vmatprep.subr.mxu0 0.0
      %10208 = vmatpush1.msra.mxu0 0.0
      %10209 = vmatprep.subr.mxu0 0.0
      %10210 = vmatpush1.msra.mxu0 0.0
      %10211 = vmatprep.subr.mxu0 0.0
      %10212 = vmatpush1.msra.mxu0 0.0
      %10213 = vmatprep.subr.mxu0 0.0
      %10214 = vmatpush1.msra.mxu0 0.0
      %10215 = vmatprep.subr.mxu0 0.0
      %10216 = vmatpush1.msra.mxu0 0.0
      %10217 = vmatprep.subr.mxu0 0.0
      %10218 = vmatpush1.msra.mxu0 0.0
      %10219 = vmatprep.subr.mxu0 0.0
      %10220 = vmatpush1.msra.mxu0 0.0
      %10221 = vmatprep.mubr.f32.mxu0 0.0
      %v10222 = vand.u32 %v10001, 4294901760
      %v10223 = vsub.f32 %v10001, %v10222
      %10224 = vmatmul.mubr.f32.gmra.mrb[0].mxu0 %v10223
      %v10225 = vpop.f32.mrb[0].mxu0
      %v10226 = vadd.f32 %v10152, %v10225
      %v10227 = vpop.f32.mrb[0].mxu0
      %10228 = vdwg.mxu0
      %10229 = vmatprep.subr.mxu0 0.0
      %v10230 = vand.u32 %v1164, 4294901760
      %10231 = vmatpush1.msra.mxu0 %v10230
      %10232 = vmatprep.subr.mxu0 0.0
      %10233 = vmatpush1.msra.mxu0 0.0
      %10234 = vmatprep.subr.mxu0 0.0
      %10235 = vmatpush1.msra.mxu0 0.0
      %10236 = vmatprep.subr.mxu0 0.0
      %10237 = vmatpush1.msra.mxu0 0.0
      %10238 = vmatprep.subr.mxu0 0.0
      %10239 = vmatpush1.msra.mxu0 0.0
      %10240 = vmatprep.subr.mxu0 0.0
      %10241 = vmatpush1.msra.mxu0 0.0
      %10242 = vmatprep.subr.mxu0 0.0
      %10243 = vmatpush1.msra.mxu0 0.0
      %10244 = vmatprep.subr.mxu0 0.0
      %10245 = vmatpush1.msra.mxu0 0.0
      %10246 = vmatprep.subr.mxu0 0.0
      %10247 = vmatpush1.msra.mxu0 0.0
      %10248 = vmatprep.subr.mxu0 0.0
      %10249 = vmatpush1.msra.mxu0 0.0
      %10250 = vmatprep.subr.mxu0 0.0
      %10251 = vmatpush1.msra.mxu0 0.0
      %10252 = vmatprep.subr.mxu0 0.0
      %10253 = vmatpush1.msra.mxu0 0.0
      %10254 = vmatprep.subr.mxu0 0.0
      %10255 = vmatpush1.msra.mxu0 0.0
      %10256 = vmatprep.subr.mxu0 0.0
      %10257 = vmatpush1.msra.mxu0 0.0
      %10258 = vmatprep.subr.mxu0 0.0
      %10259 = vmatpush1.msra.mxu0 0.0
      %10260 = vmatprep.subr.mxu0 0.0
      %10261 = vmatpush1.msra.mxu0 0.0
      %10262 = vmatprep.subr.mxu0 0.0
      %10263 = vmatpush1.msra.mxu0 0.0
      %10264 = vmatprep.subr.mxu0 0.0
      %10265 = vmatpush1.msra.mxu0 0.0
      %10266 = vmatprep.subr.mxu0 0.0
      %10267 = vmatpush1.msra.mxu0 0.0
      %10268 = vmatprep.subr.mxu0 0.0
      %10269 = vmatpush1.msra.mxu0 0.0
      %10270 = vmatprep.subr.mxu0 0.0
      %10271 = vmatpush1.msra.mxu0 0.0
      %10272 = vmatprep.subr.mxu0 0.0
      %10273 = vmatpush1.msra.mxu0 0.0
      %10274 = vmatprep.subr.mxu0 0.0
      %10275 = vmatpush1.msra.mxu0 0.0
      %10276 = vmatprep.subr.mxu0 0.0
      %10277 = vmatpush1.msra.mxu0 0.0
      %10278 = vmatprep.subr.mxu0 0.0
      %10279 = vmatpush1.msra.mxu0 0.0
      %10280 = vmatprep.subr.mxu0 0.0
      %10281 = vmatpush1.msra.mxu0 0.0
      %10282 = vmatprep.subr.mxu0 0.0
      %10283 = vmatpush1.msra.mxu0 0.0
      %10284 = vmatprep.subr.mxu0 0.0
      %10285 = vmatpush1.msra.mxu0 0.0
      %10286 = vmatprep.subr.mxu0 0.0
      %10287 = vmatpush1.msra.mxu0 0.0
      %10288 = vmatprep.subr.mxu0 0.0
      %10289 = vmatpush1.msra.mxu0 0.0
      %10290 = vmatprep.subr.mxu0 0.0
      %10291 = vmatpush1.msra.mxu0 0.0
      %10292 = vmatprep.subr.mxu0 0.0
      %10293 = vmatpush1.msra.mxu0 0.0
      %10294 = vmatprep.mubr.f32.mxu0 0.0
      %v10295 = vand.u32 %v10001, 4294901760
      %v10296 = vsub.f32 %v10001, %v10295
      %v10297 = vand.u32 %v10296, 4294901760
      %10298 = vmatmul.mubr.f32.gmra.mrb[0].mxu0 %v10297
      %v10299 = vpop.f32.mrb[0].mxu0
      %v10300 = vadd.f32 %v10226, %v10299
      %v10301 = vpop.f32.mrb[0].mxu0
      %10302 = vdwg.mxu0
      %10303 = vmatprep.subr.mxu0 0.0
      %v10304 = vand.u32 %v1164, 4294901760
      %v10305 = vsub.f32 %v1164, %v10304
      %v10306 = vand.u32 %v10305, 4294901760
      %10307 = vmatpush1.msra.mxu0 %v10306
      %10308 = vmatprep.subr.mxu0 0.0
      %10309 = vmatpush1.msra.mxu0 0.0
      %10310 = vmatprep.subr.mxu0 0.0
      %10311 = vmatpush1.msra.mxu0 0.0
      %10312 = vmatprep.subr.mxu0 0.0
      %10313 = vmatpush1.msra.mxu0 0.0
      %10314 = vmatprep.subr.mxu0 0.0
      %10315 = vmatpush1.msra.mxu0 0.0
      %10316 = vmatprep.subr.mxu0 0.0
      %10317 = vmatpush1.msra.mxu0 0.0
      %10318 = vmatprep.subr.mxu0 0.0
      %10319 = vmatpush1.msra.mxu0 0.0
      %10320 = vmatprep.subr.mxu0 0.0
      %10321 = vmatpush1.msra.mxu0 0.0
      %10322 = vmatprep.subr.mxu0 0.0
      %10323 = vmatpush1.msra.mxu0 0.0
      %10324 = vmatprep.subr.mxu0 0.0
      %10325 = vmatpush1.msra.mxu0 0.0
      %10326 = vmatprep.subr.mxu0 0.0
      %10327 = vmatpush1.msra.mxu0 0.0
      %10328 = vmatprep.subr.mxu0 0.0
      %10329 = vmatpush1.msra.mxu0 0.0
      %10330 = vmatprep.subr.mxu0 0.0
      %10331 = vmatpush1.msra.mxu0 0.0
      %10332 = vmatprep.subr.mxu0 0.0
      %10333 = vmatpush1.msra.mxu0 0.0
      %10334 = vmatprep.subr.mxu0 0.0
      %10335 = vmatpush1.msra.mxu0 0.0
      %10336 = vmatprep.subr.mxu0 0.0
      %10337 = vmatpush1.msra.mxu0 0.0
      %10338 = vmatprep.subr.mxu0 0.0
      %10339 = vmatpush1.msra.mxu0 0.0
      %10340 = vmatprep.subr.mxu0 0.0
      %10341 = vmatpush1.msra.mxu0 0.0
      %10342 = vmatprep.subr.mxu0 0.0
      %10343 = vmatpush1.msra.mxu0 0.0
      %10344 = vmatprep.subr.mxu0 0.0
      %10345 = vmatpush1.msra.mxu0 0.0
      %10346 = vmatprep.subr.mxu0 0.0
      %10347 = vmatpush1.msra.mxu0 0.0
      %10348 = vmatprep.subr.mxu0 0.0
      %10349 = vmatpush1.msra.mxu0 0.0
      %10350 = vmatprep.subr.mxu0 0.0
      %10351 = vmatpush1.msra.mxu0 0.0
      %10352 = vmatprep.subr.mxu0 0.0
      %10353 = vmatpush1.msra.mxu0 0.0
      %10354 = vmatprep.subr.mxu0 0.0
      %10355 = vmatpush1.msra.mxu0 0.0
      %10356 = vmatprep.subr.mxu0 0.0
      %10357 = vmatpush1.msra.mxu0 0.0
      %10358 = vmatprep.subr.mxu0 0.0
      %10359 = vmatpush1.msra.mxu0 0.0
      %10360 = vmatprep.subr.mxu0 0.0
      %10361 = vmatpush1.msra.mxu0 0.0
      %10362 = vmatprep.subr.mxu0 0.0
      %10363 = vmatpush1.msra.mxu0 0.0
      %10364 = vmatprep.subr.mxu0 0.0
      %10365 = vmatpush1.msra.mxu0 0.0
      %10366 = vmatprep.subr.mxu0 0.0
      %10367 = vmatpush1.msra.mxu0 0.0
      %10368 = vmatprep.subr.mxu0 0.0
      %10369 = vmatpush1.msra.mxu0 0.0
      %10370 = vmatprep.mubr.f32.mxu0 0.0
      %v10371 = vand.u32 %v10001, 4294901760
      %10372 = vmatmul.mubr.f32.gmra.mrb[0].mxu0 %v10371
      %v10373 = vpop.f32.mrb[0].mxu0
      %v10374 = vadd.f32 %v10300, %v10373
      %v10375 = vpop.f32.mrb[0].mxu0
      %10376 = vdwg.mxu0
      %10377 = vmatprep.subr.mxu0 0.0
      %v10378 = vand.u32 %v1164, 4294901760
      %10379 = vmatpush1.msra.mxu0 %v10378
      %10380 = vmatprep.subr.mxu0 0.0
      %10381 = vmatpush1.msra.mxu0 0.0
      %10382 = vmatprep.subr.mxu0 0.0
      %10383 = vmatpush1.msra.mxu0 0.0
      %10384 = vmatprep.subr.mxu0 0.0
      %10385 = vmatpush1.msra.mxu0 0.0
      %10386 = vmatprep.subr.mxu0 0.0
      %10387 = vmatpush1.msra.mxu0 0.0
      %10388 = vmatprep.subr.mxu0 0.0
      %10389 = vmatpush1.msra.mxu0 0.0
      %10390 = vmatprep.subr.mxu0 0.0
      %10391 = vmatpush1.msra.mxu0 0.0
      %10392 = vmatprep.subr.mxu0 0.0
      %10393 = vmatpush1.msra.mxu0 0.0
      %10394 = vmatprep.subr.mxu0 0.0
      %10395 = vmatpush1.msra.mxu0 0.0
      %10396 = vmatprep.subr.mxu0 0.0
      %10397 = vmatpush1.msra.mxu0 0.0
      %10398 = vmatprep.subr.mxu0 0.0
      %10399 = vmatpush1.msra.mxu0 0.0
      %10400 = vmatprep.subr.mxu0 0.0
      %10401 = vmatpush1.msra.mxu0 0.0
      %10402 = vmatprep.subr.mxu0 0.0
      %10403 = vmatpush1.msra.mxu0 0.0
      %10404 = vmatprep.subr.mxu0 0.0
      %10405 = vmatpush1.msra.mxu0 0.0
      %10406 = vmatprep.subr.mxu0 0.0
      %10407 = vmatpush1.msra.mxu0 0.0
      %10408 = vmatprep.subr.mxu0 0.0
      %10409 = vmatpush1.msra.mxu0 0.0
      %10410 = vmatprep.subr.mxu0 0.0
      %10411 = vmatpush1.msra.mxu0 0.0
      %10412 = vmatprep.subr.mxu0 0.0
      %10413 = vmatpush1.msra.mxu0 0.0
      %10414 = vmatprep.subr.mxu0 0.0
      %10415 = vmatpush1.msra.mxu0 0.0
      %10416 = vmatprep.subr.mxu0 0.0
      %10417 = vmatpush1.msra.mxu0 0.0
      %10418 = vmatprep.subr.mxu0 0.0
      %10419 = vmatpush1.msra.mxu0 0.0
      %10420 = vmatprep.subr.mxu0 0.0
      %10421 = vmatpush1.msra.mxu0 0.0
      %10422 = vmatprep.subr.mxu0 0.0
      %10423 = vmatpush1.msra.mxu0 0.0
      %10424 = vmatprep.subr.mxu0 0.0
      %10425 = vmatpush1.msra.mxu0 0.0
      %10426 = vmatprep.subr.mxu0 0.0
      %10427 = vmatpush1.msra.mxu0 0.0
      %10428 = vmatprep.subr.mxu0 0.0
      %10429 = vmatpush1.msra.mxu0 0.0
      %10430 = vmatprep.subr.mxu0 0.0
      %10431 = vmatpush1.msra.mxu0 0.0
      %10432 = vmatprep.subr.mxu0 0.0
      %10433 = vmatpush1.msra.mxu0 0.0
      %10434 = vmatprep.subr.mxu0 0.0
      %10435 = vmatpush1.msra.mxu0 0.0
      %10436 = vmatprep.subr.mxu0 0.0
      %10437 = vmatpush1.msra.mxu0 0.0
      %10438 = vmatprep.subr.mxu0 0.0
      %10439 = vmatpush1.msra.mxu0 0.0
      %10440 = vmatprep.subr.mxu0 0.0
      %10441 = vmatpush1.msra.mxu0 0.0
      %10442 = vmatprep.mubr.f32.mxu0 0.0
      %v10443 = vand.u32 %v10001, 4294901760
      %10444 = vmatmul.mubr.f32.gmra.mrb[0].mxu0 %v10443
      %v10445 = vpop.f32.mrb[0].mxu0
      %v10446 = vadd.f32 %v10374, %v10445
      %v10447 = vpop.f32.mrb[0].mxu0
      %10448 = vdwg.mxu0
      %v10449 = vmul.f32 %v10446, 0.25
      %v10451 = vrot.slane %v9553, 1
      %v10453 = vadd.f32 %v9553, %v10451
      %v10454 = vrot.slane %v9553, 2
      %v10456 = vadd.f32 %v10453, %v10454
      %10458 = vrot.lane.b32.xlu0 %v10456, 127
      %v10459 = vpop.permute.xlu0 %10458
      %v10461 = vadd.f32 %v10456, %v10459
      %10462 = vrot.lane.b32.xlu0 %v10456, 126
      %v10463 = vpop.permute.xlu0 %10462
      %v10465 = vadd.f32 %v10461, %v10463
      %v10466 = vmul.f32 %v10465, 0.11111111
      %v10468 = vrot.slane %v10449, 1
      %v10470 = vadd.f32 %v10449, %v10468
      %v10471 = vrot.slane %v10449, 2
      %v10473 = vadd.f32 %v10470, %v10471
      %10475 = vrot.lane.b32.xlu0 %v10473, 127
      %v10476 = vpop.permute.xlu0 %10475
      %v10478 = vadd.f32 %v10473, %v10476
      %10479 = vrot.lane.b32.xlu0 %v10473, 126
      %v10480 = vpop.permute.xlu0 %10479
      %v10482 = vadd.f32 %v10478, %v10480
      %v10483 = vmul.f32 %v10482, 0.11111111
      %v10484 = vmul.f32 %v9553, %v9553
      %v10486 = vrot.slane %v10484, 1
      %v10488 = vadd.f32 %v10484, %v10486
      %v10489 = vrot.slane %v10484, 2
      %v10491 = vadd.f32 %v10488, %v10489
      %10493 = vrot.lane.b32.xlu0 %v10491, 127
      %v10494 = vpop.permute.xlu0 %10493
      %v10496 = vadd.f32 %v10491, %v10494
      %10497 = vrot.lane.b32.xlu0 %v10491, 126
      %v10498 = vpop.permute.xlu0 %10497
      %v10500 = vadd.f32 %v10496, %v10498
      %v10501 = vmul.f32 %v10500, 0.11111111
      %v10502 = vmul.f32 %v10449, %v10449
      %v10504 = vrot.slane %v10502, 1
      %v10506 = vadd.f32 %v10502, %v10504
      %v10507 = vrot.slane %v10502, 2
      %v10509 = vadd.f32 %v10506, %v10507
      %10511 = vrot.lane.b32.xlu0 %v10509, 127
      %v10512 = vpop.permute.xlu0 %10511
      %v10514 = vadd.f32 %v10509, %v10512
      %10515 = vrot.lane.b32.xlu0 %v10509, 126
      %v10516 = vpop.permute.xlu0 %10515
      %v10518 = vadd.f32 %v10514, %v10516
      %v10519 = vmul.f32 %v10518, 0.11111111
      %v10520 = vmul.f32 %v9553, %v10449
      %v10522 = vrot.slane %v10520, 1
      %v10524 = vadd.f32 %v10520, %v10522
      %v10525 = vrot.slane %v10520, 2
      %v10527 = vadd.f32 %v10524, %v10525
      %10529 = vrot.lane.b32.xlu0 %v10527, 127
      %v10530 = vpop.permute.xlu0 %10529
      %v10532 = vadd.f32 %v10527, %v10530
      %10533 = vrot.lane.b32.xlu0 %v10527, 126
      %v10534 = vpop.permute.xlu0 %10533
      %v10536 = vadd.f32 %v10532, %v10534
      %v10537 = vmul.f32 %v10536, 0.11111111
      %v10538 = vmul.f32 %v10466, %v10483
      %v10539 = vmul.f32 %v10466, %v10466
      %v10540 = vmul.f32 %v10483, %v10483
      %v10541 = vsub.f32 %v10501, %v10539
      %v10542 = vsub.f32 %v10519, %v10540
      %v10543 = vsub.f32 %v10537, %v10538
      %v10544 = vmul.f32 %v10543, 2.0
      %v10545 = vadd.f32 %v10544, 8.1e-07
      %v10546 = vadd.f32 %v10541, %v10542
      %v10547 = vadd.f32 %v10546, 8.1e-07
      %v10548 = vmul.f32 %v10538, 2.0
      %v10549 = vadd.f32 %v10548, 1e-08
      %v10550 = vmul.f32 %v10549, %v10545
      %v10551 = vadd.f32 %v10539, %v10540
      %v10552 = vadd.f32 %v10551, 1e-08
      %v10553 = vmul.f32 %v10552, %v10547
      %v10554 = vrcp.pop %v10553
      %v10555 = vmul.f32 %v10550, %v10554
      %vm10556 = vcmask 9216
      %v10557 = vsel %vm10556, %v10555, 0.0
      %10558 = vadd.xlane.f32.xlu0 %v10557
      %v10559 = vpop.xlane.xlu0 %10558
      %vm10560 = vcmask 1041408
      %v10561 = vsel %vm10560, %v10559, 0.0
      %v10562 = vrot.slane %v10561, 4
      %v10563 = vadd.f32 %v10561, %v10562
      %v10564 = vrot.slane %v10563, 2
      %v10565 = vadd.f32 %v10563, %v10564
      %v10566 = vrot.slane %v10565, 1
      %v10567 = vadd.f32 %v10565, %v10566
      %v10568 = vmul.f32 %v10567, 0.25
      %vm10569 = vcmp.eq.s32.totalorder %v1092, 0
      %v10570 = vsel %vm10569, %v1090, 0.0
      %vm10571 = vcmp.eq.s32.totalorder %v1092, 1
      %v10572 = vsel %vm10571, %v4335, %v10570
      %vm10573 = vcmp.eq.s32.totalorder %v1092, 2
      %v10574 = vsel %vm10573, %v6695, %v10572
      %vm10575 = vcmp.eq.s32.totalorder %v1092, 3
      %v10576 = vsel %vm10575, %v8654, %v10574
      %vm10577 = vcmp.eq.s32.totalorder %v1092, 4
      %v10578 = vsel %vm10577, %v10568, %v10576
      %10579 = vst [vmem:[%s161] sm:$0xff] %v10578
      %p10580 = scmp.lt.s32.totalorder %s13, 1
      %s10581 = scalar_select %p10580, %s13, 1
      %s10582 = smul.addr %s10581, 8
      %s10583 = scalar_lea.vmem %s2, %s10582
      // Predicated region
      $region29: #{_lambda_.1} parent=27 // pred_check
        %p10584 = pneg %p83
      $region30: #{_lambda_.1} parent=27 // pred_check_branch
        %10586 = sbr.rel (%p10584) target = $region32
      $region31: #{_lambda_.1} parent=27 // pred_region
        _
      $region32: #{_lambda_.1} parent=27 // pred_fallthru
        _
    $region28: #{_lambda_.1} parent=5 // pred_fallthru
      _
    %p10587 = scmp.le.s32.totalorder 2, %s8
    // Predicated region
    $region33: #{_lambda_.1} parent=5 // pred_check
      %p10588 = pneg %p10587
    $region34: #{_lambda_.1} parent=5 // pred_check_branch
      %10590 = sbr.rel (%p10588) target = $region36
    $region35: #{_lambda_.1} parent=5 // pred_region
      %s10591 = ssub.s32 %s8, 2
      // Predicated region
      $region37: #{_lambda_.1} parent=35 // pred_check
        %p10592 = pneg %p89
      $region38: #{_lambda_.1} parent=35 // pred_check_branch
        %10594 = sbr.rel (%p10592) target = $region40
      $region39: #{_lambda_.1} parent=35 // pred_region
        %p10595 = scmp.lt.s32.totalorder %s14, 1
        %s10596 = scalar_select %p10595, %s14, 1
        %s10597 = smul.addr %s10596, 8
        %s10598 = scalar_lea.vmem %s2, %s10597
      $region40: #{_lambda_.1} parent=35 // pred_fallthru
        _
    $region36: #{_lambda_.1} parent=5 // pred_fallthru
      _
  $region6: #{_lambda_.1} parent=0 // loop_footer
    %s12 = sadd.s32 1, %s8
  $region7: #{_lambda_.1} parent=0 // loop_footer_branch
    %7 = sbr.rel target = $region3
  $region8: #{_lambda_.1} parent=0 // loop_exit
    _

</llo_original>
